<compile_context>
chip_gen: v6e
topology: v6e:2x2x1
jax: 0.10.0
libtpu: 0.0.40
codegen_flags: <defaults>
</compile_context>

<pallas_src>
import functools

import jax
import jax.numpy as jnp
from jax import lax
from jax.experimental import pallas as pl
from jax.experimental.pallas import tpu as pltpu

BN_EPS = 1e-5
VMEM_LIMIT_BYTES = 32 * 1024 * 1024      # safe scoped-VMEM cap on v5e / v6e / v7x


def _pick_tile(n, max_tile, multiple=1):
    """Largest divisor of n that is <= max_tile and a multiple of `multiple`,
    preferring choices that yield >= 2 grid steps (both v7x TensorCores get work).
    Falls back to n (full extent, always a legal block dim)."""
    best, best_multi = None, None
    for d in range(1, n + 1):
        if n % d or d > max_tile or d % multiple:
            continue
        best = d
        if n // d >= 2:
            best_multi = d
    if best_multi is not None:
        return best_multi
    return best if best is not None else n


# ------------------------------- Pallas kernels ------------------------------- #

def conv_bn_kernel(*refs, taps, pad, apply_act):
    """Fused (prev-block BN+ReLU) + in-VMEM zero pad + concatenated-K conv + BN stats.

    refs (apply_act=True):  x, w, scale, shift, y, stats
    refs (apply_act=False): x, w, y, stats
      x:     (TR, S, Cin) or (TB, S, T, Cin)  bf16  raw previous conv output / input
      w:     (taps*Cin, Cout)                 bf16  kernel taps stacked along K
      scale/shift: (1, Cin)                   f32   folded BN of the previous block
      y:     x.shape[:-1] + (Cout,)           bf16  raw conv output of this block
      stats: (1, 2, Cout)                     f32   per-tile [sum, sum of squares]
    The convolution runs along axis 1 of x ('same' zero padding, stride 1).
    """
    if apply_act:
        x_ref, w_ref, scale_ref, shift_ref, y_ref, stats_ref = refs
    else:
        x_ref, w_ref, y_ref, stats_ref = refs

    x = x_ref[...]
    if apply_act:
        act = jnp.maximum(x.astype(jnp.float32) * scale_ref[...] + shift_ref[...], 0.0)
        act = act.astype(jnp.bfloat16)
    else:
        act = x                                   # already bf16, no pending BN/ReLU

    s = act.shape[1]                              # output extent along the conv axis
    cin = act.shape[-1]

    if pad > 0:                                   # zero-pad along the conv axis in VMEM
        zshape = list(act.shape)
        zshape[1] = pad
        z = jnp.zeros(tuple(zshape), act.dtype)
        xp = jnp.concatenate([z, act, z], axis=1)
    else:
        xp = act

    if taps == 1:
        lhs = xp
    else:                                         # concatenated-K lhs: (.., S, taps*Cin)
        parts = [lax.slice_in_dim(xp, k, k + s, axis=1) for k in range(taps)]
        lhs = jnp.concatenate(parts, axis=-1)

    rows = 1
    for d in lhs.shape[:-1]:
        rows *= d
    acc = jnp.dot(lhs.reshape(rows, taps * cin), w_ref[...],
                  preferred_element_type=jnp.float32)          # (rows, Cout) f32

    y_ref[...] = acc.reshape(y_ref.shape).astype(y_ref.dtype)

    s1 = jnp.sum(acc, axis=0, keepdims=True)                   # (1, Cout)
    s2 = jnp.sum(acc * acc, axis=0, keepdims=True)             # (1, Cout)
    stats_ref[...] = jnp.concatenate([s1, s2], axis=0).reshape(stats_ref.shape)


def bn_relu_kernel(y_ref, scale_ref, shift_ref, o_ref):
    """Folded BatchNorm (per-channel scale/shift) + ReLU for the last block of a branch."""
    y = y_ref[...].astype(jnp.float32)
    o_ref[...] = jnp.maximum(y * scale_ref[...] + shift_ref[...], 0.0).astype(o_ref.dtype)


def maxpool3x3_kernel(x_ref, o_ref):
    """3x3 / stride 1 max pool on one -inf-padded NHWC image (bf16)."""
    x = x_ref[...]                                              # (1, H+2, W+2, C)
    h, w = o_ref.shape[1], o_ref.shape[2]
    m = x[:, 0:h, 0:w, :]
    for ky in range(3):
        for kx in range(3):
            if ky == 0 and kx == 0:
                continue
            m = jnp.maximum(m, x[:, ky:ky + h, kx:kx + w, :])
    o_ref[...] = m


# ------------------------------ ConvBlock wrappers ------------------------------ #

def _conv_bn_stats(x, w_taps, scale, shift, apply_act):
    """One fused ConvBlock pass.

    x:      (R, S, Cin) bf16  [conv along S, e.g. rows = N*H, S = W]   or
            (B, S, T, Cin) bf16 [conv along S, e.g. S = H, T = W]
    w_taps: (K, Cin, Cout) f32
    Returns (y bf16 with Cout channels, stats (nt,2,Cout) f32, element count per channel).
    """
    taps, cin, cout = w_taps.shape
    pad = (taps - 1) // 2
    lead = x.shape[0]
    tile = _pick_tile(lead, 256 if x.ndim == 3 else 8)
    nt = lead // tile

    wmat = w_taps.astype(jnp.bfloat16).reshape(taps * cin, cout)

    block_in = (tile,) + x.shape[1:]
    block_out = (tile,) + x.shape[1:-1] + (cout,)
    if x.ndim == 3:
        idx = lambda i: (i, 0, 0)
    else:
        idx = lambda i: (i, 0, 0, 0)

    in_specs = [pl.BlockSpec(block_in, idx),
                pl.BlockSpec((taps * cin, cout), lambda i: (0, 0))]
    args = [x, wmat]
    if apply_act:
        in_specs += [pl.BlockSpec((1, cin), lambda i: (0, 0)),
                     pl.BlockSpec((1, cin), lambda i: (0, 0))]
        args += [scale.reshape(1, cin), shift.reshape(1, cin)]

    count = 1
    for d in x.shape[:-1]:
        count *= d

    flops = 2 * count * taps * cin * cout
    bytes_accessed = (x.size * 2 + wmat.size * 2 + count * cout * 2
                      + nt * 2 * cout * 4 + (2 * cin * 4 if apply_act else 0))

    kern = functools.partial(conv_bn_kernel, taps=taps, pad=pad, apply_act=apply_act)
    y, stats = pl.pallas_call(
        kern,
        out_shape=(jax.ShapeDtypeStruct(x.shape[:-1] + (cout,), jnp.bfloat16),
                   jax.ShapeDtypeStruct((nt, 2, cout), jnp.float32)),
        grid=(nt,),
        in_specs=in_specs,
        out_specs=(pl.BlockSpec(block_out, idx),
                   pl.BlockSpec((1, 2, cout), lambda i: (i, 0, 0))),
        compiler_params=pltpu.CompilerParams(
            dimension_semantics=("parallel",),
            vmem_limit_bytes=VMEM_LIMIT_BYTES),
        cost_estimate=pl.CostEstimate(flops=int(flops), transcendentals=0,
                                      bytes_accessed=int(bytes_accessed)),
    )(*args)
    return y, stats, count


def _fold_bn(stats, count, gamma, beta):
    """Fold train-mode BatchNorm into one per-channel scale/shift (tiny per-channel math)."""
    s = jnp.sum(stats, axis=0)                    # (2, Cout) f32
    mean = s[0] / count
    var = jnp.maximum(s[1] / count - mean * mean, 0.0)   # biased variance (train mode)
    # TODO(synk): E[x^2]-E[x]^2 can cancel when |mean| >> std; switch to a shifted /
    # two-pass variance if bit-closeness to the f32 PyTorch reference is required.
    scale = gamma * lax.rsqrt(var + BN_EPS)
    shift = beta - mean * scale
    return scale, shift


def _bn_relu(y4, scale, shift):
    """Standalone BN+ReLU for the last ConvBlock of a branch (f32 output)."""
    n, h, w, c = y4.shape
    m = n * h * w
    tm = _pick_tile(m, 1024, multiple=8)
    nt = m // tm
    out = pl.pallas_call(
        bn_relu_kernel,
        out_shape=jax.ShapeDtypeStruct((m, c), jnp.float32),
        grid=(nt,),
        in_specs=[pl.BlockSpec((tm, c), lambda i: (i, 0)),
                  pl.BlockSpec((1, c), lambda i: (0, 0)),
                  pl.BlockSpec((1, c), lambda i: (0, 0))],
        out_specs=pl.BlockSpec((tm, c), lambda i: (i, 0)),
        compiler_params=pltpu.CompilerParams(
            dimension_semantics=("parallel",),
            vmem_limit_bytes=VMEM_LIMIT_BYTES),
    )(y4.reshape(m, c), scale.reshape(1, c), shift.reshape(1, c))
    return out.reshape(n, h, w, c)


def maxpool_3x3_same(x):
    n, h, w, c = x.shape
    pad_val = float(jnp.finfo(x.dtype).min)
    xp = jnp.pad(x, ((0, 0), (1, 1), (1, 1), (0, 0)), constant_values=pad_val)
    return pl.pallas_call(
        maxpool3x3_kernel,
        out_shape=jax.ShapeDtypeStruct((n, h, w, c), x.dtype),
        grid=(n,),
        in_specs=[pl.BlockSpec((1, h + 2, w + 2, c), lambda i: (i, 0, 0, 0))],
        out_specs=pl.BlockSpec((1, h, w, c), lambda i: (i, 0, 0, 0)),
        compiler_params=pltpu.CompilerParams(
            dimension_semantics=("parallel",),
            vmem_limit_bytes=VMEM_LIMIT_BYTES),
    )(xp)


def run_branch(x, blocks):
    """Chain of ConvBlocks.  x: (N,H,W,Cin) bf16 with no pending BN/ReLU.
    blocks: list of (weight OIHW f32, gamma, beta)."""
    n, h, w, _ = x.shape
    cur = x
    scale = shift = None
    apply_act = False
    for (wgt, gamma, beta) in blocks:
        cout, cin, kh, kw = wgt.shape
        if kh == 1:                                             # 1x1 / 1x7: conv along W
            w_taps = jnp.transpose(wgt[:, :, 0, :], (2, 1, 0))  # (KW, Cin, Cout)
            x_in = cur.reshape(n * h, w, cin)
        elif kw == 1:                                           # 7x1: conv along H (4-D)
            w_taps = jnp.transpose(wgt[:, :, :, 0], (2, 1, 0))  # (KH, Cin, Cout)
            x_in = cur.reshape(n, h, w, cin)
        else:
            # TODO(synk): general KHxKW ConvBlock (InceptionF6 only uses 1x1 / 1x7 / 7x1).
            raise NotImplementedError("only 1x1, 1x7 and 7x1 convolutions are needed")
        y, stats, count = _conv_bn_stats(x_in, w_taps, scale, shift, apply_act)
        cur = y.reshape(n, h, w, cout)
        scale, shift = _fold_bn(stats, jnp.float32(count),
                                gamma.astype(jnp.float32), beta.astype(jnp.float32))
        apply_act = True
    return _bn_relu(cur, scale, shift)


# -------------------------------- InceptionF6 -------------------------------- #

def inception_f6_forward(x_nchw, params):
    x = jnp.transpose(x_nchw, (0, 2, 3, 1)).astype(jnp.bfloat16)   # NCHW -> NHWC bf16

    b1 = run_branch(x, params["branch1"])
    b2 = run_branch(x, params["branch2"])
    b3 = run_branch(maxpool_3x3_same(x), params["branch3"])
    b4 = run_branch(x, params["branch4"])
    # TODO(synk): write each branch directly into its channel slice of the output to
    # avoid this concatenate copy.
    out = jnp.concatenate([b1, b2, b3, b4], axis=-1)
    return jnp.transpose(out, (0, 3, 1, 2))                        # back to NCHW (f32)


def _init_convblock(key, cin, cout, kh, kw):
    k_w, k_g, k_b = jax.random.split(key, 3)
    fan_in = cin * kh * kw
    w = jax.random.normal(k_w, (cout, cin, kh, kw), jnp.float32) / jnp.sqrt(fan_in)
    gamma = 1.0 + 0.1 * jax.random.normal(k_g, (cout,), jnp.float32)
    beta = 0.1 * jax.random.normal(k_b, (cout,), jnp.float32)
    # Conv bias omitted on purpose: it cancels exactly under train-mode BatchNorm.
    return (w, gamma, beta)


def init_inception_f6(key, in_channels, f_7x7):
    spec = [
        ("branch1", [(in_channels, f_7x7, 1, 1), (f_7x7, f_7x7, 1, 7),
                     (f_7x7, f_7x7, 7, 1), (f_7x7, f_7x7, 1, 7), (f_7x7, 192, 7, 1)]),
        ("branch2", [(in_channels, f_7x7, 1, 1), (f_7x7, f_7x7, 1, 7),
                     (f_7x7, 192, 7, 1)]),
        ("branch3", [(in_channels, 192, 1, 1)]),
        ("branch4", [(in_channels, 192, 1, 1)]),
    ]
    params, idx = {}, 0
    for name, blocks in spec:
        plist = []
        for (cin, cout, kh, kw) in blocks:
            plist.append(_init_convblock(jax.random.fold_in(key, idx), cin, cout, kh, kw))
            idx += 1
        params[name] = plist
    return params


if __name__ == "__main__":
    N, CIN, H, W = 2, 4, 16, 16
    F77 = 8

    key = jax.random.PRNGKey(0)
    k_x, k_p = jax.random.split(key)
    x = jax.random.normal(k_x, (N, CIN, H, W), dtype=jnp.float32)
    params = init_inception_f6(k_p, CIN, F77)

    fwd = jax.jit(inception_f6_forward)
    out = fwd(x, params)
    jax.block_until_ready(out)

    assert out.shape == (N, 4 * 192, H, W), out.shape
    assert bool(jnp.all(jnp.isfinite(out))), "non-finite output"
    print("KERNEL_OK")
</pallas_src>

<mosaic_0001>
module attributes {stable_mosaic.version = 11 : i64} {
  func.func @conv_bn_kernel(%arg0: i32, %arg1: memref<16x16x4xbf16, #tpu.memory_space<vmem>>, %arg2: memref<4x8xbf16, #tpu.memory_space<vmem>>, %arg3: memref<16x16x8xbf16, #tpu.memory_space<vmem>>, %arg4: memref<1x2x8xf32, #tpu.memory_space<vmem>>) attributes {dimension_semantics = [#tpu.dimension_semantics<parallel>], iteration_bounds = array<i64: 2>, scalar_prefetch = 0 : i64, scratch_operands = 0 : i64, tpu.core_type = #tpu.core_type<tc>, window_params = [{transform_indices = @transform_0, window_bounds = array<i64: 16, 16, 4>}, {pipeline_mode = #tpu.pipeline_mode<synchronous>, transform_indices = @transform_1, window_bounds = array<i64: 4, 8>}, {transform_indices = @transform_2, window_bounds = array<i64: 16, 16, 8>}, {transform_indices = @transform_3, window_bounds = array<i64: 1, 2, 8>}]} {
    %c0 = arith.constant 0 : index
    %c0_0 = arith.constant 0 : index
    %c0_1 = arith.constant 0 : index
    %0 = vector.load %arg1[%c0, %c0_0, %c0_1] : memref<16x16x4xbf16, #tpu.memory_space<vmem>>, vector<16x16x4xbf16>
    %1 = vector.shape_cast %0 : vector<16x16x4xbf16> to vector<256x4xbf16>
    %c0_2 = arith.constant 0 : index
    %c0_3 = arith.constant 0 : index
    %2 = vector.load %arg2[%c0_2, %c0_3] : memref<4x8xbf16, #tpu.memory_space<vmem>>, vector<4x8xbf16>
    %cst = arith.constant dense<0.000000e+00> : vector<256x8xf32>
    %3 = tpu.matmul %1, %2, %cst {dimension_numbers = #tpu.dot_dimension_numbers<[1], [0], [0], [1], [0, 0, 1, 1], [], []>} : vector<256x4xbf16>, vector<4x8xbf16>, vector<256x8xf32> -> vector<256x8xf32>
    %4 = vector.shape_cast %3 : vector<256x8xf32> to vector<16x16x8xf32>
    %5 = arith.truncf %4 : vector<16x16x8xf32> to vector<16x16x8xbf16>
    %c0_4 = arith.constant 0 : index
    %c0_5 = arith.constant 0 : index
    %c0_6 = arith.constant 0 : index
    %6 = vector.load %arg3[%c0_4, %c0_5, %c0_6] : memref<16x16x8xbf16, #tpu.memory_space<vmem>>, vector<16x16x8xbf16>
    tpu.vector_store %arg3[%c0_4, %c0_5, %c0_6], %5 {strides = array<i32>} : memref<16x16x8xbf16, #tpu.memory_space<vmem>>, vector<16x16x8xbf16>,
    %cst_7 = arith.constant dense<0.000000e+00> : vector<8xf32>
    %7 = vector.multi_reduction <add>, %3, %cst_7 [0] : vector<256x8xf32> to vector<8xf32>
    %8 = vector.shape_cast %7 : vector<8xf32> to vector<1x8xf32>
    %9 = arith.mulf %3, %3 : vector<256x8xf32>
    %cst_8 = arith.constant dense<0.000000e+00> : vector<8xf32>
    %10 = vector.multi_reduction <add>, %9, %cst_8 [0] : vector<256x8xf32> to vector<8xf32>
    %11 = vector.shape_cast %10 : vector<8xf32> to vector<1x8xf32>
    %12 = tpu.concatenate %8, %11 in 0 : vector<1x8xf32>, vector<1x8xf32> -> vector<2x8xf32>
    %13 = vector.shape_cast %12 : vector<2x8xf32> to vector<1x2x8xf32>
    %c0_9 = arith.constant 0 : index
    %c0_10 = arith.constant 0 : index
    %c0_11 = arith.constant 0 : index
    %14 = vector.load %arg4[%c0_9, %c0_10, %c0_11] : memref<1x2x8xf32, #tpu.memory_space<vmem>>, vector<1x2x8xf32>
    tpu.vector_store %arg4[%c0_9, %c0_10, %c0_11], %13 {strides = array<i32>} : memref<1x2x8xf32, #tpu.memory_space<vmem>>, vector<1x2x8xf32>,
    return
  }
  func.func @transform_0(%arg0: i32) -> (i32, i32, i32) {
    %c0_i32 = arith.constant 0 : i32
    %c0_i32_0 = arith.constant 0 : i32
    %c0_i32_1 = arith.constant 0 : i32
    return %arg0, %c0_i32, %c0_i32_0 : i32, i32, i32
  }
  func.func @transform_1(%arg0: i32) -> (i32, i32) {
    %c0_i32 = arith.constant 0 : i32
    %c0_i32_0 = arith.constant 0 : i32
    %c0_i32_1 = arith.constant 0 : i32
    return %c0_i32, %c0_i32_0 : i32, i32
  }
  func.func @transform_2(%arg0: i32) -> (i32, i32, i32) {
    %c0_i32 = arith.constant 0 : i32
    %c0_i32_0 = arith.constant 0 : i32
    %c0_i32_1 = arith.constant 0 : i32
    return %arg0, %c0_i32, %c0_i32_0 : i32, i32, i32
  }
  func.func @transform_3(%arg0: i32) -> (i32, i32, i32) {
    %c0_i32 = arith.constant 0 : i32
    %c0_i32_0 = arith.constant 0 : i32
    %c0_i32_1 = arith.constant 0 : i32
    return %arg0, %c0_i32, %c0_i32_0 : i32, i32, i32
  }
}

module attributes {stable_mosaic.version = 11 : i64} {
  func.func @conv_bn_kernel(%arg0: i32, %arg1: memref<1x16x16x8xbf16, #tpu.memory_space<vmem>>, %arg2: memref<56x192xbf16, #tpu.memory_space<vmem>>, %arg3: memref<1x8xf32, #tpu.memory_space<vmem>>, %arg4: memref<1x8xf32, #tpu.memory_space<vmem>>, %arg5: memref<1x16x16x192xbf16, #tpu.memory_space<vmem>>, %arg6: memref<1x2x192xf32, #tpu.memory_space<vmem>>) attributes {dimension_semantics = [#tpu.dimension_semantics<parallel>], iteration_bounds = array<i64: 2>, scalar_prefetch = 0 : i64, scratch_operands = 0 : i64, tpu.core_type = #tpu.core_type<tc>, window_params = [{transform_indices = @transform_0, window_bounds = array<i64: 1, 16, 16, 8>}, {pipeline_mode = #tpu.pipeline_mode<synchronous>, transform_indices = @transform_1, window_bounds = array<i64: 56, 192>}, {pipeline_mode = #tpu.pipeline_mode<synchronous>, transform_indices = @transform_2, window_bounds = array<i64: 1, 8>}, {pipeline_mode = #tpu.pipeline_mode<synchronous>, transform_indices = @transform_3, window_bounds = array<i64: 1, 8>}, {transform_indices = @transform_4, window_bounds = array<i64: 1, 16, 16, 192>}, {transform_indices = @transform_5, window_bounds = array<i64: 1, 2, 192>}]} {
    %c0 = arith.constant 0 : index
    %c0_0 = arith.constant 0 : index
    %c0_1 = arith.constant 0 : index
    %c0_2 = arith.constant 0 : index
    %0 = vector.load %arg1[%c0, %c0_0, %c0_1, %c0_2] : memref<1x16x16x8xbf16, #tpu.memory_space<vmem>>, vector<1x16x16x8xbf16>
    %1 = arith.extf %0 : vector<1x16x16x8xbf16> to vector<1x16x16x8xf32>
    %c0_3 = arith.constant 0 : index
    %c0_4 = arith.constant 0 : index
    %2 = vector.load %arg3[%c0_3, %c0_4] : memref<1x8xf32, #tpu.memory_space<vmem>>, vector<1x8xf32>
    %3 = vector.shape_cast %2 : vector<1x8xf32> to vector<1x1x1x8xf32>
    %4 = vector.broadcast %3 : vector<1x1x1x8xf32> to vector<1x16x16x8xf32>
    %5 = arith.mulf %1, %4 : vector<1x16x16x8xf32>
    %c0_5 = arith.constant 0 : index
    %c0_6 = arith.constant 0 : index
    %6 = vector.load %arg4[%c0_5, %c0_6] : memref<1x8xf32, #tpu.memory_space<vmem>>, vector<1x8xf32>
    %7 = vector.shape_cast %6 : vector<1x8xf32> to vector<1x1x1x8xf32>
    %8 = vector.broadcast %7 : vector<1x1x1x8xf32> to vector<1x16x16x8xf32>
    %9 = arith.addf %5, %8 : vector<1x16x16x8xf32>
    %cst = arith.constant 0.000000e+00 : f32
    %10 = vector.broadcast %cst : f32 to vector<1x16x16x8xf32>
    %11 = arith.maximumf %9, %10 : vector<1x16x16x8xf32>
    %12 = arith.truncf %11 : vector<1x16x16x8xf32> to vector<1x16x16x8xbf16>
    %cst_7 = arith.constant 0.000000e+00 : bf16
    %13 = vector.broadcast %cst_7 : bf16 to vector<1x3x16x8xbf16>
    %14 = tpu.concatenate %13, %12, %13 in 1 : vector<1x3x16x8xbf16>, vector<1x16x16x8xbf16>, vector<1x3x16x8xbf16> -> vector<1x22x16x8xbf16>
    %15 = vector.extract_strided_slice %14 {offsets = [0, 0, 0, 0], sizes = [1, 16, 16, 8], strides = [1, 1, 1, 1]} : vector<1x22x16x8xbf16> to vector<1x16x16x8xbf16>
    %16 = vector.extract_strided_slice %14 {offsets = [0, 1, 0, 0], sizes = [1, 16, 16, 8], strides = [1, 1, 1, 1]} : vector<1x22x16x8xbf16> to vector<1x16x16x8xbf16>
    %17 = vector.extract_strided_slice %14 {offsets = [0, 2, 0, 0], sizes = [1, 16, 16, 8], strides = [1, 1, 1, 1]} : vector<1x22x16x8xbf16> to vector<1x16x16x8xbf16>
    %18 = vector.extract_strided_slice %14 {offsets = [0, 3, 0, 0], sizes = [1, 16, 16, 8], strides = [1, 1, 1, 1]} : vector<1x22x16x8xbf16> to vector<1x16x16x8xbf16>
    %19 = vector.extract_strided_slice %14 {offsets = [0, 4, 0, 0], sizes = [1, 16, 16, 8], strides = [1, 1, 1, 1]} : vector<1x22x16x8xbf16> to vector<1x16x16x8xbf16>
    %20 = vector.extract_strided_slice %14 {offsets = [0, 5, 0, 0], sizes = [1, 16, 16, 8], strides = [1, 1, 1, 1]} : vector<1x22x16x8xbf16> to vector<1x16x16x8xbf16>
    %21 = vector.extract_strided_slice %14 {offsets = [0, 6, 0, 0], sizes = [1, 16, 16, 8], strides = [1, 1, 1, 1]} : vector<1x22x16x8xbf16> to vector<1x16x16x8xbf16>
    %22 = tpu.concatenate %15, %16, %17, %18, %19, %20, %21 in 3 : vector<1x16x16x8xbf16>, vector<1x16x16x8xbf16>, vector<1x16x16x8xbf16>, vector<1x16x16x8xbf16>, vector<1x16x16x8xbf16>, vector<1x16x16x8xbf16>, vector<1x16x16x8xbf16> -> vector<1x16x16x56xbf16>
    %23 = vector.shape_cast %22 : vector<1x16x16x56xbf16> to vector<256x56xbf16>
    %c0_8 = arith.constant 0 : index
    %c0_9 = arith.constant 0 : index
    %24 = vector.load %arg2[%c0_8, %c0_9] : memref<56x192xbf16, #tpu.memory_space<vmem>>, vector<56x192xbf16>
    %cst_10 = arith.constant dense<0.000000e+00> : vector<256x192xf32>
    %25 = tpu.matmul %23, %24, %cst_10 {dimension_numbers = #tpu.dot_dimension_numbers<[1], [0], [0], [1], [0, 0, 1, 1], [], []>} : vector<256x56xbf16>, vector<56x192xbf16>, vector<256x192xf32> -> vector<256x192xf32>
    %26 = vector.shape_cast %25 : vector<256x192xf32> to vector<1x16x16x192xf32>
    %27 = arith.truncf %26 : vector<1x16x16x192xf32> to vector<1x16x16x192xbf16>
    %c0_11 = arith.constant 0 : index
    %c0_12 = arith.constant 0 : index
    %c0_13 = arith.constant 0 : index
    %c0_14 = arith.constant 0 : index
    %28 = vector.load %arg5[%c0_11, %c0_12, %c0_13, %c0_14] : memref<1x16x16x192xbf16, #tpu.memory_space<vmem>>, vector<1x16x16x192xbf16>
    tpu.vector_store %arg5[%c0_11, %c0_12, %c0_13, %c0_14], %27 {strides = array<i32>} : memref<1x16x16x192xbf16, #tpu.memory_space<vmem>>, vector<1x16x16x192xbf16>,
    %cst_15 = arith.constant dense<0.000000e+00> : vector<192xf32>
    %29 = vector.multi_reduction <add>, %25, %cst_15 [0] : vector<256x192xf32> to vector<192xf32>
    %30 = vector.shape_cast %29 : vector<192xf32> to vector<1x192xf32>
    %31 = arith.mulf %25, %25 : vector<256x192xf32>
    %cst_16 = arith.constant dense<0.000000e+00> : vector<192xf32>
    %32 = vector.multi_reduction <add>, %31, %cst_16 [0] : vector<256x192xf32> to vector<192xf32>
    %33 = vector.shape_cast %32 : vector<192xf32> to vector<1x192xf32>
    %34 = tpu.concatenate %30, %33 in 0 : vector<1x192xf32>, vector<1x192xf32> -> vector<2x192xf32>
    %35 = vector.shape_cast %34 : vector<2x192xf32> to vector<1x2x192xf32>
    %c0_17 = arith.constant 0 : index
    %c0_18 = arith.constant 0 : index
    %c0_19 = arith.constant 0 : index
    %36 = vector.load %arg6[%c0_17, %c0_18, %c0_19] : memref<1x2x192xf32, #tpu.memory_space<vmem>>, vector<1x2x192xf32>
    tpu.vector_store %arg6[%c0_17, %c0_18, %c0_19], %35 {strides = array<i32>} : memref<1x2x192xf32, #tpu.memory_space<vmem>>, vector<1x2x192xf32>,
    return
  }
  func.func @transform_0(%arg0: i32) -> (i32, i32, i32, i32) {
    %c0_i32 = arith.constant 0 : i32
    %c0_i32_0 = arith.constant 0 : i32
    %c0_i32_1 = arith.constant 0 : i32
    %c0_i32_2 = arith.constant 0 : i32
    return %arg0, %c0_i32, %c0_i32_0, %c0_i32_1 : i32, i32, i32, i32
  }
  func.func @transform_1(%arg0: i32) -> (i32, i32) {
    %c0_i32 = arith.constant 0 : i32
    %c0_i32_0 = arith.constant 0 : i32
    %c0_i32_1 = arith.constant 0 : i32
    return %c0_i32, %c0_i32_0 : i32, i32
  }
  func.func @transform_2(%arg0: i32) -> (i32, i32) {
    %c0_i32 = arith.constant 0 : i32
    %c0_i32_0 = arith.constant 0 : i32
    %c0_i32_1 = arith.constant 0 : i32
    return %c0_i32, %c0_i32_0 : i32, i32
  }
  func.func @transform_3(%arg0: i32) -> (i32, i32) {
    %c0_i32 = arith.constant 0 : i32
    %c0_i32_0 = arith.constant 0 : i32
    %c0_i32_1 = arith.constant 0 : i32
    return %c0_i32, %c0_i32_0 : i32, i32
  }
  func.func @transform_4(%arg0: i32) -> (i32, i32, i32, i32) {
    %c0_i32 = arith.constant 0 : i32
    %c0_i32_0 = arith.constant 0 : i32
    %c0_i32_1 = arith.constant 0 : i32
    %c0_i32_2 = arith.constant 0 : i32
    return %arg0, %c0_i32, %c0_i32_0, %c0_i32_1 : i32, i32, i32, i32
  }
  func.func @transform_5(%arg0: i32) -> (i32, i32, i32) {
    %c0_i32 = arith.constant 0 : i32
    %c0_i32_0 = arith.constant 0 : i32
    %c0_i32_1 = arith.constant 0 : i32
    return %arg0, %c0_i32, %c0_i32_0 : i32, i32, i32
  }
}

module attributes {stable_mosaic.version = 11 : i64} {
  func.func @conv_bn_kernel(%arg0: i32, %arg1: memref<16x16x8xbf16, #tpu.memory_space<vmem>>, %arg2: memref<56x8xbf16, #tpu.memory_space<vmem>>, %arg3: memref<1x8xf32, #tpu.memory_space<vmem>>, %arg4: memref<1x8xf32, #tpu.memory_space<vmem>>, %arg5: memref<16x16x8xbf16, #tpu.memory_space<vmem>>, %arg6: memref<1x2x8xf32, #tpu.memory_space<vmem>>) attributes {dimension_semantics = [#tpu.dimension_semantics<parallel>], iteration_bounds = array<i64: 2>, scalar_prefetch = 0 : i64, scratch_operands = 0 : i64, tpu.core_type = #tpu.core_type<tc>, window_params = [{transform_indices = @transform_0, window_bounds = array<i64: 16, 16, 8>}, {pipeline_mode = #tpu.pipeline_mode<synchronous>, transform_indices = @transform_1, window_bounds = array<i64: 56, 8>}, {pipeline_mode = #tpu.pipeline_mode<synchronous>, transform_indices = @transform_2, window_bounds = array<i64: 1, 8>}, {pipeline_mode = #tpu.pipeline_mode<synchronous>, transform_indices = @transform_3, window_bounds = array<i64: 1, 8>}, {transform_indices = @transform_4, window_bounds = array<i64: 16, 16, 8>}, {transform_indices = @transform_5, window_bounds = array<i64: 1, 2, 8>}]} {
    %c0 = arith.constant 0 : index
    %c0_0 = arith.constant 0 : index
    %c0_1 = arith.constant 0 : index
    %0 = vector.load %arg1[%c0, %c0_0, %c0_1] : memref<16x16x8xbf16, #tpu.memory_space<vmem>>, vector<16x16x8xbf16>
    %1 = arith.extf %0 : vector<16x16x8xbf16> to vector<16x16x8xf32>
    %c0_2 = arith.constant 0 : index
    %c0_3 = arith.constant 0 : index
    %2 = vector.load %arg3[%c0_2, %c0_3] : memref<1x8xf32, #tpu.memory_space<vmem>>, vector<1x8xf32>
    %3 = vector.shape_cast %2 : vector<1x8xf32> to vector<1x1x8xf32>
    %4 = vector.broadcast %3 : vector<1x1x8xf32> to vector<16x16x8xf32>
    %5 = arith.mulf %1, %4 : vector<16x16x8xf32>
    %c0_4 = arith.constant 0 : index
    %c0_5 = arith.constant 0 : index
    %6 = vector.load %arg4[%c0_4, %c0_5] : memref<1x8xf32, #tpu.memory_space<vmem>>, vector<1x8xf32>
    %7 = vector.shape_cast %6 : vector<1x8xf32> to vector<1x1x8xf32>
    %8 = vector.broadcast %7 : vector<1x1x8xf32> to vector<16x16x8xf32>
    %9 = arith.addf %5, %8 : vector<16x16x8xf32>
    %cst = arith.constant 0.000000e+00 : f32
    %10 = vector.broadcast %cst : f32 to vector<16x16x8xf32>
    %11 = arith.maximumf %9, %10 : vector<16x16x8xf32>
    %12 = arith.truncf %11 : vector<16x16x8xf32> to vector<16x16x8xbf16>
    %cst_6 = arith.constant 0.000000e+00 : bf16
    %13 = vector.broadcast %cst_6 : bf16 to vector<16x3x8xbf16>
    %14 = tpu.concatenate %13, %12, %13 in 1 : vector<16x3x8xbf16>, vector<16x16x8xbf16>, vector<16x3x8xbf16> -> vector<16x22x8xbf16>
    %15 = vector.extract_strided_slice %14 {offsets = [0, 0, 0], sizes = [16, 16, 8], strides = [1, 1, 1]} : vector<16x22x8xbf16> to vector<16x16x8xbf16>
    %16 = vector.extract_strided_slice %14 {offsets = [0, 1, 0], sizes = [16, 16, 8], strides = [1, 1, 1]} : vector<16x22x8xbf16> to vector<16x16x8xbf16>
    %17 = vector.extract_strided_slice %14 {offsets = [0, 2, 0], sizes = [16, 16, 8], strides = [1, 1, 1]} : vector<16x22x8xbf16> to vector<16x16x8xbf16>
    %18 = vector.extract_strided_slice %14 {offsets = [0, 3, 0], sizes = [16, 16, 8], strides = [1, 1, 1]} : vector<16x22x8xbf16> to vector<16x16x8xbf16>
    %19 = vector.extract_strided_slice %14 {offsets = [0, 4, 0], sizes = [16, 16, 8], strides = [1, 1, 1]} : vector<16x22x8xbf16> to vector<16x16x8xbf16>
    %20 = vector.extract_strided_slice %14 {offsets = [0, 5, 0], sizes = [16, 16, 8], strides = [1, 1, 1]} : vector<16x22x8xbf16> to vector<16x16x8xbf16>
    %21 = vector.extract_strided_slice %14 {offsets = [0, 6, 0], sizes = [16, 16, 8], strides = [1, 1, 1]} : vector<16x22x8xbf16> to vector<16x16x8xbf16>
    %22 = tpu.concatenate %15, %16, %17, %18, %19, %20, %21 in 2 : vector<16x16x8xbf16>, vector<16x16x8xbf16>, vector<16x16x8xbf16>, vector<16x16x8xbf16>, vector<16x16x8xbf16>, vector<16x16x8xbf16>, vector<16x16x8xbf16> -> vector<16x16x56xbf16>
    %23 = vector.shape_cast %22 : vector<16x16x56xbf16> to vector<256x56xbf16>
    %c0_7 = arith.constant 0 : index
    %c0_8 = arith.constant 0 : index
    %24 = vector.load %arg2[%c0_7, %c0_8] : memref<56x8xbf16, #tpu.memory_space<vmem>>, vector<56x8xbf16>
    %cst_9 = arith.constant dense<0.000000e+00> : vector<256x8xf32>
    %25 = tpu.matmul %23, %24, %cst_9 {dimension_numbers = #tpu.dot_dimension_numbers<[1], [0], [0], [1], [0, 0, 1, 1], [], []>} : vector<256x56xbf16>, vector<56x8xbf16>, vector<256x8xf32> -> vector<256x8xf32>
    %26 = vector.shape_cast %25 : vector<256x8xf32> to vector<16x16x8xf32>
    %27 = arith.truncf %26 : vector<16x16x8xf32> to vector<16x16x8xbf16>
    %c0_10 = arith.constant 0 : index
    %c0_11 = arith.constant 0 : index
    %c0_12 = arith.constant 0 : index
    %28 = vector.load %arg5[%c0_10, %c0_11, %c0_12] : memref<16x16x8xbf16, #tpu.memory_space<vmem>>, vector<16x16x8xbf16>
    tpu.vector_store %arg5[%c0_10, %c0_11, %c0_12], %27 {strides = array<i32>} : memref<16x16x8xbf16, #tpu.memory_space<vmem>>, vector<16x16x8xbf16>,
    %cst_13 = arith.constant dense<0.000000e+00> : vector<8xf32>
    %29 = vector.multi_reduction <add>, %25, %cst_13 [0] : vector<256x8xf32> to vector<8xf32>
    %30 = vector.shape_cast %29 : vector<8xf32> to vector<1x8xf32>
    %31 = arith.mulf %25, %25 : vector<256x8xf32>
    %cst_14 = arith.constant dense<0.000000e+00> : vector<8xf32>
    %32 = vector.multi_reduction <add>, %31, %cst_14 [0] : vector<256x8xf32> to vector<8xf32>
    %33 = vector.shape_cast %32 : vector<8xf32> to vector<1x8xf32>
    %34 = tpu.concatenate %30, %33 in 0 : vector<1x8xf32>, vector<1x8xf32> -> vector<2x8xf32>
    %35 = vector.shape_cast %34 : vector<2x8xf32> to vector<1x2x8xf32>
    %c0_15 = arith.constant 0 : index
    %c0_16 = arith.constant 0 : index
    %c0_17 = arith.constant 0 : index
    %36 = vector.load %arg6[%c0_15, %c0_16, %c0_17] : memref<1x2x8xf32, #tpu.memory_space<vmem>>, vector<1x2x8xf32>
    tpu.vector_store %arg6[%c0_15, %c0_16, %c0_17], %35 {strides = array<i32>} : memref<1x2x8xf32, #tpu.memory_space<vmem>>, vector<1x2x8xf32>,
    return
  }
  func.func @transform_0(%arg0: i32) -> (i32, i32, i32) {
    %c0_i32 = arith.constant 0 : i32
    %c0_i32_0 = arith.constant 0 : i32
    %c0_i32_1 = arith.constant 0 : i32
    return %arg0, %c0_i32, %c0_i32_0 : i32, i32, i32
  }
  func.func @transform_1(%arg0: i32) -> (i32, i32) {
    %c0_i32 = arith.constant 0 : i32
    %c0_i32_0 = arith.constant 0 : i32
    %c0_i32_1 = arith.constant 0 : i32
    return %c0_i32, %c0_i32_0 : i32, i32
  }
  func.func @transform_2(%arg0: i32) -> (i32, i32) {
    %c0_i32 = arith.constant 0 : i32
    %c0_i32_0 = arith.constant 0 : i32
    %c0_i32_1 = arith.constant 0 : i32
    return %c0_i32, %c0_i32_0 : i32, i32
  }
  func.func @transform_3(%arg0: i32) -> (i32, i32) {
    %c0_i32 = arith.constant 0 : i32
    %c0_i32_0 = arith.constant 0 : i32
    %c0_i32_1 = arith.constant 0 : i32
    return %c0_i32, %c0_i32_0 : i32, i32
  }
  func.func @transform_4(%arg0: i32) -> (i32, i32, i32) {
    %c0_i32 = arith.constant 0 : i32
    %c0_i32_0 = arith.constant 0 : i32
    %c0_i32_1 = arith.constant 0 : i32
    return %arg0, %c0_i32, %c0_i32_0 : i32, i32, i32
  }
  func.func @transform_5(%arg0: i32) -> (i32, i32, i32) {
    %c0_i32 = arith.constant 0 : i32
    %c0_i32_0 = arith.constant 0 : i32
    %c0_i32_1 = arith.constant 0 : i32
    return %arg0, %c0_i32, %c0_i32_0 : i32, i32, i32
  }
}

module attributes {stable_mosaic.version = 11 : i64} {
  func.func @conv_bn_kernel(%arg0: i32, %arg1: memref<1x16x16x8xbf16, #tpu.memory_space<vmem>>, %arg2: memref<56x8xbf16, #tpu.memory_space<vmem>>, %arg3: memref<1x8xf32, #tpu.memory_space<vmem>>, %arg4: memref<1x8xf32, #tpu.memory_space<vmem>>, %arg5: memref<1x16x16x8xbf16, #tpu.memory_space<vmem>>, %arg6: memref<1x2x8xf32, #tpu.memory_space<vmem>>) attributes {dimension_semantics = [#tpu.dimension_semantics<parallel>], iteration_bounds = array<i64: 2>, scalar_prefetch = 0 : i64, scratch_operands = 0 : i64, tpu.core_type = #tpu.core_type<tc>, window_params = [{transform_indices = @transform_0, window_bounds = array<i64: 1, 16, 16, 8>}, {pipeline_mode = #tpu.pipeline_mode<synchronous>, transform_indices = @transform_1, window_bounds = array<i64: 56, 8>}, {pipeline_mode = #tpu.pipeline_mode<synchronous>, transform_indices = @transform_2, window_bounds = array<i64: 1, 8>}, {pipeline_mode = #tpu.pipeline_mode<synchronous>, transform_indices = @transform_3, window_bounds = array<i64: 1, 8>}, {transform_indices = @transform_4, window_bounds = array<i64: 1, 16, 16, 8>}, {transform_indices = @transform_5, window_bounds = array<i64: 1, 2, 8>}]} {
    %c0 = arith.constant 0 : index
    %c0_0 = arith.constant 0 : index
    %c0_1 = arith.constant 0 : index
    %c0_2 = arith.constant 0 : index
    %0 = vector.load %arg1[%c0, %c0_0, %c0_1, %c0_2] : memref<1x16x16x8xbf16, #tpu.memory_space<vmem>>, vector<1x16x16x8xbf16>
    %1 = arith.extf %0 : vector<1x16x16x8xbf16> to vector<1x16x16x8xf32>
    %c0_3 = arith.constant 0 : index
    %c0_4 = arith.constant 0 : index
    %2 = vector.load %arg3[%c0_3, %c0_4] : memref<1x8xf32, #tpu.memory_space<vmem>>, vector<1x8xf32>
    %3 = vector.shape_cast %2 : vector<1x8xf32> to vector<1x1x1x8xf32>
    %4 = vector.broadcast %3 : vector<1x1x1x8xf32> to vector<1x16x16x8xf32>
    %5 = arith.mulf %1, %4 : vector<1x16x16x8xf32>
    %c0_5 = arith.constant 0 : index
    %c0_6 = arith.constant 0 : index
    %6 = vector.load %arg4[%c0_5, %c0_6] : memref<1x8xf32, #tpu.memory_space<vmem>>, vector<1x8xf32>
    %7 = vector.shape_cast %6 : vector<1x8xf32> to vector<1x1x1x8xf32>
    %8 = vector.broadcast %7 : vector<1x1x1x8xf32> to vector<1x16x16x8xf32>
    %9 = arith.addf %5, %8 : vector<1x16x16x8xf32>
    %cst = arith.constant 0.000000e+00 : f32
    %10 = vector.broadcast %cst : f32 to vector<1x16x16x8xf32>
    %11 = arith.maximumf %9, %10 : vector<1x16x16x8xf32>
    %12 = arith.truncf %11 : vector<1x16x16x8xf32> to vector<1x16x16x8xbf16>
    %cst_7 = arith.constant 0.000000e+00 : bf16
    %13 = vector.broadcast %cst_7 : bf16 to vector<1x3x16x8xbf16>
    %14 = tpu.concatenate %13, %12, %13 in 1 : vector<1x3x16x8xbf16>, vector<1x16x16x8xbf16>, vector<1x3x16x8xbf16> -> vector<1x22x16x8xbf16>
    %15 = vector.extract_strided_slice %14 {offsets = [0, 0, 0, 0], sizes = [1, 16, 16, 8], strides = [1, 1, 1, 1]} : vector<1x22x16x8xbf16> to vector<1x16x16x8xbf16>
    %16 = vector.extract_strided_slice %14 {offsets = [0, 1, 0, 0], sizes = [1, 16, 16, 8], strides = [1, 1, 1, 1]} : vector<1x22x16x8xbf16> to vector<1x16x16x8xbf16>
    %17 = vector.extract_strided_slice %14 {offsets = [0, 2, 0, 0], sizes = [1, 16, 16, 8], strides = [1, 1, 1, 1]} : vector<1x22x16x8xbf16> to vector<1x16x16x8xbf16>
    %18 = vector.extract_strided_slice %14 {offsets = [0, 3, 0, 0], sizes = [1, 16, 16, 8], strides = [1, 1, 1, 1]} : vector<1x22x16x8xbf16> to vector<1x16x16x8xbf16>
    %19 = vector.extract_strided_slice %14 {offsets = [0, 4, 0, 0], sizes = [1, 16, 16, 8], strides = [1, 1, 1, 1]} : vector<1x22x16x8xbf16> to vector<1x16x16x8xbf16>
    %20 = vector.extract_strided_slice %14 {offsets = [0, 5, 0, 0], sizes = [1, 16, 16, 8], strides = [1, 1, 1, 1]} : vector<1x22x16x8xbf16> to vector<1x16x16x8xbf16>
    %21 = vector.extract_strided_slice %14 {offsets = [0, 6, 0, 0], sizes = [1, 16, 16, 8], strides = [1, 1, 1, 1]} : vector<1x22x16x8xbf16> to vector<1x16x16x8xbf16>
    %22 = tpu.concatenate %15, %16, %17, %18, %19, %20, %21 in 3 : vector<1x16x16x8xbf16>, vector<1x16x16x8xbf16>, vector<1x16x16x8xbf16>, vector<1x16x16x8xbf16>, vector<1x16x16x8xbf16>, vector<1x16x16x8xbf16>, vector<1x16x16x8xbf16> -> vector<1x16x16x56xbf16>
    %23 = vector.shape_cast %22 : vector<1x16x16x56xbf16> to vector<256x56xbf16>
    %c0_8 = arith.constant 0 : index
    %c0_9 = arith.constant 0 : index
    %24 = vector.load %arg2[%c0_8, %c0_9] : memref<56x8xbf16, #tpu.memory_space<vmem>>, vector<56x8xbf16>
    %cst_10 = arith.constant dense<0.000000e+00> : vector<256x8xf32>
    %25 = tpu.matmul %23, %24, %cst_10 {dimension_numbers = #tpu.dot_dimension_numbers<[1], [0], [0], [1], [0, 0, 1, 1], [], []>} : vector<256x56xbf16>, vector<56x8xbf16>, vector<256x8xf32> -> vector<256x8xf32>
    %26 = vector.shape_cast %25 : vector<256x8xf32> to vector<1x16x16x8xf32>
    %27 = arith.truncf %26 : vector<1x16x16x8xf32> to vector<1x16x16x8xbf16>
    %c0_11 = arith.constant 0 : index
    %c0_12 = arith.constant 0 : index
    %c0_13 = arith.constant 0 : index
    %c0_14 = arith.constant 0 : index
    %28 = vector.load %arg5[%c0_11, %c0_12, %c0_13, %c0_14] : memref<1x16x16x8xbf16, #tpu.memory_space<vmem>>, vector<1x16x16x8xbf16>
    tpu.vector_store %arg5[%c0_11, %c0_12, %c0_13, %c0_14], %27 {strides = array<i32>} : memref<1x16x16x8xbf16, #tpu.memory_space<vmem>>, vector<1x16x16x8xbf16>,
    %cst_15 = arith.constant dense<0.000000e+00> : vector<8xf32>
    %29 = vector.multi_reduction <add>, %25, %cst_15 [0] : vector<256x8xf32> to vector<8xf32>
    %30 = vector.shape_cast %29 : vector<8xf32> to vector<1x8xf32>
    %31 = arith.mulf %25, %25 : vector<256x8xf32>
    %cst_16 = arith.constant dense<0.000000e+00> : vector<8xf32>
    %32 = vector.multi_reduction <add>, %31, %cst_16 [0] : vector<256x8xf32> to vector<8xf32>
    %33 = vector.shape_cast %32 : vector<8xf32> to vector<1x8xf32>
    %34 = tpu.concatenate %30, %33 in 0 : vector<1x8xf32>, vector<1x8xf32> -> vector<2x8xf32>
    %35 = vector.shape_cast %34 : vector<2x8xf32> to vector<1x2x8xf32>
    %c0_17 = arith.constant 0 : index
    %c0_18 = arith.constant 0 : index
    %c0_19 = arith.constant 0 : index
    %36 = vector.load %arg6[%c0_17, %c0_18, %c0_19] : memref<1x2x8xf32, #tpu.memory_space<vmem>>, vector<1x2x8xf32>
    tpu.vector_store %arg6[%c0_17, %c0_18, %c0_19], %35 {strides = array<i32>} : memref<1x2x8xf32, #tpu.memory_space<vmem>>, vector<1x2x8xf32>,
    return
  }
  func.func @transform_0(%arg0: i32) -> (i32, i32, i32, i32) {
    %c0_i32 = arith.constant 0 : i32
    %c0_i32_0 = arith.constant 0 : i32
    %c0_i32_1 = arith.constant 0 : i32
    %c0_i32_2 = arith.constant 0 : i32
    return %arg0, %c0_i32, %c0_i32_0, %c0_i32_1 : i32, i32, i32, i32
  }
  func.func @transform_1(%arg0: i32) -> (i32, i32) {
    %c0_i32 = arith.constant 0 : i32
    %c0_i32_0 = arith.constant 0 : i32
    %c0_i32_1 = arith.constant 0 : i32
    return %c0_i32, %c0_i32_0 : i32, i32
  }
  func.func @transform_2(%arg0: i32) -> (i32, i32) {
    %c0_i32 = arith.constant 0 : i32
    %c0_i32_0 = arith.constant 0 : i32
    %c0_i32_1 = arith.constant 0 : i32
    return %c0_i32, %c0_i32_0 : i32, i32
  }
  func.func @transform_3(%arg0: i32) -> (i32, i32) {
    %c0_i32 = arith.constant 0 : i32
    %c0_i32_0 = arith.constant 0 : i32
    %c0_i32_1 = arith.constant 0 : i32
    return %c0_i32, %c0_i32_0 : i32, i32
  }
  func.func @transform_4(%arg0: i32) -> (i32, i32, i32, i32) {
    %c0_i32 = arith.constant 0 : i32
    %c0_i32_0 = arith.constant 0 : i32
    %c0_i32_1 = arith.constant 0 : i32
    %c0_i32_2 = arith.constant 0 : i32
    return %arg0, %c0_i32, %c0_i32_0, %c0_i32_1 : i32, i32, i32, i32
  }
  func.func @transform_5(%arg0: i32) -> (i32, i32, i32) {
    %c0_i32 = arith.constant 0 : i32
    %c0_i32_0 = arith.constant 0 : i32
    %c0_i32_1 = arith.constant 0 : i32
    return %arg0, %c0_i32, %c0_i32_0 : i32, i32, i32
  }
}

module attributes {stable_mosaic.version = 11 : i64} {
  func.func @conv_bn_kernel(%arg0: i32, %arg1: memref<16x16x4xbf16, #tpu.memory_space<vmem>>, %arg2: memref<4x192xbf16, #tpu.memory_space<vmem>>, %arg3: memref<16x16x192xbf16, #tpu.memory_space<vmem>>, %arg4: memref<1x2x192xf32, #tpu.memory_space<vmem>>) attributes {dimension_semantics = [#tpu.dimension_semantics<parallel>], iteration_bounds = array<i64: 2>, scalar_prefetch = 0 : i64, scratch_operands = 0 : i64, tpu.core_type = #tpu.core_type<tc>, window_params = [{transform_indices = @transform_0, window_bounds = array<i64: 16, 16, 4>}, {pipeline_mode = #tpu.pipeline_mode<synchronous>, transform_indices = @transform_1, window_bounds = array<i64: 4, 192>}, {transform_indices = @transform_2, window_bounds = array<i64: 16, 16, 192>}, {transform_indices = @transform_3, window_bounds = array<i64: 1, 2, 192>}]} {
    %c0 = arith.constant 0 : index
    %c0_0 = arith.constant 0 : index
    %c0_1 = arith.constant 0 : index
    %0 = vector.load %arg1[%c0, %c0_0, %c0_1] : memref<16x16x4xbf16, #tpu.memory_space<vmem>>, vector<16x16x4xbf16>
    %1 = vector.shape_cast %0 : vector<16x16x4xbf16> to vector<256x4xbf16>
    %c0_2 = arith.constant 0 : index
    %c0_3 = arith.constant 0 : index
    %2 = vector.load %arg2[%c0_2, %c0_3] : memref<4x192xbf16, #tpu.memory_space<vmem>>, vector<4x192xbf16>
    %cst = arith.constant dense<0.000000e+00> : vector<256x192xf32>
    %3 = tpu.matmul %1, %2, %cst {dimension_numbers = #tpu.dot_dimension_numbers<[1], [0], [0], [1], [0, 0, 1, 1], [], []>} : vector<256x4xbf16>, vector<4x192xbf16>, vector<256x192xf32> -> vector<256x192xf32>
    %4 = vector.shape_cast %3 : vector<256x192xf32> to vector<16x16x192xf32>
    %5 = arith.truncf %4 : vector<16x16x192xf32> to vector<16x16x192xbf16>
    %c0_4 = arith.constant 0 : index
    %c0_5 = arith.constant 0 : index
    %c0_6 = arith.constant 0 : index
    %6 = vector.load %arg3[%c0_4, %c0_5, %c0_6] : memref<16x16x192xbf16, #tpu.memory_space<vmem>>, vector<16x16x192xbf16>
    tpu.vector_store %arg3[%c0_4, %c0_5, %c0_6], %5 {strides = array<i32>} : memref<16x16x192xbf16, #tpu.memory_space<vmem>>, vector<16x16x192xbf16>,
    %cst_7 = arith.constant dense<0.000000e+00> : vector<192xf32>
    %7 = vector.multi_reduction <add>, %3, %cst_7 [0] : vector<256x192xf32> to vector<192xf32>
    %8 = vector.shape_cast %7 : vector<192xf32> to vector<1x192xf32>
    %9 = arith.mulf %3, %3 : vector<256x192xf32>
    %cst_8 = arith.constant dense<0.000000e+00> : vector<192xf32>
    %10 = vector.multi_reduction <add>, %9, %cst_8 [0] : vector<256x192xf32> to vector<192xf32>
    %11 = vector.shape_cast %10 : vector<192xf32> to vector<1x192xf32>
    %12 = tpu.concatenate %8, %11 in 0 : vector<1x192xf32>, vector<1x192xf32> -> vector<2x192xf32>
    %13 = vector.shape_cast %12 : vector<2x192xf32> to vector<1x2x192xf32>
    %c0_9 = arith.constant 0 : index
    %c0_10 = arith.constant 0 : index
    %c0_11 = arith.constant 0 : index
    %14 = vector.load %arg4[%c0_9, %c0_10, %c0_11] : memref<1x2x192xf32, #tpu.memory_space<vmem>>, vector<1x2x192xf32>
    tpu.vector_store %arg4[%c0_9, %c0_10, %c0_11], %13 {strides = array<i32>} : memref<1x2x192xf32, #tpu.memory_space<vmem>>, vector<1x2x192xf32>,
    return
  }
  func.func @transform_0(%arg0: i32) -> (i32, i32, i32) {
    %c0_i32 = arith.constant 0 : i32
    %c0_i32_0 = arith.constant 0 : i32
    %c0_i32_1 = arith.constant 0 : i32
    return %arg0, %c0_i32, %c0_i32_0 : i32, i32, i32
  }
  func.func @transform_1(%arg0: i32) -> (i32, i32) {
    %c0_i32 = arith.constant 0 : i32
    %c0_i32_0 = arith.constant 0 : i32
    %c0_i32_1 = arith.constant 0 : i32
    return %c0_i32, %c0_i32_0 : i32, i32
  }
  func.func @transform_2(%arg0: i32) -> (i32, i32, i32) {
    %c0_i32 = arith.constant 0 : i32
    %c0_i32_0 = arith.constant 0 : i32
    %c0_i32_1 = arith.constant 0 : i32
    return %arg0, %c0_i32, %c0_i32_0 : i32, i32, i32
  }
  func.func @transform_3(%arg0: i32) -> (i32, i32, i32) {
    %c0_i32 = arith.constant 0 : i32
    %c0_i32_0 = arith.constant 0 : i32
    %c0_i32_1 = arith.constant 0 : i32
    return %arg0, %c0_i32, %c0_i32_0 : i32, i32, i32
  }
}

module attributes {stable_mosaic.version = 11 : i64} {
  func.func @maxpool3x3_kernel(%arg0: i32, %arg1: memref<1x18x18x4xbf16, #tpu.memory_space<vmem>>, %arg2: memref<1x16x16x4xbf16, #tpu.memory_space<vmem>>) attributes {dimension_semantics = [#tpu.dimension_semantics<parallel>], iteration_bounds = array<i64: 2>, scalar_prefetch = 0 : i64, scratch_operands = 0 : i64, tpu.core_type = #tpu.core_type<tc>, window_params = [{transform_indices = @transform_0, window_bounds = array<i64: 1, 18, 18, 4>}, {transform_indices = @transform_1, window_bounds = array<i64: 1, 16, 16, 4>}]} {
    %c0 = arith.constant 0 : index
    %c0_0 = arith.constant 0 : index
    %c0_1 = arith.constant 0 : index
    %c0_2 = arith.constant 0 : index
    %0 = vector.load %arg1[%c0, %c0_0, %c0_1, %c0_2] : memref<1x18x18x4xbf16, #tpu.memory_space<vmem>>, vector<1x18x18x4xbf16>
    %1 = vector.extract_strided_slice %0 {offsets = [0, 0, 0, 0], sizes = [1, 16, 16, 4], strides = [1, 1, 1, 1]} : vector<1x18x18x4xbf16> to vector<1x16x16x4xbf16>
    %2 = vector.extract_strided_slice %0 {offsets = [0, 0, 1, 0], sizes = [1, 16, 16, 4], strides = [1, 1, 1, 1]} : vector<1x18x18x4xbf16> to vector<1x16x16x4xbf16>
    %3 = arith.maximumf %1, %2 : vector<1x16x16x4xbf16>
    %4 = vector.extract_strided_slice %0 {offsets = [0, 0, 2, 0], sizes = [1, 16, 16, 4], strides = [1, 1, 1, 1]} : vector<1x18x18x4xbf16> to vector<1x16x16x4xbf16>
    %5 = arith.maximumf %3, %4 : vector<1x16x16x4xbf16>
    %6 = vector.extract_strided_slice %0 {offsets = [0, 1, 0, 0], sizes = [1, 16, 16, 4], strides = [1, 1, 1, 1]} : vector<1x18x18x4xbf16> to vector<1x16x16x4xbf16>
    %7 = arith.maximumf %5, %6 : vector<1x16x16x4xbf16>
    %8 = vector.extract_strided_slice %0 {offsets = [0, 1, 1, 0], sizes = [1, 16, 16, 4], strides = [1, 1, 1, 1]} : vector<1x18x18x4xbf16> to vector<1x16x16x4xbf16>
    %9 = arith.maximumf %7, %8 : vector<1x16x16x4xbf16>
    %10 = vector.extract_strided_slice %0 {offsets = [0, 1, 2, 0], sizes = [1, 16, 16, 4], strides = [1, 1, 1, 1]} : vector<1x18x18x4xbf16> to vector<1x16x16x4xbf16>
    %11 = arith.maximumf %9, %10 : vector<1x16x16x4xbf16>
    %12 = vector.extract_strided_slice %0 {offsets = [0, 2, 0, 0], sizes = [1, 16, 16, 4], strides = [1, 1, 1, 1]} : vector<1x18x18x4xbf16> to vector<1x16x16x4xbf16>
    %13 = arith.maximumf %11, %12 : vector<1x16x16x4xbf16>
    %14 = vector.extract_strided_slice %0 {offsets = [0, 2, 1, 0], sizes = [1, 16, 16, 4], strides = [1, 1, 1, 1]} : vector<1x18x18x4xbf16> to vector<1x16x16x4xbf16>
    %15 = arith.maximumf %13, %14 : vector<1x16x16x4xbf16>
    %16 = vector.extract_strided_slice %0 {offsets = [0, 2, 2, 0], sizes = [1, 16, 16, 4], strides = [1, 1, 1, 1]} : vector<1x18x18x4xbf16> to vector<1x16x16x4xbf16>
    %17 = arith.maximumf %15, %16 : vector<1x16x16x4xbf16>
    %c0_3 = arith.constant 0 : index
    %c0_4 = arith.constant 0 : index
    %c0_5 = arith.constant 0 : index
    %c0_6 = arith.constant 0 : index
    %18 = vector.load %arg2[%c0_3, %c0_4, %c0_5, %c0_6] : memref<1x16x16x4xbf16, #tpu.memory_space<vmem>>, vector<1x16x16x4xbf16>
    tpu.vector_store %arg2[%c0_3, %c0_4, %c0_5, %c0_6], %17 {strides = array<i32>} : memref<1x16x16x4xbf16, #tpu.memory_space<vmem>>, vector<1x16x16x4xbf16>,
    return
  }
  func.func @transform_0(%arg0: i32) -> (i32, i32, i32, i32) {
    %c0_i32 = arith.constant 0 : i32
    %c0_i32_0 = arith.constant 0 : i32
    %c0_i32_1 = arith.constant 0 : i32
    %c0_i32_2 = arith.constant 0 : i32
    return %arg0, %c0_i32, %c0_i32_0, %c0_i32_1 : i32, i32, i32, i32
  }
  func.func @transform_1(%arg0: i32) -> (i32, i32, i32, i32) {
    %c0_i32 = arith.constant 0 : i32
    %c0_i32_0 = arith.constant 0 : i32
    %c0_i32_1 = arith.constant 0 : i32
    %c0_i32_2 = arith.constant 0 : i32
    return %arg0, %c0_i32, %c0_i32_0, %c0_i32_1 : i32, i32, i32, i32
  }
}

module attributes {stable_mosaic.version = 11 : i64} {
  func.func @bn_relu_kernel(%arg0: i32, %arg1: memref<256x192xbf16, #tpu.memory_space<vmem>>, %arg2: memref<1x192xf32, #tpu.memory_space<vmem>>, %arg3: memref<1x192xf32, #tpu.memory_space<vmem>>, %arg4: memref<256x192xf32, #tpu.memory_space<vmem>>) attributes {dimension_semantics = [#tpu.dimension_semantics<parallel>], iteration_bounds = array<i64: 2>, scalar_prefetch = 0 : i64, scratch_operands = 0 : i64, tpu.core_type = #tpu.core_type<tc>, window_params = [{transform_indices = @transform_0, window_bounds = array<i64: 256, 192>}, {pipeline_mode = #tpu.pipeline_mode<synchronous>, transform_indices = @transform_1, window_bounds = array<i64: 1, 192>}, {pipeline_mode = #tpu.pipeline_mode<synchronous>, transform_indices = @transform_2, window_bounds = array<i64: 1, 192>}, {transform_indices = @transform_3, window_bounds = array<i64: 256, 192>}]} {
    %c0 = arith.constant 0 : index
    %c0_0 = arith.constant 0 : index
    %0 = vector.load %arg1[%c0, %c0_0] : memref<256x192xbf16, #tpu.memory_space<vmem>>, vector<256x192xbf16>
    %1 = arith.extf %0 : vector<256x192xbf16> to vector<256x192xf32>
    %c0_1 = arith.constant 0 : index
    %c0_2 = arith.constant 0 : index
    %2 = vector.load %arg2[%c0_1, %c0_2] : memref<1x192xf32, #tpu.memory_space<vmem>>, vector<1x192xf32>
    %3 = vector.broadcast %2 : vector<1x192xf32> to vector<256x192xf32>
    %4 = arith.mulf %1, %3 : vector<256x192xf32>
    %c0_3 = arith.constant 0 : index
    %c0_4 = arith.constant 0 : index
    %5 = vector.load %arg3[%c0_3, %c0_4] : memref<1x192xf32, #tpu.memory_space<vmem>>, vector<1x192xf32>
    %6 = vector.broadcast %5 : vector<1x192xf32> to vector<256x192xf32>
    %7 = arith.addf %4, %6 : vector<256x192xf32>
    %cst = arith.constant 0.000000e+00 : f32
    %8 = vector.broadcast %cst : f32 to vector<256x192xf32>
    %9 = arith.maximumf %7, %8 : vector<256x192xf32>
    %c0_5 = arith.constant 0 : index
    %c0_6 = arith.constant 0 : index
    %10 = vector.load %arg4[%c0_5, %c0_6] : memref<256x192xf32, #tpu.memory_space<vmem>>, vector<256x192xf32>
    tpu.vector_store %arg4[%c0_5, %c0_6], %9 {strides = array<i32>} : memref<256x192xf32, #tpu.memory_space<vmem>>, vector<256x192xf32>,
    return
  }
  func.func @transform_0(%arg0: i32) -> (i32, i32) {
    %c0_i32 = arith.constant 0 : i32
    %c0_i32_0 = arith.constant 0 : i32
    return %arg0, %c0_i32 : i32, i32
  }
  func.func @transform_1(%arg0: i32) -> (i32, i32) {
    %c0_i32 = arith.constant 0 : i32
    %c0_i32_0 = arith.constant 0 : i32
    %c0_i32_1 = arith.constant 0 : i32
    return %c0_i32, %c0_i32_0 : i32, i32
  }
  func.func @transform_2(%arg0: i32) -> (i32, i32) {
    %c0_i32 = arith.constant 0 : i32
    %c0_i32_0 = arith.constant 0 : i32
    %c0_i32_1 = arith.constant 0 : i32
    return %c0_i32, %c0_i32_0 : i32, i32
  }
  func.func @transform_3(%arg0: i32) -> (i32, i32) {
    %c0_i32 = arith.constant 0 : i32
    %c0_i32_0 = arith.constant 0 : i32
    return %arg0, %c0_i32 : i32, i32
  }
}

</mosaic_0001>

<llo_original>
// kernel: inception_f6_forward.21
$region0: #{inception_f6_forward.21}
  #allocation0 [shape = 'u32[]', space=smem, size = 0x4, offset = 0x4, fixed_abs, tag = 'smem constant byte address 0x4 - core index']
  #allocation1 [shape = 'u32[144,128]{1,0:T(1,128)}', space=vmem, size = 0x12000, scoped, tag = 'internal scratch']
  %s0 = inlined_call_operand.vmem [shape: bf16[32,16,4], index: 0, kind: input, shape index: {}]
  %s1 = inlined_call_operand.vmem [shape: bf16[4,8], index: 1, kind: input, shape index: {}]
  %s2 = inlined_call_operand.vmem [shape: bf16[32,16,8], index: 2, kind: output, shape index: {0}]
  %s3 = inlined_call_operand.vmem [shape: f32[2,2,8], index: 3, kind: output, shape index: {1}]
  %4 = xla_tuple %s2, %s3
  %s5 = sld [smem:[#allocation0]]
  $region49: #{inception_f6_forward.21} parent=0
    _
  %s7 = ssub.s32 1, %s5
  %s8 = scalar_select 0, %s7, %s5
  loop: start=0, step=1, limit=4
  $region2: #{inception_f6_forward.21} parent=0 // loop_pre_header
    _
  $region3: #{inception_f6_forward.21} parent=0 // loop_header
    %s10 = sphi 0, %s14
    %p11 = scmp.ge.s32.totalorder %s10, 4
    %s20 = sphi 0, %s22
    %s23 = sphi 0, %s20
    %s24 = sphi 0, %s23
    %s40 = sphi 0, %s24
    %s44 = sphi 0, %s44
    %s46 = sphi 0, %s44
    %s47 = sphi 0, %s46
    %s61 = sphi 0, %s47
    %s67 = sphi 0, %s69
    %s70 = sphi 0, %s67
    %s71 = sphi 0, %s70
    %s87 = sphi 0, %s71
    %s93 = sphi 0, %s95
    %s96 = sphi 0, %s93
    %s97 = sphi 0, %s96
    %s113 = sphi 0, %s97
  $region4: #{inception_f6_forward.21} parent=0 // loop_header_branch
    %13 = sbr.rel (%p11) target = $region8
  $region5: #{inception_f6_forward.21} parent=0 // loop_body
    %s15 = ssub.s32 %s10, 1
    %s16 = ssub.s32 %s10, 2
    %s17 = sadd.s32 %s10, 1
    %s18 = ssub.s32 %s10, %s17
    %p19 = scmp.eq.s32.totalorder %s18, 0
    %s21 = sadd.s32 %s20, 1
    %s22 = scalar_select %p19, %s20, %s21
    %p25 = pneg %p19
    %p26 = scmp.eq.s32.totalorder %s10, 1
    %p27 = por %p25, %p26
    %p28 = scmp.ne.s32.totalorder %s20, %s23
    %p29 = scmp.eq.s32.totalorder %s10, 0
    %p30 = por %p28, %p29
    %p31 = scmp.ne.s32.totalorder %s20, %s23
    %p32 = scmp.eq.s32.totalorder %s15, 1
    %p33 = por %p31, %p32
    %p34 = scmp.ne.s32.totalorder %s23, %s24
    %p35 = scmp.eq.s32.totalorder %s15, 0
    %p36 = por %p34, %p35
    %p37 = scmp.ne.s32.totalorder %s23, %s24
    %p38 = scmp.eq.s32.totalorder %s16, 1
    %p39 = por %p37, %p38
    %p41 = scmp.ne.s32.totalorder %s24, %s40
    %p42 = scmp.eq.s32.totalorder %s16, 0
    %p43 = por %p41, %p42
    %s45 = sadd.s32 %s44, 1
    %p48 = scmp.eq.s32.totalorder %s10, 1
    %p49 = scmp.ne.s32.totalorder %s44, %s46
    %p50 = scmp.eq.s32.totalorder %s10, 0
    %p51 = por %p49, %p50
    %p52 = scmp.ne.s32.totalorder %s44, %s46
    %p53 = scmp.eq.s32.totalorder %s15, 1
    %p54 = por %p52, %p53
    %p55 = scmp.ne.s32.totalorder %s46, %s47
    %p56 = scmp.eq.s32.totalorder %s15, 0
    %p57 = por %p55, %p56
    %p58 = scmp.ne.s32.totalorder %s46, %s47
    %p59 = scmp.eq.s32.totalorder %s16, 1
    %p60 = por %p58, %p59
    %p62 = scmp.ne.s32.totalorder %s47, %s61
    %p63 = scmp.eq.s32.totalorder %s16, 0
    %p64 = por %p62, %p63
    %s65 = ssub.s32 %s10, %s17
    %p66 = scmp.eq.s32.totalorder %s65, 0
    %s68 = sadd.s32 %s67, 1
    %s69 = scalar_select %p66, %s67, %s68
    %p72 = pneg %p66
    %p73 = scmp.eq.s32.totalorder %s10, 1
    %p74 = por %p72, %p73
    %p75 = scmp.ne.s32.totalorder %s67, %s70
    %p76 = scmp.eq.s32.totalorder %s10, 0
    %p77 = por %p75, %p76
    %p78 = scmp.ne.s32.totalorder %s67, %s70
    %p79 = scmp.eq.s32.totalorder %s15, 1
    %p80 = por %p78, %p79
    %p81 = scmp.ne.s32.totalorder %s70, %s71
    %p82 = scmp.eq.s32.totalorder %s15, 0
    %p83 = por %p81, %p82
    %p84 = scmp.ne.s32.totalorder %s70, %s71
    %p85 = scmp.eq.s32.totalorder %s16, 1
    %p86 = por %p84, %p85
    %p88 = scmp.ne.s32.totalorder %s71, %s87
    %p89 = scmp.eq.s32.totalorder %s16, 0
    %p90 = por %p88, %p89
    %s91 = ssub.s32 %s10, %s17
    %p92 = scmp.eq.s32.totalorder %s91, 0
    %s94 = sadd.s32 %s93, 1
    %s95 = scalar_select %p92, %s93, %s94
    %p98 = pneg %p92
    %p99 = scmp.eq.s32.totalorder %s10, 1
    %p100 = por %p98, %p99
    %p101 = scmp.ne.s32.totalorder %s93, %s96
    %p102 = scmp.eq.s32.totalorder %s10, 0
    %p103 = por %p101, %p102
    %p104 = scmp.ne.s32.totalorder %s93, %s96
    %p105 = scmp.eq.s32.totalorder %s15, 1
    %p106 = por %p104, %p105
    %p107 = scmp.ne.s32.totalorder %s96, %s97
    %p108 = scmp.eq.s32.totalorder %s15, 0
    %p109 = por %p107, %p108
    %p110 = scmp.ne.s32.totalorder %s96, %s97
    %p111 = scmp.eq.s32.totalorder %s16, 1
    %p112 = por %p110, %p111
    %p114 = scmp.ne.s32.totalorder %s97, %s113
    %p115 = scmp.eq.s32.totalorder %s16, 0
    %p116 = por %p114, %p115
    %p117 = scmp.le.s32.totalorder 1, %s10
    %p118 = scmp.lt.s32.totalorder %s10, 3
    %p119 = pnand %p117, %p118
    %p120 = pneg %p119
    // Predicated region
    $region9: #{inception_f6_forward.21} parent=5 // pred_check
      _
    $region10: #{inception_f6_forward.21} parent=5 // pred_check_branch
      %122 = sbr.rel (%p119) target = $region12
    $region11: #{inception_f6_forward.21} parent=5 // pred_region
      %s123 = ssub.s32 %s10, 1
      // Predicated region
      $region13: #{inception_f6_forward.21} parent=11 // pred_check
        %p124 = pneg %p57
      $region14: #{inception_f6_forward.21} parent=11 // pred_check_branch
        %126 = sbr.rel (%p124) target = $region16
      $region15: #{inception_f6_forward.21} parent=11 // pred_region
        _
      $region16: #{inception_f6_forward.21} parent=11 // pred_fallthru
        _
    $region12: #{inception_f6_forward.21} parent=5 // pred_fallthru
      _
    %p127 = scmp.lt.s32.totalorder %s10, 2
    // Predicated region
    $region17: #{inception_f6_forward.21} parent=5 // pred_check
      %p128 = pneg %p127
    $region18: #{inception_f6_forward.21} parent=5 // pred_check_branch
      %130 = sbr.rel (%p128) target = $region20
    $region19: #{inception_f6_forward.21} parent=5 // pred_region
      // Predicated region
      $region21: #{inception_f6_forward.21} parent=19 // pred_check
        %p131 = pneg %p30
      $region22: #{inception_f6_forward.21} parent=19 // pred_check_branch
        %133 = sbr.rel (%p131) target = $region24
      $region23: #{inception_f6_forward.21} parent=19 // pred_region
        %s134 = smul.u32 16, %s10
        %p135 = scmp.lt.s32.totalorder %s134, 31
        %s136 = scalar_select %p135, %s134, 31
        %s137 = smul.addr %s136, 2
        %s138 = smul.addr %s137, 4
        %s139 = scalar_lea.vmem %s0, %s138
        %s140 = smul.u32 16, %s10
      $region24: #{inception_f6_forward.21} parent=19 // pred_fallthru
        _
    $region20: #{inception_f6_forward.21} parent=5 // pred_fallthru
      _
    %p141 = scmp.le.s32.totalorder 1, %s10
    %p142 = scmp.lt.s32.totalorder %s10, 3
    %p143 = pnand %p141, %p142
    %p144 = pneg %p143
    // Predicated region
    $region25: #{inception_f6_forward.21} parent=5 // pred_check
      _
    $region26: #{inception_f6_forward.21} parent=5 // pred_check_branch
      %146 = sbr.rel (%p143) target = $region28
    $region27: #{inception_f6_forward.21} parent=5 // pred_region
      %s147 = ssub.s32 %s10, 1
      %s148 = smul.u32 16, %s15
      %p149 = scmp.lt.s32.totalorder %s148, 31
      %s150 = scalar_select %p149, %s148, 31
      %s151 = smul.addr %s150, 2
      %s152 = smul.addr %s151, 4
      %s153 = scalar_lea.vmem %s0, %s152
      %p154 = pneg %p36
      %p155 = pneg %p33
      %p156 = pneg %p57
      %p157 = pneg %p54
      %p158 = pneg %p83
      %p159 = pneg %p80
      %s160 = smul.u32 16, %s15
      %p161 = scmp.lt.s32.totalorder %s160, 31
      %s162 = scalar_select %p161, %s160, 31
      %s163 = smul.addr %s162, 2
      %s164 = smul.addr %s163, 4
      %s165 = scalar_lea.vmem %s2, %s164
      %p166 = pneg %p109
      %p167 = pneg %p106
      %p168 = scmp.lt.s32.totalorder %s15, 1
      %s169 = scalar_select %p168, %s15, 1
      %s170 = smul.addr %s169, 2
      %s171 = scalar_lea.vmem %s3, %s170
      %s172 = smul.u32 16, %s15
      %p173 = scmp.lt.s32.totalorder %s172, 31
      %s174 = scalar_select %p173, %s172, 31
      %s175 = smul.addr %s174, 2
      %s176 = smul.addr %s175, 4
      %s177 = scalar_lea.vmem %s0, %s176
      %s178 = smul.u32 16, %s15
      %s179 = smul.u32 16, %s15
      %p180 = scmp.lt.s32.totalorder %s179, 31
      %s181 = scalar_select %p180, %s179, 31
      %s182 = smul.addr %s181, 2
      %s183 = smul.addr %s182, 4
      %s184 = scalar_lea.vmem %s2, %s183
      %s185 = smul.u32 16, %s15
      %p186 = scmp.lt.s32.totalorder %s15, 1
      %s187 = scalar_select %p186, %s15, 1
      %s188 = smul.addr %s187, 2
      %s189 = scalar_lea.vmem %s3, %s188
      %v191 = vld [vmem:[%s177] sm:$0xf]
      %v192 = vld [vmem:[%s177 + $0x4] sm:$0xf]
      %v193 = vld [vmem:[%s177 + $0x8] sm:$0xf]
      %v194 = vld [vmem:[%s177 + $0xc] sm:$0xf]
      %v195 = vld [vmem:[%s177 + $0x10] sm:$0xf]
      %v196 = vld [vmem:[%s177 + $0x14] sm:$0xf]
      %v197 = vld [vmem:[%s177 + $0x18] sm:$0xf]
      %v198 = vld [vmem:[%s177 + $0x1c] sm:$0xf]
      %v199 = vld [vmem:[%s177 + $0x20] sm:$0xf]
      %v200 = vld [vmem:[%s177 + $0x24] sm:$0xf]
      %v201 = vld [vmem:[%s177 + $0x28] sm:$0xf]
      %v202 = vld [vmem:[%s177 + $0x2c] sm:$0xf]
      %v203 = vld [vmem:[%s177 + $0x30] sm:$0xf]
      %v204 = vld [vmem:[%s177 + $0x34] sm:$0xf]
      %v205 = vld [vmem:[%s177 + $0x38] sm:$0xf]
      %v206 = vld [vmem:[%s177 + $0x3c] sm:$0xf]
      %v207 = vld [vmem:[%s177 + $0x40] sm:$0xf]
      %v208 = vld [vmem:[%s177 + $0x44] sm:$0xf]
      %v209 = vld [vmem:[%s177 + $0x48] sm:$0xf]
      %v210 = vld [vmem:[%s177 + $0x4c] sm:$0xf]
      %v211 = vld [vmem:[%s177 + $0x50] sm:$0xf]
      %v212 = vld [vmem:[%s177 + $0x54] sm:$0xf]
      %v213 = vld [vmem:[%s177 + $0x58] sm:$0xf]
      %v214 = vld [vmem:[%s177 + $0x5c] sm:$0xf]
      %v215 = vld [vmem:[%s177 + $0x60] sm:$0xf]
      %v216 = vld [vmem:[%s177 + $0x64] sm:$0xf]
      %v217 = vld [vmem:[%s177 + $0x68] sm:$0xf]
      %v218 = vld [vmem:[%s177 + $0x6c] sm:$0xf]
      %v219 = vld [vmem:[%s177 + $0x70] sm:$0xf]
      %v220 = vld [vmem:[%s177 + $0x74] sm:$0xf]
      %v221 = vld [vmem:[%s177 + $0x78] sm:$0xf]
      %v222 = vld [vmem:[%s177 + $0x7c] sm:$0xf]
      %v223 = vld [vmem:[%s1] sm:$0x3]
      %v256 = vunpack.c.l.b16 %v191
      %v257 = vunpack.c.l.b16 %v192
      %v258 = vunpack.c.l.b16 %v193
      %v259 = vunpack.c.l.b16 %v194
      %v260 = vunpack.c.l.b16 %v195
      %v261 = vunpack.c.l.b16 %v196
      %v262 = vunpack.c.l.b16 %v197
      %v263 = vunpack.c.l.b16 %v198
      %v264 = vunpack.c.l.b16 %v199
      %v265 = vunpack.c.l.b16 %v200
      %v266 = vunpack.c.l.b16 %v201
      %v267 = vunpack.c.l.b16 %v202
      %v268 = vunpack.c.l.b16 %v203
      %v269 = vunpack.c.l.b16 %v204
      %v270 = vunpack.c.l.b16 %v205
      %v271 = vunpack.c.l.b16 %v206
      %v272 = vunpack.c.l.b16 %v207
      %v273 = vunpack.c.l.b16 %v208
      %v274 = vunpack.c.l.b16 %v209
      %v275 = vunpack.c.l.b16 %v210
      %v276 = vunpack.c.l.b16 %v211
      %v277 = vunpack.c.l.b16 %v212
      %v278 = vunpack.c.l.b16 %v213
      %v279 = vunpack.c.l.b16 %v214
      %v280 = vunpack.c.l.b16 %v215
      %v281 = vunpack.c.l.b16 %v216
      %v282 = vunpack.c.l.b16 %v217
      %v283 = vunpack.c.l.b16 %v218
      %v284 = vunpack.c.l.b16 %v219
      %v285 = vunpack.c.l.b16 %v220
      %v286 = vunpack.c.l.b16 %v221
      %v287 = vunpack.c.l.b16 %v222
      %v288 = vpack.c.b16 %v257, %v256
      %v289 = vpack.c.b16 %v259, %v258
      %v290 = vpack.c.b16 %v261, %v260
      %v291 = vpack.c.b16 %v263, %v262
      %v292 = vpack.c.b16 %v265, %v264
      %v293 = vpack.c.b16 %v267, %v266
      %v294 = vpack.c.b16 %v269, %v268
      %v295 = vpack.c.b16 %v271, %v270
      %v296 = vpack.c.b16 %v273, %v272
      %v297 = vpack.c.b16 %v275, %v274
      %v298 = vpack.c.b16 %v277, %v276
      %v299 = vpack.c.b16 %v279, %v278
      %v300 = vpack.c.b16 %v281, %v280
      %v301 = vpack.c.b16 %v283, %v282
      %v302 = vpack.c.b16 %v285, %v284
      %v303 = vpack.c.b16 %v287, %v286
      %vm304 = vcmask 31744
      %v306 = vsel %vm304, %v288, 0
      %v309 = vsel %vm304, %v289, 0
      %v312 = vsel %vm304, %v290, 0
      %v315 = vsel %vm304, %v291, 0
      %v318 = vsel %vm304, %v292, 0
      %v321 = vsel %vm304, %v293, 0
      %v324 = vsel %vm304, %v294, 0
      %v327 = vsel %vm304, %v295, 0
      %v330 = vsel %vm304, %v296, 0
      %v333 = vsel %vm304, %v297, 0
      %v336 = vsel %vm304, %v298, 0
      %v339 = vsel %vm304, %v299, 0
      %v342 = vsel %vm304, %v300, 0
      %v345 = vsel %vm304, %v301, 0
      %v348 = vsel %vm304, %v302, 0
      %v351 = vsel %vm304, %v303, 0
      %vm353 = vcmask 1041408
      %v355 = vsel %vm353, %v223, 0
      %357 = vmatprep.subr.bf16.mxu0 0
      %358 = vmatpush1.bf16.msra.mxu0 0
      %359 = vmatprep.subr.bf16.mxu0 0
      %360 = vmatpush1.bf16.msra.mxu0 0
      %361 = vmatprep.subr.bf16.mxu0 0
      %362 = vmatpush1.bf16.msra.mxu0 0
      %363 = vmatprep.subr.bf16.mxu0 0
      %364 = vmatpush1.bf16.msra.mxu0 0
      %365 = vmatprep.subr.bf16.mxu0 0
      %366 = vmatpush1.bf16.msra.mxu0 0
      %367 = vmatprep.subr.bf16.mxu0 0
      %368 = vmatpush1.bf16.msra.mxu0 0
      %369 = vmatprep.subr.bf16.mxu0 0
      %370 = vmatpush1.bf16.msra.mxu0 0
      %371 = vmatprep.subr.bf16.mxu0 0
      %372 = vmatpush1.bf16.msra.mxu0 %v355
      %373 = vmatprep.subr.bf16.mxu0 0
      %374 = vmatpush2.bf16.msra.mxu0 0
      %375 = vmatprep.subr.bf16.mxu0 0
      %376 = vmatpush2.bf16.msra.mxu0 0
      %377 = vmatprep.subr.bf16.mxu0 0
      %378 = vmatpush2.bf16.msra.mxu0 0
      %379 = vmatprep.subr.bf16.mxu0 0
      %380 = vmatpush2.bf16.msra.mxu0 0
      %381 = vmatprep.subr.bf16.mxu0 0
      %382 = vmatpush2.bf16.msra.mxu0 0
      %383 = vmatprep.subr.bf16.mxu0 0
      %384 = vmatpush2.bf16.msra.mxu0 0
      %385 = vmatprep.subr.bf16.mxu0 0
      %386 = vmatpush2.bf16.msra.mxu0 0
      %387 = vmatprep.subr.bf16.mxu0 0
      %388 = vmatpush2.bf16.msra.mxu0 0
      %389 = vmatprep.mubr.bf16.mxu0 0
      %390 = vmatmul.mubr.bf16.gmra.mxu0 %v306
      %v391 = vpop.f32.mrf.mxu0
      %v392 = vadd.f32 0.0, %v391
      %v393 = vpop.f32.mrf.mxu0
      %v394 = vpop.f32.mrf.mxu0
      %v395 = vadd.f32 0.0, %v394
      %v396 = vpop.f32.mrf.mxu0
      %397 = vmatprep.mubr.bf16.mxu0 0
      %398 = vmatmul.mubr.bf16.gmra.mxu0 %v309
      %v399 = vpop.f32.mrf.mxu0
      %v400 = vadd.f32 0.0, %v399
      %v401 = vpop.f32.mrf.mxu0
      %v402 = vpop.f32.mrf.mxu0
      %v403 = vadd.f32 0.0, %v402
      %v404 = vpop.f32.mrf.mxu0
      %405 = vmatprep.mubr.bf16.mxu0 0
      %406 = vmatmul.mubr.bf16.gmra.mxu0 %v312
      %v407 = vpop.f32.mrf.mxu0
      %v408 = vadd.f32 0.0, %v407
      %v409 = vpop.f32.mrf.mxu0
      %v410 = vpop.f32.mrf.mxu0
      %v411 = vadd.f32 0.0, %v410
      %v412 = vpop.f32.mrf.mxu0
      %413 = vmatprep.mubr.bf16.mxu0 0
      %414 = vmatmul.mubr.bf16.gmra.mxu0 %v315
      %v415 = vpop.f32.mrf.mxu0
      %v416 = vadd.f32 0.0, %v415
      %v417 = vpop.f32.mrf.mxu0
      %v418 = vpop.f32.mrf.mxu0
      %v419 = vadd.f32 0.0, %v418
      %v420 = vpop.f32.mrf.mxu0
      %421 = vmatprep.mubr.bf16.mxu0 0
      %422 = vmatmul.mubr.bf16.gmra.mxu0 %v318
      %v423 = vpop.f32.mrf.mxu0
      %v424 = vadd.f32 0.0, %v423
      %v425 = vpop.f32.mrf.mxu0
      %v426 = vpop.f32.mrf.mxu0
      %v427 = vadd.f32 0.0, %v426
      %v428 = vpop.f32.mrf.mxu0
      %429 = vmatprep.mubr.bf16.mxu0 0
      %430 = vmatmul.mubr.bf16.gmra.mxu0 %v321
      %v431 = vpop.f32.mrf.mxu0
      %v432 = vadd.f32 0.0, %v431
      %v433 = vpop.f32.mrf.mxu0
      %v434 = vpop.f32.mrf.mxu0
      %v435 = vadd.f32 0.0, %v434
      %v436 = vpop.f32.mrf.mxu0
      %437 = vmatprep.mubr.bf16.mxu0 0
      %438 = vmatmul.mubr.bf16.gmra.mxu0 %v324
      %v439 = vpop.f32.mrf.mxu0
      %v440 = vadd.f32 0.0, %v439
      %v441 = vpop.f32.mrf.mxu0
      %v442 = vpop.f32.mrf.mxu0
      %v443 = vadd.f32 0.0, %v442
      %v444 = vpop.f32.mrf.mxu0
      %445 = vmatprep.mubr.bf16.mxu0 0
      %446 = vmatmul.mubr.bf16.gmra.mxu0 %v327
      %v447 = vpop.f32.mrf.mxu0
      %v448 = vadd.f32 0.0, %v447
      %v449 = vpop.f32.mrf.mxu0
      %v450 = vpop.f32.mrf.mxu0
      %v451 = vadd.f32 0.0, %v450
      %v452 = vpop.f32.mrf.mxu0
      %453 = vmatprep.mubr.bf16.mxu0 0
      %454 = vmatmul.mubr.bf16.gmra.mxu0 %v330
      %v455 = vpop.f32.mrf.mxu0
      %v456 = vadd.f32 0.0, %v455
      %v457 = vpop.f32.mrf.mxu0
      %v458 = vpop.f32.mrf.mxu0
      %v459 = vadd.f32 0.0, %v458
      %v460 = vpop.f32.mrf.mxu0
      %461 = vmatprep.mubr.bf16.mxu0 0
      %462 = vmatmul.mubr.bf16.gmra.mxu0 %v333
      %v463 = vpop.f32.mrf.mxu0
      %v464 = vadd.f32 0.0, %v463
      %v465 = vpop.f32.mrf.mxu0
      %v466 = vpop.f32.mrf.mxu0
      %v467 = vadd.f32 0.0, %v466
      %v468 = vpop.f32.mrf.mxu0
      %469 = vmatprep.mubr.bf16.mxu0 0
      %470 = vmatmul.mubr.bf16.gmra.mxu0 %v336
      %v471 = vpop.f32.mrf.mxu0
      %v472 = vadd.f32 0.0, %v471
      %v473 = vpop.f32.mrf.mxu0
      %v474 = vpop.f32.mrf.mxu0
      %v475 = vadd.f32 0.0, %v474
      %v476 = vpop.f32.mrf.mxu0
      %477 = vmatprep.mubr.bf16.mxu0 0
      %478 = vmatmul.mubr.bf16.gmra.mxu0 %v339
      %v479 = vpop.f32.mrf.mxu0
      %v480 = vadd.f32 0.0, %v479
      %v481 = vpop.f32.mrf.mxu0
      %v482 = vpop.f32.mrf.mxu0
      %v483 = vadd.f32 0.0, %v482
      %v484 = vpop.f32.mrf.mxu0
      %485 = vmatprep.mubr.bf16.mxu0 0
      %486 = vmatmul.mubr.bf16.gmra.mxu0 %v342
      %v487 = vpop.f32.mrf.mxu0
      %v488 = vadd.f32 0.0, %v487
      %v489 = vpop.f32.mrf.mxu0
      %v490 = vpop.f32.mrf.mxu0
      %v491 = vadd.f32 0.0, %v490
      %v492 = vpop.f32.mrf.mxu0
      %493 = vmatprep.mubr.bf16.mxu0 0
      %494 = vmatmul.mubr.bf16.gmra.mxu0 %v345
      %v495 = vpop.f32.mrf.mxu0
      %v496 = vadd.f32 0.0, %v495
      %v497 = vpop.f32.mrf.mxu0
      %v498 = vpop.f32.mrf.mxu0
      %v499 = vadd.f32 0.0, %v498
      %v500 = vpop.f32.mrf.mxu0
      %501 = vmatprep.mubr.bf16.mxu0 0
      %502 = vmatmul.mubr.bf16.gmra.mxu0 %v348
      %v503 = vpop.f32.mrf.mxu0
      %v504 = vadd.f32 0.0, %v503
      %v505 = vpop.f32.mrf.mxu0
      %v506 = vpop.f32.mrf.mxu0
      %v507 = vadd.f32 0.0, %v506
      %v508 = vpop.f32.mrf.mxu0
      %509 = vmatprep.mubr.bf16.mxu0 0
      %510 = vmatmul.mubr.bf16.gmra.mxu0 %v351
      %v511 = vpop.f32.mrf.mxu0
      %v512 = vadd.f32 0.0, %v511
      %v513 = vpop.f32.mrf.mxu0
      %v514 = vpop.f32.mrf.mxu0
      %v515 = vadd.f32 0.0, %v514
      %v516 = vpop.f32.mrf.mxu0
      %517 = vdwg.mxu0
      %v518 = vpack.c.bf16 %v395, %v392
      %v519 = vpack.c.bf16 %v403, %v400
      %v520 = vpack.c.bf16 %v411, %v408
      %v521 = vpack.c.bf16 %v419, %v416
      %v522 = vpack.c.bf16 %v427, %v424
      %v523 = vpack.c.bf16 %v435, %v432
      %v524 = vpack.c.bf16 %v443, %v440
      %v525 = vpack.c.bf16 %v451, %v448
      %v526 = vpack.c.bf16 %v459, %v456
      %v527 = vpack.c.bf16 %v467, %v464
      %v528 = vpack.c.bf16 %v475, %v472
      %v529 = vpack.c.bf16 %v483, %v480
      %v530 = vpack.c.bf16 %v491, %v488
      %v531 = vpack.c.bf16 %v499, %v496
      %v532 = vpack.c.bf16 %v507, %v504
      %v533 = vpack.c.bf16 %v515, %v512
      %v550 = vunpack.c.l.b16 %v518
      %v551 = vunpack.c.h.b16 %v518
      %v552 = vunpack.c.l.b16 %v519
      %v553 = vunpack.c.h.b16 %v519
      %v554 = vunpack.c.l.b16 %v520
      %v555 = vunpack.c.h.b16 %v520
      %v556 = vunpack.c.l.b16 %v521
      %v557 = vunpack.c.h.b16 %v521
      %v558 = vunpack.c.l.b16 %v522
      %v559 = vunpack.c.h.b16 %v522
      %v560 = vunpack.c.l.b16 %v523
      %v561 = vunpack.c.h.b16 %v523
      %v562 = vunpack.c.l.b16 %v524
      %v563 = vunpack.c.h.b16 %v524
      %v564 = vunpack.c.l.b16 %v525
      %v565 = vunpack.c.h.b16 %v525
      %v566 = vunpack.c.l.b16 %v526
      %v567 = vunpack.c.h.b16 %v526
      %v568 = vunpack.c.l.b16 %v527
      %v569 = vunpack.c.h.b16 %v527
      %v570 = vunpack.c.l.b16 %v528
      %v571 = vunpack.c.h.b16 %v528
      %v572 = vunpack.c.l.b16 %v529
      %v573 = vunpack.c.h.b16 %v529
      %v574 = vunpack.c.l.b16 %v530
      %v575 = vunpack.c.h.b16 %v530
      %v576 = vunpack.c.l.b16 %v531
      %v577 = vunpack.c.h.b16 %v531
      %v578 = vunpack.c.l.b16 %v532
      %v579 = vunpack.c.h.b16 %v532
      %v580 = vunpack.c.l.b16 %v533
      %v581 = vunpack.c.h.b16 %v533
      %v582 = vpack.c.b16 %v550, %v550
      %v583 = vpack.c.b16 %v551, %v551
      %v584 = vpack.c.b16 %v552, %v552
      %v585 = vpack.c.b16 %v553, %v553
      %v586 = vpack.c.b16 %v554, %v554
      %v587 = vpack.c.b16 %v555, %v555
      %v588 = vpack.c.b16 %v556, %v556
      %v589 = vpack.c.b16 %v557, %v557
      %v590 = vpack.c.b16 %v558, %v558
      %v591 = vpack.c.b16 %v559, %v559
      %v592 = vpack.c.b16 %v560, %v560
      %v593 = vpack.c.b16 %v561, %v561
      %v594 = vpack.c.b16 %v562, %v562
      %v595 = vpack.c.b16 %v563, %v563
      %v596 = vpack.c.b16 %v564, %v564
      %v597 = vpack.c.b16 %v565, %v565
      %v598 = vpack.c.b16 %v566, %v566
      %v599 = vpack.c.b16 %v567, %v567
      %v600 = vpack.c.b16 %v568, %v568
      %v601 = vpack.c.b16 %v569, %v569
      %v602 = vpack.c.b16 %v570, %v570
      %v603 = vpack.c.b16 %v571, %v571
      %v604 = vpack.c.b16 %v572, %v572
      %v605 = vpack.c.b16 %v573, %v573
      %v606 = vpack.c.b16 %v574, %v574
      %v607 = vpack.c.b16 %v575, %v575
      %v608 = vpack.c.b16 %v576, %v576
      %v609 = vpack.c.b16 %v577, %v577
      %v610 = vpack.c.b16 %v578, %v578
      %v611 = vpack.c.b16 %v579, %v579
      %v612 = vpack.c.b16 %v580, %v580
      %v613 = vpack.c.b16 %v581, %v581
      %vm646 = vcmask 60416
      %647 = vst.msk [vmem:[%s184] sm:$0xf] %vm646, %v582
      %648 = vst.msk [vmem:[%s184 + $0x4] sm:$0xf] %vm646, %v583
      %649 = vst.msk [vmem:[%s184 + $0x8] sm:$0xf] %vm646, %v584
      %650 = vst.msk [vmem:[%s184 + $0xc] sm:$0xf] %vm646, %v585
      %651 = vst.msk [vmem:[%s184 + $0x10] sm:$0xf] %vm646, %v586
      %652 = vst.msk [vmem:[%s184 + $0x14] sm:$0xf] %vm646, %v587
      %653 = vst.msk [vmem:[%s184 + $0x18] sm:$0xf] %vm646, %v588
      %654 = vst.msk [vmem:[%s184 + $0x1c] sm:$0xf] %vm646, %v589
      %655 = vst.msk [vmem:[%s184 + $0x20] sm:$0xf] %vm646, %v590
      %656 = vst.msk [vmem:[%s184 + $0x24] sm:$0xf] %vm646, %v591
      %657 = vst.msk [vmem:[%s184 + $0x28] sm:$0xf] %vm646, %v592
      %658 = vst.msk [vmem:[%s184 + $0x2c] sm:$0xf] %vm646, %v593
      %659 = vst.msk [vmem:[%s184 + $0x30] sm:$0xf] %vm646, %v594
      %660 = vst.msk [vmem:[%s184 + $0x34] sm:$0xf] %vm646, %v595
      %661 = vst.msk [vmem:[%s184 + $0x38] sm:$0xf] %vm646, %v596
      %662 = vst.msk [vmem:[%s184 + $0x3c] sm:$0xf] %vm646, %v597
      %663 = vst.msk [vmem:[%s184 + $0x40] sm:$0xf] %vm646, %v598
      %664 = vst.msk [vmem:[%s184 + $0x44] sm:$0xf] %vm646, %v599
      %665 = vst.msk [vmem:[%s184 + $0x48] sm:$0xf] %vm646, %v600
      %666 = vst.msk [vmem:[%s184 + $0x4c] sm:$0xf] %vm646, %v601
      %667 = vst.msk [vmem:[%s184 + $0x50] sm:$0xf] %vm646, %v602
      %668 = vst.msk [vmem:[%s184 + $0x54] sm:$0xf] %vm646, %v603
      %669 = vst.msk [vmem:[%s184 + $0x58] sm:$0xf] %vm646, %v604
      %670 = vst.msk [vmem:[%s184 + $0x5c] sm:$0xf] %vm646, %v605
      %671 = vst.msk [vmem:[%s184 + $0x60] sm:$0xf] %vm646, %v606
      %672 = vst.msk [vmem:[%s184 + $0x64] sm:$0xf] %vm646, %v607
      %673 = vst.msk [vmem:[%s184 + $0x68] sm:$0xf] %vm646, %v608
      %674 = vst.msk [vmem:[%s184 + $0x6c] sm:$0xf] %vm646, %v609
      %675 = vst.msk [vmem:[%s184 + $0x70] sm:$0xf] %vm646, %v610
      %676 = vst.msk [vmem:[%s184 + $0x74] sm:$0xf] %vm646, %v611
      %677 = vst.msk [vmem:[%s184 + $0x78] sm:$0xf] %vm646, %v612
      %678 = vst.msk [vmem:[%s184 + $0x7c] sm:$0xf] %vm646, %v613
      %vm679 = vcmask 64512
      %v680 = vsel %vm679, %v392, 0.0
      %v681 = vsel %vm679, %v395, 0.0
      %v682 = vadd.f32 %v680, %v681
      %v683 = vsel %vm679, %v400, 0.0
      %v684 = vadd.f32 %v682, %v683
      %v685 = vsel %vm679, %v403, 0.0
      %v686 = vadd.f32 %v684, %v685
      %v687 = vsel %vm679, %v408, 0.0
      %v688 = vadd.f32 %v686, %v687
      %v689 = vsel %vm679, %v411, 0.0
      %v690 = vadd.f32 %v688, %v689
      %v691 = vsel %vm679, %v416, 0.0
      %v692 = vadd.f32 %v690, %v691
      %v693 = vsel %vm679, %v419, 0.0
      %v694 = vadd.f32 %v692, %v693
      %v695 = vsel %vm679, %v424, 0.0
      %v696 = vadd.f32 %v694, %v695
      %v697 = vsel %vm679, %v427, 0.0
      %v698 = vadd.f32 %v696, %v697
      %v699 = vsel %vm679, %v432, 0.0
      %v700 = vadd.f32 %v698, %v699
      %v701 = vsel %vm679, %v435, 0.0
      %v702 = vadd.f32 %v700, %v701
      %v703 = vsel %vm679, %v440, 0.0
      %v704 = vadd.f32 %v702, %v703
      %v705 = vsel %vm679, %v443, 0.0
      %v706 = vadd.f32 %v704, %v705
      %v707 = vsel %vm679, %v448, 0.0
      %v708 = vadd.f32 %v706, %v707
      %v709 = vsel %vm679, %v451, 0.0
      %v710 = vadd.f32 %v708, %v709
      %v711 = vsel %vm679, %v456, 0.0
      %v712 = vadd.f32 %v710, %v711
      %v713 = vsel %vm679, %v459, 0.0
      %v714 = vadd.f32 %v712, %v713
      %v715 = vsel %vm679, %v464, 0.0
      %v716 = vadd.f32 %v714, %v715
      %v717 = vsel %vm679, %v467, 0.0
      %v718 = vadd.f32 %v716, %v717
      %v719 = vsel %vm679, %v472, 0.0
      %v720 = vadd.f32 %v718, %v719
      %v721 = vsel %vm679, %v475, 0.0
      %v722 = vadd.f32 %v720, %v721
      %v723 = vsel %vm679, %v480, 0.0
      %v724 = vadd.f32 %v722, %v723
      %v725 = vsel %vm679, %v483, 0.0
      %v726 = vadd.f32 %v724, %v725
      %v727 = vsel %vm679, %v488, 0.0
      %v728 = vadd.f32 %v726, %v727
      %v729 = vsel %vm679, %v491, 0.0
      %v730 = vadd.f32 %v728, %v729
      %v731 = vsel %vm679, %v496, 0.0
      %v732 = vadd.f32 %v730, %v731
      %v733 = vsel %vm679, %v499, 0.0
      %v734 = vadd.f32 %v732, %v733
      %v735 = vsel %vm679, %v504, 0.0
      %v736 = vadd.f32 %v734, %v735
      %v737 = vsel %vm679, %v507, 0.0
      %v738 = vadd.f32 %v736, %v737
      %v739 = vsel %vm679, %v512, 0.0
      %v740 = vadd.f32 %v738, %v739
      %v741 = vsel %vm679, %v515, 0.0
      %v742 = vadd.f32 %v740, %v741
      %v743 = vrot.slane %v742, 4
      %v744 = vadd.f32 %v742, %v743
      %v745 = vrot.slane %v744, 2
      %v746 = vadd.f32 %v744, %v745
      %v747 = vrot.slane %v746, 1
      %v748 = vadd.f32 %v746, %v747
      %v749 = vmul.f32 %v392, %v392
      %v750 = vmul.f32 %v395, %v395
      %v751 = vmul.f32 %v400, %v400
      %v752 = vmul.f32 %v403, %v403
      %v753 = vmul.f32 %v408, %v408
      %v754 = vmul.f32 %v411, %v411
      %v755 = vmul.f32 %v416, %v416
      %v756 = vmul.f32 %v419, %v419
      %v757 = vmul.f32 %v424, %v424
      %v758 = vmul.f32 %v427, %v427
      %v759 = vmul.f32 %v432, %v432
      %v760 = vmul.f32 %v435, %v435
      %v761 = vmul.f32 %v440, %v440
      %v762 = vmul.f32 %v443, %v443
      %v763 = vmul.f32 %v448, %v448
      %v764 = vmul.f32 %v451, %v451
      %v765 = vmul.f32 %v456, %v456
      %v766 = vmul.f32 %v459, %v459
      %v767 = vmul.f32 %v464, %v464
      %v768 = vmul.f32 %v467, %v467
      %v769 = vmul.f32 %v472, %v472
      %v770 = vmul.f32 %v475, %v475
      %v771 = vmul.f32 %v480, %v480
      %v772 = vmul.f32 %v483, %v483
      %v773 = vmul.f32 %v488, %v488
      %v774 = vmul.f32 %v491, %v491
      %v775 = vmul.f32 %v496, %v496
      %v776 = vmul.f32 %v499, %v499
      %v777 = vmul.f32 %v504, %v504
      %v778 = vmul.f32 %v507, %v507
      %v779 = vmul.f32 %v512, %v512
      %v780 = vmul.f32 %v515, %v515
      %v781 = vsel %vm679, %v749, 0.0
      %v782 = vsel %vm679, %v750, 0.0
      %v783 = vadd.f32 %v781, %v782
      %v784 = vsel %vm679, %v751, 0.0
      %v785 = vadd.f32 %v783, %v784
      %v786 = vsel %vm679, %v752, 0.0
      %v787 = vadd.f32 %v785, %v786
      %v788 = vsel %vm679, %v753, 0.0
      %v789 = vadd.f32 %v787, %v788
      %v790 = vsel %vm679, %v754, 0.0
      %v791 = vadd.f32 %v789, %v790
      %v792 = vsel %vm679, %v755, 0.0
      %v793 = vadd.f32 %v791, %v792
      %v794 = vsel %vm679, %v756, 0.0
      %v795 = vadd.f32 %v793, %v794
      %v796 = vsel %vm679, %v757, 0.0
      %v797 = vadd.f32 %v795, %v796
      %v798 = vsel %vm679, %v758, 0.0
      %v799 = vadd.f32 %v797, %v798
      %v800 = vsel %vm679, %v759, 0.0
      %v801 = vadd.f32 %v799, %v800
      %v802 = vsel %vm679, %v760, 0.0
      %v803 = vadd.f32 %v801, %v802
      %v804 = vsel %vm679, %v761, 0.0
      %v805 = vadd.f32 %v803, %v804
      %v806 = vsel %vm679, %v762, 0.0
      %v807 = vadd.f32 %v805, %v806
      %v808 = vsel %vm679, %v763, 0.0
      %v809 = vadd.f32 %v807, %v808
      %v810 = vsel %vm679, %v764, 0.0
      %v811 = vadd.f32 %v809, %v810
      %v812 = vsel %vm679, %v765, 0.0
      %v813 = vadd.f32 %v811, %v812
      %v814 = vsel %vm679, %v766, 0.0
      %v815 = vadd.f32 %v813, %v814
      %v816 = vsel %vm679, %v767, 0.0
      %v817 = vadd.f32 %v815, %v816
      %v818 = vsel %vm679, %v768, 0.0
      %v819 = vadd.f32 %v817, %v818
      %v820 = vsel %vm679, %v769, 0.0
      %v821 = vadd.f32 %v819, %v820
      %v822 = vsel %vm679, %v770, 0.0
      %v823 = vadd.f32 %v821, %v822
      %v824 = vsel %vm679, %v771, 0.0
      %v825 = vadd.f32 %v823, %v824
      %v826 = vsel %vm679, %v772, 0.0
      %v827 = vadd.f32 %v825, %v826
      %v828 = vsel %vm679, %v773, 0.0
      %v829 = vadd.f32 %v827, %v828
      %v830 = vsel %vm679, %v774, 0.0
      %v831 = vadd.f32 %v829, %v830
      %v832 = vsel %vm679, %v775, 0.0
      %v833 = vadd.f32 %v831, %v832
      %v834 = vsel %vm679, %v776, 0.0
      %v835 = vadd.f32 %v833, %v834
      %v836 = vsel %vm679, %v777, 0.0
      %v837 = vadd.f32 %v835, %v836
      %v838 = vsel %vm679, %v778, 0.0
      %v839 = vadd.f32 %v837, %v838
      %v840 = vsel %vm679, %v779, 0.0
      %v841 = vadd.f32 %v839, %v840
      %v842 = vsel %vm679, %v780, 0.0
      %v843 = vadd.f32 %v841, %v842
      %v844 = vrot.slane %v843, 4
      %v845 = vadd.f32 %v843, %v844
      %v846 = vrot.slane %v845, 2
      %v847 = vadd.f32 %v845, %v846
      %v848 = vrot.slane %v847, 1
      %v849 = vadd.f32 %v847, %v848
      %vm850 = vcmask 1040384
      %v851 = vsel %vm850, %v748, %v849
      %vm852 = vcmask 58368
      %853 = vst.msk [vmem:[%s189] sm:$0x3] %vm852, %v851
      %s854 = smul.u32 16, %s15
      %p855 = scmp.lt.s32.totalorder %s854, 31
      %s856 = scalar_select %p855, %s854, 31
      %s857 = smul.addr %s856, 2
      %s858 = smul.addr %s857, 4
      %s859 = scalar_lea.vmem %s2, %s858
      %p860 = scmp.lt.s32.totalorder %s15, 1
      %s861 = scalar_select %p860, %s15, 1
      %s862 = smul.addr %s861, 2
      %s863 = scalar_lea.vmem %s3, %s862
      // Predicated region
      $region29: #{inception_f6_forward.21} parent=27 // pred_check
        %p864 = pneg %p80
      $region30: #{inception_f6_forward.21} parent=27 // pred_check_branch
        %866 = sbr.rel (%p864) target = $region32
      $region31: #{inception_f6_forward.21} parent=27 // pred_region
        %s867 = smul.u32 16, %s15
      $region32: #{inception_f6_forward.21} parent=27 // pred_fallthru
        _
      // Predicated region
      $region33: #{inception_f6_forward.21} parent=27 // pred_check
        %p868 = pneg %p106
      $region34: #{inception_f6_forward.21} parent=27 // pred_check_branch
        %870 = sbr.rel (%p868) target = $region36
      $region35: #{inception_f6_forward.21} parent=27 // pred_region
        _
      $region36: #{inception_f6_forward.21} parent=27 // pred_fallthru
        _
    $region28: #{inception_f6_forward.21} parent=5 // pred_fallthru
      _
    %p871 = scmp.le.s32.totalorder 2, %s10
    // Predicated region
    $region37: #{inception_f6_forward.21} parent=5 // pred_check
      %p872 = pneg %p871
    $region38: #{inception_f6_forward.21} parent=5 // pred_check_branch
      %874 = sbr.rel (%p872) target = $region40
    $region39: #{inception_f6_forward.21} parent=5 // pred_region
      %s875 = ssub.s32 %s10, 2
      // Predicated region
      $region41: #{inception_f6_forward.21} parent=39 // pred_check
        %p876 = pneg %p86
      $region42: #{inception_f6_forward.21} parent=39 // pred_check_branch
        %878 = sbr.rel (%p876) target = $region44
      $region43: #{inception_f6_forward.21} parent=39 // pred_region
        %s879 = smul.u32 16, %s16
        %p880 = scmp.lt.s32.totalorder %s879, 31
        %s881 = scalar_select %p880, %s879, 31
        %s882 = smul.addr %s881, 2
        %s883 = smul.addr %s882, 4
        %s884 = scalar_lea.vmem %s2, %s883
      $region44: #{inception_f6_forward.21} parent=39 // pred_fallthru
        _
      // Predicated region
      $region45: #{inception_f6_forward.21} parent=39 // pred_check
        %p885 = pneg %p112
      $region46: #{inception_f6_forward.21} parent=39 // pred_check_branch
        %887 = sbr.rel (%p885) target = $region48
      $region47: #{inception_f6_forward.21} parent=39 // pred_region
        %p888 = scmp.lt.s32.totalorder %s16, 1
        %s889 = scalar_select %p888, %s16, 1
        %s890 = smul.addr %s889, 2
        %s891 = scalar_lea.vmem %s3, %s890
      $region48: #{inception_f6_forward.21} parent=39 // pred_fallthru
        _
    $region40: #{inception_f6_forward.21} parent=5 // pred_fallthru
      _
  $region6: #{inception_f6_forward.21} parent=0 // loop_footer
    %s14 = sadd.s32 1, %s10
  $region7: #{inception_f6_forward.21} parent=0 // loop_footer_branch
    %9 = sbr.rel target = $region3
  $region8: #{inception_f6_forward.21} parent=0 // loop_exit
    _

// kernel: inception_f6_forward.23
$region0: #{inception_f6_forward.23}
  #allocation0 [shape = 'u32[]', space=smem, size = 0x4, offset = 0x4, fixed_abs, tag = 'smem constant byte address 0x4 - core index']
  #allocation1 [shape = 'u32[144,128]{1,0:T(1,128)}', space=vmem, size = 0x12000, scoped, tag = 'internal scratch']
  %s0 = inlined_call_operand.vmem [shape: bf16[2,16,16,8], index: 0, kind: input, shape index: {}]
  %s1 = inlined_call_operand.vmem [shape: bf16[56,192], index: 1, kind: input, shape index: {}]
  %s2 = inlined_call_operand.vmem [shape: f32[1,8], index: 2, kind: input, shape index: {}]
  %s3 = inlined_call_operand.vmem [shape: f32[1,8], index: 3, kind: input, shape index: {}]
  %s4 = inlined_call_operand.vmem [shape: bf16[2,16,16,192], index: 4, kind: output, shape index: {0}]
  %s5 = inlined_call_operand.vmem [shape: f32[2,2,192], index: 5, kind: output, shape index: {1}]
  %6 = xla_tuple %s4, %s5
  %s7 = sld [smem:[#allocation0]]
  $region57: #{inception_f6_forward.23} parent=0
    _
  %s9 = ssub.s32 1, %s7
  %s10 = scalar_select 0, %s9, %s7
  loop: start=0, step=1, limit=4
  $region2: #{inception_f6_forward.23} parent=0 // loop_pre_header
    _
  $region3: #{inception_f6_forward.23} parent=0 // loop_header
    %s12 = sphi 0, %s16
    %p13 = scmp.ge.s32.totalorder %s12, 4
    %s22 = sphi 0, %s24
    %s25 = sphi 0, %s22
    %s26 = sphi 0, %s25
    %s42 = sphi 0, %s26
    %s46 = sphi 0, %s46
    %s48 = sphi 0, %s46
    %s49 = sphi 0, %s48
    %s63 = sphi 0, %s49
    %s67 = sphi 0, %s67
    %s69 = sphi 0, %s67
    %s70 = sphi 0, %s69
    %s84 = sphi 0, %s70
    %s88 = sphi 0, %s88
    %s90 = sphi 0, %s88
    %s91 = sphi 0, %s90
    %s105 = sphi 0, %s91
    %s111 = sphi 0, %s113
    %s114 = sphi 0, %s111
    %s115 = sphi 0, %s114
    %s131 = sphi 0, %s115
    %s137 = sphi 0, %s139
    %s140 = sphi 0, %s137
    %s141 = sphi 0, %s140
    %s157 = sphi 0, %s141
  $region4: #{inception_f6_forward.23} parent=0 // loop_header_branch
    %15 = sbr.rel (%p13) target = $region8
  $region5: #{inception_f6_forward.23} parent=0 // loop_body
    %s17 = ssub.s32 %s12, 1
    %s18 = ssub.s32 %s12, 2
    %s19 = sadd.s32 %s12, 1
    %s20 = ssub.s32 %s12, %s19
    %p21 = scmp.eq.s32.totalorder %s20, 0
    %s23 = sadd.s32 %s22, 1
    %s24 = scalar_select %p21, %s22, %s23
    %p27 = pneg %p21
    %p28 = scmp.eq.s32.totalorder %s12, 1
    %p29 = por %p27, %p28
    %p30 = scmp.ne.s32.totalorder %s22, %s25
    %p31 = scmp.eq.s32.totalorder %s12, 0
    %p32 = por %p30, %p31
    %p33 = scmp.ne.s32.totalorder %s22, %s25
    %p34 = scmp.eq.s32.totalorder %s17, 1
    %p35 = por %p33, %p34
    %p36 = scmp.ne.s32.totalorder %s25, %s26
    %p37 = scmp.eq.s32.totalorder %s17, 0
    %p38 = por %p36, %p37
    %p39 = scmp.ne.s32.totalorder %s25, %s26
    %p40 = scmp.eq.s32.totalorder %s18, 1
    %p41 = por %p39, %p40
    %p43 = scmp.ne.s32.totalorder %s26, %s42
    %p44 = scmp.eq.s32.totalorder %s18, 0
    %p45 = por %p43, %p44
    %s47 = sadd.s32 %s46, 1
    %p50 = scmp.eq.s32.totalorder %s12, 1
    %p51 = scmp.ne.s32.totalorder %s46, %s48
    %p52 = scmp.eq.s32.totalorder %s12, 0
    %p53 = por %p51, %p52
    %p54 = scmp.ne.s32.totalorder %s46, %s48
    %p55 = scmp.eq.s32.totalorder %s17, 1
    %p56 = por %p54, %p55
    %p57 = scmp.ne.s32.totalorder %s48, %s49
    %p58 = scmp.eq.s32.totalorder %s17, 0
    %p59 = por %p57, %p58
    %p60 = scmp.ne.s32.totalorder %s48, %s49
    %p61 = scmp.eq.s32.totalorder %s18, 1
    %p62 = por %p60, %p61
    %p64 = scmp.ne.s32.totalorder %s49, %s63
    %p65 = scmp.eq.s32.totalorder %s18, 0
    %p66 = por %p64, %p65
    %s68 = sadd.s32 %s67, 1
    %p71 = scmp.eq.s32.totalorder %s12, 1
    %p72 = scmp.ne.s32.totalorder %s67, %s69
    %p73 = scmp.eq.s32.totalorder %s12, 0
    %p74 = por %p72, %p73
    %p75 = scmp.ne.s32.totalorder %s67, %s69
    %p76 = scmp.eq.s32.totalorder %s17, 1
    %p77 = por %p75, %p76
    %p78 = scmp.ne.s32.totalorder %s69, %s70
    %p79 = scmp.eq.s32.totalorder %s17, 0
    %p80 = por %p78, %p79
    %p81 = scmp.ne.s32.totalorder %s69, %s70
    %p82 = scmp.eq.s32.totalorder %s18, 1
    %p83 = por %p81, %p82
    %p85 = scmp.ne.s32.totalorder %s70, %s84
    %p86 = scmp.eq.s32.totalorder %s18, 0
    %p87 = por %p85, %p86
    %s89 = sadd.s32 %s88, 1
    %p92 = scmp.eq.s32.totalorder %s12, 1
    %p93 = scmp.ne.s32.totalorder %s88, %s90
    %p94 = scmp.eq.s32.totalorder %s12, 0
    %p95 = por %p93, %p94
    %p96 = scmp.ne.s32.totalorder %s88, %s90
    %p97 = scmp.eq.s32.totalorder %s17, 1
    %p98 = por %p96, %p97
    %p99 = scmp.ne.s32.totalorder %s90, %s91
    %p100 = scmp.eq.s32.totalorder %s17, 0
    %p101 = por %p99, %p100
    %p102 = scmp.ne.s32.totalorder %s90, %s91
    %p103 = scmp.eq.s32.totalorder %s18, 1
    %p104 = por %p102, %p103
    %p106 = scmp.ne.s32.totalorder %s91, %s105
    %p107 = scmp.eq.s32.totalorder %s18, 0
    %p108 = por %p106, %p107
    %s109 = ssub.s32 %s12, %s19
    %p110 = scmp.eq.s32.totalorder %s109, 0
    %s112 = sadd.s32 %s111, 1
    %s113 = scalar_select %p110, %s111, %s112
    %p116 = pneg %p110
    %p117 = scmp.eq.s32.totalorder %s12, 1
    %p118 = por %p116, %p117
    %p119 = scmp.ne.s32.totalorder %s111, %s114
    %p120 = scmp.eq.s32.totalorder %s12, 0
    %p121 = por %p119, %p120
    %p122 = scmp.ne.s32.totalorder %s111, %s114
    %p123 = scmp.eq.s32.totalorder %s17, 1
    %p124 = por %p122, %p123
    %p125 = scmp.ne.s32.totalorder %s114, %s115
    %p126 = scmp.eq.s32.totalorder %s17, 0
    %p127 = por %p125, %p126
    %p128 = scmp.ne.s32.totalorder %s114, %s115
    %p129 = scmp.eq.s32.totalorder %s18, 1
    %p130 = por %p128, %p129
    %p132 = scmp.ne.s32.totalorder %s115, %s131
    %p133 = scmp.eq.s32.totalorder %s18, 0
    %p134 = por %p132, %p133
    %s135 = ssub.s32 %s12, %s19
    %p136 = scmp.eq.s32.totalorder %s135, 0
    %s138 = sadd.s32 %s137, 1
    %s139 = scalar_select %p136, %s137, %s138
    %p142 = pneg %p136
    %p143 = scmp.eq.s32.totalorder %s12, 1
    %p144 = por %p142, %p143
    %p145 = scmp.ne.s32.totalorder %s137, %s140
    %p146 = scmp.eq.s32.totalorder %s12, 0
    %p147 = por %p145, %p146
    %p148 = scmp.ne.s32.totalorder %s137, %s140
    %p149 = scmp.eq.s32.totalorder %s17, 1
    %p150 = por %p148, %p149
    %p151 = scmp.ne.s32.totalorder %s140, %s141
    %p152 = scmp.eq.s32.totalorder %s17, 0
    %p153 = por %p151, %p152
    %p154 = scmp.ne.s32.totalorder %s140, %s141
    %p155 = scmp.eq.s32.totalorder %s18, 1
    %p156 = por %p154, %p155
    %p158 = scmp.ne.s32.totalorder %s141, %s157
    %p159 = scmp.eq.s32.totalorder %s18, 0
    %p160 = por %p158, %p159
    %p161 = scmp.le.s32.totalorder 1, %s12
    %p162 = scmp.lt.s32.totalorder %s12, 3
    %p163 = pnand %p161, %p162
    %p164 = pneg %p163
    // Predicated region
    $region9: #{inception_f6_forward.23} parent=5 // pred_check
      _
    $region10: #{inception_f6_forward.23} parent=5 // pred_check_branch
      %166 = sbr.rel (%p163) target = $region12
    $region11: #{inception_f6_forward.23} parent=5 // pred_region
      %s167 = ssub.s32 %s12, 1
      // Predicated region
      $region13: #{inception_f6_forward.23} parent=11 // pred_check
        %p168 = pneg %p59
      $region14: #{inception_f6_forward.23} parent=11 // pred_check_branch
        %170 = sbr.rel (%p168) target = $region16
      $region15: #{inception_f6_forward.23} parent=11 // pred_region
        _
      $region16: #{inception_f6_forward.23} parent=11 // pred_fallthru
        _
      // Predicated region
      $region17: #{inception_f6_forward.23} parent=11 // pred_check
        %p171 = pneg %p80
      $region18: #{inception_f6_forward.23} parent=11 // pred_check_branch
        %173 = sbr.rel (%p171) target = $region20
      $region19: #{inception_f6_forward.23} parent=11 // pred_region
        _
      $region20: #{inception_f6_forward.23} parent=11 // pred_fallthru
        _
      // Predicated region
      $region21: #{inception_f6_forward.23} parent=11 // pred_check
        %p174 = pneg %p101
      $region22: #{inception_f6_forward.23} parent=11 // pred_check_branch
        %176 = sbr.rel (%p174) target = $region24
      $region23: #{inception_f6_forward.23} parent=11 // pred_region
        _
      $region24: #{inception_f6_forward.23} parent=11 // pred_fallthru
        _
    $region12: #{inception_f6_forward.23} parent=5 // pred_fallthru
      _
    %p177 = scmp.lt.s32.totalorder %s12, 2
    // Predicated region
    $region25: #{inception_f6_forward.23} parent=5 // pred_check
      %p178 = pneg %p177
    $region26: #{inception_f6_forward.23} parent=5 // pred_check_branch
      %180 = sbr.rel (%p178) target = $region28
    $region27: #{inception_f6_forward.23} parent=5 // pred_region
      // Predicated region
      $region29: #{inception_f6_forward.23} parent=27 // pred_check
        %p181 = pneg %p32
      $region30: #{inception_f6_forward.23} parent=27 // pred_check_branch
        %183 = sbr.rel (%p181) target = $region32
      $region31: #{inception_f6_forward.23} parent=27 // pred_region
        %p184 = scmp.lt.s32.totalorder %s12, 1
        %s185 = scalar_select %p184, %s12, 1
        %s186 = smul.addr %s185, 32
        %s187 = smul.addr %s186, 4
        %s188 = scalar_lea.vmem %s0, %s187
      $region32: #{inception_f6_forward.23} parent=27 // pred_fallthru
        _
    $region28: #{inception_f6_forward.23} parent=5 // pred_fallthru
      _
    %p189 = scmp.le.s32.totalorder 1, %s12
    %p190 = scmp.lt.s32.totalorder %s12, 3
    %p191 = pnand %p189, %p190
    %p192 = pneg %p191
    // Predicated region
    $region33: #{inception_f6_forward.23} parent=5 // pred_check
      _
    $region34: #{inception_f6_forward.23} parent=5 // pred_check_branch
      %194 = sbr.rel (%p191) target = $region36
    $region35: #{inception_f6_forward.23} parent=5 // pred_region
      %s195 = ssub.s32 %s12, 1
      %p196 = scmp.lt.s32.totalorder %s17, 1
      %s197 = scalar_select %p196, %s17, 1
      %s198 = smul.addr %s197, 32
      %s199 = smul.addr %s198, 4
      %s200 = scalar_lea.vmem %s0, %s199
      %p201 = pneg %p38
      %p202 = pneg %p35
      %p203 = pneg %p59
      %p204 = pneg %p56
      %p205 = pneg %p80
      %p206 = pneg %p77
      %p207 = pneg %p101
      %p208 = pneg %p98
      %p209 = pneg %p127
      %p210 = pneg %p124
      %p211 = scmp.lt.s32.totalorder %s17, 1
      %s212 = scalar_select %p211, %s17, 1
      %s213 = smul.addr %s212, 64
      %s214 = smul.addr %s213, 4
      %s215 = scalar_lea.vmem %s4, %s214
      %p216 = pneg %p153
      %p217 = pneg %p150
      %p218 = scmp.lt.s32.totalorder %s17, 1
      %s219 = scalar_select %p218, %s17, 1
      %s220 = smul.addr %s219, 2
      %s221 = smul.addr %s220, 2
      %s222 = scalar_lea.vmem %s5, %s221
      %p223 = scmp.lt.s32.totalorder %s17, 1
      %s224 = scalar_select %p223, %s17, 1
      %s225 = smul.addr %s224, 32
      %s226 = smul.addr %s225, 4
      %s227 = scalar_lea.vmem %s0, %s226
      %p228 = scmp.lt.s32.totalorder %s17, 1
      %s229 = scalar_select %p228, %s17, 1
      %s230 = smul.addr %s229, 64
      %s231 = smul.addr %s230, 4
      %s232 = scalar_lea.vmem %s4, %s231
      %p233 = scmp.lt.s32.totalorder %s17, 1
      %s234 = scalar_select %p233, %s17, 1
      %s235 = smul.addr %s234, 2
      %s236 = smul.addr %s235, 2
      %s237 = scalar_lea.vmem %s5, %s236
      %v239 = vld [vmem:[%s227] sm:$0xf]
      %v240 = vld [vmem:[%s227 + $0x4] sm:$0xf]
      %v241 = vld [vmem:[%s227 + $0x8] sm:$0xf]
      %v242 = vld [vmem:[%s227 + $0xc] sm:$0xf]
      %v243 = vld [vmem:[%s227 + $0x10] sm:$0xf]
      %v244 = vld [vmem:[%s227 + $0x14] sm:$0xf]
      %v245 = vld [vmem:[%s227 + $0x18] sm:$0xf]
      %v246 = vld [vmem:[%s227 + $0x1c] sm:$0xf]
      %v247 = vld [vmem:[%s227 + $0x20] sm:$0xf]
      %v248 = vld [vmem:[%s227 + $0x24] sm:$0xf]
      %v249 = vld [vmem:[%s227 + $0x28] sm:$0xf]
      %v250 = vld [vmem:[%s227 + $0x2c] sm:$0xf]
      %v251 = vld [vmem:[%s227 + $0x30] sm:$0xf]
      %v252 = vld [vmem:[%s227 + $0x34] sm:$0xf]
      %v253 = vld [vmem:[%s227 + $0x38] sm:$0xf]
      %v254 = vld [vmem:[%s227 + $0x3c] sm:$0xf]
      %v255 = vld [vmem:[%s227 + $0x40] sm:$0xf]
      %v256 = vld [vmem:[%s227 + $0x44] sm:$0xf]
      %v257 = vld [vmem:[%s227 + $0x48] sm:$0xf]
      %v258 = vld [vmem:[%s227 + $0x4c] sm:$0xf]
      %v259 = vld [vmem:[%s227 + $0x50] sm:$0xf]
      %v260 = vld [vmem:[%s227 + $0x54] sm:$0xf]
      %v261 = vld [vmem:[%s227 + $0x58] sm:$0xf]
      %v262 = vld [vmem:[%s227 + $0x5c] sm:$0xf]
      %v263 = vld [vmem:[%s227 + $0x60] sm:$0xf]
      %v264 = vld [vmem:[%s227 + $0x64] sm:$0xf]
      %v265 = vld [vmem:[%s227 + $0x68] sm:$0xf]
      %v266 = vld [vmem:[%s227 + $0x6c] sm:$0xf]
      %v267 = vld [vmem:[%s227 + $0x70] sm:$0xf]
      %v268 = vld [vmem:[%s227 + $0x74] sm:$0xf]
      %v269 = vld [vmem:[%s227 + $0x78] sm:$0xf]
      %v270 = vld [vmem:[%s227 + $0x7c] sm:$0xf]
      %v271 = vunpack.c.l.bf16 %v239
      %v272 = vunpack.c.l.bf16 %v240
      %v273 = vunpack.c.l.bf16 %v241
      %v274 = vunpack.c.l.bf16 %v242
      %v275 = vunpack.c.l.bf16 %v243
      %v276 = vunpack.c.l.bf16 %v244
      %v277 = vunpack.c.l.bf16 %v245
      %v278 = vunpack.c.l.bf16 %v246
      %v279 = vunpack.c.l.bf16 %v247
      %v280 = vunpack.c.l.bf16 %v248
      %v281 = vunpack.c.l.bf16 %v249
      %v282 = vunpack.c.l.bf16 %v250
      %v283 = vunpack.c.l.bf16 %v251
      %v284 = vunpack.c.l.bf16 %v252
      %v285 = vunpack.c.l.bf16 %v253
      %v286 = vunpack.c.l.bf16 %v254
      %v287 = vunpack.c.l.bf16 %v255
      %v288 = vunpack.c.l.bf16 %v256
      %v289 = vunpack.c.l.bf16 %v257
      %v290 = vunpack.c.l.bf16 %v258
      %v291 = vunpack.c.l.bf16 %v259
      %v292 = vunpack.c.l.bf16 %v260
      %v293 = vunpack.c.l.bf16 %v261
      %v294 = vunpack.c.l.bf16 %v262
      %v295 = vunpack.c.l.bf16 %v263
      %v296 = vunpack.c.l.bf16 %v264
      %v297 = vunpack.c.l.bf16 %v265
      %v298 = vunpack.c.l.bf16 %v266
      %v299 = vunpack.c.l.bf16 %v267
      %v300 = vunpack.c.l.bf16 %v268
      %v301 = vunpack.c.l.bf16 %v269
      %v302 = vunpack.c.l.bf16 %v270
      %v303 = vld [vmem:[%s2] sm:$0x1]
      %v305 = vlaneseq
      %v306 = vshrl.u32 %v305, 7
      %v307 = vsub.s32 0, %v306
      %v308 = vrot.slane %v303, %v307
      %v310 = vmul.f32 %v271, %v308
      %v311 = vmul.f32 %v272, %v308
      %v312 = vmul.f32 %v273, %v308
      %v313 = vmul.f32 %v274, %v308
      %v314 = vmul.f32 %v275, %v308
      %v315 = vmul.f32 %v276, %v308
      %v316 = vmul.f32 %v277, %v308
      %v317 = vmul.f32 %v278, %v308
      %v318 = vmul.f32 %v279, %v308
      %v319 = vmul.f32 %v280, %v308
      %v320 = vmul.f32 %v281, %v308
      %v321 = vmul.f32 %v282, %v308
      %v322 = vmul.f32 %v283, %v308
      %v323 = vmul.f32 %v284, %v308
      %v324 = vmul.f32 %v285, %v308
      %v325 = vmul.f32 %v286, %v308
      %v326 = vmul.f32 %v287, %v308
      %v327 = vmul.f32 %v288, %v308
      %v328 = vmul.f32 %v289, %v308
      %v329 = vmul.f32 %v290, %v308
      %v330 = vmul.f32 %v291, %v308
      %v331 = vmul.f32 %v292, %v308
      %v332 = vmul.f32 %v293, %v308
      %v333 = vmul.f32 %v294, %v308
      %v334 = vmul.f32 %v295, %v308
      %v335 = vmul.f32 %v296, %v308
      %v336 = vmul.f32 %v297, %v308
      %v337 = vmul.f32 %v298, %v308
      %v338 = vmul.f32 %v299, %v308
      %v339 = vmul.f32 %v300, %v308
      %v340 = vmul.f32 %v301, %v308
      %v341 = vmul.f32 %v302, %v308
      %v342 = vld [vmem:[%s3] sm:$0x1]
      %v344 = vlaneseq
      %v345 = vshrl.u32 %v344, 7
      %v346 = vsub.s32 0, %v345
      %v347 = vrot.slane %v342, %v346
      %v349 = vadd.f32 %v310, %v347
      %v350 = vadd.f32 %v311, %v347
      %v351 = vadd.f32 %v312, %v347
      %v352 = vadd.f32 %v313, %v347
      %v353 = vadd.f32 %v314, %v347
      %v354 = vadd.f32 %v315, %v347
      %v355 = vadd.f32 %v316, %v347
      %v356 = vadd.f32 %v317, %v347
      %v357 = vadd.f32 %v318, %v347
      %v358 = vadd.f32 %v319, %v347
      %v359 = vadd.f32 %v320, %v347
      %v360 = vadd.f32 %v321, %v347
      %v361 = vadd.f32 %v322, %v347
      %v362 = vadd.f32 %v323, %v347
      %v363 = vadd.f32 %v324, %v347
      %v364 = vadd.f32 %v325, %v347
      %v365 = vadd.f32 %v326, %v347
      %v366 = vadd.f32 %v327, %v347
      %v367 = vadd.f32 %v328, %v347
      %v368 = vadd.f32 %v329, %v347
      %v369 = vadd.f32 %v330, %v347
      %v370 = vadd.f32 %v331, %v347
      %v371 = vadd.f32 %v332, %v347
      %v372 = vadd.f32 %v333, %v347
      %v373 = vadd.f32 %v334, %v347
      %v374 = vadd.f32 %v335, %v347
      %v375 = vadd.f32 %v336, %v347
      %v376 = vadd.f32 %v337, %v347
      %v377 = vadd.f32 %v338, %v347
      %v378 = vadd.f32 %v339, %v347
      %v379 = vadd.f32 %v340, %v347
      %v380 = vadd.f32 %v341, %v347
      %v381 = vmax.f32 %v349, 0.0
      %v382 = vmax.f32 %v350, 0.0
      %v383 = vmax.f32 %v351, 0.0
      %v384 = vmax.f32 %v352, 0.0
      %v385 = vmax.f32 %v353, 0.0
      %v386 = vmax.f32 %v354, 0.0
      %v387 = vmax.f32 %v355, 0.0
      %v388 = vmax.f32 %v356, 0.0
      %v389 = vmax.f32 %v357, 0.0
      %v390 = vmax.f32 %v358, 0.0
      %v391 = vmax.f32 %v359, 0.0
      %v392 = vmax.f32 %v360, 0.0
      %v393 = vmax.f32 %v361, 0.0
      %v394 = vmax.f32 %v362, 0.0
      %v395 = vmax.f32 %v363, 0.0
      %v396 = vmax.f32 %v364, 0.0
      %v397 = vmax.f32 %v365, 0.0
      %v398 = vmax.f32 %v366, 0.0
      %v399 = vmax.f32 %v367, 0.0
      %v400 = vmax.f32 %v368, 0.0
      %v401 = vmax.f32 %v369, 0.0
      %v402 = vmax.f32 %v370, 0.0
      %v403 = vmax.f32 %v371, 0.0
      %v404 = vmax.f32 %v372, 0.0
      %v405 = vmax.f32 %v373, 0.0
      %v406 = vmax.f32 %v374, 0.0
      %v407 = vmax.f32 %v375, 0.0
      %v408 = vmax.f32 %v376, 0.0
      %v409 = vmax.f32 %v377, 0.0
      %v410 = vmax.f32 %v378, 0.0
      %v411 = vmax.f32 %v379, 0.0
      %v412 = vmax.f32 %v380, 0.0
      %v413 = vpack.c.bf16 %v382, %v381
      %v414 = vpack.c.bf16 %v384, %v383
      %v415 = vpack.c.bf16 %v386, %v385
      %v416 = vpack.c.bf16 %v388, %v387
      %v417 = vpack.c.bf16 %v390, %v389
      %v418 = vpack.c.bf16 %v392, %v391
      %v419 = vpack.c.bf16 %v394, %v393
      %v420 = vpack.c.bf16 %v396, %v395
      %v421 = vpack.c.bf16 %v398, %v397
      %v422 = vpack.c.bf16 %v400, %v399
      %v423 = vpack.c.bf16 %v402, %v401
      %v424 = vpack.c.bf16 %v404, %v403
      %v425 = vpack.c.bf16 %v406, %v405
      %v426 = vpack.c.bf16 %v408, %v407
      %v427 = vpack.c.bf16 %v410, %v409
      %v428 = vpack.c.bf16 %v412, %v411
      %444 = vrot.lane.b32.xlu0 0, 8
      %v445 = vpop.permute.xlu0 %444
      %446 = vrot.lane.b32.xlu0 %v413, 8
      %v447 = vpop.permute.xlu0 %446
      %448 = vrot.lane.b32.xlu0 %v414, 8
      %v449 = vpop.permute.xlu0 %448
      %450 = vrot.lane.b32.xlu0 %v415, 8
      %v451 = vpop.permute.xlu0 %450
      %452 = vrot.lane.b32.xlu0 %v416, 8
      %v453 = vpop.permute.xlu0 %452
      %454 = vrot.lane.b32.xlu0 %v417, 8
      %v455 = vpop.permute.xlu0 %454
      %456 = vrot.lane.b32.xlu0 %v418, 8
      %v457 = vpop.permute.xlu0 %456
      %458 = vrot.lane.b32.xlu0 %v419, 8
      %v459 = vpop.permute.xlu0 %458
      %460 = vrot.lane.b32.xlu0 %v420, 8
      %v461 = vpop.permute.xlu0 %460
      %462 = vrot.lane.b32.xlu0 %v421, 8
      %v463 = vpop.permute.xlu0 %462
      %464 = vrot.lane.b32.xlu0 %v422, 8
      %v465 = vpop.permute.xlu0 %464
      %466 = vrot.lane.b32.xlu0 %v423, 8
      %v467 = vpop.permute.xlu0 %466
      %468 = vrot.lane.b32.xlu0 %v424, 8
      %v469 = vpop.permute.xlu0 %468
      %470 = vrot.lane.b32.xlu0 %v425, 8
      %v471 = vpop.permute.xlu0 %470
      %472 = vrot.lane.b32.xlu0 %v426, 8
      %v473 = vpop.permute.xlu0 %472
      %475 = vrot.lane.b32.xlu0 0, 16
      %v476 = vpop.permute.xlu0 %475
      %477 = vrot.lane.b32.xlu0 %v413, 16
      %v478 = vpop.permute.xlu0 %477
      %479 = vrot.lane.b32.xlu0 %v414, 16
      %v480 = vpop.permute.xlu0 %479
      %481 = vrot.lane.b32.xlu0 %v415, 16
      %v482 = vpop.permute.xlu0 %481
      %483 = vrot.lane.b32.xlu0 %v416, 16
      %v484 = vpop.permute.xlu0 %483
      %485 = vrot.lane.b32.xlu0 %v417, 16
      %v486 = vpop.permute.xlu0 %485
      %487 = vrot.lane.b32.xlu0 %v418, 16
      %v488 = vpop.permute.xlu0 %487
      %489 = vrot.lane.b32.xlu0 %v419, 16
      %v490 = vpop.permute.xlu0 %489
      %491 = vrot.lane.b32.xlu0 %v420, 16
      %v492 = vpop.permute.xlu0 %491
      %493 = vrot.lane.b32.xlu0 %v421, 16
      %v494 = vpop.permute.xlu0 %493
      %495 = vrot.lane.b32.xlu0 %v422, 16
      %v496 = vpop.permute.xlu0 %495
      %497 = vrot.lane.b32.xlu0 %v423, 16
      %v498 = vpop.permute.xlu0 %497
      %499 = vrot.lane.b32.xlu0 %v424, 16
      %v500 = vpop.permute.xlu0 %499
      %501 = vrot.lane.b32.xlu0 %v425, 16
      %v502 = vpop.permute.xlu0 %501
      %503 = vrot.lane.b32.xlu0 %v426, 16
      %v504 = vpop.permute.xlu0 %503
      %505 = vrot.lane.b32.xlu0 %v427, 16
      %v506 = vpop.permute.xlu0 %505
      %508 = vrot.lane.b32.xlu0 %v413, 24
      %v509 = vpop.permute.xlu0 %508
      %510 = vrot.lane.b32.xlu0 %v414, 24
      %v511 = vpop.permute.xlu0 %510
      %512 = vrot.lane.b32.xlu0 %v415, 24
      %v513 = vpop.permute.xlu0 %512
      %514 = vrot.lane.b32.xlu0 %v416, 24
      %v515 = vpop.permute.xlu0 %514
      %516 = vrot.lane.b32.xlu0 %v417, 24
      %v517 = vpop.permute.xlu0 %516
      %518 = vrot.lane.b32.xlu0 %v418, 24
      %v519 = vpop.permute.xlu0 %518
      %520 = vrot.lane.b32.xlu0 %v419, 24
      %v521 = vpop.permute.xlu0 %520
      %522 = vrot.lane.b32.xlu0 %v420, 24
      %v523 = vpop.permute.xlu0 %522
      %524 = vrot.lane.b32.xlu0 %v421, 24
      %v525 = vpop.permute.xlu0 %524
      %526 = vrot.lane.b32.xlu0 %v422, 24
      %v527 = vpop.permute.xlu0 %526
      %528 = vrot.lane.b32.xlu0 %v423, 24
      %v529 = vpop.permute.xlu0 %528
      %530 = vrot.lane.b32.xlu0 %v424, 24
      %v531 = vpop.permute.xlu0 %530
      %532 = vrot.lane.b32.xlu0 %v425, 24
      %v533 = vpop.permute.xlu0 %532
      %534 = vrot.lane.b32.xlu0 %v426, 24
      %v535 = vpop.permute.xlu0 %534
      %536 = vrot.lane.b32.xlu0 %v427, 24
      %v537 = vpop.permute.xlu0 %536
      %538 = vrot.lane.b32.xlu0 %v428, 24
      %v539 = vpop.permute.xlu0 %538
      %540 = vrot.lane.b32.xlu0 %v414, 32
      %v541 = vpop.permute.xlu0 %540
      %542 = vrot.lane.b32.xlu0 %v415, 32
      %v543 = vpop.permute.xlu0 %542
      %544 = vrot.lane.b32.xlu0 %v416, 32
      %v545 = vpop.permute.xlu0 %544
      %546 = vrot.lane.b32.xlu0 %v417, 32
      %v547 = vpop.permute.xlu0 %546
      %548 = vrot.lane.b32.xlu0 %v418, 32
      %v549 = vpop.permute.xlu0 %548
      %550 = vrot.lane.b32.xlu0 %v419, 32
      %v551 = vpop.permute.xlu0 %550
      %552 = vrot.lane.b32.xlu0 %v420, 32
      %v553 = vpop.permute.xlu0 %552
      %554 = vrot.lane.b32.xlu0 %v421, 32
      %v555 = vpop.permute.xlu0 %554
      %556 = vrot.lane.b32.xlu0 %v422, 32
      %v557 = vpop.permute.xlu0 %556
      %558 = vrot.lane.b32.xlu0 %v423, 32
      %v559 = vpop.permute.xlu0 %558
      %560 = vrot.lane.b32.xlu0 %v424, 32
      %v561 = vpop.permute.xlu0 %560
      %562 = vrot.lane.b32.xlu0 %v425, 32
      %v563 = vpop.permute.xlu0 %562
      %564 = vrot.lane.b32.xlu0 %v426, 32
      %v565 = vpop.permute.xlu0 %564
      %566 = vrot.lane.b32.xlu0 %v427, 32
      %v567 = vpop.permute.xlu0 %566
      %568 = vrot.lane.b32.xlu0 %v428, 32
      %v569 = vpop.permute.xlu0 %568
      %570 = vrot.lane.b32.xlu0 0, 32
      %v571 = vpop.permute.xlu0 %570
      %572 = vrot.lane.b32.xlu0 %v415, 40
      %v573 = vpop.permute.xlu0 %572
      %574 = vrot.lane.b32.xlu0 %v416, 40
      %v575 = vpop.permute.xlu0 %574
      %576 = vrot.lane.b32.xlu0 %v417, 40
      %v577 = vpop.permute.xlu0 %576
      %578 = vrot.lane.b32.xlu0 %v418, 40
      %v579 = vpop.permute.xlu0 %578
      %580 = vrot.lane.b32.xlu0 %v419, 40
      %v581 = vpop.permute.xlu0 %580
      %582 = vrot.lane.b32.xlu0 %v420, 40
      %v583 = vpop.permute.xlu0 %582
      %584 = vrot.lane.b32.xlu0 %v421, 40
      %v585 = vpop.permute.xlu0 %584
      %586 = vrot.lane.b32.xlu0 %v422, 40
      %v587 = vpop.permute.xlu0 %586
      %588 = vrot.lane.b32.xlu0 %v423, 40
      %v589 = vpop.permute.xlu0 %588
      %590 = vrot.lane.b32.xlu0 %v424, 40
      %v591 = vpop.permute.xlu0 %590
      %592 = vrot.lane.b32.xlu0 %v425, 40
      %v593 = vpop.permute.xlu0 %592
      %594 = vrot.lane.b32.xlu0 %v426, 40
      %v595 = vpop.permute.xlu0 %594
      %596 = vrot.lane.b32.xlu0 %v427, 40
      %v597 = vpop.permute.xlu0 %596
      %598 = vrot.lane.b32.xlu0 %v428, 40
      %v599 = vpop.permute.xlu0 %598
      %600 = vrot.lane.b32.xlu0 0, 40
      %v601 = vpop.permute.xlu0 %600
      %602 = vrot.lane.b32.xlu0 %v416, 48
      %v603 = vpop.permute.xlu0 %602
      %604 = vrot.lane.b32.xlu0 %v417, 48
      %v605 = vpop.permute.xlu0 %604
      %606 = vrot.lane.b32.xlu0 %v418, 48
      %v607 = vpop.permute.xlu0 %606
      %608 = vrot.lane.b32.xlu0 %v419, 48
      %v609 = vpop.permute.xlu0 %608
      %610 = vrot.lane.b32.xlu0 %v420, 48
      %v611 = vpop.permute.xlu0 %610
      %612 = vrot.lane.b32.xlu0 %v421, 48
      %v613 = vpop.permute.xlu0 %612
      %614 = vrot.lane.b32.xlu0 %v422, 48
      %v615 = vpop.permute.xlu0 %614
      %616 = vrot.lane.b32.xlu0 %v423, 48
      %v617 = vpop.permute.xlu0 %616
      %618 = vrot.lane.b32.xlu0 %v424, 48
      %v619 = vpop.permute.xlu0 %618
      %620 = vrot.lane.b32.xlu0 %v425, 48
      %v621 = vpop.permute.xlu0 %620
      %622 = vrot.lane.b32.xlu0 %v426, 48
      %v623 = vpop.permute.xlu0 %622
      %624 = vrot.lane.b32.xlu0 %v427, 48
      %v625 = vpop.permute.xlu0 %624
      %626 = vrot.lane.b32.xlu0 %v428, 48
      %v627 = vpop.permute.xlu0 %626
      %628 = vrot.lane.b32.xlu0 0, 48
      %v629 = vpop.permute.xlu0 %628
      %vm630 = vcmask 64512
      %v633 = vsel %vm630, 0, %v445
      %v635 = vsel %vm630, 0, %v447
      %v638 = vsel %vm630, %v413, %v449
      %v641 = vsel %vm630, %v414, %v451
      %v644 = vsel %vm630, %v415, %v453
      %v647 = vsel %vm630, %v416, %v455
      %v650 = vsel %vm630, %v417, %v457
      %v653 = vsel %vm630, %v418, %v459
      %v656 = vsel %vm630, %v419, %v461
      %v659 = vsel %vm630, %v420, %v463
      %v662 = vsel %vm630, %v421, %v465
      %v665 = vsel %vm630, %v422, %v467
      %v668 = vsel %vm630, %v423, %v469
      %v671 = vsel %vm630, %v424, %v471
      %v674 = vsel %vm630, %v425, %v473
      %vm675 = vcmask 130048
      %v677 = vsel %vm675, %v633, %v476
      %v679 = vsel %vm675, %v633, %v478
      %v681 = vsel %vm675, %v635, %v480
      %v683 = vsel %vm675, %v638, %v482
      %v685 = vsel %vm675, %v641, %v484
      %v687 = vsel %vm675, %v644, %v486
      %v689 = vsel %vm675, %v647, %v488
      %v691 = vsel %vm675, %v650, %v490
      %v693 = vsel %vm675, %v653, %v492
      %v695 = vsel %vm675, %v656, %v494
      %v697 = vsel %vm675, %v659, %v496
      %v699 = vsel %vm675, %v662, %v498
      %v701 = vsel %vm675, %v665, %v500
      %v703 = vsel %vm675, %v668, %v502
      %v705 = vsel %vm675, %v671, %v504
      %v707 = vsel %vm675, %v674, %v506
      %vm708 = vcmask 195584
      %v710 = vsel %vm708, %v677, %v509
      %v712 = vsel %vm708, %v679, %v511
      %v714 = vsel %vm708, %v681, %v513
      %v716 = vsel %vm708, %v683, %v515
      %v718 = vsel %vm708, %v685, %v517
      %v720 = vsel %vm708, %v687, %v519
      %v722 = vsel %vm708, %v689, %v521
      %v724 = vsel %vm708, %v691, %v523
      %v726 = vsel %vm708, %v693, %v525
      %v728 = vsel %vm708, %v695, %v527
      %v730 = vsel %vm708, %v697, %v529
      %v732 = vsel %vm708, %v699, %v531
      %v734 = vsel %vm708, %v701, %v533
      %v736 = vsel %vm708, %v703, %v535
      %v738 = vsel %vm708, %v705, %v537
      %v740 = vsel %vm708, %v707, %v539
      %vm741 = vcmask 261120
      %v743 = vsel %vm741, %v710, %v541
      %v745 = vsel %vm741, %v712, %v543
      %v747 = vsel %vm741, %v714, %v545
      %v749 = vsel %vm741, %v716, %v547
      %v751 = vsel %vm741, %v718, %v549
      %v753 = vsel %vm741, %v720, %v551
      %v755 = vsel %vm741, %v722, %v553
      %v757 = vsel %vm741, %v724, %v555
      %v759 = vsel %vm741, %v726, %v557
      %v761 = vsel %vm741, %v728, %v559
      %v763 = vsel %vm741, %v730, %v561
      %v765 = vsel %vm741, %v732, %v563
      %v767 = vsel %vm741, %v734, %v565
      %v769 = vsel %vm741, %v736, %v567
      %v771 = vsel %vm741, %v738, %v569
      %v773 = vsel %vm741, %v740, %v571
      %vm774 = vcmask 326656
      %v776 = vsel %vm774, %v743, %v573
      %v778 = vsel %vm774, %v745, %v575
      %v780 = vsel %vm774, %v747, %v577
      %v782 = vsel %vm774, %v749, %v579
      %v784 = vsel %vm774, %v751, %v581
      %v786 = vsel %vm774, %v753, %v583
      %v788 = vsel %vm774, %v755, %v585
      %v790 = vsel %vm774, %v757, %v587
      %v792 = vsel %vm774, %v759, %v589
      %v794 = vsel %vm774, %v761, %v591
      %v796 = vsel %vm774, %v763, %v593
      %v798 = vsel %vm774, %v765, %v595
      %v800 = vsel %vm774, %v767, %v597
      %v802 = vsel %vm774, %v769, %v599
      %v804 = vsel %vm774, %v771, %v601
      %v805 = vsel %vm774, %v773, %v601
      %vm806 = vcmask 392192
      %v808 = vsel %vm806, %v776, %v603
      %v810 = vsel %vm806, %v778, %v605
      %v812 = vsel %vm806, %v780, %v607
      %v814 = vsel %vm806, %v782, %v609
      %v816 = vsel %vm806, %v784, %v611
      %v818 = vsel %vm806, %v786, %v613
      %v820 = vsel %vm806, %v788, %v615
      %v822 = vsel %vm806, %v790, %v617
      %v824 = vsel %vm806, %v792, %v619
      %v826 = vsel %vm806, %v794, %v621
      %v828 = vsel %vm806, %v796, %v623
      %v830 = vsel %vm806, %v798, %v625
      %v832 = vsel %vm806, %v800, %v627
      %v834 = vsel %vm806, %v802, %v629
      %v835 = vsel %vm806, %v804, %v629
      %v836 = vsel %vm806, %v805, %v629
      %v837 = vld [vmem:[%s1] sm:$0xff]
      %v838 = vld [vmem:[%s1 + $0x8] sm:$0xff]
      %v839 = vld [vmem:[%s1 + $0x10] sm:$0xff]
      %v840 = vld [vmem:[%s1 + $0x18] sm:$0xff]
      %v841 = vld [vmem:[%s1 + $0x20] sm:$0xff]
      %v842 = vld [vmem:[%s1 + $0x28] sm:$0xff]
      %v843 = vld [vmem:[%s1 + $0x30] sm:$0xff]
      %v851 = vunpack.c.l.b16 %v837
      %v852 = vunpack.c.h.b16 %v837
      %v853 = vunpack.c.l.b16 %v838
      %v854 = vunpack.c.h.b16 %v838
      %v855 = vunpack.c.l.b16 %v839
      %v856 = vunpack.c.h.b16 %v839
      %v857 = vunpack.c.l.b16 %v840
      %v858 = vunpack.c.h.b16 %v840
      %v859 = vunpack.c.l.b16 %v841
      %v860 = vunpack.c.h.b16 %v841
      %v861 = vunpack.c.l.b16 %v842
      %v862 = vunpack.c.h.b16 %v842
      %v863 = vunpack.c.l.b16 %v843
      %v864 = vunpack.c.h.b16 %v843
      %v865 = vpack.c.b16 %v853, %v851
      %v866 = vpack.c.b16 %v854, %v852
      %v867 = vpack.c.b16 %v857, %v855
      %v868 = vpack.c.b16 %v858, %v856
      %v869 = vpack.c.b16 %v861, %v859
      %v870 = vpack.c.b16 %v862, %v860
      %v871 = vpack.c.b16 %v863, %v863
      %v872 = vpack.c.b16 %v864, %v864
      %vm879 = vcmask 457728
      %v880 = vsel %vm879, %v808, 0
      %v882 = vsel %vm879, %v810, 0
      %v884 = vsel %vm879, %v812, 0
      %v886 = vsel %vm879, %v814, 0
      %v888 = vsel %vm879, %v816, 0
      %v890 = vsel %vm879, %v818, 0
      %v892 = vsel %vm879, %v820, 0
      %v894 = vsel %vm879, %v822, 0
      %v896 = vsel %vm879, %v824, 0
      %v898 = vsel %vm879, %v826, 0
      %v900 = vsel %vm879, %v828, 0
      %v902 = vsel %vm879, %v830, 0
      %v904 = vsel %vm879, %v832, 0
      %v906 = vsel %vm879, %v834, 0
      %v908 = vsel %vm879, %v835, 0
      %v910 = vsel %vm879, %v836, 0
      %vm912 = vcmask 1043456
      %v914 = vsel %vm912, %v871, 0
      %v917 = vsel %vm912, %v872, 0
      %919 = vmatprep.subr.bf16.mxu0 0
      %920 = vmatpush1.bf16.msra.mxu0 0
      %921 = vmatprep.subr.bf16.mxu0 0
      %922 = vmatpush1.bf16.msra.mxu0 0
      %923 = vmatprep.subr.bf16.mxu0 0
      %924 = vmatpush1.bf16.msra.mxu0 0
      %925 = vmatprep.subr.bf16.mxu0 0
      %926 = vmatpush1.bf16.msra.mxu0 0
      %927 = vmatprep.subr.bf16.mxu0 %v917
      %928 = vmatpush1.bf16.msra.mxu0 %v914
      %929 = vmatprep.subr.bf16.mxu0 %v870
      %930 = vmatpush1.bf16.msra.mxu0 %v869
      %931 = vmatprep.subr.bf16.mxu0 %v868
      %932 = vmatpush1.bf16.msra.mxu0 %v867
      %933 = vmatprep.subr.bf16.mxu0 %v866
      %934 = vmatpush1.bf16.msra.mxu0 %v865
      %935 = vmatprep.subr.bf16.mxu0 0
      %936 = vmatpush2.bf16.msra.mxu0 0
      %937 = vmatprep.subr.bf16.mxu0 0
      %938 = vmatpush2.bf16.msra.mxu0 0
      %939 = vmatprep.subr.bf16.mxu0 0
      %940 = vmatpush2.bf16.msra.mxu0 0
      %941 = vmatprep.subr.bf16.mxu0 0
      %942 = vmatpush2.bf16.msra.mxu0 0
      %943 = vmatprep.subr.bf16.mxu0 0
      %944 = vmatpush2.bf16.msra.mxu0 0
      %945 = vmatprep.subr.bf16.mxu0 0
      %946 = vmatpush2.bf16.msra.mxu0 0
      %947 = vmatprep.subr.bf16.mxu0 0
      %948 = vmatpush2.bf16.msra.mxu0 0
      %949 = vmatprep.subr.bf16.mxu0 0
      %950 = vmatpush2.bf16.msra.mxu0 0
      %951 = vmatprep.mubr.bf16.mxu0 0
      %952 = vmatmul.mubr.bf16.gmra.mxu0 %v880
      %v953 = vpop.f32.mrf.mxu0
      %v954 = vadd.f32 0.0, %v953
      %v955 = vpop.f32.mrf.mxu0
      %v956 = vadd.f32 0.0, %v955
      %v957 = vpop.f32.mrf.mxu0
      %v958 = vadd.f32 0.0, %v957
      %v959 = vpop.f32.mrf.mxu0
      %v960 = vadd.f32 0.0, %v959
      %961 = vmatprep.mubr.bf16.mxu0 0
      %962 = vmatmul.mubr.bf16.gmra.mxu0 %v882
      %v963 = vpop.f32.mrf.mxu0
      %v964 = vadd.f32 0.0, %v963
      %v965 = vpop.f32.mrf.mxu0
      %v966 = vadd.f32 0.0, %v965
      %v967 = vpop.f32.mrf.mxu0
      %v968 = vadd.f32 0.0, %v967
      %v969 = vpop.f32.mrf.mxu0
      %v970 = vadd.f32 0.0, %v969
      %971 = vmatprep.mubr.bf16.mxu0 0
      %972 = vmatmul.mubr.bf16.gmra.mxu0 %v884
      %v973 = vpop.f32.mrf.mxu0
      %v974 = vadd.f32 0.0, %v973
      %v975 = vpop.f32.mrf.mxu0
      %v976 = vadd.f32 0.0, %v975
      %v977 = vpop.f32.mrf.mxu0
      %v978 = vadd.f32 0.0, %v977
      %v979 = vpop.f32.mrf.mxu0
      %v980 = vadd.f32 0.0, %v979
      %981 = vmatprep.mubr.bf16.mxu0 0
      %982 = vmatmul.mubr.bf16.gmra.mxu0 %v886
      %v983 = vpop.f32.mrf.mxu0
      %v984 = vadd.f32 0.0, %v983
      %v985 = vpop.f32.mrf.mxu0
      %v986 = vadd.f32 0.0, %v985
      %v987 = vpop.f32.mrf.mxu0
      %v988 = vadd.f32 0.0, %v987
      %v989 = vpop.f32.mrf.mxu0
      %v990 = vadd.f32 0.0, %v989
      %991 = vmatprep.mubr.bf16.mxu0 0
      %992 = vmatmul.mubr.bf16.gmra.mxu0 %v888
      %v993 = vpop.f32.mrf.mxu0
      %v994 = vadd.f32 0.0, %v993
      %v995 = vpop.f32.mrf.mxu0
      %v996 = vadd.f32 0.0, %v995
      %v997 = vpop.f32.mrf.mxu0
      %v998 = vadd.f32 0.0, %v997
      %v999 = vpop.f32.mrf.mxu0
      %v1000 = vadd.f32 0.0, %v999
      %1001 = vmatprep.mubr.bf16.mxu0 0
      %1002 = vmatmul.mubr.bf16.gmra.mxu0 %v890
      %v1003 = vpop.f32.mrf.mxu0
      %v1004 = vadd.f32 0.0, %v1003
      %v1005 = vpop.f32.mrf.mxu0
      %v1006 = vadd.f32 0.0, %v1005
      %v1007 = vpop.f32.mrf.mxu0
      %v1008 = vadd.f32 0.0, %v1007
      %v1009 = vpop.f32.mrf.mxu0
      %v1010 = vadd.f32 0.0, %v1009
      %1011 = vmatprep.mubr.bf16.mxu0 0
      %1012 = vmatmul.mubr.bf16.gmra.mxu0 %v892
      %v1013 = vpop.f32.mrf.mxu0
      %v1014 = vadd.f32 0.0, %v1013
      %v1015 = vpop.f32.mrf.mxu0
      %v1016 = vadd.f32 0.0, %v1015
      %v1017 = vpop.f32.mrf.mxu0
      %v1018 = vadd.f32 0.0, %v1017
      %v1019 = vpop.f32.mrf.mxu0
      %v1020 = vadd.f32 0.0, %v1019
      %1021 = vmatprep.mubr.bf16.mxu0 0
      %1022 = vmatmul.mubr.bf16.gmra.mxu0 %v894
      %v1023 = vpop.f32.mrf.mxu0
      %v1024 = vadd.f32 0.0, %v1023
      %v1025 = vpop.f32.mrf.mxu0
      %v1026 = vadd.f32 0.0, %v1025
      %v1027 = vpop.f32.mrf.mxu0
      %v1028 = vadd.f32 0.0, %v1027
      %v1029 = vpop.f32.mrf.mxu0
      %v1030 = vadd.f32 0.0, %v1029
      %1031 = vmatprep.mubr.bf16.mxu0 0
      %1032 = vmatmul.mubr.bf16.gmra.mxu0 %v896
      %v1033 = vpop.f32.mrf.mxu0
      %v1034 = vadd.f32 0.0, %v1033
      %v1035 = vpop.f32.mrf.mxu0
      %v1036 = vadd.f32 0.0, %v1035
      %v1037 = vpop.f32.mrf.mxu0
      %v1038 = vadd.f32 0.0, %v1037
      %v1039 = vpop.f32.mrf.mxu0
      %v1040 = vadd.f32 0.0, %v1039
      %1041 = vmatprep.mubr.bf16.mxu0 0
      %1042 = vmatmul.mubr.bf16.gmra.mxu0 %v898
      %v1043 = vpop.f32.mrf.mxu0
      %v1044 = vadd.f32 0.0, %v1043
      %v1045 = vpop.f32.mrf.mxu0
      %v1046 = vadd.f32 0.0, %v1045
      %v1047 = vpop.f32.mrf.mxu0
      %v1048 = vadd.f32 0.0, %v1047
      %v1049 = vpop.f32.mrf.mxu0
      %v1050 = vadd.f32 0.0, %v1049
      %1051 = vmatprep.mubr.bf16.mxu0 0
      %1052 = vmatmul.mubr.bf16.gmra.mxu0 %v900
      %v1053 = vpop.f32.mrf.mxu0
      %v1054 = vadd.f32 0.0, %v1053
      %v1055 = vpop.f32.mrf.mxu0
      %v1056 = vadd.f32 0.0, %v1055
      %v1057 = vpop.f32.mrf.mxu0
      %v1058 = vadd.f32 0.0, %v1057
      %v1059 = vpop.f32.mrf.mxu0
      %v1060 = vadd.f32 0.0, %v1059
      %1061 = vmatprep.mubr.bf16.mxu0 0
      %1062 = vmatmul.mubr.bf16.gmra.mxu0 %v902
      %v1063 = vpop.f32.mrf.mxu0
      %v1064 = vadd.f32 0.0, %v1063
      %v1065 = vpop.f32.mrf.mxu0
      %v1066 = vadd.f32 0.0, %v1065
      %v1067 = vpop.f32.mrf.mxu0
      %v1068 = vadd.f32 0.0, %v1067
      %v1069 = vpop.f32.mrf.mxu0
      %v1070 = vadd.f32 0.0, %v1069
      %1071 = vmatprep.mubr.bf16.mxu0 0
      %1072 = vmatmul.mubr.bf16.gmra.mxu0 %v904
      %v1073 = vpop.f32.mrf.mxu0
      %v1074 = vadd.f32 0.0, %v1073
      %v1075 = vpop.f32.mrf.mxu0
      %v1076 = vadd.f32 0.0, %v1075
      %v1077 = vpop.f32.mrf.mxu0
      %v1078 = vadd.f32 0.0, %v1077
      %v1079 = vpop.f32.mrf.mxu0
      %v1080 = vadd.f32 0.0, %v1079
      %1081 = vmatprep.mubr.bf16.mxu0 0
      %1082 = vmatmul.mubr.bf16.gmra.mxu0 %v906
      %v1083 = vpop.f32.mrf.mxu0
      %v1084 = vadd.f32 0.0, %v1083
      %v1085 = vpop.f32.mrf.mxu0
      %v1086 = vadd.f32 0.0, %v1085
      %v1087 = vpop.f32.mrf.mxu0
      %v1088 = vadd.f32 0.0, %v1087
      %v1089 = vpop.f32.mrf.mxu0
      %v1090 = vadd.f32 0.0, %v1089
      %1091 = vmatprep.mubr.bf16.mxu0 0
      %1092 = vmatmul.mubr.bf16.gmra.mxu0 %v908
      %v1093 = vpop.f32.mrf.mxu0
      %v1094 = vadd.f32 0.0, %v1093
      %v1095 = vpop.f32.mrf.mxu0
      %v1096 = vadd.f32 0.0, %v1095
      %v1097 = vpop.f32.mrf.mxu0
      %v1098 = vadd.f32 0.0, %v1097
      %v1099 = vpop.f32.mrf.mxu0
      %v1100 = vadd.f32 0.0, %v1099
      %1101 = vmatprep.mubr.bf16.mxu0 0
      %1102 = vmatmul.mubr.bf16.gmra.mxu0 %v910
      %v1103 = vpop.f32.mrf.mxu0
      %v1104 = vadd.f32 0.0, %v1103
      %v1105 = vpop.f32.mrf.mxu0
      %v1106 = vadd.f32 0.0, %v1105
      %v1107 = vpop.f32.mrf.mxu0
      %v1108 = vadd.f32 0.0, %v1107
      %v1109 = vpop.f32.mrf.mxu0
      %v1110 = vadd.f32 0.0, %v1109
      %1111 = vdwg.mxu0
      %v1112 = vpack.c.bf16 %v958, %v954
      %v1113 = vpack.c.bf16 %v960, %v956
      %v1114 = vpack.c.bf16 %v968, %v964
      %v1115 = vpack.c.bf16 %v970, %v966
      %v1116 = vpack.c.bf16 %v978, %v974
      %v1117 = vpack.c.bf16 %v980, %v976
      %v1118 = vpack.c.bf16 %v988, %v984
      %v1119 = vpack.c.bf16 %v990, %v986
      %v1120 = vpack.c.bf16 %v998, %v994
      %v1121 = vpack.c.bf16 %v1000, %v996
      %v1122 = vpack.c.bf16 %v1008, %v1004
      %v1123 = vpack.c.bf16 %v1010, %v1006
      %v1124 = vpack.c.bf16 %v1018, %v1014
      %v1125 = vpack.c.bf16 %v1020, %v1016
      %v1126 = vpack.c.bf16 %v1028, %v1024
      %v1127 = vpack.c.bf16 %v1030, %v1026
      %v1128 = vpack.c.bf16 %v1038, %v1034
      %v1129 = vpack.c.bf16 %v1040, %v1036
      %v1130 = vpack.c.bf16 %v1048, %v1044
      %v1131 = vpack.c.bf16 %v1050, %v1046
      %v1132 = vpack.c.bf16 %v1058, %v1054
      %v1133 = vpack.c.bf16 %v1060, %v1056
      %v1134 = vpack.c.bf16 %v1068, %v1064
      %v1135 = vpack.c.bf16 %v1070, %v1066
      %v1136 = vpack.c.bf16 %v1078, %v1074
      %v1137 = vpack.c.bf16 %v1080, %v1076
      %v1138 = vpack.c.bf16 %v1088, %v1084
      %v1139 = vpack.c.bf16 %v1090, %v1086
      %v1140 = vpack.c.bf16 %v1098, %v1094
      %v1141 = vpack.c.bf16 %v1100, %v1096
      %v1142 = vpack.c.bf16 %v1108, %v1104
      %v1143 = vpack.c.bf16 %v1110, %v1106
      %v1176 = vunpack.c.l.b16 %v1112
      %v1177 = vunpack.c.l.b16 %v1113
      %v1178 = vunpack.c.h.b16 %v1112
      %v1179 = vunpack.c.h.b16 %v1113
      %v1180 = vunpack.c.l.b16 %v1114
      %v1181 = vunpack.c.l.b16 %v1115
      %v1182 = vunpack.c.h.b16 %v1114
      %v1183 = vunpack.c.h.b16 %v1115
      %v1184 = vunpack.c.l.b16 %v1116
      %v1185 = vunpack.c.l.b16 %v1117
      %v1186 = vunpack.c.h.b16 %v1116
      %v1187 = vunpack.c.h.b16 %v1117
      %v1188 = vunpack.c.l.b16 %v1118
      %v1189 = vunpack.c.l.b16 %v1119
      %v1190 = vunpack.c.h.b16 %v1118
      %v1191 = vunpack.c.h.b16 %v1119
      %v1192 = vunpack.c.l.b16 %v1120
      %v1193 = vunpack.c.l.b16 %v1121
      %v1194 = vunpack.c.h.b16 %v1120
      %v1195 = vunpack.c.h.b16 %v1121
      %v1196 = vunpack.c.l.b16 %v1122
      %v1197 = vunpack.c.l.b16 %v1123
      %v1198 = vunpack.c.h.b16 %v1122
      %v1199 = vunpack.c.h.b16 %v1123
      %v1200 = vunpack.c.l.b16 %v1124
      %v1201 = vunpack.c.l.b16 %v1125
      %v1202 = vunpack.c.h.b16 %v1124
      %v1203 = vunpack.c.h.b16 %v1125
      %v1204 = vunpack.c.l.b16 %v1126
      %v1205 = vunpack.c.l.b16 %v1127
      %v1206 = vunpack.c.h.b16 %v1126
      %v1207 = vunpack.c.h.b16 %v1127
      %v1208 = vunpack.c.l.b16 %v1128
      %v1209 = vunpack.c.l.b16 %v1129
      %v1210 = vunpack.c.h.b16 %v1128
      %v1211 = vunpack.c.h.b16 %v1129
      %v1212 = vunpack.c.l.b16 %v1130
      %v1213 = vunpack.c.l.b16 %v1131
      %v1214 = vunpack.c.h.b16 %v1130
      %v1215 = vunpack.c.h.b16 %v1131
      %v1216 = vunpack.c.l.b16 %v1132
      %v1217 = vunpack.c.l.b16 %v1133
      %v1218 = vunpack.c.h.b16 %v1132
      %v1219 = vunpack.c.h.b16 %v1133
      %v1220 = vunpack.c.l.b16 %v1134
      %v1221 = vunpack.c.l.b16 %v1135
      %v1222 = vunpack.c.h.b16 %v1134
      %v1223 = vunpack.c.h.b16 %v1135
      %v1224 = vunpack.c.l.b16 %v1136
      %v1225 = vunpack.c.l.b16 %v1137
      %v1226 = vunpack.c.h.b16 %v1136
      %v1227 = vunpack.c.h.b16 %v1137
      %v1228 = vunpack.c.l.b16 %v1138
      %v1229 = vunpack.c.l.b16 %v1139
      %v1230 = vunpack.c.h.b16 %v1138
      %v1231 = vunpack.c.h.b16 %v1139
      %v1232 = vunpack.c.l.b16 %v1140
      %v1233 = vunpack.c.l.b16 %v1141
      %v1234 = vunpack.c.h.b16 %v1140
      %v1235 = vunpack.c.h.b16 %v1141
      %v1236 = vunpack.c.l.b16 %v1142
      %v1237 = vunpack.c.l.b16 %v1143
      %v1238 = vunpack.c.h.b16 %v1142
      %v1239 = vunpack.c.h.b16 %v1143
      %v1240 = vpack.c.b16 %v1177, %v1176
      %v1241 = vpack.c.b16 %v1179, %v1178
      %v1242 = vpack.c.b16 %v1181, %v1180
      %v1243 = vpack.c.b16 %v1183, %v1182
      %v1244 = vpack.c.b16 %v1185, %v1184
      %v1245 = vpack.c.b16 %v1187, %v1186
      %v1246 = vpack.c.b16 %v1189, %v1188
      %v1247 = vpack.c.b16 %v1191, %v1190
      %v1248 = vpack.c.b16 %v1193, %v1192
      %v1249 = vpack.c.b16 %v1195, %v1194
      %v1250 = vpack.c.b16 %v1197, %v1196
      %v1251 = vpack.c.b16 %v1199, %v1198
      %v1252 = vpack.c.b16 %v1201, %v1200
      %v1253 = vpack.c.b16 %v1203, %v1202
      %v1254 = vpack.c.b16 %v1205, %v1204
      %v1255 = vpack.c.b16 %v1207, %v1206
      %v1256 = vpack.c.b16 %v1209, %v1208
      %v1257 = vpack.c.b16 %v1211, %v1210
      %v1258 = vpack.c.b16 %v1213, %v1212
      %v1259 = vpack.c.b16 %v1215, %v1214
      %v1260 = vpack.c.b16 %v1217, %v1216
      %v1261 = vpack.c.b16 %v1219, %v1218
      %v1262 = vpack.c.b16 %v1221, %v1220
      %v1263 = vpack.c.b16 %v1223, %v1222
      %v1264 = vpack.c.b16 %v1225, %v1224
      %v1265 = vpack.c.b16 %v1227, %v1226
      %v1266 = vpack.c.b16 %v1229, %v1228
      %v1267 = vpack.c.b16 %v1231, %v1230
      %v1268 = vpack.c.b16 %v1233, %v1232
      %v1269 = vpack.c.b16 %v1235, %v1234
      %v1270 = vpack.c.b16 %v1237, %v1236
      %v1271 = vpack.c.b16 %v1239, %v1238
      %vm1304 = vcmask 523268
      %vm1305 = vmor %vm1304, %vm912
      %1306 = vst.msk [vmem:[%s232] sm:$0xff] %vm1305, %v1240
      %1307 = vst.msk [vmem:[%s232 + $0x8] sm:$0xff] %vm1305, %v1241
      %1308 = vst.msk [vmem:[%s232 + $0x10] sm:$0xff] %vm1305, %v1242
      %1309 = vst.msk [vmem:[%s232 + $0x18] sm:$0xff] %vm1305, %v1243
      %1310 = vst.msk [vmem:[%s232 + $0x20] sm:$0xff] %vm1305, %v1244
      %1311 = vst.msk [vmem:[%s232 + $0x28] sm:$0xff] %vm1305, %v1245
      %1312 = vst.msk [vmem:[%s232 + $0x30] sm:$0xff] %vm1305, %v1246
      %1313 = vst.msk [vmem:[%s232 + $0x38] sm:$0xff] %vm1305, %v1247
      %1314 = vst.msk [vmem:[%s232 + $0x40] sm:$0xff] %vm1305, %v1248
      %1315 = vst.msk [vmem:[%s232 + $0x48] sm:$0xff] %vm1305, %v1249
      %1316 = vst.msk [vmem:[%s232 + $0x50] sm:$0xff] %vm1305, %v1250
      %1317 = vst.msk [vmem:[%s232 + $0x58] sm:$0xff] %vm1305, %v1251
      %1318 = vst.msk [vmem:[%s232 + $0x60] sm:$0xff] %vm1305, %v1252
      %1319 = vst.msk [vmem:[%s232 + $0x68] sm:$0xff] %vm1305, %v1253
      %1320 = vst.msk [vmem:[%s232 + $0x70] sm:$0xff] %vm1305, %v1254
      %1321 = vst.msk [vmem:[%s232 + $0x78] sm:$0xff] %vm1305, %v1255
      %1322 = vst.msk [vmem:[%s232 + $0x80] sm:$0xff] %vm1305, %v1256
      %1323 = vst.msk [vmem:[%s232 + $0x88] sm:$0xff] %vm1305, %v1257
      %1324 = vst.msk [vmem:[%s232 + $0x90] sm:$0xff] %vm1305, %v1258
      %1325 = vst.msk [vmem:[%s232 + $0x98] sm:$0xff] %vm1305, %v1259
      %1326 = vst.msk [vmem:[%s232 + $0xa0] sm:$0xff] %vm1305, %v1260
      %1327 = vst.msk [vmem:[%s232 + $0xa8] sm:$0xff] %vm1305, %v1261
      %1328 = vst.msk [vmem:[%s232 + $0xb0] sm:$0xff] %vm1305, %v1262
      %1329 = vst.msk [vmem:[%s232 + $0xb8] sm:$0xff] %vm1305, %v1263
      %1330 = vst.msk [vmem:[%s232 + $0xc0] sm:$0xff] %vm1305, %v1264
      %1331 = vst.msk [vmem:[%s232 + $0xc8] sm:$0xff] %vm1305, %v1265
      %1332 = vst.msk [vmem:[%s232 + $0xd0] sm:$0xff] %vm1305, %v1266
      %1333 = vst.msk [vmem:[%s232 + $0xd8] sm:$0xff] %vm1305, %v1267
      %1334 = vst.msk [vmem:[%s232 + $0xe0] sm:$0xff] %vm1305, %v1268
      %1335 = vst.msk [vmem:[%s232 + $0xe8] sm:$0xff] %vm1305, %v1269
      %1336 = vst.msk [vmem:[%s232 + $0xf0] sm:$0xff] %vm1305, %v1270
      %1337 = vst.msk [vmem:[%s232 + $0xf8] sm:$0xff] %vm1305, %v1271
      %v1338 = vadd.f32 %v954, %v958
      %v1339 = vadd.f32 %v1338, %v964
      %v1340 = vadd.f32 %v1339, %v968
      %v1341 = vadd.f32 %v1340, %v974
      %v1342 = vadd.f32 %v1341, %v978
      %v1343 = vadd.f32 %v1342, %v984
      %v1344 = vadd.f32 %v1343, %v988
      %v1345 = vadd.f32 %v1344, %v994
      %v1346 = vadd.f32 %v1345, %v998
      %v1347 = vadd.f32 %v1346, %v1004
      %v1348 = vadd.f32 %v1347, %v1008
      %v1349 = vadd.f32 %v1348, %v1014
      %v1350 = vadd.f32 %v1349, %v1018
      %v1351 = vadd.f32 %v1350, %v1024
      %v1352 = vadd.f32 %v1351, %v1028
      %v1353 = vadd.f32 %v1352, %v1034
      %v1354 = vadd.f32 %v1353, %v1038
      %v1355 = vadd.f32 %v1354, %v1044
      %v1356 = vadd.f32 %v1355, %v1048
      %v1357 = vadd.f32 %v1356, %v1054
      %v1358 = vadd.f32 %v1357, %v1058
      %v1359 = vadd.f32 %v1358, %v1064
      %v1360 = vadd.f32 %v1359, %v1068
      %v1361 = vadd.f32 %v1360, %v1074
      %v1362 = vadd.f32 %v1361, %v1078
      %v1363 = vadd.f32 %v1362, %v1084
      %v1364 = vadd.f32 %v1363, %v1088
      %v1365 = vadd.f32 %v1364, %v1094
      %v1366 = vadd.f32 %v1365, %v1098
      %v1367 = vadd.f32 %v1366, %v1104
      %v1368 = vadd.f32 %v1367, %v1108
      %v1369 = vrot.slane %v1368, 4
      %v1370 = vadd.f32 %v1368, %v1369
      %v1371 = vrot.slane %v1370, 2
      %v1372 = vadd.f32 %v1370, %v1371
      %v1373 = vrot.slane %v1372, 1
      %v1374 = vadd.f32 %v1372, %v1373
      %vm1375 = vcmask 523264
      %v1376 = vsel %vm1375, %v956, 0.0
      %v1377 = vsel %vm1375, %v960, 0.0
      %v1378 = vadd.f32 %v1376, %v1377
      %v1379 = vsel %vm1375, %v966, 0.0
      %v1380 = vadd.f32 %v1378, %v1379
      %v1381 = vsel %vm1375, %v970, 0.0
      %v1382 = vadd.f32 %v1380, %v1381
      %v1383 = vsel %vm1375, %v976, 0.0
      %v1384 = vadd.f32 %v1382, %v1383
      %v1385 = vsel %vm1375, %v980, 0.0
      %v1386 = vadd.f32 %v1384, %v1385
      %v1387 = vsel %vm1375, %v986, 0.0
      %v1388 = vadd.f32 %v1386, %v1387
      %v1389 = vsel %vm1375, %v990, 0.0
      %v1390 = vadd.f32 %v1388, %v1389
      %v1391 = vsel %vm1375, %v996, 0.0
      %v1392 = vadd.f32 %v1390, %v1391
      %v1393 = vsel %vm1375, %v1000, 0.0
      %v1394 = vadd.f32 %v1392, %v1393
      %v1395 = vsel %vm1375, %v1006, 0.0
      %v1396 = vadd.f32 %v1394, %v1395
      %v1397 = vsel %vm1375, %v1010, 0.0
      %v1398 = vadd.f32 %v1396, %v1397
      %v1399 = vsel %vm1375, %v1016, 0.0
      %v1400 = vadd.f32 %v1398, %v1399
      %v1401 = vsel %vm1375, %v1020, 0.0
      %v1402 = vadd.f32 %v1400, %v1401
      %v1403 = vsel %vm1375, %v1026, 0.0
      %v1404 = vadd.f32 %v1402, %v1403
      %v1405 = vsel %vm1375, %v1030, 0.0
      %v1406 = vadd.f32 %v1404, %v1405
      %v1407 = vsel %vm1375, %v1036, 0.0
      %v1408 = vadd.f32 %v1406, %v1407
      %v1409 = vsel %vm1375, %v1040, 0.0
      %v1410 = vadd.f32 %v1408, %v1409
      %v1411 = vsel %vm1375, %v1046, 0.0
      %v1412 = vadd.f32 %v1410, %v1411
      %v1413 = vsel %vm1375, %v1050, 0.0
      %v1414 = vadd.f32 %v1412, %v1413
      %v1415 = vsel %vm1375, %v1056, 0.0
      %v1416 = vadd.f32 %v1414, %v1415
      %v1417 = vsel %vm1375, %v1060, 0.0
      %v1418 = vadd.f32 %v1416, %v1417
      %v1419 = vsel %vm1375, %v1066, 0.0
      %v1420 = vadd.f32 %v1418, %v1419
      %v1421 = vsel %vm1375, %v1070, 0.0
      %v1422 = vadd.f32 %v1420, %v1421
      %v1423 = vsel %vm1375, %v1076, 0.0
      %v1424 = vadd.f32 %v1422, %v1423
      %v1425 = vsel %vm1375, %v1080, 0.0
      %v1426 = vadd.f32 %v1424, %v1425
      %v1427 = vsel %vm1375, %v1086, 0.0
      %v1428 = vadd.f32 %v1426, %v1427
      %v1429 = vsel %vm1375, %v1090, 0.0
      %v1430 = vadd.f32 %v1428, %v1429
      %v1431 = vsel %vm1375, %v1096, 0.0
      %v1432 = vadd.f32 %v1430, %v1431
      %v1433 = vsel %vm1375, %v1100, 0.0
      %v1434 = vadd.f32 %v1432, %v1433
      %v1435 = vsel %vm1375, %v1106, 0.0
      %v1436 = vadd.f32 %v1434, %v1435
      %v1437 = vsel %vm1375, %v1110, 0.0
      %v1438 = vadd.f32 %v1436, %v1437
      %v1439 = vrot.slane %v1438, 4
      %v1440 = vadd.f32 %v1438, %v1439
      %v1441 = vrot.slane %v1440, 2
      %v1442 = vadd.f32 %v1440, %v1441
      %v1443 = vrot.slane %v1442, 1
      %v1444 = vadd.f32 %v1442, %v1443
      %v1445 = vmul.f32 %v954, %v954
      %v1446 = vmul.f32 %v956, %v956
      %v1447 = vmul.f32 %v958, %v958
      %v1448 = vmul.f32 %v960, %v960
      %v1449 = vmul.f32 %v964, %v964
      %v1450 = vmul.f32 %v966, %v966
      %v1451 = vmul.f32 %v968, %v968
      %v1452 = vmul.f32 %v970, %v970
      %v1453 = vmul.f32 %v974, %v974
      %v1454 = vmul.f32 %v976, %v976
      %v1455 = vmul.f32 %v978, %v978
      %v1456 = vmul.f32 %v980, %v980
      %v1457 = vmul.f32 %v984, %v984
      %v1458 = vmul.f32 %v986, %v986
      %v1459 = vmul.f32 %v988, %v988
      %v1460 = vmul.f32 %v990, %v990
      %v1461 = vmul.f32 %v994, %v994
      %v1462 = vmul.f32 %v996, %v996
      %v1463 = vmul.f32 %v998, %v998
      %v1464 = vmul.f32 %v1000, %v1000
      %v1465 = vmul.f32 %v1004, %v1004
      %v1466 = vmul.f32 %v1006, %v1006
      %v1467 = vmul.f32 %v1008, %v1008
      %v1468 = vmul.f32 %v1010, %v1010
      %v1469 = vmul.f32 %v1014, %v1014
      %v1470 = vmul.f32 %v1016, %v1016
      %v1471 = vmul.f32 %v1018, %v1018
      %v1472 = vmul.f32 %v1020, %v1020
      %v1473 = vmul.f32 %v1024, %v1024
      %v1474 = vmul.f32 %v1026, %v1026
      %v1475 = vmul.f32 %v1028, %v1028
      %v1476 = vmul.f32 %v1030, %v1030
      %v1477 = vmul.f32 %v1034, %v1034
      %v1478 = vmul.f32 %v1036, %v1036
      %v1479 = vmul.f32 %v1038, %v1038
      %v1480 = vmul.f32 %v1040, %v1040
      %v1481 = vmul.f32 %v1044, %v1044
      %v1482 = vmul.f32 %v1046, %v1046
      %v1483 = vmul.f32 %v1048, %v1048
      %v1484 = vmul.f32 %v1050, %v1050
      %v1485 = vmul.f32 %v1054, %v1054
      %v1486 = vmul.f32 %v1056, %v1056
      %v1487 = vmul.f32 %v1058, %v1058
      %v1488 = vmul.f32 %v1060, %v1060
      %v1489 = vmul.f32 %v1064, %v1064
      %v1490 = vmul.f32 %v1066, %v1066
      %v1491 = vmul.f32 %v1068, %v1068
      %v1492 = vmul.f32 %v1070, %v1070
      %v1493 = vmul.f32 %v1074, %v1074
      %v1494 = vmul.f32 %v1076, %v1076
      %v1495 = vmul.f32 %v1078, %v1078
      %v1496 = vmul.f32 %v1080, %v1080
      %v1497 = vmul.f32 %v1084, %v1084
      %v1498 = vmul.f32 %v1086, %v1086
      %v1499 = vmul.f32 %v1088, %v1088
      %v1500 = vmul.f32 %v1090, %v1090
      %v1501 = vmul.f32 %v1094, %v1094
      %v1502 = vmul.f32 %v1096, %v1096
      %v1503 = vmul.f32 %v1098, %v1098
      %v1504 = vmul.f32 %v1100, %v1100
      %v1505 = vmul.f32 %v1104, %v1104
      %v1506 = vmul.f32 %v1106, %v1106
      %v1507 = vmul.f32 %v1108, %v1108
      %v1508 = vmul.f32 %v1110, %v1110
      %v1509 = vadd.f32 %v1445, %v1447
      %v1510 = vadd.f32 %v1509, %v1449
      %v1511 = vadd.f32 %v1510, %v1451
      %v1512 = vadd.f32 %v1511, %v1453
      %v1513 = vadd.f32 %v1512, %v1455
      %v1514 = vadd.f32 %v1513, %v1457
      %v1515 = vadd.f32 %v1514, %v1459
      %v1516 = vadd.f32 %v1515, %v1461
      %v1517 = vadd.f32 %v1516, %v1463
      %v1518 = vadd.f32 %v1517, %v1465
      %v1519 = vadd.f32 %v1518, %v1467
      %v1520 = vadd.f32 %v1519, %v1469
      %v1521 = vadd.f32 %v1520, %v1471
      %v1522 = vadd.f32 %v1521, %v1473
      %v1523 = vadd.f32 %v1522, %v1475
      %v1524 = vadd.f32 %v1523, %v1477
      %v1525 = vadd.f32 %v1524, %v1479
      %v1526 = vadd.f32 %v1525, %v1481
      %v1527 = vadd.f32 %v1526, %v1483
      %v1528 = vadd.f32 %v1527, %v1485
      %v1529 = vadd.f32 %v1528, %v1487
      %v1530 = vadd.f32 %v1529, %v1489
      %v1531 = vadd.f32 %v1530, %v1491
      %v1532 = vadd.f32 %v1531, %v1493
      %v1533 = vadd.f32 %v1532, %v1495
      %v1534 = vadd.f32 %v1533, %v1497
      %v1535 = vadd.f32 %v1534, %v1499
      %v1536 = vadd.f32 %v1535, %v1501
      %v1537 = vadd.f32 %v1536, %v1503
      %v1538 = vadd.f32 %v1537, %v1505
      %v1539 = vadd.f32 %v1538, %v1507
      %v1540 = vrot.slane %v1539, 4
      %v1541 = vadd.f32 %v1539, %v1540
      %v1542 = vrot.slane %v1541, 2
      %v1543 = vadd.f32 %v1541, %v1542
      %v1544 = vrot.slane %v1543, 1
      %v1545 = vadd.f32 %v1543, %v1544
      %v1546 = vsel %vm1375, %v1446, 0.0
      %v1547 = vsel %vm1375, %v1448, 0.0
      %v1548 = vadd.f32 %v1546, %v1547
      %v1549 = vsel %vm1375, %v1450, 0.0
      %v1550 = vadd.f32 %v1548, %v1549
      %v1551 = vsel %vm1375, %v1452, 0.0
      %v1552 = vadd.f32 %v1550, %v1551
      %v1553 = vsel %vm1375, %v1454, 0.0
      %v1554 = vadd.f32 %v1552, %v1553
      %v1555 = vsel %vm1375, %v1456, 0.0
      %v1556 = vadd.f32 %v1554, %v1555
      %v1557 = vsel %vm1375, %v1458, 0.0
      %v1558 = vadd.f32 %v1556, %v1557
      %v1559 = vsel %vm1375, %v1460, 0.0
      %v1560 = vadd.f32 %v1558, %v1559
      %v1561 = vsel %vm1375, %v1462, 0.0
      %v1562 = vadd.f32 %v1560, %v1561
      %v1563 = vsel %vm1375, %v1464, 0.0
      %v1564 = vadd.f32 %v1562, %v1563
      %v1565 = vsel %vm1375, %v1466, 0.0
      %v1566 = vadd.f32 %v1564, %v1565
      %v1567 = vsel %vm1375, %v1468, 0.0
      %v1568 = vadd.f32 %v1566, %v1567
      %v1569 = vsel %vm1375, %v1470, 0.0
      %v1570 = vadd.f32 %v1568, %v1569
      %v1571 = vsel %vm1375, %v1472, 0.0
      %v1572 = vadd.f32 %v1570, %v1571
      %v1573 = vsel %vm1375, %v1474, 0.0
      %v1574 = vadd.f32 %v1572, %v1573
      %v1575 = vsel %vm1375, %v1476, 0.0
      %v1576 = vadd.f32 %v1574, %v1575
      %v1577 = vsel %vm1375, %v1478, 0.0
      %v1578 = vadd.f32 %v1576, %v1577
      %v1579 = vsel %vm1375, %v1480, 0.0
      %v1580 = vadd.f32 %v1578, %v1579
      %v1581 = vsel %vm1375, %v1482, 0.0
      %v1582 = vadd.f32 %v1580, %v1581
      %v1583 = vsel %vm1375, %v1484, 0.0
      %v1584 = vadd.f32 %v1582, %v1583
      %v1585 = vsel %vm1375, %v1486, 0.0
      %v1586 = vadd.f32 %v1584, %v1585
      %v1587 = vsel %vm1375, %v1488, 0.0
      %v1588 = vadd.f32 %v1586, %v1587
      %v1589 = vsel %vm1375, %v1490, 0.0
      %v1590 = vadd.f32 %v1588, %v1589
      %v1591 = vsel %vm1375, %v1492, 0.0
      %v1592 = vadd.f32 %v1590, %v1591
      %v1593 = vsel %vm1375, %v1494, 0.0
      %v1594 = vadd.f32 %v1592, %v1593
      %v1595 = vsel %vm1375, %v1496, 0.0
      %v1596 = vadd.f32 %v1594, %v1595
      %v1597 = vsel %vm1375, %v1498, 0.0
      %v1598 = vadd.f32 %v1596, %v1597
      %v1599 = vsel %vm1375, %v1500, 0.0
      %v1600 = vadd.f32 %v1598, %v1599
      %v1601 = vsel %vm1375, %v1502, 0.0
      %v1602 = vadd.f32 %v1600, %v1601
      %v1603 = vsel %vm1375, %v1504, 0.0
      %v1604 = vadd.f32 %v1602, %v1603
      %v1605 = vsel %vm1375, %v1506, 0.0
      %v1606 = vadd.f32 %v1604, %v1605
      %v1607 = vsel %vm1375, %v1508, 0.0
      %v1608 = vadd.f32 %v1606, %v1607
      %v1609 = vrot.slane %v1608, 4
      %v1610 = vadd.f32 %v1608, %v1609
      %v1611 = vrot.slane %v1610, 2
      %v1612 = vadd.f32 %v1610, %v1611
      %v1613 = vrot.slane %v1612, 1
      %v1614 = vadd.f32 %v1612, %v1613
      %vm1615 = vcmask 1040384
      %v1616 = vsel %vm1615, %v1374, %v1545
      %v1617 = vsel %vm1615, %v1444, %v1614
      %v1620 = vcombine.low %v1616, %v1617
      %v1622 = vunpack.c.l.s4 1983009808
      %v1623 = vunpack.c.0.s8 %v1622
      %v1624 = vlaneseq
      %v1625 = vshrl.u32 %v1624, 7
      %v1626 = vsub.s32 %v1623, %v1625
      %v1627 = vrot.slane %v1620, %v1626
      %vm1629 = vcmask 1041408
      %vm1630 = vcmask 519170
      %vm1631 = vmor %vm1630, %vm1629
      %1632 = vst.msk [vmem:[%s237] sm:$0xf] %vm1631, %v1627
      %p1633 = scmp.lt.s32.totalorder %s17, 1
      %s1634 = scalar_select %p1633, %s17, 1
      %s1635 = smul.addr %s1634, 64
      %s1636 = smul.addr %s1635, 4
      %s1637 = scalar_lea.vmem %s4, %s1636
      %p1638 = scmp.lt.s32.totalorder %s17, 1
      %s1639 = scalar_select %p1638, %s17, 1
      %s1640 = smul.addr %s1639, 2
      %s1641 = smul.addr %s1640, 2
      %s1642 = scalar_lea.vmem %s5, %s1641
      // Predicated region
      $region37: #{inception_f6_forward.23} parent=35 // pred_check
        %p1643 = pneg %p124
      $region38: #{inception_f6_forward.23} parent=35 // pred_check_branch
        %1645 = sbr.rel (%p1643) target = $region40
      $region39: #{inception_f6_forward.23} parent=35 // pred_region
        _
      $region40: #{inception_f6_forward.23} parent=35 // pred_fallthru
        _
      // Predicated region
      $region41: #{inception_f6_forward.23} parent=35 // pred_check
        %p1646 = pneg %p150
      $region42: #{inception_f6_forward.23} parent=35 // pred_check_branch
        %1648 = sbr.rel (%p1646) target = $region44
      $region43: #{inception_f6_forward.23} parent=35 // pred_region
        _
      $region44: #{inception_f6_forward.23} parent=35 // pred_fallthru
        _
    $region36: #{inception_f6_forward.23} parent=5 // pred_fallthru
      _
    %p1649 = scmp.le.s32.totalorder 2, %s12
    // Predicated region
    $region45: #{inception_f6_forward.23} parent=5 // pred_check
      %p1650 = pneg %p1649
    $region46: #{inception_f6_forward.23} parent=5 // pred_check_branch
      %1652 = sbr.rel (%p1650) target = $region48
    $region47: #{inception_f6_forward.23} parent=5 // pred_region
      %s1653 = ssub.s32 %s12, 2
      // Predicated region
      $region49: #{inception_f6_forward.23} parent=47 // pred_check
        %p1654 = pneg %p130
      $region50: #{inception_f6_forward.23} parent=47 // pred_check_branch
        %1656 = sbr.rel (%p1654) target = $region52
      $region51: #{inception_f6_forward.23} parent=47 // pred_region
        %p1657 = scmp.lt.s32.totalorder %s18, 1
        %s1658 = scalar_select %p1657, %s18, 1
        %s1659 = smul.addr %s1658, 64
        %s1660 = smul.addr %s1659, 4
        %s1661 = scalar_lea.vmem %s4, %s1660
      $region52: #{inception_f6_forward.23} parent=47 // pred_fallthru
        _
      // Predicated region
      $region53: #{inception_f6_forward.23} parent=47 // pred_check
        %p1662 = pneg %p156
      $region54: #{inception_f6_forward.23} parent=47 // pred_check_branch
        %1664 = sbr.rel (%p1662) target = $region56
      $region55: #{inception_f6_forward.23} parent=47 // pred_region
        %p1665 = scmp.lt.s32.totalorder %s18, 1
        %s1666 = scalar_select %p1665, %s18, 1
        %s1667 = smul.addr %s1666, 2
        %s1668 = smul.addr %s1667, 2
        %s1669 = scalar_lea.vmem %s5, %s1668
      $region56: #{inception_f6_forward.23} parent=47 // pred_fallthru
        _
    $region48: #{inception_f6_forward.23} parent=5 // pred_fallthru
      _
  $region6: #{inception_f6_forward.23} parent=0 // loop_footer
    %s16 = sadd.s32 1, %s12
  $region7: #{inception_f6_forward.23} parent=0 // loop_footer_branch
    %11 = sbr.rel target = $region3
  $region8: #{inception_f6_forward.23} parent=0 // loop_exit
    _

// kernel: inception_f6_forward.22
$region0: #{inception_f6_forward.22}
  #allocation0 [shape = 'u32[]', space=smem, size = 0x4, offset = 0x4, fixed_abs, tag = 'smem constant byte address 0x4 - core index']
  #allocation1 [shape = 'u32[144,128]{1,0:T(1,128)}', space=vmem, size = 0x12000, scoped, tag = 'internal scratch']
  %s0 = inlined_call_operand.vmem [shape: bf16[32,16,8], index: 0, kind: input, shape index: {}]
  %s1 = inlined_call_operand.vmem [shape: bf16[56,8], index: 1, kind: input, shape index: {}]
  %s2 = inlined_call_operand.vmem [shape: f32[1,8], index: 2, kind: input, shape index: {}]
  %s3 = inlined_call_operand.vmem [shape: f32[1,8], index: 3, kind: input, shape index: {}]
  %s4 = inlined_call_operand.vmem [shape: bf16[32,16,8], index: 4, kind: output, shape index: {0}]
  %s5 = inlined_call_operand.vmem [shape: f32[2,2,8], index: 5, kind: output, shape index: {1}]
  %6 = xla_tuple %s4, %s5
  %s7 = sld [smem:[#allocation0]]
  $region57: #{inception_f6_forward.22} parent=0
    _
  %s9 = ssub.s32 1, %s7
  %s10 = scalar_select 0, %s9, %s7
  loop: start=0, step=1, limit=4
  $region2: #{inception_f6_forward.22} parent=0 // loop_pre_header
    _
  $region3: #{inception_f6_forward.22} parent=0 // loop_header
    %s12 = sphi 0, %s16
    %p13 = scmp.ge.s32.totalorder %s12, 4
    %s22 = sphi 0, %s24
    %s25 = sphi 0, %s22
    %s26 = sphi 0, %s25
    %s42 = sphi 0, %s26
    %s46 = sphi 0, %s46
    %s48 = sphi 0, %s46
    %s49 = sphi 0, %s48
    %s63 = sphi 0, %s49
    %s67 = sphi 0, %s67
    %s69 = sphi 0, %s67
    %s70 = sphi 0, %s69
    %s84 = sphi 0, %s70
    %s88 = sphi 0, %s88
    %s90 = sphi 0, %s88
    %s91 = sphi 0, %s90
    %s105 = sphi 0, %s91
    %s111 = sphi 0, %s113
    %s114 = sphi 0, %s111
    %s115 = sphi 0, %s114
    %s131 = sphi 0, %s115
    %s137 = sphi 0, %s139
    %s140 = sphi 0, %s137
    %s141 = sphi 0, %s140
    %s157 = sphi 0, %s141
  $region4: #{inception_f6_forward.22} parent=0 // loop_header_branch
    %15 = sbr.rel (%p13) target = $region8
  $region5: #{inception_f6_forward.22} parent=0 // loop_body
    %s17 = ssub.s32 %s12, 1
    %s18 = ssub.s32 %s12, 2
    %s19 = sadd.s32 %s12, 1
    %s20 = ssub.s32 %s12, %s19
    %p21 = scmp.eq.s32.totalorder %s20, 0
    %s23 = sadd.s32 %s22, 1
    %s24 = scalar_select %p21, %s22, %s23
    %p27 = pneg %p21
    %p28 = scmp.eq.s32.totalorder %s12, 1
    %p29 = por %p27, %p28
    %p30 = scmp.ne.s32.totalorder %s22, %s25
    %p31 = scmp.eq.s32.totalorder %s12, 0
    %p32 = por %p30, %p31
    %p33 = scmp.ne.s32.totalorder %s22, %s25
    %p34 = scmp.eq.s32.totalorder %s17, 1
    %p35 = por %p33, %p34
    %p36 = scmp.ne.s32.totalorder %s25, %s26
    %p37 = scmp.eq.s32.totalorder %s17, 0
    %p38 = por %p36, %p37
    %p39 = scmp.ne.s32.totalorder %s25, %s26
    %p40 = scmp.eq.s32.totalorder %s18, 1
    %p41 = por %p39, %p40
    %p43 = scmp.ne.s32.totalorder %s26, %s42
    %p44 = scmp.eq.s32.totalorder %s18, 0
    %p45 = por %p43, %p44
    %s47 = sadd.s32 %s46, 1
    %p50 = scmp.eq.s32.totalorder %s12, 1
    %p51 = scmp.ne.s32.totalorder %s46, %s48
    %p52 = scmp.eq.s32.totalorder %s12, 0
    %p53 = por %p51, %p52
    %p54 = scmp.ne.s32.totalorder %s46, %s48
    %p55 = scmp.eq.s32.totalorder %s17, 1
    %p56 = por %p54, %p55
    %p57 = scmp.ne.s32.totalorder %s48, %s49
    %p58 = scmp.eq.s32.totalorder %s17, 0
    %p59 = por %p57, %p58
    %p60 = scmp.ne.s32.totalorder %s48, %s49
    %p61 = scmp.eq.s32.totalorder %s18, 1
    %p62 = por %p60, %p61
    %p64 = scmp.ne.s32.totalorder %s49, %s63
    %p65 = scmp.eq.s32.totalorder %s18, 0
    %p66 = por %p64, %p65
    %s68 = sadd.s32 %s67, 1
    %p71 = scmp.eq.s32.totalorder %s12, 1
    %p72 = scmp.ne.s32.totalorder %s67, %s69
    %p73 = scmp.eq.s32.totalorder %s12, 0
    %p74 = por %p72, %p73
    %p75 = scmp.ne.s32.totalorder %s67, %s69
    %p76 = scmp.eq.s32.totalorder %s17, 1
    %p77 = por %p75, %p76
    %p78 = scmp.ne.s32.totalorder %s69, %s70
    %p79 = scmp.eq.s32.totalorder %s17, 0
    %p80 = por %p78, %p79
    %p81 = scmp.ne.s32.totalorder %s69, %s70
    %p82 = scmp.eq.s32.totalorder %s18, 1
    %p83 = por %p81, %p82
    %p85 = scmp.ne.s32.totalorder %s70, %s84
    %p86 = scmp.eq.s32.totalorder %s18, 0
    %p87 = por %p85, %p86
    %s89 = sadd.s32 %s88, 1
    %p92 = scmp.eq.s32.totalorder %s12, 1
    %p93 = scmp.ne.s32.totalorder %s88, %s90
    %p94 = scmp.eq.s32.totalorder %s12, 0
    %p95 = por %p93, %p94
    %p96 = scmp.ne.s32.totalorder %s88, %s90
    %p97 = scmp.eq.s32.totalorder %s17, 1
    %p98 = por %p96, %p97
    %p99 = scmp.ne.s32.totalorder %s90, %s91
    %p100 = scmp.eq.s32.totalorder %s17, 0
    %p101 = por %p99, %p100
    %p102 = scmp.ne.s32.totalorder %s90, %s91
    %p103 = scmp.eq.s32.totalorder %s18, 1
    %p104 = por %p102, %p103
    %p106 = scmp.ne.s32.totalorder %s91, %s105
    %p107 = scmp.eq.s32.totalorder %s18, 0
    %p108 = por %p106, %p107
    %s109 = ssub.s32 %s12, %s19
    %p110 = scmp.eq.s32.totalorder %s109, 0
    %s112 = sadd.s32 %s111, 1
    %s113 = scalar_select %p110, %s111, %s112
    %p116 = pneg %p110
    %p117 = scmp.eq.s32.totalorder %s12, 1
    %p118 = por %p116, %p117
    %p119 = scmp.ne.s32.totalorder %s111, %s114
    %p120 = scmp.eq.s32.totalorder %s12, 0
    %p121 = por %p119, %p120
    %p122 = scmp.ne.s32.totalorder %s111, %s114
    %p123 = scmp.eq.s32.totalorder %s17, 1
    %p124 = por %p122, %p123
    %p125 = scmp.ne.s32.totalorder %s114, %s115
    %p126 = scmp.eq.s32.totalorder %s17, 0
    %p127 = por %p125, %p126
    %p128 = scmp.ne.s32.totalorder %s114, %s115
    %p129 = scmp.eq.s32.totalorder %s18, 1
    %p130 = por %p128, %p129
    %p132 = scmp.ne.s32.totalorder %s115, %s131
    %p133 = scmp.eq.s32.totalorder %s18, 0
    %p134 = por %p132, %p133
    %s135 = ssub.s32 %s12, %s19
    %p136 = scmp.eq.s32.totalorder %s135, 0
    %s138 = sadd.s32 %s137, 1
    %s139 = scalar_select %p136, %s137, %s138
    %p142 = pneg %p136
    %p143 = scmp.eq.s32.totalorder %s12, 1
    %p144 = por %p142, %p143
    %p145 = scmp.ne.s32.totalorder %s137, %s140
    %p146 = scmp.eq.s32.totalorder %s12, 0
    %p147 = por %p145, %p146
    %p148 = scmp.ne.s32.totalorder %s137, %s140
    %p149 = scmp.eq.s32.totalorder %s17, 1
    %p150 = por %p148, %p149
    %p151 = scmp.ne.s32.totalorder %s140, %s141
    %p152 = scmp.eq.s32.totalorder %s17, 0
    %p153 = por %p151, %p152
    %p154 = scmp.ne.s32.totalorder %s140, %s141
    %p155 = scmp.eq.s32.totalorder %s18, 1
    %p156 = por %p154, %p155
    %p158 = scmp.ne.s32.totalorder %s141, %s157
    %p159 = scmp.eq.s32.totalorder %s18, 0
    %p160 = por %p158, %p159
    %p161 = scmp.le.s32.totalorder 1, %s12
    %p162 = scmp.lt.s32.totalorder %s12, 3
    %p163 = pnand %p161, %p162
    %p164 = pneg %p163
    // Predicated region
    $region9: #{inception_f6_forward.22} parent=5 // pred_check
      _
    $region10: #{inception_f6_forward.22} parent=5 // pred_check_branch
      %166 = sbr.rel (%p163) target = $region12
    $region11: #{inception_f6_forward.22} parent=5 // pred_region
      %s167 = ssub.s32 %s12, 1
      // Predicated region
      $region13: #{inception_f6_forward.22} parent=11 // pred_check
        %p168 = pneg %p59
      $region14: #{inception_f6_forward.22} parent=11 // pred_check_branch
        %170 = sbr.rel (%p168) target = $region16
      $region15: #{inception_f6_forward.22} parent=11 // pred_region
        _
      $region16: #{inception_f6_forward.22} parent=11 // pred_fallthru
        _
      // Predicated region
      $region17: #{inception_f6_forward.22} parent=11 // pred_check
        %p171 = pneg %p80
      $region18: #{inception_f6_forward.22} parent=11 // pred_check_branch
        %173 = sbr.rel (%p171) target = $region20
      $region19: #{inception_f6_forward.22} parent=11 // pred_region
        _
      $region20: #{inception_f6_forward.22} parent=11 // pred_fallthru
        _
      // Predicated region
      $region21: #{inception_f6_forward.22} parent=11 // pred_check
        %p174 = pneg %p101
      $region22: #{inception_f6_forward.22} parent=11 // pred_check_branch
        %176 = sbr.rel (%p174) target = $region24
      $region23: #{inception_f6_forward.22} parent=11 // pred_region
        _
      $region24: #{inception_f6_forward.22} parent=11 // pred_fallthru
        _
    $region12: #{inception_f6_forward.22} parent=5 // pred_fallthru
      _
    %p177 = scmp.lt.s32.totalorder %s12, 2
    // Predicated region
    $region25: #{inception_f6_forward.22} parent=5 // pred_check
      %p178 = pneg %p177
    $region26: #{inception_f6_forward.22} parent=5 // pred_check_branch
      %180 = sbr.rel (%p178) target = $region28
    $region27: #{inception_f6_forward.22} parent=5 // pred_region
      // Predicated region
      $region29: #{inception_f6_forward.22} parent=27 // pred_check
        %p181 = pneg %p32
      $region30: #{inception_f6_forward.22} parent=27 // pred_check_branch
        %183 = sbr.rel (%p181) target = $region32
      $region31: #{inception_f6_forward.22} parent=27 // pred_region
        %s184 = smul.u32 16, %s12
        %p185 = scmp.lt.s32.totalorder %s184, 31
        %s186 = scalar_select %p185, %s184, 31
        %s187 = smul.addr %s186, 2
        %s188 = smul.addr %s187, 4
        %s189 = scalar_lea.vmem %s0, %s188
        %s190 = smul.u32 16, %s12
      $region32: #{inception_f6_forward.22} parent=27 // pred_fallthru
        _
    $region28: #{inception_f6_forward.22} parent=5 // pred_fallthru
      _
    %p191 = scmp.le.s32.totalorder 1, %s12
    %p192 = scmp.lt.s32.totalorder %s12, 3
    %p193 = pnand %p191, %p192
    %p194 = pneg %p193
    // Predicated region
    $region33: #{inception_f6_forward.22} parent=5 // pred_check
      _
    $region34: #{inception_f6_forward.22} parent=5 // pred_check_branch
      %196 = sbr.rel (%p193) target = $region36
    $region35: #{inception_f6_forward.22} parent=5 // pred_region
      %s197 = ssub.s32 %s12, 1
      %s198 = smul.u32 16, %s17
      %p199 = scmp.lt.s32.totalorder %s198, 31
      %s200 = scalar_select %p199, %s198, 31
      %s201 = smul.addr %s200, 2
      %s202 = smul.addr %s201, 4
      %s203 = scalar_lea.vmem %s0, %s202
      %p204 = pneg %p38
      %p205 = pneg %p35
      %p206 = pneg %p59
      %p207 = pneg %p56
      %p208 = pneg %p80
      %p209 = pneg %p77
      %p210 = pneg %p101
      %p211 = pneg %p98
      %p212 = pneg %p127
      %p213 = pneg %p124
      %s214 = smul.u32 16, %s17
      %p215 = scmp.lt.s32.totalorder %s214, 31
      %s216 = scalar_select %p215, %s214, 31
      %s217 = smul.addr %s216, 2
      %s218 = smul.addr %s217, 4
      %s219 = scalar_lea.vmem %s4, %s218
      %p220 = pneg %p153
      %p221 = pneg %p150
      %p222 = scmp.lt.s32.totalorder %s17, 1
      %s223 = scalar_select %p222, %s17, 1
      %s224 = smul.addr %s223, 2
      %s225 = scalar_lea.vmem %s5, %s224
      %s226 = smul.u32 16, %s17
      %p227 = scmp.lt.s32.totalorder %s226, 31
      %s228 = scalar_select %p227, %s226, 31
      %s229 = smul.addr %s228, 2
      %s230 = smul.addr %s229, 4
      %s231 = scalar_lea.vmem %s0, %s230
      %s232 = smul.u32 16, %s17
      %s233 = smul.u32 16, %s17
      %p234 = scmp.lt.s32.totalorder %s233, 31
      %s235 = scalar_select %p234, %s233, 31
      %s236 = smul.addr %s235, 2
      %s237 = smul.addr %s236, 4
      %s238 = scalar_lea.vmem %s4, %s237
      %s239 = smul.u32 16, %s17
      %p240 = scmp.lt.s32.totalorder %s17, 1
      %s241 = scalar_select %p240, %s17, 1
      %s242 = smul.addr %s241, 2
      %s243 = scalar_lea.vmem %s5, %s242
      %v245 = vld [vmem:[%s231] sm:$0xf]
      %v246 = vld [vmem:[%s231 + $0x4] sm:$0xf]
      %v247 = vld [vmem:[%s231 + $0x8] sm:$0xf]
      %v248 = vld [vmem:[%s231 + $0xc] sm:$0xf]
      %v249 = vld [vmem:[%s231 + $0x10] sm:$0xf]
      %v250 = vld [vmem:[%s231 + $0x14] sm:$0xf]
      %v251 = vld [vmem:[%s231 + $0x18] sm:$0xf]
      %v252 = vld [vmem:[%s231 + $0x1c] sm:$0xf]
      %v253 = vld [vmem:[%s231 + $0x20] sm:$0xf]
      %v254 = vld [vmem:[%s231 + $0x24] sm:$0xf]
      %v255 = vld [vmem:[%s231 + $0x28] sm:$0xf]
      %v256 = vld [vmem:[%s231 + $0x2c] sm:$0xf]
      %v257 = vld [vmem:[%s231 + $0x30] sm:$0xf]
      %v258 = vld [vmem:[%s231 + $0x34] sm:$0xf]
      %v259 = vld [vmem:[%s231 + $0x38] sm:$0xf]
      %v260 = vld [vmem:[%s231 + $0x3c] sm:$0xf]
      %v261 = vld [vmem:[%s231 + $0x40] sm:$0xf]
      %v262 = vld [vmem:[%s231 + $0x44] sm:$0xf]
      %v263 = vld [vmem:[%s231 + $0x48] sm:$0xf]
      %v264 = vld [vmem:[%s231 + $0x4c] sm:$0xf]
      %v265 = vld [vmem:[%s231 + $0x50] sm:$0xf]
      %v266 = vld [vmem:[%s231 + $0x54] sm:$0xf]
      %v267 = vld [vmem:[%s231 + $0x58] sm:$0xf]
      %v268 = vld [vmem:[%s231 + $0x5c] sm:$0xf]
      %v269 = vld [vmem:[%s231 + $0x60] sm:$0xf]
      %v270 = vld [vmem:[%s231 + $0x64] sm:$0xf]
      %v271 = vld [vmem:[%s231 + $0x68] sm:$0xf]
      %v272 = vld [vmem:[%s231 + $0x6c] sm:$0xf]
      %v273 = vld [vmem:[%s231 + $0x70] sm:$0xf]
      %v274 = vld [vmem:[%s231 + $0x74] sm:$0xf]
      %v275 = vld [vmem:[%s231 + $0x78] sm:$0xf]
      %v276 = vld [vmem:[%s231 + $0x7c] sm:$0xf]
      %v277 = vunpack.c.l.bf16 %v245
      %v278 = vunpack.c.l.bf16 %v246
      %v279 = vunpack.c.l.bf16 %v247
      %v280 = vunpack.c.l.bf16 %v248
      %v281 = vunpack.c.l.bf16 %v249
      %v282 = vunpack.c.l.bf16 %v250
      %v283 = vunpack.c.l.bf16 %v251
      %v284 = vunpack.c.l.bf16 %v252
      %v285 = vunpack.c.l.bf16 %v253
      %v286 = vunpack.c.l.bf16 %v254
      %v287 = vunpack.c.l.bf16 %v255
      %v288 = vunpack.c.l.bf16 %v256
      %v289 = vunpack.c.l.bf16 %v257
      %v290 = vunpack.c.l.bf16 %v258
      %v291 = vunpack.c.l.bf16 %v259
      %v292 = vunpack.c.l.bf16 %v260
      %v293 = vunpack.c.l.bf16 %v261
      %v294 = vunpack.c.l.bf16 %v262
      %v295 = vunpack.c.l.bf16 %v263
      %v296 = vunpack.c.l.bf16 %v264
      %v297 = vunpack.c.l.bf16 %v265
      %v298 = vunpack.c.l.bf16 %v266
      %v299 = vunpack.c.l.bf16 %v267
      %v300 = vunpack.c.l.bf16 %v268
      %v301 = vunpack.c.l.bf16 %v269
      %v302 = vunpack.c.l.bf16 %v270
      %v303 = vunpack.c.l.bf16 %v271
      %v304 = vunpack.c.l.bf16 %v272
      %v305 = vunpack.c.l.bf16 %v273
      %v306 = vunpack.c.l.bf16 %v274
      %v307 = vunpack.c.l.bf16 %v275
      %v308 = vunpack.c.l.bf16 %v276
      %v309 = vld [vmem:[%s2] sm:$0x1]
      %v311 = vlaneseq
      %v312 = vshrl.u32 %v311, 7
      %v313 = vsub.s32 0, %v312
      %v314 = vrot.slane %v309, %v313
      %v316 = vmul.f32 %v277, %v314
      %v317 = vmul.f32 %v278, %v314
      %v318 = vmul.f32 %v279, %v314
      %v319 = vmul.f32 %v280, %v314
      %v320 = vmul.f32 %v281, %v314
      %v321 = vmul.f32 %v282, %v314
      %v322 = vmul.f32 %v283, %v314
      %v323 = vmul.f32 %v284, %v314
      %v324 = vmul.f32 %v285, %v314
      %v325 = vmul.f32 %v286, %v314
      %v326 = vmul.f32 %v287, %v314
      %v327 = vmul.f32 %v288, %v314
      %v328 = vmul.f32 %v289, %v314
      %v329 = vmul.f32 %v290, %v314
      %v330 = vmul.f32 %v291, %v314
      %v331 = vmul.f32 %v292, %v314
      %v332 = vmul.f32 %v293, %v314
      %v333 = vmul.f32 %v294, %v314
      %v334 = vmul.f32 %v295, %v314
      %v335 = vmul.f32 %v296, %v314
      %v336 = vmul.f32 %v297, %v314
      %v337 = vmul.f32 %v298, %v314
      %v338 = vmul.f32 %v299, %v314
      %v339 = vmul.f32 %v300, %v314
      %v340 = vmul.f32 %v301, %v314
      %v341 = vmul.f32 %v302, %v314
      %v342 = vmul.f32 %v303, %v314
      %v343 = vmul.f32 %v304, %v314
      %v344 = vmul.f32 %v305, %v314
      %v345 = vmul.f32 %v306, %v314
      %v346 = vmul.f32 %v307, %v314
      %v347 = vmul.f32 %v308, %v314
      %v348 = vld [vmem:[%s3] sm:$0x1]
      %v350 = vlaneseq
      %v351 = vshrl.u32 %v350, 7
      %v352 = vsub.s32 0, %v351
      %v353 = vrot.slane %v348, %v352
      %v355 = vadd.f32 %v316, %v353
      %v356 = vadd.f32 %v317, %v353
      %v357 = vadd.f32 %v318, %v353
      %v358 = vadd.f32 %v319, %v353
      %v359 = vadd.f32 %v320, %v353
      %v360 = vadd.f32 %v321, %v353
      %v361 = vadd.f32 %v322, %v353
      %v362 = vadd.f32 %v323, %v353
      %v363 = vadd.f32 %v324, %v353
      %v364 = vadd.f32 %v325, %v353
      %v365 = vadd.f32 %v326, %v353
      %v366 = vadd.f32 %v327, %v353
      %v367 = vadd.f32 %v328, %v353
      %v368 = vadd.f32 %v329, %v353
      %v369 = vadd.f32 %v330, %v353
      %v370 = vadd.f32 %v331, %v353
      %v371 = vadd.f32 %v332, %v353
      %v372 = vadd.f32 %v333, %v353
      %v373 = vadd.f32 %v334, %v353
      %v374 = vadd.f32 %v335, %v353
      %v375 = vadd.f32 %v336, %v353
      %v376 = vadd.f32 %v337, %v353
      %v377 = vadd.f32 %v338, %v353
      %v378 = vadd.f32 %v339, %v353
      %v379 = vadd.f32 %v340, %v353
      %v380 = vadd.f32 %v341, %v353
      %v381 = vadd.f32 %v342, %v353
      %v382 = vadd.f32 %v343, %v353
      %v383 = vadd.f32 %v344, %v353
      %v384 = vadd.f32 %v345, %v353
      %v385 = vadd.f32 %v346, %v353
      %v386 = vadd.f32 %v347, %v353
      %v387 = vmax.f32 %v355, 0.0
      %v388 = vmax.f32 %v356, 0.0
      %v389 = vmax.f32 %v357, 0.0
      %v390 = vmax.f32 %v358, 0.0
      %v391 = vmax.f32 %v359, 0.0
      %v392 = vmax.f32 %v360, 0.0
      %v393 = vmax.f32 %v361, 0.0
      %v394 = vmax.f32 %v362, 0.0
      %v395 = vmax.f32 %v363, 0.0
      %v396 = vmax.f32 %v364, 0.0
      %v397 = vmax.f32 %v365, 0.0
      %v398 = vmax.f32 %v366, 0.0
      %v399 = vmax.f32 %v367, 0.0
      %v400 = vmax.f32 %v368, 0.0
      %v401 = vmax.f32 %v369, 0.0
      %v402 = vmax.f32 %v370, 0.0
      %v403 = vmax.f32 %v371, 0.0
      %v404 = vmax.f32 %v372, 0.0
      %v405 = vmax.f32 %v373, 0.0
      %v406 = vmax.f32 %v374, 0.0
      %v407 = vmax.f32 %v375, 0.0
      %v408 = vmax.f32 %v376, 0.0
      %v409 = vmax.f32 %v377, 0.0
      %v410 = vmax.f32 %v378, 0.0
      %v411 = vmax.f32 %v379, 0.0
      %v412 = vmax.f32 %v380, 0.0
      %v413 = vmax.f32 %v381, 0.0
      %v414 = vmax.f32 %v382, 0.0
      %v415 = vmax.f32 %v383, 0.0
      %v416 = vmax.f32 %v384, 0.0
      %v417 = vmax.f32 %v385, 0.0
      %v418 = vmax.f32 %v386, 0.0
      %v419 = vpack.c.bf16 %v388, %v387
      %v420 = vpack.c.bf16 %v390, %v389
      %v421 = vpack.c.bf16 %v392, %v391
      %v422 = vpack.c.bf16 %v394, %v393
      %v423 = vpack.c.bf16 %v396, %v395
      %v424 = vpack.c.bf16 %v398, %v397
      %v425 = vpack.c.bf16 %v400, %v399
      %v426 = vpack.c.bf16 %v402, %v401
      %v427 = vpack.c.bf16 %v404, %v403
      %v428 = vpack.c.bf16 %v406, %v405
      %v429 = vpack.c.bf16 %v408, %v407
      %v430 = vpack.c.bf16 %v410, %v409
      %v431 = vpack.c.bf16 %v412, %v411
      %v432 = vpack.c.bf16 %v414, %v413
      %v433 = vpack.c.bf16 %v416, %v415
      %v434 = vpack.c.bf16 %v418, %v417
      %v436 = vshrl.u32 %v419, 16
      %v438 = vrot.slane %v436, 6
      %v439 = vshll.u32 %v419, 16
      %v441 = vrot.slane %v439, 7
      %v442 = vor.u32 %v438, %v441
      %v444 = vshrl.u32 %v420, 16
      %v446 = vrot.slane %v444, 6
      %v447 = vshll.u32 %v420, 16
      %v449 = vrot.slane %v447, 7
      %v450 = vor.u32 %v446, %v449
      %v452 = vshrl.u32 %v421, 16
      %v454 = vrot.slane %v452, 6
      %v455 = vshll.u32 %v421, 16
      %v457 = vrot.slane %v455, 7
      %v458 = vor.u32 %v454, %v457
      %v460 = vshrl.u32 %v422, 16
      %v462 = vrot.slane %v460, 6
      %v463 = vshll.u32 %v422, 16
      %v465 = vrot.slane %v463, 7
      %v466 = vor.u32 %v462, %v465
      %v468 = vshrl.u32 %v423, 16
      %v470 = vrot.slane %v468, 6
      %v471 = vshll.u32 %v423, 16
      %v473 = vrot.slane %v471, 7
      %v474 = vor.u32 %v470, %v473
      %v476 = vshrl.u32 %v424, 16
      %v478 = vrot.slane %v476, 6
      %v479 = vshll.u32 %v424, 16
      %v481 = vrot.slane %v479, 7
      %v482 = vor.u32 %v478, %v481
      %v484 = vshrl.u32 %v425, 16
      %v486 = vrot.slane %v484, 6
      %v487 = vshll.u32 %v425, 16
      %v489 = vrot.slane %v487, 7
      %v490 = vor.u32 %v486, %v489
      %v492 = vshrl.u32 %v426, 16
      %v494 = vrot.slane %v492, 6
      %v495 = vshll.u32 %v426, 16
      %v497 = vrot.slane %v495, 7
      %v498 = vor.u32 %v494, %v497
      %v500 = vshrl.u32 %v427, 16
      %v502 = vrot.slane %v500, 6
      %v503 = vshll.u32 %v427, 16
      %v505 = vrot.slane %v503, 7
      %v506 = vor.u32 %v502, %v505
      %v508 = vshrl.u32 %v428, 16
      %v510 = vrot.slane %v508, 6
      %v511 = vshll.u32 %v428, 16
      %v513 = vrot.slane %v511, 7
      %v514 = vor.u32 %v510, %v513
      %v516 = vshrl.u32 %v429, 16
      %v518 = vrot.slane %v516, 6
      %v519 = vshll.u32 %v429, 16
      %v521 = vrot.slane %v519, 7
      %v522 = vor.u32 %v518, %v521
      %v524 = vshrl.u32 %v430, 16
      %v526 = vrot.slane %v524, 6
      %v527 = vshll.u32 %v430, 16
      %v529 = vrot.slane %v527, 7
      %v530 = vor.u32 %v526, %v529
      %v532 = vshrl.u32 %v431, 16
      %v534 = vrot.slane %v532, 6
      %v535 = vshll.u32 %v431, 16
      %v537 = vrot.slane %v535, 7
      %v538 = vor.u32 %v534, %v537
      %v540 = vshrl.u32 %v432, 16
      %v542 = vrot.slane %v540, 6
      %v543 = vshll.u32 %v432, 16
      %v545 = vrot.slane %v543, 7
      %v546 = vor.u32 %v542, %v545
      %v548 = vshrl.u32 %v433, 16
      %v550 = vrot.slane %v548, 6
      %v551 = vshll.u32 %v433, 16
      %v553 = vrot.slane %v551, 7
      %v554 = vor.u32 %v550, %v553
      %v556 = vshrl.u32 %v434, 16
      %v558 = vrot.slane %v556, 6
      %v559 = vshll.u32 %v434, 16
      %v561 = vrot.slane %v559, 7
      %v562 = vor.u32 %v558, %v561
      %vm579 = vcmask 1041408
      %vm580 = vsmask.f32 1280
      %vm581 = vmand %vm579, %vm580
      %v582 = vsel %vm581, 0, %v442
      %v583 = vsel %vm581, 0, %v450
      %v584 = vsel %vm581, 0, %v458
      %v585 = vsel %vm581, 0, %v466
      %v586 = vsel %vm581, 0, %v474
      %v587 = vsel %vm581, 0, %v482
      %v588 = vsel %vm581, 0, %v490
      %v589 = vsel %vm581, 0, %v498
      %v590 = vsel %vm581, 0, %v506
      %v591 = vsel %vm581, 0, %v514
      %v592 = vsel %vm581, 0, %v522
      %v593 = vsel %vm581, 0, %v530
      %v594 = vsel %vm581, 0, %v538
      %v595 = vsel %vm581, 0, %v546
      %v596 = vsel %vm581, 0, %v554
      %v597 = vsel %vm581, 0, %v562
      %v598 = vsel %vm581, %v442, 0
      %v599 = vsel %vm581, %v450, 0
      %v600 = vsel %vm581, %v458, 0
      %v601 = vsel %vm581, %v466, 0
      %v602 = vsel %vm581, %v474, 0
      %v603 = vsel %vm581, %v482, 0
      %v604 = vsel %vm581, %v490, 0
      %v605 = vsel %vm581, %v498, 0
      %v606 = vsel %vm581, %v506, 0
      %v607 = vsel %vm581, %v514, 0
      %v608 = vsel %vm581, %v522, 0
      %v609 = vsel %vm581, %v530, 0
      %v610 = vsel %vm581, %v538, 0
      %v611 = vsel %vm581, %v546, 0
      %v612 = vsel %vm581, %v554, 0
      %v613 = vsel %vm581, %v562, 0
      %vm614 = vsmask.f32 7424
      %v616 = vshrl.u32 %v582, 16
      %v618 = vshll.u32 %v582, 16
      %v620 = vrot.slane %v618, 1
      %v621 = vor.u32 %v616, %v620
      %v623 = vshll.u32 %v598, 16
      %v625 = vrot.slane %v623, 1
      %v626 = vsel %vm614, %v621, %v625
      %v628 = vshrl.u32 %v583, 16
      %v630 = vshll.u32 %v583, 16
      %v632 = vrot.slane %v630, 1
      %v633 = vor.u32 %v628, %v632
      %v635 = vshll.u32 %v599, 16
      %v637 = vrot.slane %v635, 1
      %v638 = vsel %vm614, %v633, %v637
      %v640 = vshrl.u32 %v584, 16
      %v642 = vshll.u32 %v584, 16
      %v644 = vrot.slane %v642, 1
      %v645 = vor.u32 %v640, %v644
      %v647 = vshll.u32 %v600, 16
      %v649 = vrot.slane %v647, 1
      %v650 = vsel %vm614, %v645, %v649
      %v652 = vshrl.u32 %v585, 16
      %v654 = vshll.u32 %v585, 16
      %v656 = vrot.slane %v654, 1
      %v657 = vor.u32 %v652, %v656
      %v659 = vshll.u32 %v601, 16
      %v661 = vrot.slane %v659, 1
      %v662 = vsel %vm614, %v657, %v661
      %v664 = vshrl.u32 %v586, 16
      %v666 = vshll.u32 %v586, 16
      %v668 = vrot.slane %v666, 1
      %v669 = vor.u32 %v664, %v668
      %v671 = vshll.u32 %v602, 16
      %v673 = vrot.slane %v671, 1
      %v674 = vsel %vm614, %v669, %v673
      %v676 = vshrl.u32 %v587, 16
      %v678 = vshll.u32 %v587, 16
      %v680 = vrot.slane %v678, 1
      %v681 = vor.u32 %v676, %v680
      %v683 = vshll.u32 %v603, 16
      %v685 = vrot.slane %v683, 1
      %v686 = vsel %vm614, %v681, %v685
      %v688 = vshrl.u32 %v588, 16
      %v690 = vshll.u32 %v588, 16
      %v692 = vrot.slane %v690, 1
      %v693 = vor.u32 %v688, %v692
      %v695 = vshll.u32 %v604, 16
      %v697 = vrot.slane %v695, 1
      %v698 = vsel %vm614, %v693, %v697
      %v700 = vshrl.u32 %v589, 16
      %v702 = vshll.u32 %v589, 16
      %v704 = vrot.slane %v702, 1
      %v705 = vor.u32 %v700, %v704
      %v707 = vshll.u32 %v605, 16
      %v709 = vrot.slane %v707, 1
      %v710 = vsel %vm614, %v705, %v709
      %v712 = vshrl.u32 %v590, 16
      %v714 = vshll.u32 %v590, 16
      %v716 = vrot.slane %v714, 1
      %v717 = vor.u32 %v712, %v716
      %v719 = vshll.u32 %v606, 16
      %v721 = vrot.slane %v719, 1
      %v722 = vsel %vm614, %v717, %v721
      %v724 = vshrl.u32 %v591, 16
      %v726 = vshll.u32 %v591, 16
      %v728 = vrot.slane %v726, 1
      %v729 = vor.u32 %v724, %v728
      %v731 = vshll.u32 %v607, 16
      %v733 = vrot.slane %v731, 1
      %v734 = vsel %vm614, %v729, %v733
      %v736 = vshrl.u32 %v592, 16
      %v738 = vshll.u32 %v592, 16
      %v740 = vrot.slane %v738, 1
      %v741 = vor.u32 %v736, %v740
      %v743 = vshll.u32 %v608, 16
      %v745 = vrot.slane %v743, 1
      %v746 = vsel %vm614, %v741, %v745
      %v748 = vshrl.u32 %v593, 16
      %v750 = vshll.u32 %v593, 16
      %v752 = vrot.slane %v750, 1
      %v753 = vor.u32 %v748, %v752
      %v755 = vshll.u32 %v609, 16
      %v757 = vrot.slane %v755, 1
      %v758 = vsel %vm614, %v753, %v757
      %v760 = vshrl.u32 %v594, 16
      %v762 = vshll.u32 %v594, 16
      %v764 = vrot.slane %v762, 1
      %v765 = vor.u32 %v760, %v764
      %v767 = vshll.u32 %v610, 16
      %v769 = vrot.slane %v767, 1
      %v770 = vsel %vm614, %v765, %v769
      %v772 = vshrl.u32 %v595, 16
      %v774 = vshll.u32 %v595, 16
      %v776 = vrot.slane %v774, 1
      %v777 = vor.u32 %v772, %v776
      %v779 = vshll.u32 %v611, 16
      %v781 = vrot.slane %v779, 1
      %v782 = vsel %vm614, %v777, %v781
      %v784 = vshrl.u32 %v596, 16
      %v786 = vshll.u32 %v596, 16
      %v788 = vrot.slane %v786, 1
      %v789 = vor.u32 %v784, %v788
      %v791 = vshll.u32 %v612, 16
      %v793 = vrot.slane %v791, 1
      %v794 = vsel %vm614, %v789, %v793
      %v796 = vshrl.u32 %v597, 16
      %v798 = vshll.u32 %v597, 16
      %v800 = vrot.slane %v798, 1
      %v801 = vor.u32 %v796, %v800
      %v803 = vshll.u32 %v613, 16
      %v805 = vrot.slane %v803, 1
      %v806 = vsel %vm614, %v801, %v805
      %807 = vrot.lane.b32.xlu0 %v626, 8
      %v808 = vpop.permute.xlu0 %807
      %809 = vrot.lane.b32.xlu0 %v638, 8
      %v810 = vpop.permute.xlu0 %809
      %811 = vrot.lane.b32.xlu0 %v650, 8
      %v812 = vpop.permute.xlu0 %811
      %813 = vrot.lane.b32.xlu0 %v662, 8
      %v814 = vpop.permute.xlu0 %813
      %815 = vrot.lane.b32.xlu0 %v674, 8
      %v816 = vpop.permute.xlu0 %815
      %817 = vrot.lane.b32.xlu0 %v686, 8
      %v818 = vpop.permute.xlu0 %817
      %819 = vrot.lane.b32.xlu0 %v698, 8
      %v820 = vpop.permute.xlu0 %819
      %821 = vrot.lane.b32.xlu0 %v710, 8
      %v822 = vpop.permute.xlu0 %821
      %823 = vrot.lane.b32.xlu0 %v722, 8
      %v824 = vpop.permute.xlu0 %823
      %825 = vrot.lane.b32.xlu0 %v734, 8
      %v826 = vpop.permute.xlu0 %825
      %827 = vrot.lane.b32.xlu0 %v746, 8
      %v828 = vpop.permute.xlu0 %827
      %829 = vrot.lane.b32.xlu0 %v758, 8
      %v830 = vpop.permute.xlu0 %829
      %831 = vrot.lane.b32.xlu0 %v770, 8
      %v832 = vpop.permute.xlu0 %831
      %833 = vrot.lane.b32.xlu0 %v782, 8
      %v834 = vpop.permute.xlu0 %833
      %835 = vrot.lane.b32.xlu0 %v794, 8
      %v836 = vpop.permute.xlu0 %835
      %837 = vrot.lane.b32.xlu0 %v806, 8
      %v838 = vpop.permute.xlu0 %837
      %vm871 = vcmask 1046528
      %v872 = vrot.slane %v582, 1
      %v873 = vrot.slane %v598, 1
      %v874 = vsel %vm871, %v872, %v873
      %v875 = vrot.slane %v583, 1
      %v876 = vrot.slane %v599, 1
      %v877 = vsel %vm871, %v875, %v876
      %v878 = vrot.slane %v584, 1
      %v879 = vrot.slane %v600, 1
      %v880 = vsel %vm871, %v878, %v879
      %v881 = vrot.slane %v585, 1
      %v882 = vrot.slane %v601, 1
      %v883 = vsel %vm871, %v881, %v882
      %v884 = vrot.slane %v586, 1
      %v885 = vrot.slane %v602, 1
      %v886 = vsel %vm871, %v884, %v885
      %v887 = vrot.slane %v587, 1
      %v888 = vrot.slane %v603, 1
      %v889 = vsel %vm871, %v887, %v888
      %v890 = vrot.slane %v588, 1
      %v891 = vrot.slane %v604, 1
      %v892 = vsel %vm871, %v890, %v891
      %v893 = vrot.slane %v589, 1
      %v894 = vrot.slane %v605, 1
      %v895 = vsel %vm871, %v893, %v894
      %v896 = vrot.slane %v590, 1
      %v897 = vrot.slane %v606, 1
      %v898 = vsel %vm871, %v896, %v897
      %v899 = vrot.slane %v591, 1
      %v900 = vrot.slane %v607, 1
      %v901 = vsel %vm871, %v899, %v900
      %v902 = vrot.slane %v592, 1
      %v903 = vrot.slane %v608, 1
      %v904 = vsel %vm871, %v902, %v903
      %v905 = vrot.slane %v593, 1
      %v906 = vrot.slane %v609, 1
      %v907 = vsel %vm871, %v905, %v906
      %v908 = vrot.slane %v594, 1
      %v909 = vrot.slane %v610, 1
      %v910 = vsel %vm871, %v908, %v909
      %v911 = vrot.slane %v595, 1
      %v912 = vrot.slane %v611, 1
      %v913 = vsel %vm871, %v911, %v912
      %v914 = vrot.slane %v596, 1
      %v915 = vrot.slane %v612, 1
      %v916 = vsel %vm871, %v914, %v915
      %v917 = vrot.slane %v597, 1
      %v918 = vrot.slane %v613, 1
      %v919 = vsel %vm871, %v917, %v918
      %920 = vrot.lane.b32.xlu0 %v874, 16
      %v921 = vpop.permute.xlu0 %920
      %922 = vrot.lane.b32.xlu0 %v877, 16
      %v923 = vpop.permute.xlu0 %922
      %924 = vrot.lane.b32.xlu0 %v880, 16
      %v925 = vpop.permute.xlu0 %924
      %926 = vrot.lane.b32.xlu0 %v883, 16
      %v927 = vpop.permute.xlu0 %926
      %928 = vrot.lane.b32.xlu0 %v886, 16
      %v929 = vpop.permute.xlu0 %928
      %930 = vrot.lane.b32.xlu0 %v889, 16
      %v931 = vpop.permute.xlu0 %930
      %932 = vrot.lane.b32.xlu0 %v892, 16
      %v933 = vpop.permute.xlu0 %932
      %934 = vrot.lane.b32.xlu0 %v895, 16
      %v935 = vpop.permute.xlu0 %934
      %936 = vrot.lane.b32.xlu0 %v898, 16
      %v937 = vpop.permute.xlu0 %936
      %938 = vrot.lane.b32.xlu0 %v901, 16
      %v939 = vpop.permute.xlu0 %938
      %940 = vrot.lane.b32.xlu0 %v904, 16
      %v941 = vpop.permute.xlu0 %940
      %942 = vrot.lane.b32.xlu0 %v907, 16
      %v943 = vpop.permute.xlu0 %942
      %944 = vrot.lane.b32.xlu0 %v910, 16
      %v945 = vpop.permute.xlu0 %944
      %946 = vrot.lane.b32.xlu0 %v913, 16
      %v947 = vpop.permute.xlu0 %946
      %948 = vrot.lane.b32.xlu0 %v916, 16
      %v949 = vpop.permute.xlu0 %948
      %950 = vrot.lane.b32.xlu0 %v919, 16
      %v951 = vpop.permute.xlu0 %950
      %vm952 = vsmask.f32 6400
      %v953 = vrot.slane %v616, 1
      %v954 = vrot.slane %v618, 2
      %v955 = vor.u32 %v953, %v954
      %v956 = vshrl.u32 %v598, 16
      %v958 = vrot.slane %v956, 1
      %v959 = vrot.slane %v623, 2
      %v960 = vor.u32 %v958, %v959
      %v961 = vsel %vm952, %v955, %v960
      %v962 = vrot.slane %v628, 1
      %v963 = vrot.slane %v630, 2
      %v964 = vor.u32 %v962, %v963
      %v965 = vshrl.u32 %v599, 16
      %v967 = vrot.slane %v965, 1
      %v968 = vrot.slane %v635, 2
      %v969 = vor.u32 %v967, %v968
      %v970 = vsel %vm952, %v964, %v969
      %v971 = vrot.slane %v640, 1
      %v972 = vrot.slane %v642, 2
      %v973 = vor.u32 %v971, %v972
      %v974 = vshrl.u32 %v600, 16
      %v976 = vrot.slane %v974, 1
      %v977 = vrot.slane %v647, 2
      %v978 = vor.u32 %v976, %v977
      %v979 = vsel %vm952, %v973, %v978
      %v980 = vrot.slane %v652, 1
      %v981 = vrot.slane %v654, 2
      %v982 = vor.u32 %v980, %v981
      %v983 = vshrl.u32 %v601, 16
      %v985 = vrot.slane %v983, 1
      %v986 = vrot.slane %v659, 2
      %v987 = vor.u32 %v985, %v986
      %v988 = vsel %vm952, %v982, %v987
      %v989 = vrot.slane %v664, 1
      %v990 = vrot.slane %v666, 2
      %v991 = vor.u32 %v989, %v990
      %v992 = vshrl.u32 %v602, 16
      %v994 = vrot.slane %v992, 1
      %v995 = vrot.slane %v671, 2
      %v996 = vor.u32 %v994, %v995
      %v997 = vsel %vm952, %v991, %v996
      %v998 = vrot.slane %v676, 1
      %v999 = vrot.slane %v678, 2
      %v1000 = vor.u32 %v998, %v999
      %v1001 = vshrl.u32 %v603, 16
      %v1003 = vrot.slane %v1001, 1
      %v1004 = vrot.slane %v683, 2
      %v1005 = vor.u32 %v1003, %v1004
      %v1006 = vsel %vm952, %v1000, %v1005
      %v1007 = vrot.slane %v688, 1
      %v1008 = vrot.slane %v690, 2
      %v1009 = vor.u32 %v1007, %v1008
      %v1010 = vshrl.u32 %v604, 16
      %v1012 = vrot.slane %v1010, 1
      %v1013 = vrot.slane %v695, 2
      %v1014 = vor.u32 %v1012, %v1013
      %v1015 = vsel %vm952, %v1009, %v1014
      %v1016 = vrot.slane %v700, 1
      %v1017 = vrot.slane %v702, 2
      %v1018 = vor.u32 %v1016, %v1017
      %v1019 = vshrl.u32 %v605, 16
      %v1021 = vrot.slane %v1019, 1
      %v1022 = vrot.slane %v707, 2
      %v1023 = vor.u32 %v1021, %v1022
      %v1024 = vsel %vm952, %v1018, %v1023
      %v1025 = vrot.slane %v712, 1
      %v1026 = vrot.slane %v714, 2
      %v1027 = vor.u32 %v1025, %v1026
      %v1028 = vshrl.u32 %v606, 16
      %v1030 = vrot.slane %v1028, 1
      %v1031 = vrot.slane %v719, 2
      %v1032 = vor.u32 %v1030, %v1031
      %v1033 = vsel %vm952, %v1027, %v1032
      %v1034 = vrot.slane %v724, 1
      %v1035 = vrot.slane %v726, 2
      %v1036 = vor.u32 %v1034, %v1035
      %v1037 = vshrl.u32 %v607, 16
      %v1039 = vrot.slane %v1037, 1
      %v1040 = vrot.slane %v731, 2
      %v1041 = vor.u32 %v1039, %v1040
      %v1042 = vsel %vm952, %v1036, %v1041
      %v1043 = vrot.slane %v736, 1
      %v1044 = vrot.slane %v738, 2
      %v1045 = vor.u32 %v1043, %v1044
      %v1046 = vshrl.u32 %v608, 16
      %v1048 = vrot.slane %v1046, 1
      %v1049 = vrot.slane %v743, 2
      %v1050 = vor.u32 %v1048, %v1049
      %v1051 = vsel %vm952, %v1045, %v1050
      %v1052 = vrot.slane %v748, 1
      %v1053 = vrot.slane %v750, 2
      %v1054 = vor.u32 %v1052, %v1053
      %v1055 = vshrl.u32 %v609, 16
      %v1057 = vrot.slane %v1055, 1
      %v1058 = vrot.slane %v755, 2
      %v1059 = vor.u32 %v1057, %v1058
      %v1060 = vsel %vm952, %v1054, %v1059
      %v1061 = vrot.slane %v760, 1
      %v1062 = vrot.slane %v762, 2
      %v1063 = vor.u32 %v1061, %v1062
      %v1064 = vshrl.u32 %v610, 16
      %v1066 = vrot.slane %v1064, 1
      %v1067 = vrot.slane %v767, 2
      %v1068 = vor.u32 %v1066, %v1067
      %v1069 = vsel %vm952, %v1063, %v1068
      %v1070 = vrot.slane %v772, 1
      %v1071 = vrot.slane %v774, 2
      %v1072 = vor.u32 %v1070, %v1071
      %v1073 = vshrl.u32 %v611, 16
      %v1075 = vrot.slane %v1073, 1
      %v1076 = vrot.slane %v779, 2
      %v1077 = vor.u32 %v1075, %v1076
      %v1078 = vsel %vm952, %v1072, %v1077
      %v1079 = vrot.slane %v784, 1
      %v1080 = vrot.slane %v786, 2
      %v1081 = vor.u32 %v1079, %v1080
      %v1082 = vshrl.u32 %v612, 16
      %v1084 = vrot.slane %v1082, 1
      %v1085 = vrot.slane %v791, 2
      %v1086 = vor.u32 %v1084, %v1085
      %v1087 = vsel %vm952, %v1081, %v1086
      %v1088 = vrot.slane %v796, 1
      %v1089 = vrot.slane %v798, 2
      %v1090 = vor.u32 %v1088, %v1089
      %v1091 = vshrl.u32 %v613, 16
      %v1093 = vrot.slane %v1091, 1
      %v1094 = vrot.slane %v803, 2
      %v1095 = vor.u32 %v1093, %v1094
      %v1096 = vsel %vm952, %v1090, %v1095
      %1097 = vrot.lane.b32.xlu0 %v961, 24
      %v1098 = vpop.permute.xlu0 %1097
      %1099 = vrot.lane.b32.xlu0 %v970, 24
      %v1100 = vpop.permute.xlu0 %1099
      %1101 = vrot.lane.b32.xlu0 %v979, 24
      %v1102 = vpop.permute.xlu0 %1101
      %1103 = vrot.lane.b32.xlu0 %v988, 24
      %v1104 = vpop.permute.xlu0 %1103
      %1105 = vrot.lane.b32.xlu0 %v997, 24
      %v1106 = vpop.permute.xlu0 %1105
      %1107 = vrot.lane.b32.xlu0 %v1006, 24
      %v1108 = vpop.permute.xlu0 %1107
      %1109 = vrot.lane.b32.xlu0 %v1015, 24
      %v1110 = vpop.permute.xlu0 %1109
      %1111 = vrot.lane.b32.xlu0 %v1024, 24
      %v1112 = vpop.permute.xlu0 %1111
      %1113 = vrot.lane.b32.xlu0 %v1033, 24
      %v1114 = vpop.permute.xlu0 %1113
      %1115 = vrot.lane.b32.xlu0 %v1042, 24
      %v1116 = vpop.permute.xlu0 %1115
      %1117 = vrot.lane.b32.xlu0 %v1051, 24
      %v1118 = vpop.permute.xlu0 %1117
      %1119 = vrot.lane.b32.xlu0 %v1060, 24
      %v1120 = vpop.permute.xlu0 %1119
      %1121 = vrot.lane.b32.xlu0 %v1069, 24
      %v1122 = vpop.permute.xlu0 %1121
      %1123 = vrot.lane.b32.xlu0 %v1078, 24
      %v1124 = vpop.permute.xlu0 %1123
      %1125 = vrot.lane.b32.xlu0 %v1087, 24
      %v1126 = vpop.permute.xlu0 %1125
      %1127 = vrot.lane.b32.xlu0 %v1096, 24
      %v1128 = vpop.permute.xlu0 %1127
      %vm1129 = vcmask 1045504
      %v1130 = vrot.slane %v582, 2
      %v1131 = vrot.slane %v598, 2
      %v1132 = vsel %vm1129, %v1130, %v1131
      %v1133 = vrot.slane %v583, 2
      %v1134 = vrot.slane %v599, 2
      %v1135 = vsel %vm1129, %v1133, %v1134
      %v1136 = vrot.slane %v584, 2
      %v1137 = vrot.slane %v600, 2
      %v1138 = vsel %vm1129, %v1136, %v1137
      %v1139 = vrot.slane %v585, 2
      %v1140 = vrot.slane %v601, 2
      %v1141 = vsel %vm1129, %v1139, %v1140
      %v1142 = vrot.slane %v586, 2
      %v1143 = vrot.slane %v602, 2
      %v1144 = vsel %vm1129, %v1142, %v1143
      %v1145 = vrot.slane %v587, 2
      %v1146 = vrot.slane %v603, 2
      %v1147 = vsel %vm1129, %v1145, %v1146
      %v1148 = vrot.slane %v588, 2
      %v1149 = vrot.slane %v604, 2
      %v1150 = vsel %vm1129, %v1148, %v1149
      %v1151 = vrot.slane %v589, 2
      %v1152 = vrot.slane %v605, 2
      %v1153 = vsel %vm1129, %v1151, %v1152
      %v1154 = vrot.slane %v590, 2
      %v1155 = vrot.slane %v606, 2
      %v1156 = vsel %vm1129, %v1154, %v1155
      %v1157 = vrot.slane %v591, 2
      %v1158 = vrot.slane %v607, 2
      %v1159 = vsel %vm1129, %v1157, %v1158
      %v1160 = vrot.slane %v592, 2
      %v1161 = vrot.slane %v608, 2
      %v1162 = vsel %vm1129, %v1160, %v1161
      %v1163 = vrot.slane %v593, 2
      %v1164 = vrot.slane %v609, 2
      %v1165 = vsel %vm1129, %v1163, %v1164
      %v1166 = vrot.slane %v594, 2
      %v1167 = vrot.slane %v610, 2
      %v1168 = vsel %vm1129, %v1166, %v1167
      %v1169 = vrot.slane %v595, 2
      %v1170 = vrot.slane %v611, 2
      %v1171 = vsel %vm1129, %v1169, %v1170
      %v1172 = vrot.slane %v596, 2
      %v1173 = vrot.slane %v612, 2
      %v1174 = vsel %vm1129, %v1172, %v1173
      %v1175 = vrot.slane %v597, 2
      %v1176 = vrot.slane %v613, 2
      %v1177 = vsel %vm1129, %v1175, %v1176
      %1178 = vrot.lane.b32.xlu0 %v1132, 32
      %v1179 = vpop.permute.xlu0 %1178
      %1180 = vrot.lane.b32.xlu0 %v1135, 32
      %v1181 = vpop.permute.xlu0 %1180
      %1182 = vrot.lane.b32.xlu0 %v1138, 32
      %v1183 = vpop.permute.xlu0 %1182
      %1184 = vrot.lane.b32.xlu0 %v1141, 32
      %v1185 = vpop.permute.xlu0 %1184
      %1186 = vrot.lane.b32.xlu0 %v1144, 32
      %v1187 = vpop.permute.xlu0 %1186
      %1188 = vrot.lane.b32.xlu0 %v1147, 32
      %v1189 = vpop.permute.xlu0 %1188
      %1190 = vrot.lane.b32.xlu0 %v1150, 32
      %v1191 = vpop.permute.xlu0 %1190
      %1192 = vrot.lane.b32.xlu0 %v1153, 32
      %v1193 = vpop.permute.xlu0 %1192
      %1194 = vrot.lane.b32.xlu0 %v1156, 32
      %v1195 = vpop.permute.xlu0 %1194
      %1196 = vrot.lane.b32.xlu0 %v1159, 32
      %v1197 = vpop.permute.xlu0 %1196
      %1198 = vrot.lane.b32.xlu0 %v1162, 32
      %v1199 = vpop.permute.xlu0 %1198
      %1200 = vrot.lane.b32.xlu0 %v1165, 32
      %v1201 = vpop.permute.xlu0 %1200
      %1202 = vrot.lane.b32.xlu0 %v1168, 32
      %v1203 = vpop.permute.xlu0 %1202
      %1204 = vrot.lane.b32.xlu0 %v1171, 32
      %v1205 = vpop.permute.xlu0 %1204
      %1206 = vrot.lane.b32.xlu0 %v1174, 32
      %v1207 = vpop.permute.xlu0 %1206
      %1208 = vrot.lane.b32.xlu0 %v1177, 32
      %v1209 = vpop.permute.xlu0 %1208
      %vm1210 = vsmask.f32 5376
      %v1211 = vrot.slane %v616, 2
      %v1212 = vrot.slane %v618, 3
      %v1213 = vor.u32 %v1211, %v1212
      %v1214 = vrot.slane %v956, 2
      %v1215 = vrot.slane %v623, 3
      %v1216 = vor.u32 %v1214, %v1215
      %v1217 = vsel %vm1210, %v1213, %v1216
      %v1218 = vrot.slane %v628, 2
      %v1219 = vrot.slane %v630, 3
      %v1220 = vor.u32 %v1218, %v1219
      %v1221 = vrot.slane %v965, 2
      %v1222 = vrot.slane %v635, 3
      %v1223 = vor.u32 %v1221, %v1222
      %v1224 = vsel %vm1210, %v1220, %v1223
      %v1225 = vrot.slane %v640, 2
      %v1226 = vrot.slane %v642, 3
      %v1227 = vor.u32 %v1225, %v1226
      %v1228 = vrot.slane %v974, 2
      %v1229 = vrot.slane %v647, 3
      %v1230 = vor.u32 %v1228, %v1229
      %v1231 = vsel %vm1210, %v1227, %v1230
      %v1232 = vrot.slane %v652, 2
      %v1233 = vrot.slane %v654, 3
      %v1234 = vor.u32 %v1232, %v1233
      %v1235 = vrot.slane %v983, 2
      %v1236 = vrot.slane %v659, 3
      %v1237 = vor.u32 %v1235, %v1236
      %v1238 = vsel %vm1210, %v1234, %v1237
      %v1239 = vrot.slane %v664, 2
      %v1240 = vrot.slane %v666, 3
      %v1241 = vor.u32 %v1239, %v1240
      %v1242 = vrot.slane %v992, 2
      %v1243 = vrot.slane %v671, 3
      %v1244 = vor.u32 %v1242, %v1243
      %v1245 = vsel %vm1210, %v1241, %v1244
      %v1246 = vrot.slane %v676, 2
      %v1247 = vrot.slane %v678, 3
      %v1248 = vor.u32 %v1246, %v1247
      %v1249 = vrot.slane %v1001, 2
      %v1250 = vrot.slane %v683, 3
      %v1251 = vor.u32 %v1249, %v1250
      %v1252 = vsel %vm1210, %v1248, %v1251
      %v1253 = vrot.slane %v688, 2
      %v1254 = vrot.slane %v690, 3
      %v1255 = vor.u32 %v1253, %v1254
      %v1256 = vrot.slane %v1010, 2
      %v1257 = vrot.slane %v695, 3
      %v1258 = vor.u32 %v1256, %v1257
      %v1259 = vsel %vm1210, %v1255, %v1258
      %v1260 = vrot.slane %v700, 2
      %v1261 = vrot.slane %v702, 3
      %v1262 = vor.u32 %v1260, %v1261
      %v1263 = vrot.slane %v1019, 2
      %v1264 = vrot.slane %v707, 3
      %v1265 = vor.u32 %v1263, %v1264
      %v1266 = vsel %vm1210, %v1262, %v1265
      %v1267 = vrot.slane %v712, 2
      %v1268 = vrot.slane %v714, 3
      %v1269 = vor.u32 %v1267, %v1268
      %v1270 = vrot.slane %v1028, 2
      %v1271 = vrot.slane %v719, 3
      %v1272 = vor.u32 %v1270, %v1271
      %v1273 = vsel %vm1210, %v1269, %v1272
      %v1274 = vrot.slane %v724, 2
      %v1275 = vrot.slane %v726, 3
      %v1276 = vor.u32 %v1274, %v1275
      %v1277 = vrot.slane %v1037, 2
      %v1278 = vrot.slane %v731, 3
      %v1279 = vor.u32 %v1277, %v1278
      %v1280 = vsel %vm1210, %v1276, %v1279
      %v1281 = vrot.slane %v736, 2
      %v1282 = vrot.slane %v738, 3
      %v1283 = vor.u32 %v1281, %v1282
      %v1284 = vrot.slane %v1046, 2
      %v1285 = vrot.slane %v743, 3
      %v1286 = vor.u32 %v1284, %v1285
      %v1287 = vsel %vm1210, %v1283, %v1286
      %v1288 = vrot.slane %v748, 2
      %v1289 = vrot.slane %v750, 3
      %v1290 = vor.u32 %v1288, %v1289
      %v1291 = vrot.slane %v1055, 2
      %v1292 = vrot.slane %v755, 3
      %v1293 = vor.u32 %v1291, %v1292
      %v1294 = vsel %vm1210, %v1290, %v1293
      %v1295 = vrot.slane %v760, 2
      %v1296 = vrot.slane %v762, 3
      %v1297 = vor.u32 %v1295, %v1296
      %v1298 = vrot.slane %v1064, 2
      %v1299 = vrot.slane %v767, 3
      %v1300 = vor.u32 %v1298, %v1299
      %v1301 = vsel %vm1210, %v1297, %v1300
      %v1302 = vrot.slane %v772, 2
      %v1303 = vrot.slane %v774, 3
      %v1304 = vor.u32 %v1302, %v1303
      %v1305 = vrot.slane %v1073, 2
      %v1306 = vrot.slane %v779, 3
      %v1307 = vor.u32 %v1305, %v1306
      %v1308 = vsel %vm1210, %v1304, %v1307
      %v1309 = vrot.slane %v784, 2
      %v1310 = vrot.slane %v786, 3
      %v1311 = vor.u32 %v1309, %v1310
      %v1312 = vrot.slane %v1082, 2
      %v1313 = vrot.slane %v791, 3
      %v1314 = vor.u32 %v1312, %v1313
      %v1315 = vsel %vm1210, %v1311, %v1314
      %v1316 = vrot.slane %v796, 2
      %v1317 = vrot.slane %v798, 3
      %v1318 = vor.u32 %v1316, %v1317
      %v1319 = vrot.slane %v1091, 2
      %v1320 = vrot.slane %v803, 3
      %v1321 = vor.u32 %v1319, %v1320
      %v1322 = vsel %vm1210, %v1318, %v1321
      %1323 = vrot.lane.b32.xlu0 %v1217, 40
      %v1324 = vpop.permute.xlu0 %1323
      %1325 = vrot.lane.b32.xlu0 %v1224, 40
      %v1326 = vpop.permute.xlu0 %1325
      %1327 = vrot.lane.b32.xlu0 %v1231, 40
      %v1328 = vpop.permute.xlu0 %1327
      %1329 = vrot.lane.b32.xlu0 %v1238, 40
      %v1330 = vpop.permute.xlu0 %1329
      %1331 = vrot.lane.b32.xlu0 %v1245, 40
      %v1332 = vpop.permute.xlu0 %1331
      %1333 = vrot.lane.b32.xlu0 %v1252, 40
      %v1334 = vpop.permute.xlu0 %1333
      %1335 = vrot.lane.b32.xlu0 %v1259, 40
      %v1336 = vpop.permute.xlu0 %1335
      %1337 = vrot.lane.b32.xlu0 %v1266, 40
      %v1338 = vpop.permute.xlu0 %1337
      %1339 = vrot.lane.b32.xlu0 %v1273, 40
      %v1340 = vpop.permute.xlu0 %1339
      %1341 = vrot.lane.b32.xlu0 %v1280, 40
      %v1342 = vpop.permute.xlu0 %1341
      %1343 = vrot.lane.b32.xlu0 %v1287, 40
      %v1344 = vpop.permute.xlu0 %1343
      %1345 = vrot.lane.b32.xlu0 %v1294, 40
      %v1346 = vpop.permute.xlu0 %1345
      %1347 = vrot.lane.b32.xlu0 %v1301, 40
      %v1348 = vpop.permute.xlu0 %1347
      %1349 = vrot.lane.b32.xlu0 %v1308, 40
      %v1350 = vpop.permute.xlu0 %1349
      %1351 = vrot.lane.b32.xlu0 %v1315, 40
      %v1352 = vpop.permute.xlu0 %1351
      %1353 = vrot.lane.b32.xlu0 %v1322, 40
      %v1354 = vpop.permute.xlu0 %1353
      %vm1355 = vcmask 1044480
      %v1356 = vrot.slane %v582, 3
      %v1357 = vrot.slane %v598, 3
      %v1358 = vsel %vm1355, %v1356, %v1357
      %v1359 = vrot.slane %v583, 3
      %v1360 = vrot.slane %v599, 3
      %v1361 = vsel %vm1355, %v1359, %v1360
      %v1362 = vrot.slane %v584, 3
      %v1363 = vrot.slane %v600, 3
      %v1364 = vsel %vm1355, %v1362, %v1363
      %v1365 = vrot.slane %v585, 3
      %v1366 = vrot.slane %v601, 3
      %v1367 = vsel %vm1355, %v1365, %v1366
      %v1368 = vrot.slane %v586, 3
      %v1369 = vrot.slane %v602, 3
      %v1370 = vsel %vm1355, %v1368, %v1369
      %v1371 = vrot.slane %v587, 3
      %v1372 = vrot.slane %v603, 3
      %v1373 = vsel %vm1355, %v1371, %v1372
      %v1374 = vrot.slane %v588, 3
      %v1375 = vrot.slane %v604, 3
      %v1376 = vsel %vm1355, %v1374, %v1375
      %v1377 = vrot.slane %v589, 3
      %v1378 = vrot.slane %v605, 3
      %v1379 = vsel %vm1355, %v1377, %v1378
      %v1380 = vrot.slane %v590, 3
      %v1381 = vrot.slane %v606, 3
      %v1382 = vsel %vm1355, %v1380, %v1381
      %v1383 = vrot.slane %v591, 3
      %v1384 = vrot.slane %v607, 3
      %v1385 = vsel %vm1355, %v1383, %v1384
      %v1386 = vrot.slane %v592, 3
      %v1387 = vrot.slane %v608, 3
      %v1388 = vsel %vm1355, %v1386, %v1387
      %v1389 = vrot.slane %v593, 3
      %v1390 = vrot.slane %v609, 3
      %v1391 = vsel %vm1355, %v1389, %v1390
      %v1392 = vrot.slane %v594, 3
      %v1393 = vrot.slane %v610, 3
      %v1394 = vsel %vm1355, %v1392, %v1393
      %v1395 = vrot.slane %v595, 3
      %v1396 = vrot.slane %v611, 3
      %v1397 = vsel %vm1355, %v1395, %v1396
      %v1398 = vrot.slane %v596, 3
      %v1399 = vrot.slane %v612, 3
      %v1400 = vsel %vm1355, %v1398, %v1399
      %v1401 = vrot.slane %v597, 3
      %v1402 = vrot.slane %v613, 3
      %v1403 = vsel %vm1355, %v1401, %v1402
      %1404 = vrot.lane.b32.xlu0 %v1358, 48
      %v1405 = vpop.permute.xlu0 %1404
      %1406 = vrot.lane.b32.xlu0 %v1361, 48
      %v1407 = vpop.permute.xlu0 %1406
      %1408 = vrot.lane.b32.xlu0 %v1364, 48
      %v1409 = vpop.permute.xlu0 %1408
      %1410 = vrot.lane.b32.xlu0 %v1367, 48
      %v1411 = vpop.permute.xlu0 %1410
      %1412 = vrot.lane.b32.xlu0 %v1370, 48
      %v1413 = vpop.permute.xlu0 %1412
      %1414 = vrot.lane.b32.xlu0 %v1373, 48
      %v1415 = vpop.permute.xlu0 %1414
      %1416 = vrot.lane.b32.xlu0 %v1376, 48
      %v1417 = vpop.permute.xlu0 %1416
      %1418 = vrot.lane.b32.xlu0 %v1379, 48
      %v1419 = vpop.permute.xlu0 %1418
      %1420 = vrot.lane.b32.xlu0 %v1382, 48
      %v1421 = vpop.permute.xlu0 %1420
      %1422 = vrot.lane.b32.xlu0 %v1385, 48
      %v1423 = vpop.permute.xlu0 %1422
      %1424 = vrot.lane.b32.xlu0 %v1388, 48
      %v1425 = vpop.permute.xlu0 %1424
      %1426 = vrot.lane.b32.xlu0 %v1391, 48
      %v1427 = vpop.permute.xlu0 %1426
      %1428 = vrot.lane.b32.xlu0 %v1394, 48
      %v1429 = vpop.permute.xlu0 %1428
      %1430 = vrot.lane.b32.xlu0 %v1397, 48
      %v1431 = vpop.permute.xlu0 %1430
      %1432 = vrot.lane.b32.xlu0 %v1400, 48
      %v1433 = vpop.permute.xlu0 %1432
      %1434 = vrot.lane.b32.xlu0 %v1403, 48
      %v1435 = vpop.permute.xlu0 %1434
      %vm1436 = vcmask 64512
      %v1438 = vsel %vm1436, %v582, %v808
      %v1440 = vsel %vm1436, %v583, %v810
      %v1442 = vsel %vm1436, %v584, %v812
      %v1444 = vsel %vm1436, %v585, %v814
      %v1446 = vsel %vm1436, %v586, %v816
      %v1448 = vsel %vm1436, %v587, %v818
      %v1450 = vsel %vm1436, %v588, %v820
      %v1452 = vsel %vm1436, %v589, %v822
      %v1454 = vsel %vm1436, %v590, %v824
      %v1456 = vsel %vm1436, %v591, %v826
      %v1458 = vsel %vm1436, %v592, %v828
      %v1460 = vsel %vm1436, %v593, %v830
      %v1462 = vsel %vm1436, %v594, %v832
      %v1464 = vsel %vm1436, %v595, %v834
      %v1466 = vsel %vm1436, %v596, %v836
      %v1468 = vsel %vm1436, %v597, %v838
      %vm1469 = vcmask 130048
      %v1471 = vsel %vm1469, %v1438, %v921
      %v1473 = vsel %vm1469, %v1440, %v923
      %v1475 = vsel %vm1469, %v1442, %v925
      %v1477 = vsel %vm1469, %v1444, %v927
      %v1479 = vsel %vm1469, %v1446, %v929
      %v1481 = vsel %vm1469, %v1448, %v931
      %v1483 = vsel %vm1469, %v1450, %v933
      %v1485 = vsel %vm1469, %v1452, %v935
      %v1487 = vsel %vm1469, %v1454, %v937
      %v1489 = vsel %vm1469, %v1456, %v939
      %v1491 = vsel %vm1469, %v1458, %v941
      %v1493 = vsel %vm1469, %v1460, %v943
      %v1495 = vsel %vm1469, %v1462, %v945
      %v1497 = vsel %vm1469, %v1464, %v947
      %v1499 = vsel %vm1469, %v1466, %v949
      %v1501 = vsel %vm1469, %v1468, %v951
      %vm1502 = vcmask 195584
      %v1504 = vsel %vm1502, %v1471, %v1098
      %v1506 = vsel %vm1502, %v1473, %v1100
      %v1508 = vsel %vm1502, %v1475, %v1102
      %v1510 = vsel %vm1502, %v1477, %v1104
      %v1512 = vsel %vm1502, %v1479, %v1106
      %v1514 = vsel %vm1502, %v1481, %v1108
      %v1516 = vsel %vm1502, %v1483, %v1110
      %v1518 = vsel %vm1502, %v1485, %v1112
      %v1520 = vsel %vm1502, %v1487, %v1114
      %v1522 = vsel %vm1502, %v1489, %v1116
      %v1524 = vsel %vm1502, %v1491, %v1118
      %v1526 = vsel %vm1502, %v1493, %v1120
      %v1528 = vsel %vm1502, %v1495, %v1122
      %v1530 = vsel %vm1502, %v1497, %v1124
      %v1532 = vsel %vm1502, %v1499, %v1126
      %v1534 = vsel %vm1502, %v1501, %v1128
      %vm1535 = vcmask 261120
      %v1537 = vsel %vm1535, %v1504, %v1179
      %v1539 = vsel %vm1535, %v1506, %v1181
      %v1541 = vsel %vm1535, %v1508, %v1183
      %v1543 = vsel %vm1535, %v1510, %v1185
      %v1545 = vsel %vm1535, %v1512, %v1187
      %v1547 = vsel %vm1535, %v1514, %v1189
      %v1549 = vsel %vm1535, %v1516, %v1191
      %v1551 = vsel %vm1535, %v1518, %v1193
      %v1553 = vsel %vm1535, %v1520, %v1195
      %v1555 = vsel %vm1535, %v1522, %v1197
      %v1557 = vsel %vm1535, %v1524, %v1199
      %v1559 = vsel %vm1535, %v1526, %v1201
      %v1561 = vsel %vm1535, %v1528, %v1203
      %v1563 = vsel %vm1535, %v1530, %v1205
      %v1565 = vsel %vm1535, %v1532, %v1207
      %v1567 = vsel %vm1535, %v1534, %v1209
      %vm1568 = vcmask 326656
      %v1570 = vsel %vm1568, %v1537, %v1324
      %v1572 = vsel %vm1568, %v1539, %v1326
      %v1574 = vsel %vm1568, %v1541, %v1328
      %v1576 = vsel %vm1568, %v1543, %v1330
      %v1578 = vsel %vm1568, %v1545, %v1332
      %v1580 = vsel %vm1568, %v1547, %v1334
      %v1582 = vsel %vm1568, %v1549, %v1336
      %v1584 = vsel %vm1568, %v1551, %v1338
      %v1586 = vsel %vm1568, %v1553, %v1340
      %v1588 = vsel %vm1568, %v1555, %v1342
      %v1590 = vsel %vm1568, %v1557, %v1344
      %v1592 = vsel %vm1568, %v1559, %v1346
      %v1594 = vsel %vm1568, %v1561, %v1348
      %v1596 = vsel %vm1568, %v1563, %v1350
      %v1598 = vsel %vm1568, %v1565, %v1352
      %v1600 = vsel %vm1568, %v1567, %v1354
      %vm1601 = vcmask 392192
      %v1603 = vsel %vm1601, %v1570, %v1405
      %v1605 = vsel %vm1601, %v1572, %v1407
      %v1607 = vsel %vm1601, %v1574, %v1409
      %v1609 = vsel %vm1601, %v1576, %v1411
      %v1611 = vsel %vm1601, %v1578, %v1413
      %v1613 = vsel %vm1601, %v1580, %v1415
      %v1615 = vsel %vm1601, %v1582, %v1417
      %v1617 = vsel %vm1601, %v1584, %v1419
      %v1619 = vsel %vm1601, %v1586, %v1421
      %v1621 = vsel %vm1601, %v1588, %v1423
      %v1623 = vsel %vm1601, %v1590, %v1425
      %v1625 = vsel %vm1601, %v1592, %v1427
      %v1627 = vsel %vm1601, %v1594, %v1429
      %v1629 = vsel %vm1601, %v1596, %v1431
      %v1631 = vsel %vm1601, %v1598, %v1433
      %v1633 = vsel %vm1601, %v1600, %v1435
      %v1634 = vld [vmem:[%s1] sm:$0xf]
      %v1635 = vld [vmem:[%s1 + $0x4] sm:$0xf]
      %v1636 = vld [vmem:[%s1 + $0x8] sm:$0xf]
      %v1637 = vld [vmem:[%s1 + $0xc] sm:$0xf]
      %v1638 = vld [vmem:[%s1 + $0x10] sm:$0xf]
      %v1639 = vld [vmem:[%s1 + $0x14] sm:$0xf]
      %v1640 = vld [vmem:[%s1 + $0x18] sm:$0xf]
      %v1648 = vunpack.c.l.b16 %v1634
      %v1649 = vunpack.c.l.b16 %v1635
      %v1650 = vunpack.c.l.b16 %v1636
      %v1651 = vunpack.c.l.b16 %v1637
      %v1652 = vunpack.c.l.b16 %v1638
      %v1653 = vunpack.c.l.b16 %v1639
      %v1654 = vunpack.c.l.b16 %v1640
      %v1655 = vpack.c.b16 %v1649, %v1648
      %v1656 = vpack.c.b16 %v1651, %v1650
      %v1657 = vpack.c.b16 %v1653, %v1652
      %v1658 = vpack.c.b16 %v1654, %v1654
      %vm1662 = vcmask 457728
      %v1663 = vsel %vm1662, %v1603, 0
      %v1665 = vsel %vm1662, %v1605, 0
      %v1667 = vsel %vm1662, %v1607, 0
      %v1669 = vsel %vm1662, %v1609, 0
      %v1671 = vsel %vm1662, %v1611, 0
      %v1673 = vsel %vm1662, %v1613, 0
      %v1675 = vsel %vm1662, %v1615, 0
      %v1677 = vsel %vm1662, %v1617, 0
      %v1679 = vsel %vm1662, %v1619, 0
      %v1681 = vsel %vm1662, %v1621, 0
      %v1683 = vsel %vm1662, %v1623, 0
      %v1685 = vsel %vm1662, %v1625, 0
      %v1687 = vsel %vm1662, %v1627, 0
      %v1689 = vsel %vm1662, %v1629, 0
      %v1691 = vsel %vm1662, %v1631, 0
      %v1693 = vsel %vm1662, %v1633, 0
      %vm1695 = vcmask 1043456
      %v1697 = vsel %vm1695, %v1658, 0
      %1699 = vmatprep.subr.bf16.mxu0 0
      %1700 = vmatpush1.bf16.msra.mxu0 0
      %1701 = vmatprep.subr.bf16.mxu0 0
      %1702 = vmatpush1.bf16.msra.mxu0 0
      %1703 = vmatprep.subr.bf16.mxu0 0
      %1704 = vmatpush1.bf16.msra.mxu0 0
      %1705 = vmatprep.subr.bf16.mxu0 0
      %1706 = vmatpush1.bf16.msra.mxu0 0
      %1707 = vmatprep.subr.bf16.mxu0 0
      %1708 = vmatpush1.bf16.msra.mxu0 %v1697
      %1709 = vmatprep.subr.bf16.mxu0 0
      %1710 = vmatpush1.bf16.msra.mxu0 %v1657
      %1711 = vmatprep.subr.bf16.mxu0 0
      %1712 = vmatpush1.bf16.msra.mxu0 %v1656
      %1713 = vmatprep.subr.bf16.mxu0 0
      %1714 = vmatpush1.bf16.msra.mxu0 %v1655
      %1715 = vmatprep.subr.bf16.mxu0 0
      %1716 = vmatpush2.bf16.msra.mxu0 0
      %1717 = vmatprep.subr.bf16.mxu0 0
      %1718 = vmatpush2.bf16.msra.mxu0 0
      %1719 = vmatprep.subr.bf16.mxu0 0
      %1720 = vmatpush2.bf16.msra.mxu0 0
      %1721 = vmatprep.subr.bf16.mxu0 0
      %1722 = vmatpush2.bf16.msra.mxu0 0
      %1723 = vmatprep.subr.bf16.mxu0 0
      %1724 = vmatpush2.bf16.msra.mxu0 0
      %1725 = vmatprep.subr.bf16.mxu0 0
      %1726 = vmatpush2.bf16.msra.mxu0 0
      %1727 = vmatprep.subr.bf16.mxu0 0
      %1728 = vmatpush2.bf16.msra.mxu0 0
      %1729 = vmatprep.subr.bf16.mxu0 0
      %1730 = vmatpush2.bf16.msra.mxu0 0
      %1731 = vmatprep.mubr.bf16.mxu0 0
      %1732 = vmatmul.mubr.bf16.gmra.mxu0 %v1663
      %v1733 = vpop.f32.mrf.mxu0
      %v1734 = vadd.f32 0.0, %v1733
      %v1735 = vpop.f32.mrf.mxu0
      %v1736 = vpop.f32.mrf.mxu0
      %v1737 = vadd.f32 0.0, %v1736
      %v1738 = vpop.f32.mrf.mxu0
      %1739 = vmatprep.mubr.bf16.mxu0 0
      %1740 = vmatmul.mubr.bf16.gmra.mxu0 %v1665
      %v1741 = vpop.f32.mrf.mxu0
      %v1742 = vadd.f32 0.0, %v1741
      %v1743 = vpop.f32.mrf.mxu0
      %v1744 = vpop.f32.mrf.mxu0
      %v1745 = vadd.f32 0.0, %v1744
      %v1746 = vpop.f32.mrf.mxu0
      %1747 = vmatprep.mubr.bf16.mxu0 0
      %1748 = vmatmul.mubr.bf16.gmra.mxu0 %v1667
      %v1749 = vpop.f32.mrf.mxu0
      %v1750 = vadd.f32 0.0, %v1749
      %v1751 = vpop.f32.mrf.mxu0
      %v1752 = vpop.f32.mrf.mxu0
      %v1753 = vadd.f32 0.0, %v1752
      %v1754 = vpop.f32.mrf.mxu0
      %1755 = vmatprep.mubr.bf16.mxu0 0
      %1756 = vmatmul.mubr.bf16.gmra.mxu0 %v1669
      %v1757 = vpop.f32.mrf.mxu0
      %v1758 = vadd.f32 0.0, %v1757
      %v1759 = vpop.f32.mrf.mxu0
      %v1760 = vpop.f32.mrf.mxu0
      %v1761 = vadd.f32 0.0, %v1760
      %v1762 = vpop.f32.mrf.mxu0
      %1763 = vmatprep.mubr.bf16.mxu0 0
      %1764 = vmatmul.mubr.bf16.gmra.mxu0 %v1671
      %v1765 = vpop.f32.mrf.mxu0
      %v1766 = vadd.f32 0.0, %v1765
      %v1767 = vpop.f32.mrf.mxu0
      %v1768 = vpop.f32.mrf.mxu0
      %v1769 = vadd.f32 0.0, %v1768
      %v1770 = vpop.f32.mrf.mxu0
      %1771 = vmatprep.mubr.bf16.mxu0 0
      %1772 = vmatmul.mubr.bf16.gmra.mxu0 %v1673
      %v1773 = vpop.f32.mrf.mxu0
      %v1774 = vadd.f32 0.0, %v1773
      %v1775 = vpop.f32.mrf.mxu0
      %v1776 = vpop.f32.mrf.mxu0
      %v1777 = vadd.f32 0.0, %v1776
      %v1778 = vpop.f32.mrf.mxu0
      %1779 = vmatprep.mubr.bf16.mxu0 0
      %1780 = vmatmul.mubr.bf16.gmra.mxu0 %v1675
      %v1781 = vpop.f32.mrf.mxu0
      %v1782 = vadd.f32 0.0, %v1781
      %v1783 = vpop.f32.mrf.mxu0
      %v1784 = vpop.f32.mrf.mxu0
      %v1785 = vadd.f32 0.0, %v1784
      %v1786 = vpop.f32.mrf.mxu0
      %1787 = vmatprep.mubr.bf16.mxu0 0
      %1788 = vmatmul.mubr.bf16.gmra.mxu0 %v1677
      %v1789 = vpop.f32.mrf.mxu0
      %v1790 = vadd.f32 0.0, %v1789
      %v1791 = vpop.f32.mrf.mxu0
      %v1792 = vpop.f32.mrf.mxu0
      %v1793 = vadd.f32 0.0, %v1792
      %v1794 = vpop.f32.mrf.mxu0
      %1795 = vmatprep.mubr.bf16.mxu0 0
      %1796 = vmatmul.mubr.bf16.gmra.mxu0 %v1679
      %v1797 = vpop.f32.mrf.mxu0
      %v1798 = vadd.f32 0.0, %v1797
      %v1799 = vpop.f32.mrf.mxu0
      %v1800 = vpop.f32.mrf.mxu0
      %v1801 = vadd.f32 0.0, %v1800
      %v1802 = vpop.f32.mrf.mxu0
      %1803 = vmatprep.mubr.bf16.mxu0 0
      %1804 = vmatmul.mubr.bf16.gmra.mxu0 %v1681
      %v1805 = vpop.f32.mrf.mxu0
      %v1806 = vadd.f32 0.0, %v1805
      %v1807 = vpop.f32.mrf.mxu0
      %v1808 = vpop.f32.mrf.mxu0
      %v1809 = vadd.f32 0.0, %v1808
      %v1810 = vpop.f32.mrf.mxu0
      %1811 = vmatprep.mubr.bf16.mxu0 0
      %1812 = vmatmul.mubr.bf16.gmra.mxu0 %v1683
      %v1813 = vpop.f32.mrf.mxu0
      %v1814 = vadd.f32 0.0, %v1813
      %v1815 = vpop.f32.mrf.mxu0
      %v1816 = vpop.f32.mrf.mxu0
      %v1817 = vadd.f32 0.0, %v1816
      %v1818 = vpop.f32.mrf.mxu0
      %1819 = vmatprep.mubr.bf16.mxu0 0
      %1820 = vmatmul.mubr.bf16.gmra.mxu0 %v1685
      %v1821 = vpop.f32.mrf.mxu0
      %v1822 = vadd.f32 0.0, %v1821
      %v1823 = vpop.f32.mrf.mxu0
      %v1824 = vpop.f32.mrf.mxu0
      %v1825 = vadd.f32 0.0, %v1824
      %v1826 = vpop.f32.mrf.mxu0
      %1827 = vmatprep.mubr.bf16.mxu0 0
      %1828 = vmatmul.mubr.bf16.gmra.mxu0 %v1687
      %v1829 = vpop.f32.mrf.mxu0
      %v1830 = vadd.f32 0.0, %v1829
      %v1831 = vpop.f32.mrf.mxu0
      %v1832 = vpop.f32.mrf.mxu0
      %v1833 = vadd.f32 0.0, %v1832
      %v1834 = vpop.f32.mrf.mxu0
      %1835 = vmatprep.mubr.bf16.mxu0 0
      %1836 = vmatmul.mubr.bf16.gmra.mxu0 %v1689
      %v1837 = vpop.f32.mrf.mxu0
      %v1838 = vadd.f32 0.0, %v1837
      %v1839 = vpop.f32.mrf.mxu0
      %v1840 = vpop.f32.mrf.mxu0
      %v1841 = vadd.f32 0.0, %v1840
      %v1842 = vpop.f32.mrf.mxu0
      %1843 = vmatprep.mubr.bf16.mxu0 0
      %1844 = vmatmul.mubr.bf16.gmra.mxu0 %v1691
      %v1845 = vpop.f32.mrf.mxu0
      %v1846 = vadd.f32 0.0, %v1845
      %v1847 = vpop.f32.mrf.mxu0
      %v1848 = vpop.f32.mrf.mxu0
      %v1849 = vadd.f32 0.0, %v1848
      %v1850 = vpop.f32.mrf.mxu0
      %1851 = vmatprep.mubr.bf16.mxu0 0
      %1852 = vmatmul.mubr.bf16.gmra.mxu0 %v1693
      %v1853 = vpop.f32.mrf.mxu0
      %v1854 = vadd.f32 0.0, %v1853
      %v1855 = vpop.f32.mrf.mxu0
      %v1856 = vpop.f32.mrf.mxu0
      %v1857 = vadd.f32 0.0, %v1856
      %v1858 = vpop.f32.mrf.mxu0
      %1859 = vdwg.mxu0
      %v1860 = vpack.c.bf16 %v1737, %v1734
      %v1861 = vpack.c.bf16 %v1745, %v1742
      %v1862 = vpack.c.bf16 %v1753, %v1750
      %v1863 = vpack.c.bf16 %v1761, %v1758
      %v1864 = vpack.c.bf16 %v1769, %v1766
      %v1865 = vpack.c.bf16 %v1777, %v1774
      %v1866 = vpack.c.bf16 %v1785, %v1782
      %v1867 = vpack.c.bf16 %v1793, %v1790
      %v1868 = vpack.c.bf16 %v1801, %v1798
      %v1869 = vpack.c.bf16 %v1809, %v1806
      %v1870 = vpack.c.bf16 %v1817, %v1814
      %v1871 = vpack.c.bf16 %v1825, %v1822
      %v1872 = vpack.c.bf16 %v1833, %v1830
      %v1873 = vpack.c.bf16 %v1841, %v1838
      %v1874 = vpack.c.bf16 %v1849, %v1846
      %v1875 = vpack.c.bf16 %v1857, %v1854
      %v1892 = vunpack.c.l.b16 %v1860
      %v1893 = vunpack.c.h.b16 %v1860
      %v1894 = vunpack.c.l.b16 %v1861
      %v1895 = vunpack.c.h.b16 %v1861
      %v1896 = vunpack.c.l.b16 %v1862
      %v1897 = vunpack.c.h.b16 %v1862
      %v1898 = vunpack.c.l.b16 %v1863
      %v1899 = vunpack.c.h.b16 %v1863
      %v1900 = vunpack.c.l.b16 %v1864
      %v1901 = vunpack.c.h.b16 %v1864
      %v1902 = vunpack.c.l.b16 %v1865
      %v1903 = vunpack.c.h.b16 %v1865
      %v1904 = vunpack.c.l.b16 %v1866
      %v1905 = vunpack.c.h.b16 %v1866
      %v1906 = vunpack.c.l.b16 %v1867
      %v1907 = vunpack.c.h.b16 %v1867
      %v1908 = vunpack.c.l.b16 %v1868
      %v1909 = vunpack.c.h.b16 %v1868
      %v1910 = vunpack.c.l.b16 %v1869
      %v1911 = vunpack.c.h.b16 %v1869
      %v1912 = vunpack.c.l.b16 %v1870
      %v1913 = vunpack.c.h.b16 %v1870
      %v1914 = vunpack.c.l.b16 %v1871
      %v1915 = vunpack.c.h.b16 %v1871
      %v1916 = vunpack.c.l.b16 %v1872
      %v1917 = vunpack.c.h.b16 %v1872
      %v1918 = vunpack.c.l.b16 %v1873
      %v1919 = vunpack.c.h.b16 %v1873
      %v1920 = vunpack.c.l.b16 %v1874
      %v1921 = vunpack.c.h.b16 %v1874
      %v1922 = vunpack.c.l.b16 %v1875
      %v1923 = vunpack.c.h.b16 %v1875
      %v1924 = vpack.c.b16 %v1892, %v1892
      %v1925 = vpack.c.b16 %v1893, %v1893
      %v1926 = vpack.c.b16 %v1894, %v1894
      %v1927 = vpack.c.b16 %v1895, %v1895
      %v1928 = vpack.c.b16 %v1896, %v1896
      %v1929 = vpack.c.b16 %v1897, %v1897
      %v1930 = vpack.c.b16 %v1898, %v1898
      %v1931 = vpack.c.b16 %v1899, %v1899
      %v1932 = vpack.c.b16 %v1900, %v1900
      %v1933 = vpack.c.b16 %v1901, %v1901
      %v1934 = vpack.c.b16 %v1902, %v1902
      %v1935 = vpack.c.b16 %v1903, %v1903
      %v1936 = vpack.c.b16 %v1904, %v1904
      %v1937 = vpack.c.b16 %v1905, %v1905
      %v1938 = vpack.c.b16 %v1906, %v1906
      %v1939 = vpack.c.b16 %v1907, %v1907
      %v1940 = vpack.c.b16 %v1908, %v1908
      %v1941 = vpack.c.b16 %v1909, %v1909
      %v1942 = vpack.c.b16 %v1910, %v1910
      %v1943 = vpack.c.b16 %v1911, %v1911
      %v1944 = vpack.c.b16 %v1912, %v1912
      %v1945 = vpack.c.b16 %v1913, %v1913
      %v1946 = vpack.c.b16 %v1914, %v1914
      %v1947 = vpack.c.b16 %v1915, %v1915
      %v1948 = vpack.c.b16 %v1916, %v1916
      %v1949 = vpack.c.b16 %v1917, %v1917
      %v1950 = vpack.c.b16 %v1918, %v1918
      %v1951 = vpack.c.b16 %v1919, %v1919
      %v1952 = vpack.c.b16 %v1920, %v1920
      %v1953 = vpack.c.b16 %v1921, %v1921
      %v1954 = vpack.c.b16 %v1922, %v1922
      %v1955 = vpack.c.b16 %v1923, %v1923
      %vm1988 = vcmask 60416
      %1989 = vst.msk [vmem:[%s238] sm:$0xf] %vm1988, %v1924
      %1990 = vst.msk [vmem:[%s238 + $0x4] sm:$0xf] %vm1988, %v1925
      %1991 = vst.msk [vmem:[%s238 + $0x8] sm:$0xf] %vm1988, %v1926
      %1992 = vst.msk [vmem:[%s238 + $0xc] sm:$0xf] %vm1988, %v1927
      %1993 = vst.msk [vmem:[%s238 + $0x10] sm:$0xf] %vm1988, %v1928
      %1994 = vst.msk [vmem:[%s238 + $0x14] sm:$0xf] %vm1988, %v1929
      %1995 = vst.msk [vmem:[%s238 + $0x18] sm:$0xf] %vm1988, %v1930
      %1996 = vst.msk [vmem:[%s238 + $0x1c] sm:$0xf] %vm1988, %v1931
      %1997 = vst.msk [vmem:[%s238 + $0x20] sm:$0xf] %vm1988, %v1932
      %1998 = vst.msk [vmem:[%s238 + $0x24] sm:$0xf] %vm1988, %v1933
      %1999 = vst.msk [vmem:[%s238 + $0x28] sm:$0xf] %vm1988, %v1934
      %2000 = vst.msk [vmem:[%s238 + $0x2c] sm:$0xf] %vm1988, %v1935
      %2001 = vst.msk [vmem:[%s238 + $0x30] sm:$0xf] %vm1988, %v1936
      %2002 = vst.msk [vmem:[%s238 + $0x34] sm:$0xf] %vm1988, %v1937
      %2003 = vst.msk [vmem:[%s238 + $0x38] sm:$0xf] %vm1988, %v1938
      %2004 = vst.msk [vmem:[%s238 + $0x3c] sm:$0xf] %vm1988, %v1939
      %2005 = vst.msk [vmem:[%s238 + $0x40] sm:$0xf] %vm1988, %v1940
      %2006 = vst.msk [vmem:[%s238 + $0x44] sm:$0xf] %vm1988, %v1941
      %2007 = vst.msk [vmem:[%s238 + $0x48] sm:$0xf] %vm1988, %v1942
      %2008 = vst.msk [vmem:[%s238 + $0x4c] sm:$0xf] %vm1988, %v1943
      %2009 = vst.msk [vmem:[%s238 + $0x50] sm:$0xf] %vm1988, %v1944
      %2010 = vst.msk [vmem:[%s238 + $0x54] sm:$0xf] %vm1988, %v1945
      %2011 = vst.msk [vmem:[%s238 + $0x58] sm:$0xf] %vm1988, %v1946
      %2012 = vst.msk [vmem:[%s238 + $0x5c] sm:$0xf] %vm1988, %v1947
      %2013 = vst.msk [vmem:[%s238 + $0x60] sm:$0xf] %vm1988, %v1948
      %2014 = vst.msk [vmem:[%s238 + $0x64] sm:$0xf] %vm1988, %v1949
      %2015 = vst.msk [vmem:[%s238 + $0x68] sm:$0xf] %vm1988, %v1950
      %2016 = vst.msk [vmem:[%s238 + $0x6c] sm:$0xf] %vm1988, %v1951
      %2017 = vst.msk [vmem:[%s238 + $0x70] sm:$0xf] %vm1988, %v1952
      %2018 = vst.msk [vmem:[%s238 + $0x74] sm:$0xf] %vm1988, %v1953
      %2019 = vst.msk [vmem:[%s238 + $0x78] sm:$0xf] %vm1988, %v1954
      %2020 = vst.msk [vmem:[%s238 + $0x7c] sm:$0xf] %vm1988, %v1955
      %v2021 = vsel %vm1436, %v1734, 0.0
      %v2022 = vsel %vm1436, %v1737, 0.0
      %v2023 = vadd.f32 %v2021, %v2022
      %v2024 = vsel %vm1436, %v1742, 0.0
      %v2025 = vadd.f32 %v2023, %v2024
      %v2026 = vsel %vm1436, %v1745, 0.0
      %v2027 = vadd.f32 %v2025, %v2026
      %v2028 = vsel %vm1436, %v1750, 0.0
      %v2029 = vadd.f32 %v2027, %v2028
      %v2030 = vsel %vm1436, %v1753, 0.0
      %v2031 = vadd.f32 %v2029, %v2030
      %v2032 = vsel %vm1436, %v1758, 0.0
      %v2033 = vadd.f32 %v2031, %v2032
      %v2034 = vsel %vm1436, %v1761, 0.0
      %v2035 = vadd.f32 %v2033, %v2034
      %v2036 = vsel %vm1436, %v1766, 0.0
      %v2037 = vadd.f32 %v2035, %v2036
      %v2038 = vsel %vm1436, %v1769, 0.0
      %v2039 = vadd.f32 %v2037, %v2038
      %v2040 = vsel %vm1436, %v1774, 0.0
      %v2041 = vadd.f32 %v2039, %v2040
      %v2042 = vsel %vm1436, %v1777, 0.0
      %v2043 = vadd.f32 %v2041, %v2042
      %v2044 = vsel %vm1436, %v1782, 0.0
      %v2045 = vadd.f32 %v2043, %v2044
      %v2046 = vsel %vm1436, %v1785, 0.0
      %v2047 = vadd.f32 %v2045, %v2046
      %v2048 = vsel %vm1436, %v1790, 0.0
      %v2049 = vadd.f32 %v2047, %v2048
      %v2050 = vsel %vm1436, %v1793, 0.0
      %v2051 = vadd.f32 %v2049, %v2050
      %v2052 = vsel %vm1436, %v1798, 0.0
      %v2053 = vadd.f32 %v2051, %v2052
      %v2054 = vsel %vm1436, %v1801, 0.0
      %v2055 = vadd.f32 %v2053, %v2054
      %v2056 = vsel %vm1436, %v1806, 0.0
      %v2057 = vadd.f32 %v2055, %v2056
      %v2058 = vsel %vm1436, %v1809, 0.0
      %v2059 = vadd.f32 %v2057, %v2058
      %v2060 = vsel %vm1436, %v1814, 0.0
      %v2061 = vadd.f32 %v2059, %v2060
      %v2062 = vsel %vm1436, %v1817, 0.0
      %v2063 = vadd.f32 %v2061, %v2062
      %v2064 = vsel %vm1436, %v1822, 0.0
      %v2065 = vadd.f32 %v2063, %v2064
      %v2066 = vsel %vm1436, %v1825, 0.0
      %v2067 = vadd.f32 %v2065, %v2066
      %v2068 = vsel %vm1436, %v1830, 0.0
      %v2069 = vadd.f32 %v2067, %v2068
      %v2070 = vsel %vm1436, %v1833, 0.0
      %v2071 = vadd.f32 %v2069, %v2070
      %v2072 = vsel %vm1436, %v1838, 0.0
      %v2073 = vadd.f32 %v2071, %v2072
      %v2074 = vsel %vm1436, %v1841, 0.0
      %v2075 = vadd.f32 %v2073, %v2074
      %v2076 = vsel %vm1436, %v1846, 0.0
      %v2077 = vadd.f32 %v2075, %v2076
      %v2078 = vsel %vm1436, %v1849, 0.0
      %v2079 = vadd.f32 %v2077, %v2078
      %v2080 = vsel %vm1436, %v1854, 0.0
      %v2081 = vadd.f32 %v2079, %v2080
      %v2082 = vsel %vm1436, %v1857, 0.0
      %v2083 = vadd.f32 %v2081, %v2082
      %v2084 = vrot.slane %v2083, 4
      %v2085 = vadd.f32 %v2083, %v2084
      %v2086 = vrot.slane %v2085, 2
      %v2087 = vadd.f32 %v2085, %v2086
      %v2088 = vrot.slane %v2087, 1
      %v2089 = vadd.f32 %v2087, %v2088
      %v2090 = vmul.f32 %v1734, %v1734
      %v2091 = vmul.f32 %v1737, %v1737
      %v2092 = vmul.f32 %v1742, %v1742
      %v2093 = vmul.f32 %v1745, %v1745
      %v2094 = vmul.f32 %v1750, %v1750
      %v2095 = vmul.f32 %v1753, %v1753
      %v2096 = vmul.f32 %v1758, %v1758
      %v2097 = vmul.f32 %v1761, %v1761
      %v2098 = vmul.f32 %v1766, %v1766
      %v2099 = vmul.f32 %v1769, %v1769
      %v2100 = vmul.f32 %v1774, %v1774
      %v2101 = vmul.f32 %v1777, %v1777
      %v2102 = vmul.f32 %v1782, %v1782
      %v2103 = vmul.f32 %v1785, %v1785
      %v2104 = vmul.f32 %v1790, %v1790
      %v2105 = vmul.f32 %v1793, %v1793
      %v2106 = vmul.f32 %v1798, %v1798
      %v2107 = vmul.f32 %v1801, %v1801
      %v2108 = vmul.f32 %v1806, %v1806
      %v2109 = vmul.f32 %v1809, %v1809
      %v2110 = vmul.f32 %v1814, %v1814
      %v2111 = vmul.f32 %v1817, %v1817
      %v2112 = vmul.f32 %v1822, %v1822
      %v2113 = vmul.f32 %v1825, %v1825
      %v2114 = vmul.f32 %v1830, %v1830
      %v2115 = vmul.f32 %v1833, %v1833
      %v2116 = vmul.f32 %v1838, %v1838
      %v2117 = vmul.f32 %v1841, %v1841
      %v2118 = vmul.f32 %v1846, %v1846
      %v2119 = vmul.f32 %v1849, %v1849
      %v2120 = vmul.f32 %v1854, %v1854
      %v2121 = vmul.f32 %v1857, %v1857
      %v2122 = vsel %vm1436, %v2090, 0.0
      %v2123 = vsel %vm1436, %v2091, 0.0
      %v2124 = vadd.f32 %v2122, %v2123
      %v2125 = vsel %vm1436, %v2092, 0.0
      %v2126 = vadd.f32 %v2124, %v2125
      %v2127 = vsel %vm1436, %v2093, 0.0
      %v2128 = vadd.f32 %v2126, %v2127
      %v2129 = vsel %vm1436, %v2094, 0.0
      %v2130 = vadd.f32 %v2128, %v2129
      %v2131 = vsel %vm1436, %v2095, 0.0
      %v2132 = vadd.f32 %v2130, %v2131
      %v2133 = vsel %vm1436, %v2096, 0.0
      %v2134 = vadd.f32 %v2132, %v2133
      %v2135 = vsel %vm1436, %v2097, 0.0
      %v2136 = vadd.f32 %v2134, %v2135
      %v2137 = vsel %vm1436, %v2098, 0.0
      %v2138 = vadd.f32 %v2136, %v2137
      %v2139 = vsel %vm1436, %v2099, 0.0
      %v2140 = vadd.f32 %v2138, %v2139
      %v2141 = vsel %vm1436, %v2100, 0.0
      %v2142 = vadd.f32 %v2140, %v2141
      %v2143 = vsel %vm1436, %v2101, 0.0
      %v2144 = vadd.f32 %v2142, %v2143
      %v2145 = vsel %vm1436, %v2102, 0.0
      %v2146 = vadd.f32 %v2144, %v2145
      %v2147 = vsel %vm1436, %v2103, 0.0
      %v2148 = vadd.f32 %v2146, %v2147
      %v2149 = vsel %vm1436, %v2104, 0.0
      %v2150 = vadd.f32 %v2148, %v2149
      %v2151 = vsel %vm1436, %v2105, 0.0
      %v2152 = vadd.f32 %v2150, %v2151
      %v2153 = vsel %vm1436, %v2106, 0.0
      %v2154 = vadd.f32 %v2152, %v2153
      %v2155 = vsel %vm1436, %v2107, 0.0
      %v2156 = vadd.f32 %v2154, %v2155
      %v2157 = vsel %vm1436, %v2108, 0.0
      %v2158 = vadd.f32 %v2156, %v2157
      %v2159 = vsel %vm1436, %v2109, 0.0
      %v2160 = vadd.f32 %v2158, %v2159
      %v2161 = vsel %vm1436, %v2110, 0.0
      %v2162 = vadd.f32 %v2160, %v2161
      %v2163 = vsel %vm1436, %v2111, 0.0
      %v2164 = vadd.f32 %v2162, %v2163
      %v2165 = vsel %vm1436, %v2112, 0.0
      %v2166 = vadd.f32 %v2164, %v2165
      %v2167 = vsel %vm1436, %v2113, 0.0
      %v2168 = vadd.f32 %v2166, %v2167
      %v2169 = vsel %vm1436, %v2114, 0.0
      %v2170 = vadd.f32 %v2168, %v2169
      %v2171 = vsel %vm1436, %v2115, 0.0
      %v2172 = vadd.f32 %v2170, %v2171
      %v2173 = vsel %vm1436, %v2116, 0.0
      %v2174 = vadd.f32 %v2172, %v2173
      %v2175 = vsel %vm1436, %v2117, 0.0
      %v2176 = vadd.f32 %v2174, %v2175
      %v2177 = vsel %vm1436, %v2118, 0.0
      %v2178 = vadd.f32 %v2176, %v2177
      %v2179 = vsel %vm1436, %v2119, 0.0
      %v2180 = vadd.f32 %v2178, %v2179
      %v2181 = vsel %vm1436, %v2120, 0.0
      %v2182 = vadd.f32 %v2180, %v2181
      %v2183 = vsel %vm1436, %v2121, 0.0
      %v2184 = vadd.f32 %v2182, %v2183
      %v2185 = vrot.slane %v2184, 4
      %v2186 = vadd.f32 %v2184, %v2185
      %v2187 = vrot.slane %v2186, 2
      %v2188 = vadd.f32 %v2186, %v2187
      %v2189 = vrot.slane %v2188, 1
      %v2190 = vadd.f32 %v2188, %v2189
      %vm2191 = vcmask 1040384
      %v2192 = vsel %vm2191, %v2089, %v2190
      %vm2193 = vcmask 58368
      %2194 = vst.msk [vmem:[%s243] sm:$0x3] %vm2193, %v2192
      %s2195 = smul.u32 16, %s17
      %p2196 = scmp.lt.s32.totalorder %s2195, 31
      %s2197 = scalar_select %p2196, %s2195, 31
      %s2198 = smul.addr %s2197, 2
      %s2199 = smul.addr %s2198, 4
      %s2200 = scalar_lea.vmem %s4, %s2199
      %p2201 = scmp.lt.s32.totalorder %s17, 1
      %s2202 = scalar_select %p2201, %s17, 1
      %s2203 = smul.addr %s2202, 2
      %s2204 = scalar_lea.vmem %s5, %s2203
      // Predicated region
      $region37: #{inception_f6_forward.22} parent=35 // pred_check
        %p2205 = pneg %p124
      $region38: #{inception_f6_forward.22} parent=35 // pred_check_branch
        %2207 = sbr.rel (%p2205) target = $region40
      $region39: #{inception_f6_forward.22} parent=35 // pred_region
        %s2208 = smul.u32 16, %s17
      $region40: #{inception_f6_forward.22} parent=35 // pred_fallthru
        _
      // Predicated region
      $region41: #{inception_f6_forward.22} parent=35 // pred_check
        %p2209 = pneg %p150
      $region42: #{inception_f6_forward.22} parent=35 // pred_check_branch
        %2211 = sbr.rel (%p2209) target = $region44
      $region43: #{inception_f6_forward.22} parent=35 // pred_region
        _
      $region44: #{inception_f6_forward.22} parent=35 // pred_fallthru
        _
    $region36: #{inception_f6_forward.22} parent=5 // pred_fallthru
      _
    %p2212 = scmp.le.s32.totalorder 2, %s12
    // Predicated region
    $region45: #{inception_f6_forward.22} parent=5 // pred_check
      %p2213 = pneg %p2212
    $region46: #{inception_f6_forward.22} parent=5 // pred_check_branch
      %2215 = sbr.rel (%p2213) target = $region48
    $region47: #{inception_f6_forward.22} parent=5 // pred_region
      %s2216 = ssub.s32 %s12, 2
      // Predicated region
      $region49: #{inception_f6_forward.22} parent=47 // pred_check
        %p2217 = pneg %p130
      $region50: #{inception_f6_forward.22} parent=47 // pred_check_branch
        %2219 = sbr.rel (%p2217) target = $region52
      $region51: #{inception_f6_forward.22} parent=47 // pred_region
        %s2220 = smul.u32 16, %s18
        %p2221 = scmp.lt.s32.totalorder %s2220, 31
        %s2222 = scalar_select %p2221, %s2220, 31
        %s2223 = smul.addr %s2222, 2
        %s2224 = smul.addr %s2223, 4
        %s2225 = scalar_lea.vmem %s4, %s2224
      $region52: #{inception_f6_forward.22} parent=47 // pred_fallthru
        _
      // Predicated region
      $region53: #{inception_f6_forward.22} parent=47 // pred_check
        %p2226 = pneg %p156
      $region54: #{inception_f6_forward.22} parent=47 // pred_check_branch
        %2228 = sbr.rel (%p2226) target = $region56
      $region55: #{inception_f6_forward.22} parent=47 // pred_region
        %p2229 = scmp.lt.s32.totalorder %s18, 1
        %s2230 = scalar_select %p2229, %s18, 1
        %s2231 = smul.addr %s2230, 2
        %s2232 = scalar_lea.vmem %s5, %s2231
      $region56: #{inception_f6_forward.22} parent=47 // pred_fallthru
        _
    $region48: #{inception_f6_forward.22} parent=5 // pred_fallthru
      _
  $region6: #{inception_f6_forward.22} parent=0 // loop_footer
    %s16 = sadd.s32 1, %s12
  $region7: #{inception_f6_forward.22} parent=0 // loop_footer_branch
    %11 = sbr.rel target = $region3
  $region8: #{inception_f6_forward.22} parent=0 // loop_exit
    _

// kernel: inception_f6_forward.17
$region0: #{inception_f6_forward.17}
  #allocation0 [shape = 'u32[]', space=smem, size = 0x4, offset = 0x4, fixed_abs, tag = 'smem constant byte address 0x4 - core index']
  #allocation1 [shape = 'u32[144,128]{1,0:T(1,128)}', space=vmem, size = 0x12000, scoped, tag = 'internal scratch']
  %s0 = inlined_call_operand.vmem [shape: bf16[2,16,16,8], index: 0, kind: input, shape index: {}]
  %s1 = inlined_call_operand.vmem [shape: bf16[56,8], index: 1, kind: input, shape index: {}]
  %s2 = inlined_call_operand.vmem [shape: f32[1,8], index: 2, kind: input, shape index: {}]
  %s3 = inlined_call_operand.vmem [shape: f32[1,8], index: 3, kind: input, shape index: {}]
  %s4 = inlined_call_operand.vmem [shape: bf16[2,16,16,8], index: 4, kind: output, shape index: {0}]
  %s5 = inlined_call_operand.vmem [shape: f32[2,2,8], index: 5, kind: output, shape index: {1}]
  %6 = xla_tuple %s4, %s5
  %s7 = sld [smem:[#allocation0]]
  $region57: #{inception_f6_forward.17} parent=0
    _
  %s9 = ssub.s32 1, %s7
  %s10 = scalar_select 0, %s9, %s7
  loop: start=0, step=1, limit=4
  $region2: #{inception_f6_forward.17} parent=0 // loop_pre_header
    _
  $region3: #{inception_f6_forward.17} parent=0 // loop_header
    %s12 = sphi 0, %s16
    %p13 = scmp.ge.s32.totalorder %s12, 4
    %s22 = sphi 0, %s24
    %s25 = sphi 0, %s22
    %s26 = sphi 0, %s25
    %s42 = sphi 0, %s26
    %s46 = sphi 0, %s46
    %s48 = sphi 0, %s46
    %s49 = sphi 0, %s48
    %s63 = sphi 0, %s49
    %s67 = sphi 0, %s67
    %s69 = sphi 0, %s67
    %s70 = sphi 0, %s69
    %s84 = sphi 0, %s70
    %s88 = sphi 0, %s88
    %s90 = sphi 0, %s88
    %s91 = sphi 0, %s90
    %s105 = sphi 0, %s91
    %s111 = sphi 0, %s113
    %s114 = sphi 0, %s111
    %s115 = sphi 0, %s114
    %s131 = sphi 0, %s115
    %s137 = sphi 0, %s139
    %s140 = sphi 0, %s137
    %s141 = sphi 0, %s140
    %s157 = sphi 0, %s141
  $region4: #{inception_f6_forward.17} parent=0 // loop_header_branch
    %15 = sbr.rel (%p13) target = $region8
  $region5: #{inception_f6_forward.17} parent=0 // loop_body
    %s17 = ssub.s32 %s12, 1
    %s18 = ssub.s32 %s12, 2
    %s19 = sadd.s32 %s12, 1
    %s20 = ssub.s32 %s12, %s19
    %p21 = scmp.eq.s32.totalorder %s20, 0
    %s23 = sadd.s32 %s22, 1
    %s24 = scalar_select %p21, %s22, %s23
    %p27 = pneg %p21
    %p28 = scmp.eq.s32.totalorder %s12, 1
    %p29 = por %p27, %p28
    %p30 = scmp.ne.s32.totalorder %s22, %s25
    %p31 = scmp.eq.s32.totalorder %s12, 0
    %p32 = por %p30, %p31
    %p33 = scmp.ne.s32.totalorder %s22, %s25
    %p34 = scmp.eq.s32.totalorder %s17, 1
    %p35 = por %p33, %p34
    %p36 = scmp.ne.s32.totalorder %s25, %s26
    %p37 = scmp.eq.s32.totalorder %s17, 0
    %p38 = por %p36, %p37
    %p39 = scmp.ne.s32.totalorder %s25, %s26
    %p40 = scmp.eq.s32.totalorder %s18, 1
    %p41 = por %p39, %p40
    %p43 = scmp.ne.s32.totalorder %s26, %s42
    %p44 = scmp.eq.s32.totalorder %s18, 0
    %p45 = por %p43, %p44
    %s47 = sadd.s32 %s46, 1
    %p50 = scmp.eq.s32.totalorder %s12, 1
    %p51 = scmp.ne.s32.totalorder %s46, %s48
    %p52 = scmp.eq.s32.totalorder %s12, 0
    %p53 = por %p51, %p52
    %p54 = scmp.ne.s32.totalorder %s46, %s48
    %p55 = scmp.eq.s32.totalorder %s17, 1
    %p56 = por %p54, %p55
    %p57 = scmp.ne.s32.totalorder %s48, %s49
    %p58 = scmp.eq.s32.totalorder %s17, 0
    %p59 = por %p57, %p58
    %p60 = scmp.ne.s32.totalorder %s48, %s49
    %p61 = scmp.eq.s32.totalorder %s18, 1
    %p62 = por %p60, %p61
    %p64 = scmp.ne.s32.totalorder %s49, %s63
    %p65 = scmp.eq.s32.totalorder %s18, 0
    %p66 = por %p64, %p65
    %s68 = sadd.s32 %s67, 1
    %p71 = scmp.eq.s32.totalorder %s12, 1
    %p72 = scmp.ne.s32.totalorder %s67, %s69
    %p73 = scmp.eq.s32.totalorder %s12, 0
    %p74 = por %p72, %p73
    %p75 = scmp.ne.s32.totalorder %s67, %s69
    %p76 = scmp.eq.s32.totalorder %s17, 1
    %p77 = por %p75, %p76
    %p78 = scmp.ne.s32.totalorder %s69, %s70
    %p79 = scmp.eq.s32.totalorder %s17, 0
    %p80 = por %p78, %p79
    %p81 = scmp.ne.s32.totalorder %s69, %s70
    %p82 = scmp.eq.s32.totalorder %s18, 1
    %p83 = por %p81, %p82
    %p85 = scmp.ne.s32.totalorder %s70, %s84
    %p86 = scmp.eq.s32.totalorder %s18, 0
    %p87 = por %p85, %p86
    %s89 = sadd.s32 %s88, 1
    %p92 = scmp.eq.s32.totalorder %s12, 1
    %p93 = scmp.ne.s32.totalorder %s88, %s90
    %p94 = scmp.eq.s32.totalorder %s12, 0
    %p95 = por %p93, %p94
    %p96 = scmp.ne.s32.totalorder %s88, %s90
    %p97 = scmp.eq.s32.totalorder %s17, 1
    %p98 = por %p96, %p97
    %p99 = scmp.ne.s32.totalorder %s90, %s91
    %p100 = scmp.eq.s32.totalorder %s17, 0
    %p101 = por %p99, %p100
    %p102 = scmp.ne.s32.totalorder %s90, %s91
    %p103 = scmp.eq.s32.totalorder %s18, 1
    %p104 = por %p102, %p103
    %p106 = scmp.ne.s32.totalorder %s91, %s105
    %p107 = scmp.eq.s32.totalorder %s18, 0
    %p108 = por %p106, %p107
    %s109 = ssub.s32 %s12, %s19
    %p110 = scmp.eq.s32.totalorder %s109, 0
    %s112 = sadd.s32 %s111, 1
    %s113 = scalar_select %p110, %s111, %s112
    %p116 = pneg %p110
    %p117 = scmp.eq.s32.totalorder %s12, 1
    %p118 = por %p116, %p117
    %p119 = scmp.ne.s32.totalorder %s111, %s114
    %p120 = scmp.eq.s32.totalorder %s12, 0
    %p121 = por %p119, %p120
    %p122 = scmp.ne.s32.totalorder %s111, %s114
    %p123 = scmp.eq.s32.totalorder %s17, 1
    %p124 = por %p122, %p123
    %p125 = scmp.ne.s32.totalorder %s114, %s115
    %p126 = scmp.eq.s32.totalorder %s17, 0
    %p127 = por %p125, %p126
    %p128 = scmp.ne.s32.totalorder %s114, %s115
    %p129 = scmp.eq.s32.totalorder %s18, 1
    %p130 = por %p128, %p129
    %p132 = scmp.ne.s32.totalorder %s115, %s131
    %p133 = scmp.eq.s32.totalorder %s18, 0
    %p134 = por %p132, %p133
    %s135 = ssub.s32 %s12, %s19
    %p136 = scmp.eq.s32.totalorder %s135, 0
    %s138 = sadd.s32 %s137, 1
    %s139 = scalar_select %p136, %s137, %s138
    %p142 = pneg %p136
    %p143 = scmp.eq.s32.totalorder %s12, 1
    %p144 = por %p142, %p143
    %p145 = scmp.ne.s32.totalorder %s137, %s140
    %p146 = scmp.eq.s32.totalorder %s12, 0
    %p147 = por %p145, %p146
    %p148 = scmp.ne.s32.totalorder %s137, %s140
    %p149 = scmp.eq.s32.totalorder %s17, 1
    %p150 = por %p148, %p149
    %p151 = scmp.ne.s32.totalorder %s140, %s141
    %p152 = scmp.eq.s32.totalorder %s17, 0
    %p153 = por %p151, %p152
    %p154 = scmp.ne.s32.totalorder %s140, %s141
    %p155 = scmp.eq.s32.totalorder %s18, 1
    %p156 = por %p154, %p155
    %p158 = scmp.ne.s32.totalorder %s141, %s157
    %p159 = scmp.eq.s32.totalorder %s18, 0
    %p160 = por %p158, %p159
    %p161 = scmp.le.s32.totalorder 1, %s12
    %p162 = scmp.lt.s32.totalorder %s12, 3
    %p163 = pnand %p161, %p162
    %p164 = pneg %p163
    // Predicated region
    $region9: #{inception_f6_forward.17} parent=5 // pred_check
      _
    $region10: #{inception_f6_forward.17} parent=5 // pred_check_branch
      %166 = sbr.rel (%p163) target = $region12
    $region11: #{inception_f6_forward.17} parent=5 // pred_region
      %s167 = ssub.s32 %s12, 1
      // Predicated region
      $region13: #{inception_f6_forward.17} parent=11 // pred_check
        %p168 = pneg %p59
      $region14: #{inception_f6_forward.17} parent=11 // pred_check_branch
        %170 = sbr.rel (%p168) target = $region16
      $region15: #{inception_f6_forward.17} parent=11 // pred_region
        _
      $region16: #{inception_f6_forward.17} parent=11 // pred_fallthru
        _
      // Predicated region
      $region17: #{inception_f6_forward.17} parent=11 // pred_check
        %p171 = pneg %p80
      $region18: #{inception_f6_forward.17} parent=11 // pred_check_branch
        %173 = sbr.rel (%p171) target = $region20
      $region19: #{inception_f6_forward.17} parent=11 // pred_region
        _
      $region20: #{inception_f6_forward.17} parent=11 // pred_fallthru
        _
      // Predicated region
      $region21: #{inception_f6_forward.17} parent=11 // pred_check
        %p174 = pneg %p101
      $region22: #{inception_f6_forward.17} parent=11 // pred_check_branch
        %176 = sbr.rel (%p174) target = $region24
      $region23: #{inception_f6_forward.17} parent=11 // pred_region
        _
      $region24: #{inception_f6_forward.17} parent=11 // pred_fallthru
        _
    $region12: #{inception_f6_forward.17} parent=5 // pred_fallthru
      _
    %p177 = scmp.lt.s32.totalorder %s12, 2
    // Predicated region
    $region25: #{inception_f6_forward.17} parent=5 // pred_check
      %p178 = pneg %p177
    $region26: #{inception_f6_forward.17} parent=5 // pred_check_branch
      %180 = sbr.rel (%p178) target = $region28
    $region27: #{inception_f6_forward.17} parent=5 // pred_region
      // Predicated region
      $region29: #{inception_f6_forward.17} parent=27 // pred_check
        %p181 = pneg %p32
      $region30: #{inception_f6_forward.17} parent=27 // pred_check_branch
        %183 = sbr.rel (%p181) target = $region32
      $region31: #{inception_f6_forward.17} parent=27 // pred_region
        %p184 = scmp.lt.s32.totalorder %s12, 1
        %s185 = scalar_select %p184, %s12, 1
        %s186 = smul.addr %s185, 32
        %s187 = smul.addr %s186, 4
        %s188 = scalar_lea.vmem %s0, %s187
      $region32: #{inception_f6_forward.17} parent=27 // pred_fallthru
        _
    $region28: #{inception_f6_forward.17} parent=5 // pred_fallthru
      _
    %p189 = scmp.le.s32.totalorder 1, %s12
    %p190 = scmp.lt.s32.totalorder %s12, 3
    %p191 = pnand %p189, %p190
    %p192 = pneg %p191
    // Predicated region
    $region33: #{inception_f6_forward.17} parent=5 // pred_check
      _
    $region34: #{inception_f6_forward.17} parent=5 // pred_check_branch
      %194 = sbr.rel (%p191) target = $region36
    $region35: #{inception_f6_forward.17} parent=5 // pred_region
      %s195 = ssub.s32 %s12, 1
      %p196 = scmp.lt.s32.totalorder %s17, 1
      %s197 = scalar_select %p196, %s17, 1
      %s198 = smul.addr %s197, 32
      %s199 = smul.addr %s198, 4
      %s200 = scalar_lea.vmem %s0, %s199
      %p201 = pneg %p38
      %p202 = pneg %p35
      %p203 = pneg %p59
      %p204 = pneg %p56
      %p205 = pneg %p80
      %p206 = pneg %p77
      %p207 = pneg %p101
      %p208 = pneg %p98
      %p209 = pneg %p127
      %p210 = pneg %p124
      %p211 = scmp.lt.s32.totalorder %s17, 1
      %s212 = scalar_select %p211, %s17, 1
      %s213 = smul.addr %s212, 32
      %s214 = smul.addr %s213, 4
      %s215 = scalar_lea.vmem %s4, %s214
      %p216 = pneg %p153
      %p217 = pneg %p150
      %p218 = scmp.lt.s32.totalorder %s17, 1
      %s219 = scalar_select %p218, %s17, 1
      %s220 = smul.addr %s219, 2
      %s221 = scalar_lea.vmem %s5, %s220
      %p222 = scmp.lt.s32.totalorder %s17, 1
      %s223 = scalar_select %p222, %s17, 1
      %s224 = smul.addr %s223, 32
      %s225 = smul.addr %s224, 4
      %s226 = scalar_lea.vmem %s0, %s225
      %p227 = scmp.lt.s32.totalorder %s17, 1
      %s228 = scalar_select %p227, %s17, 1
      %s229 = smul.addr %s228, 32
      %s230 = smul.addr %s229, 4
      %s231 = scalar_lea.vmem %s4, %s230
      %p232 = scmp.lt.s32.totalorder %s17, 1
      %s233 = scalar_select %p232, %s17, 1
      %s234 = smul.addr %s233, 2
      %s235 = scalar_lea.vmem %s5, %s234
      %v237 = vld [vmem:[%s226] sm:$0xf]
      %v238 = vld [vmem:[%s226 + $0x4] sm:$0xf]
      %v239 = vld [vmem:[%s226 + $0x8] sm:$0xf]
      %v240 = vld [vmem:[%s226 + $0xc] sm:$0xf]
      %v241 = vld [vmem:[%s226 + $0x10] sm:$0xf]
      %v242 = vld [vmem:[%s226 + $0x14] sm:$0xf]
      %v243 = vld [vmem:[%s226 + $0x18] sm:$0xf]
      %v244 = vld [vmem:[%s226 + $0x1c] sm:$0xf]
      %v245 = vld [vmem:[%s226 + $0x20] sm:$0xf]
      %v246 = vld [vmem:[%s226 + $0x24] sm:$0xf]
      %v247 = vld [vmem:[%s226 + $0x28] sm:$0xf]
      %v248 = vld [vmem:[%s226 + $0x2c] sm:$0xf]
      %v249 = vld [vmem:[%s226 + $0x30] sm:$0xf]
      %v250 = vld [vmem:[%s226 + $0x34] sm:$0xf]
      %v251 = vld [vmem:[%s226 + $0x38] sm:$0xf]
      %v252 = vld [vmem:[%s226 + $0x3c] sm:$0xf]
      %v253 = vld [vmem:[%s226 + $0x40] sm:$0xf]
      %v254 = vld [vmem:[%s226 + $0x44] sm:$0xf]
      %v255 = vld [vmem:[%s226 + $0x48] sm:$0xf]
      %v256 = vld [vmem:[%s226 + $0x4c] sm:$0xf]
      %v257 = vld [vmem:[%s226 + $0x50] sm:$0xf]
      %v258 = vld [vmem:[%s226 + $0x54] sm:$0xf]
      %v259 = vld [vmem:[%s226 + $0x58] sm:$0xf]
      %v260 = vld [vmem:[%s226 + $0x5c] sm:$0xf]
      %v261 = vld [vmem:[%s226 + $0x60] sm:$0xf]
      %v262 = vld [vmem:[%s226 + $0x64] sm:$0xf]
      %v263 = vld [vmem:[%s226 + $0x68] sm:$0xf]
      %v264 = vld [vmem:[%s226 + $0x6c] sm:$0xf]
      %v265 = vld [vmem:[%s226 + $0x70] sm:$0xf]
      %v266 = vld [vmem:[%s226 + $0x74] sm:$0xf]
      %v267 = vld [vmem:[%s226 + $0x78] sm:$0xf]
      %v268 = vld [vmem:[%s226 + $0x7c] sm:$0xf]
      %v269 = vunpack.c.l.bf16 %v237
      %v270 = vunpack.c.l.bf16 %v238
      %v271 = vunpack.c.l.bf16 %v239
      %v272 = vunpack.c.l.bf16 %v240
      %v273 = vunpack.c.l.bf16 %v241
      %v274 = vunpack.c.l.bf16 %v242
      %v275 = vunpack.c.l.bf16 %v243
      %v276 = vunpack.c.l.bf16 %v244
      %v277 = vunpack.c.l.bf16 %v245
      %v278 = vunpack.c.l.bf16 %v246
      %v279 = vunpack.c.l.bf16 %v247
      %v280 = vunpack.c.l.bf16 %v248
      %v281 = vunpack.c.l.bf16 %v249
      %v282 = vunpack.c.l.bf16 %v250
      %v283 = vunpack.c.l.bf16 %v251
      %v284 = vunpack.c.l.bf16 %v252
      %v285 = vunpack.c.l.bf16 %v253
      %v286 = vunpack.c.l.bf16 %v254
      %v287 = vunpack.c.l.bf16 %v255
      %v288 = vunpack.c.l.bf16 %v256
      %v289 = vunpack.c.l.bf16 %v257
      %v290 = vunpack.c.l.bf16 %v258
      %v291 = vunpack.c.l.bf16 %v259
      %v292 = vunpack.c.l.bf16 %v260
      %v293 = vunpack.c.l.bf16 %v261
      %v294 = vunpack.c.l.bf16 %v262
      %v295 = vunpack.c.l.bf16 %v263
      %v296 = vunpack.c.l.bf16 %v264
      %v297 = vunpack.c.l.bf16 %v265
      %v298 = vunpack.c.l.bf16 %v266
      %v299 = vunpack.c.l.bf16 %v267
      %v300 = vunpack.c.l.bf16 %v268
      %v301 = vld [vmem:[%s2] sm:$0x1]
      %v303 = vlaneseq
      %v304 = vshrl.u32 %v303, 7
      %v305 = vsub.s32 0, %v304
      %v306 = vrot.slane %v301, %v305
      %v308 = vmul.f32 %v269, %v306
      %v309 = vmul.f32 %v270, %v306
      %v310 = vmul.f32 %v271, %v306
      %v311 = vmul.f32 %v272, %v306
      %v312 = vmul.f32 %v273, %v306
      %v313 = vmul.f32 %v274, %v306
      %v314 = vmul.f32 %v275, %v306
      %v315 = vmul.f32 %v276, %v306
      %v316 = vmul.f32 %v277, %v306
      %v317 = vmul.f32 %v278, %v306
      %v318 = vmul.f32 %v279, %v306
      %v319 = vmul.f32 %v280, %v306
      %v320 = vmul.f32 %v281, %v306
      %v321 = vmul.f32 %v282, %v306
      %v322 = vmul.f32 %v283, %v306
      %v323 = vmul.f32 %v284, %v306
      %v324 = vmul.f32 %v285, %v306
      %v325 = vmul.f32 %v286, %v306
      %v326 = vmul.f32 %v287, %v306
      %v327 = vmul.f32 %v288, %v306
      %v328 = vmul.f32 %v289, %v306
      %v329 = vmul.f32 %v290, %v306
      %v330 = vmul.f32 %v291, %v306
      %v331 = vmul.f32 %v292, %v306
      %v332 = vmul.f32 %v293, %v306
      %v333 = vmul.f32 %v294, %v306
      %v334 = vmul.f32 %v295, %v306
      %v335 = vmul.f32 %v296, %v306
      %v336 = vmul.f32 %v297, %v306
      %v337 = vmul.f32 %v298, %v306
      %v338 = vmul.f32 %v299, %v306
      %v339 = vmul.f32 %v300, %v306
      %v340 = vld [vmem:[%s3] sm:$0x1]
      %v342 = vlaneseq
      %v343 = vshrl.u32 %v342, 7
      %v344 = vsub.s32 0, %v343
      %v345 = vrot.slane %v340, %v344
      %v347 = vadd.f32 %v308, %v345
      %v348 = vadd.f32 %v309, %v345
      %v349 = vadd.f32 %v310, %v345
      %v350 = vadd.f32 %v311, %v345
      %v351 = vadd.f32 %v312, %v345
      %v352 = vadd.f32 %v313, %v345
      %v353 = vadd.f32 %v314, %v345
      %v354 = vadd.f32 %v315, %v345
      %v355 = vadd.f32 %v316, %v345
      %v356 = vadd.f32 %v317, %v345
      %v357 = vadd.f32 %v318, %v345
      %v358 = vadd.f32 %v319, %v345
      %v359 = vadd.f32 %v320, %v345
      %v360 = vadd.f32 %v321, %v345
      %v361 = vadd.f32 %v322, %v345
      %v362 = vadd.f32 %v323, %v345
      %v363 = vadd.f32 %v324, %v345
      %v364 = vadd.f32 %v325, %v345
      %v365 = vadd.f32 %v326, %v345
      %v366 = vadd.f32 %v327, %v345
      %v367 = vadd.f32 %v328, %v345
      %v368 = vadd.f32 %v329, %v345
      %v369 = vadd.f32 %v330, %v345
      %v370 = vadd.f32 %v331, %v345
      %v371 = vadd.f32 %v332, %v345
      %v372 = vadd.f32 %v333, %v345
      %v373 = vadd.f32 %v334, %v345
      %v374 = vadd.f32 %v335, %v345
      %v375 = vadd.f32 %v336, %v345
      %v376 = vadd.f32 %v337, %v345
      %v377 = vadd.f32 %v338, %v345
      %v378 = vadd.f32 %v339, %v345
      %v379 = vmax.f32 %v347, 0.0
      %v380 = vmax.f32 %v348, 0.0
      %v381 = vmax.f32 %v349, 0.0
      %v382 = vmax.f32 %v350, 0.0
      %v383 = vmax.f32 %v351, 0.0
      %v384 = vmax.f32 %v352, 0.0
      %v385 = vmax.f32 %v353, 0.0
      %v386 = vmax.f32 %v354, 0.0
      %v387 = vmax.f32 %v355, 0.0
      %v388 = vmax.f32 %v356, 0.0
      %v389 = vmax.f32 %v357, 0.0
      %v390 = vmax.f32 %v358, 0.0
      %v391 = vmax.f32 %v359, 0.0
      %v392 = vmax.f32 %v360, 0.0
      %v393 = vmax.f32 %v361, 0.0
      %v394 = vmax.f32 %v362, 0.0
      %v395 = vmax.f32 %v363, 0.0
      %v396 = vmax.f32 %v364, 0.0
      %v397 = vmax.f32 %v365, 0.0
      %v398 = vmax.f32 %v366, 0.0
      %v399 = vmax.f32 %v367, 0.0
      %v400 = vmax.f32 %v368, 0.0
      %v401 = vmax.f32 %v369, 0.0
      %v402 = vmax.f32 %v370, 0.0
      %v403 = vmax.f32 %v371, 0.0
      %v404 = vmax.f32 %v372, 0.0
      %v405 = vmax.f32 %v373, 0.0
      %v406 = vmax.f32 %v374, 0.0
      %v407 = vmax.f32 %v375, 0.0
      %v408 = vmax.f32 %v376, 0.0
      %v409 = vmax.f32 %v377, 0.0
      %v410 = vmax.f32 %v378, 0.0
      %v411 = vpack.c.bf16 %v380, %v379
      %v412 = vpack.c.bf16 %v382, %v381
      %v413 = vpack.c.bf16 %v384, %v383
      %v414 = vpack.c.bf16 %v386, %v385
      %v415 = vpack.c.bf16 %v388, %v387
      %v416 = vpack.c.bf16 %v390, %v389
      %v417 = vpack.c.bf16 %v392, %v391
      %v418 = vpack.c.bf16 %v394, %v393
      %v419 = vpack.c.bf16 %v396, %v395
      %v420 = vpack.c.bf16 %v398, %v397
      %v421 = vpack.c.bf16 %v400, %v399
      %v422 = vpack.c.bf16 %v402, %v401
      %v423 = vpack.c.bf16 %v404, %v403
      %v424 = vpack.c.bf16 %v406, %v405
      %v425 = vpack.c.bf16 %v408, %v407
      %v426 = vpack.c.bf16 %v410, %v409
      %442 = vrot.lane.b32.xlu0 0, 8
      %v443 = vpop.permute.xlu0 %442
      %444 = vrot.lane.b32.xlu0 %v411, 8
      %v445 = vpop.permute.xlu0 %444
      %446 = vrot.lane.b32.xlu0 %v412, 8
      %v447 = vpop.permute.xlu0 %446
      %448 = vrot.lane.b32.xlu0 %v413, 8
      %v449 = vpop.permute.xlu0 %448
      %450 = vrot.lane.b32.xlu0 %v414, 8
      %v451 = vpop.permute.xlu0 %450
      %452 = vrot.lane.b32.xlu0 %v415, 8
      %v453 = vpop.permute.xlu0 %452
      %454 = vrot.lane.b32.xlu0 %v416, 8
      %v455 = vpop.permute.xlu0 %454
      %456 = vrot.lane.b32.xlu0 %v417, 8
      %v457 = vpop.permute.xlu0 %456
      %458 = vrot.lane.b32.xlu0 %v418, 8
      %v459 = vpop.permute.xlu0 %458
      %460 = vrot.lane.b32.xlu0 %v419, 8
      %v461 = vpop.permute.xlu0 %460
      %462 = vrot.lane.b32.xlu0 %v420, 8
      %v463 = vpop.permute.xlu0 %462
      %464 = vrot.lane.b32.xlu0 %v421, 8
      %v465 = vpop.permute.xlu0 %464
      %466 = vrot.lane.b32.xlu0 %v422, 8
      %v467 = vpop.permute.xlu0 %466
      %468 = vrot.lane.b32.xlu0 %v423, 8
      %v469 = vpop.permute.xlu0 %468
      %470 = vrot.lane.b32.xlu0 %v424, 8
      %v471 = vpop.permute.xlu0 %470
      %473 = vrot.lane.b32.xlu0 0, 16
      %v474 = vpop.permute.xlu0 %473
      %475 = vrot.lane.b32.xlu0 %v411, 16
      %v476 = vpop.permute.xlu0 %475
      %477 = vrot.lane.b32.xlu0 %v412, 16
      %v478 = vpop.permute.xlu0 %477
      %479 = vrot.lane.b32.xlu0 %v413, 16
      %v480 = vpop.permute.xlu0 %479
      %481 = vrot.lane.b32.xlu0 %v414, 16
      %v482 = vpop.permute.xlu0 %481
      %483 = vrot.lane.b32.xlu0 %v415, 16
      %v484 = vpop.permute.xlu0 %483
      %485 = vrot.lane.b32.xlu0 %v416, 16
      %v486 = vpop.permute.xlu0 %485
      %487 = vrot.lane.b32.xlu0 %v417, 16
      %v488 = vpop.permute.xlu0 %487
      %489 = vrot.lane.b32.xlu0 %v418, 16
      %v490 = vpop.permute.xlu0 %489
      %491 = vrot.lane.b32.xlu0 %v419, 16
      %v492 = vpop.permute.xlu0 %491
      %493 = vrot.lane.b32.xlu0 %v420, 16
      %v494 = vpop.permute.xlu0 %493
      %495 = vrot.lane.b32.xlu0 %v421, 16
      %v496 = vpop.permute.xlu0 %495
      %497 = vrot.lane.b32.xlu0 %v422, 16
      %v498 = vpop.permute.xlu0 %497
      %499 = vrot.lane.b32.xlu0 %v423, 16
      %v500 = vpop.permute.xlu0 %499
      %501 = vrot.lane.b32.xlu0 %v424, 16
      %v502 = vpop.permute.xlu0 %501
      %503 = vrot.lane.b32.xlu0 %v425, 16
      %v504 = vpop.permute.xlu0 %503
      %506 = vrot.lane.b32.xlu0 %v411, 24
      %v507 = vpop.permute.xlu0 %506
      %508 = vrot.lane.b32.xlu0 %v412, 24
      %v509 = vpop.permute.xlu0 %508
      %510 = vrot.lane.b32.xlu0 %v413, 24
      %v511 = vpop.permute.xlu0 %510
      %512 = vrot.lane.b32.xlu0 %v414, 24
      %v513 = vpop.permute.xlu0 %512
      %514 = vrot.lane.b32.xlu0 %v415, 24
      %v515 = vpop.permute.xlu0 %514
      %516 = vrot.lane.b32.xlu0 %v416, 24
      %v517 = vpop.permute.xlu0 %516
      %518 = vrot.lane.b32.xlu0 %v417, 24
      %v519 = vpop.permute.xlu0 %518
      %520 = vrot.lane.b32.xlu0 %v418, 24
      %v521 = vpop.permute.xlu0 %520
      %522 = vrot.lane.b32.xlu0 %v419, 24
      %v523 = vpop.permute.xlu0 %522
      %524 = vrot.lane.b32.xlu0 %v420, 24
      %v525 = vpop.permute.xlu0 %524
      %526 = vrot.lane.b32.xlu0 %v421, 24
      %v527 = vpop.permute.xlu0 %526
      %528 = vrot.lane.b32.xlu0 %v422, 24
      %v529 = vpop.permute.xlu0 %528
      %530 = vrot.lane.b32.xlu0 %v423, 24
      %v531 = vpop.permute.xlu0 %530
      %532 = vrot.lane.b32.xlu0 %v424, 24
      %v533 = vpop.permute.xlu0 %532
      %534 = vrot.lane.b32.xlu0 %v425, 24
      %v535 = vpop.permute.xlu0 %534
      %536 = vrot.lane.b32.xlu0 %v426, 24
      %v537 = vpop.permute.xlu0 %536
      %538 = vrot.lane.b32.xlu0 %v412, 32
      %v539 = vpop.permute.xlu0 %538
      %540 = vrot.lane.b32.xlu0 %v413, 32
      %v541 = vpop.permute.xlu0 %540
      %542 = vrot.lane.b32.xlu0 %v414, 32
      %v543 = vpop.permute.xlu0 %542
      %544 = vrot.lane.b32.xlu0 %v415, 32
      %v545 = vpop.permute.xlu0 %544
      %546 = vrot.lane.b32.xlu0 %v416, 32
      %v547 = vpop.permute.xlu0 %546
      %548 = vrot.lane.b32.xlu0 %v417, 32
      %v549 = vpop.permute.xlu0 %548
      %550 = vrot.lane.b32.xlu0 %v418, 32
      %v551 = vpop.permute.xlu0 %550
      %552 = vrot.lane.b32.xlu0 %v419, 32
      %v553 = vpop.permute.xlu0 %552
      %554 = vrot.lane.b32.xlu0 %v420, 32
      %v555 = vpop.permute.xlu0 %554
      %556 = vrot.lane.b32.xlu0 %v421, 32
      %v557 = vpop.permute.xlu0 %556
      %558 = vrot.lane.b32.xlu0 %v422, 32
      %v559 = vpop.permute.xlu0 %558
      %560 = vrot.lane.b32.xlu0 %v423, 32
      %v561 = vpop.permute.xlu0 %560
      %562 = vrot.lane.b32.xlu0 %v424, 32
      %v563 = vpop.permute.xlu0 %562
      %564 = vrot.lane.b32.xlu0 %v425, 32
      %v565 = vpop.permute.xlu0 %564
      %566 = vrot.lane.b32.xlu0 %v426, 32
      %v567 = vpop.permute.xlu0 %566
      %568 = vrot.lane.b32.xlu0 0, 32
      %v569 = vpop.permute.xlu0 %568
      %570 = vrot.lane.b32.xlu0 %v413, 40
      %v571 = vpop.permute.xlu0 %570
      %572 = vrot.lane.b32.xlu0 %v414, 40
      %v573 = vpop.permute.xlu0 %572
      %574 = vrot.lane.b32.xlu0 %v415, 40
      %v575 = vpop.permute.xlu0 %574
      %576 = vrot.lane.b32.xlu0 %v416, 40
      %v577 = vpop.permute.xlu0 %576
      %578 = vrot.lane.b32.xlu0 %v417, 40
      %v579 = vpop.permute.xlu0 %578
      %580 = vrot.lane.b32.xlu0 %v418, 40
      %v581 = vpop.permute.xlu0 %580
      %582 = vrot.lane.b32.xlu0 %v419, 40
      %v583 = vpop.permute.xlu0 %582
      %584 = vrot.lane.b32.xlu0 %v420, 40
      %v585 = vpop.permute.xlu0 %584
      %586 = vrot.lane.b32.xlu0 %v421, 40
      %v587 = vpop.permute.xlu0 %586
      %588 = vrot.lane.b32.xlu0 %v422, 40
      %v589 = vpop.permute.xlu0 %588
      %590 = vrot.lane.b32.xlu0 %v423, 40
      %v591 = vpop.permute.xlu0 %590
      %592 = vrot.lane.b32.xlu0 %v424, 40
      %v593 = vpop.permute.xlu0 %592
      %594 = vrot.lane.b32.xlu0 %v425, 40
      %v595 = vpop.permute.xlu0 %594
      %596 = vrot.lane.b32.xlu0 %v426, 40
      %v597 = vpop.permute.xlu0 %596
      %598 = vrot.lane.b32.xlu0 0, 40
      %v599 = vpop.permute.xlu0 %598
      %600 = vrot.lane.b32.xlu0 %v414, 48
      %v601 = vpop.permute.xlu0 %600
      %602 = vrot.lane.b32.xlu0 %v415, 48
      %v603 = vpop.permute.xlu0 %602
      %604 = vrot.lane.b32.xlu0 %v416, 48
      %v605 = vpop.permute.xlu0 %604
      %606 = vrot.lane.b32.xlu0 %v417, 48
      %v607 = vpop.permute.xlu0 %606
      %608 = vrot.lane.b32.xlu0 %v418, 48
      %v609 = vpop.permute.xlu0 %608
      %610 = vrot.lane.b32.xlu0 %v419, 48
      %v611 = vpop.permute.xlu0 %610
      %612 = vrot.lane.b32.xlu0 %v420, 48
      %v613 = vpop.permute.xlu0 %612
      %614 = vrot.lane.b32.xlu0 %v421, 48
      %v615 = vpop.permute.xlu0 %614
      %616 = vrot.lane.b32.xlu0 %v422, 48
      %v617 = vpop.permute.xlu0 %616
      %618 = vrot.lane.b32.xlu0 %v423, 48
      %v619 = vpop.permute.xlu0 %618
      %620 = vrot.lane.b32.xlu0 %v424, 48
      %v621 = vpop.permute.xlu0 %620
      %622 = vrot.lane.b32.xlu0 %v425, 48
      %v623 = vpop.permute.xlu0 %622
      %624 = vrot.lane.b32.xlu0 %v426, 48
      %v625 = vpop.permute.xlu0 %624
      %626 = vrot.lane.b32.xlu0 0, 48
      %v627 = vpop.permute.xlu0 %626
      %vm628 = vcmask 64512
      %v631 = vsel %vm628, 0, %v443
      %v633 = vsel %vm628, 0, %v445
      %v636 = vsel %vm628, %v411, %v447
      %v639 = vsel %vm628, %v412, %v449
      %v642 = vsel %vm628, %v413, %v451
      %v645 = vsel %vm628, %v414, %v453
      %v648 = vsel %vm628, %v415, %v455
      %v651 = vsel %vm628, %v416, %v457
      %v654 = vsel %vm628, %v417, %v459
      %v657 = vsel %vm628, %v418, %v461
      %v660 = vsel %vm628, %v419, %v463
      %v663 = vsel %vm628, %v420, %v465
      %v666 = vsel %vm628, %v421, %v467
      %v669 = vsel %vm628, %v422, %v469
      %v672 = vsel %vm628, %v423, %v471
      %vm673 = vcmask 130048
      %v675 = vsel %vm673, %v631, %v474
      %v677 = vsel %vm673, %v631, %v476
      %v679 = vsel %vm673, %v633, %v478
      %v681 = vsel %vm673, %v636, %v480
      %v683 = vsel %vm673, %v639, %v482
      %v685 = vsel %vm673, %v642, %v484
      %v687 = vsel %vm673, %v645, %v486
      %v689 = vsel %vm673, %v648, %v488
      %v691 = vsel %vm673, %v651, %v490
      %v693 = vsel %vm673, %v654, %v492
      %v695 = vsel %vm673, %v657, %v494
      %v697 = vsel %vm673, %v660, %v496
      %v699 = vsel %vm673, %v663, %v498
      %v701 = vsel %vm673, %v666, %v500
      %v703 = vsel %vm673, %v669, %v502
      %v705 = vsel %vm673, %v672, %v504
      %vm706 = vcmask 195584
      %v708 = vsel %vm706, %v675, %v507
      %v710 = vsel %vm706, %v677, %v509
      %v712 = vsel %vm706, %v679, %v511
      %v714 = vsel %vm706, %v681, %v513
      %v716 = vsel %vm706, %v683, %v515
      %v718 = vsel %vm706, %v685, %v517
      %v720 = vsel %vm706, %v687, %v519
      %v722 = vsel %vm706, %v689, %v521
      %v724 = vsel %vm706, %v691, %v523
      %v726 = vsel %vm706, %v693, %v525
      %v728 = vsel %vm706, %v695, %v527
      %v730 = vsel %vm706, %v697, %v529
      %v732 = vsel %vm706, %v699, %v531
      %v734 = vsel %vm706, %v701, %v533
      %v736 = vsel %vm706, %v703, %v535
      %v738 = vsel %vm706, %v705, %v537
      %vm739 = vcmask 261120
      %v741 = vsel %vm739, %v708, %v539
      %v743 = vsel %vm739, %v710, %v541
      %v745 = vsel %vm739, %v712, %v543
      %v747 = vsel %vm739, %v714, %v545
      %v749 = vsel %vm739, %v716, %v547
      %v751 = vsel %vm739, %v718, %v549
      %v753 = vsel %vm739, %v720, %v551
      %v755 = vsel %vm739, %v722, %v553
      %v757 = vsel %vm739, %v724, %v555
      %v759 = vsel %vm739, %v726, %v557
      %v761 = vsel %vm739, %v728, %v559
      %v763 = vsel %vm739, %v730, %v561
      %v765 = vsel %vm739, %v732, %v563
      %v767 = vsel %vm739, %v734, %v565
      %v769 = vsel %vm739, %v736, %v567
      %v771 = vsel %vm739, %v738, %v569
      %vm772 = vcmask 326656
      %v774 = vsel %vm772, %v741, %v571
      %v776 = vsel %vm772, %v743, %v573
      %v778 = vsel %vm772, %v745, %v575
      %v780 = vsel %vm772, %v747, %v577
      %v782 = vsel %vm772, %v749, %v579
      %v784 = vsel %vm772, %v751, %v581
      %v786 = vsel %vm772, %v753, %v583
      %v788 = vsel %vm772, %v755, %v585
      %v790 = vsel %vm772, %v757, %v587
      %v792 = vsel %vm772, %v759, %v589
      %v794 = vsel %vm772, %v761, %v591
      %v796 = vsel %vm772, %v763, %v593
      %v798 = vsel %vm772, %v765, %v595
      %v800 = vsel %vm772, %v767, %v597
      %v802 = vsel %vm772, %v769, %v599
      %v803 = vsel %vm772, %v771, %v599
      %vm804 = vcmask 392192
      %v806 = vsel %vm804, %v774, %v601
      %v808 = vsel %vm804, %v776, %v603
      %v810 = vsel %vm804, %v778, %v605
      %v812 = vsel %vm804, %v780, %v607
      %v814 = vsel %vm804, %v782, %v609
      %v816 = vsel %vm804, %v784, %v611
      %v818 = vsel %vm804, %v786, %v613
      %v820 = vsel %vm804, %v788, %v615
      %v822 = vsel %vm804, %v790, %v617
      %v824 = vsel %vm804, %v792, %v619
      %v826 = vsel %vm804, %v794, %v621
      %v828 = vsel %vm804, %v796, %v623
      %v830 = vsel %vm804, %v798, %v625
      %v832 = vsel %vm804, %v800, %v627
      %v833 = vsel %vm804, %v802, %v627
      %v834 = vsel %vm804, %v803, %v627
      %v835 = vld [vmem:[%s1] sm:$0xf]
      %v836 = vld [vmem:[%s1 + $0x4] sm:$0xf]
      %v837 = vld [vmem:[%s1 + $0x8] sm:$0xf]
      %v838 = vld [vmem:[%s1 + $0xc] sm:$0xf]
      %v839 = vld [vmem:[%s1 + $0x10] sm:$0xf]
      %v840 = vld [vmem:[%s1 + $0x14] sm:$0xf]
      %v841 = vld [vmem:[%s1 + $0x18] sm:$0xf]
      %v849 = vunpack.c.l.b16 %v835
      %v850 = vunpack.c.l.b16 %v836
      %v851 = vunpack.c.l.b16 %v837
      %v852 = vunpack.c.l.b16 %v838
      %v853 = vunpack.c.l.b16 %v839
      %v854 = vunpack.c.l.b16 %v840
      %v855 = vunpack.c.l.b16 %v841
      %v856 = vpack.c.b16 %v850, %v849
      %v857 = vpack.c.b16 %v852, %v851
      %v858 = vpack.c.b16 %v854, %v853
      %v859 = vpack.c.b16 %v855, %v855
      %vm863 = vcmask 457728
      %v864 = vsel %vm863, %v806, 0
      %v866 = vsel %vm863, %v808, 0
      %v868 = vsel %vm863, %v810, 0
      %v870 = vsel %vm863, %v812, 0
      %v872 = vsel %vm863, %v814, 0
      %v874 = vsel %vm863, %v816, 0
      %v876 = vsel %vm863, %v818, 0
      %v878 = vsel %vm863, %v820, 0
      %v880 = vsel %vm863, %v822, 0
      %v882 = vsel %vm863, %v824, 0
      %v884 = vsel %vm863, %v826, 0
      %v886 = vsel %vm863, %v828, 0
      %v888 = vsel %vm863, %v830, 0
      %v890 = vsel %vm863, %v832, 0
      %v892 = vsel %vm863, %v833, 0
      %v894 = vsel %vm863, %v834, 0
      %vm896 = vcmask 1043456
      %v898 = vsel %vm896, %v859, 0
      %900 = vmatprep.subr.bf16.mxu0 0
      %901 = vmatpush1.bf16.msra.mxu0 0
      %902 = vmatprep.subr.bf16.mxu0 0
      %903 = vmatpush1.bf16.msra.mxu0 0
      %904 = vmatprep.subr.bf16.mxu0 0
      %905 = vmatpush1.bf16.msra.mxu0 0
      %906 = vmatprep.subr.bf16.mxu0 0
      %907 = vmatpush1.bf16.msra.mxu0 0
      %908 = vmatprep.subr.bf16.mxu0 0
      %909 = vmatpush1.bf16.msra.mxu0 %v898
      %910 = vmatprep.subr.bf16.mxu0 0
      %911 = vmatpush1.bf16.msra.mxu0 %v858
      %912 = vmatprep.subr.bf16.mxu0 0
      %913 = vmatpush1.bf16.msra.mxu0 %v857
      %914 = vmatprep.subr.bf16.mxu0 0
      %915 = vmatpush1.bf16.msra.mxu0 %v856
      %916 = vmatprep.subr.bf16.mxu0 0
      %917 = vmatpush2.bf16.msra.mxu0 0
      %918 = vmatprep.subr.bf16.mxu0 0
      %919 = vmatpush2.bf16.msra.mxu0 0
      %920 = vmatprep.subr.bf16.mxu0 0
      %921 = vmatpush2.bf16.msra.mxu0 0
      %922 = vmatprep.subr.bf16.mxu0 0
      %923 = vmatpush2.bf16.msra.mxu0 0
      %924 = vmatprep.subr.bf16.mxu0 0
      %925 = vmatpush2.bf16.msra.mxu0 0
      %926 = vmatprep.subr.bf16.mxu0 0
      %927 = vmatpush2.bf16.msra.mxu0 0
      %928 = vmatprep.subr.bf16.mxu0 0
      %929 = vmatpush2.bf16.msra.mxu0 0
      %930 = vmatprep.subr.bf16.mxu0 0
      %931 = vmatpush2.bf16.msra.mxu0 0
      %932 = vmatprep.mubr.bf16.mxu0 0
      %933 = vmatmul.mubr.bf16.gmra.mxu0 %v864
      %v934 = vpop.f32.mrf.mxu0
      %v935 = vadd.f32 0.0, %v934
      %v936 = vpop.f32.mrf.mxu0
      %v937 = vpop.f32.mrf.mxu0
      %v938 = vadd.f32 0.0, %v937
      %v939 = vpop.f32.mrf.mxu0
      %940 = vmatprep.mubr.bf16.mxu0 0
      %941 = vmatmul.mubr.bf16.gmra.mxu0 %v866
      %v942 = vpop.f32.mrf.mxu0
      %v943 = vadd.f32 0.0, %v942
      %v944 = vpop.f32.mrf.mxu0
      %v945 = vpop.f32.mrf.mxu0
      %v946 = vadd.f32 0.0, %v945
      %v947 = vpop.f32.mrf.mxu0
      %948 = vmatprep.mubr.bf16.mxu0 0
      %949 = vmatmul.mubr.bf16.gmra.mxu0 %v868
      %v950 = vpop.f32.mrf.mxu0
      %v951 = vadd.f32 0.0, %v950
      %v952 = vpop.f32.mrf.mxu0
      %v953 = vpop.f32.mrf.mxu0
      %v954 = vadd.f32 0.0, %v953
      %v955 = vpop.f32.mrf.mxu0
      %956 = vmatprep.mubr.bf16.mxu0 0
      %957 = vmatmul.mubr.bf16.gmra.mxu0 %v870
      %v958 = vpop.f32.mrf.mxu0
      %v959 = vadd.f32 0.0, %v958
      %v960 = vpop.f32.mrf.mxu0
      %v961 = vpop.f32.mrf.mxu0
      %v962 = vadd.f32 0.0, %v961
      %v963 = vpop.f32.mrf.mxu0
      %964 = vmatprep.mubr.bf16.mxu0 0
      %965 = vmatmul.mubr.bf16.gmra.mxu0 %v872
      %v966 = vpop.f32.mrf.mxu0
      %v967 = vadd.f32 0.0, %v966
      %v968 = vpop.f32.mrf.mxu0
      %v969 = vpop.f32.mrf.mxu0
      %v970 = vadd.f32 0.0, %v969
      %v971 = vpop.f32.mrf.mxu0
      %972 = vmatprep.mubr.bf16.mxu0 0
      %973 = vmatmul.mubr.bf16.gmra.mxu0 %v874
      %v974 = vpop.f32.mrf.mxu0
      %v975 = vadd.f32 0.0, %v974
      %v976 = vpop.f32.mrf.mxu0
      %v977 = vpop.f32.mrf.mxu0
      %v978 = vadd.f32 0.0, %v977
      %v979 = vpop.f32.mrf.mxu0
      %980 = vmatprep.mubr.bf16.mxu0 0
      %981 = vmatmul.mubr.bf16.gmra.mxu0 %v876
      %v982 = vpop.f32.mrf.mxu0
      %v983 = vadd.f32 0.0, %v982
      %v984 = vpop.f32.mrf.mxu0
      %v985 = vpop.f32.mrf.mxu0
      %v986 = vadd.f32 0.0, %v985
      %v987 = vpop.f32.mrf.mxu0
      %988 = vmatprep.mubr.bf16.mxu0 0
      %989 = vmatmul.mubr.bf16.gmra.mxu0 %v878
      %v990 = vpop.f32.mrf.mxu0
      %v991 = vadd.f32 0.0, %v990
      %v992 = vpop.f32.mrf.mxu0
      %v993 = vpop.f32.mrf.mxu0
      %v994 = vadd.f32 0.0, %v993
      %v995 = vpop.f32.mrf.mxu0
      %996 = vmatprep.mubr.bf16.mxu0 0
      %997 = vmatmul.mubr.bf16.gmra.mxu0 %v880
      %v998 = vpop.f32.mrf.mxu0
      %v999 = vadd.f32 0.0, %v998
      %v1000 = vpop.f32.mrf.mxu0
      %v1001 = vpop.f32.mrf.mxu0
      %v1002 = vadd.f32 0.0, %v1001
      %v1003 = vpop.f32.mrf.mxu0
      %1004 = vmatprep.mubr.bf16.mxu0 0
      %1005 = vmatmul.mubr.bf16.gmra.mxu0 %v882
      %v1006 = vpop.f32.mrf.mxu0
      %v1007 = vadd.f32 0.0, %v1006
      %v1008 = vpop.f32.mrf.mxu0
      %v1009 = vpop.f32.mrf.mxu0
      %v1010 = vadd.f32 0.0, %v1009
      %v1011 = vpop.f32.mrf.mxu0
      %1012 = vmatprep.mubr.bf16.mxu0 0
      %1013 = vmatmul.mubr.bf16.gmra.mxu0 %v884
      %v1014 = vpop.f32.mrf.mxu0
      %v1015 = vadd.f32 0.0, %v1014
      %v1016 = vpop.f32.mrf.mxu0
      %v1017 = vpop.f32.mrf.mxu0
      %v1018 = vadd.f32 0.0, %v1017
      %v1019 = vpop.f32.mrf.mxu0
      %1020 = vmatprep.mubr.bf16.mxu0 0
      %1021 = vmatmul.mubr.bf16.gmra.mxu0 %v886
      %v1022 = vpop.f32.mrf.mxu0
      %v1023 = vadd.f32 0.0, %v1022
      %v1024 = vpop.f32.mrf.mxu0
      %v1025 = vpop.f32.mrf.mxu0
      %v1026 = vadd.f32 0.0, %v1025
      %v1027 = vpop.f32.mrf.mxu0
      %1028 = vmatprep.mubr.bf16.mxu0 0
      %1029 = vmatmul.mubr.bf16.gmra.mxu0 %v888
      %v1030 = vpop.f32.mrf.mxu0
      %v1031 = vadd.f32 0.0, %v1030
      %v1032 = vpop.f32.mrf.mxu0
      %v1033 = vpop.f32.mrf.mxu0
      %v1034 = vadd.f32 0.0, %v1033
      %v1035 = vpop.f32.mrf.mxu0
      %1036 = vmatprep.mubr.bf16.mxu0 0
      %1037 = vmatmul.mubr.bf16.gmra.mxu0 %v890
      %v1038 = vpop.f32.mrf.mxu0
      %v1039 = vadd.f32 0.0, %v1038
      %v1040 = vpop.f32.mrf.mxu0
      %v1041 = vpop.f32.mrf.mxu0
      %v1042 = vadd.f32 0.0, %v1041
      %v1043 = vpop.f32.mrf.mxu0
      %1044 = vmatprep.mubr.bf16.mxu0 0
      %1045 = vmatmul.mubr.bf16.gmra.mxu0 %v892
      %v1046 = vpop.f32.mrf.mxu0
      %v1047 = vadd.f32 0.0, %v1046
      %v1048 = vpop.f32.mrf.mxu0
      %v1049 = vpop.f32.mrf.mxu0
      %v1050 = vadd.f32 0.0, %v1049
      %v1051 = vpop.f32.mrf.mxu0
      %1052 = vmatprep.mubr.bf16.mxu0 0
      %1053 = vmatmul.mubr.bf16.gmra.mxu0 %v894
      %v1054 = vpop.f32.mrf.mxu0
      %v1055 = vadd.f32 0.0, %v1054
      %v1056 = vpop.f32.mrf.mxu0
      %v1057 = vpop.f32.mrf.mxu0
      %v1058 = vadd.f32 0.0, %v1057
      %v1059 = vpop.f32.mrf.mxu0
      %1060 = vdwg.mxu0
      %v1061 = vpack.c.bf16 %v938, %v935
      %v1062 = vpack.c.bf16 %v946, %v943
      %v1063 = vpack.c.bf16 %v954, %v951
      %v1064 = vpack.c.bf16 %v962, %v959
      %v1065 = vpack.c.bf16 %v970, %v967
      %v1066 = vpack.c.bf16 %v978, %v975
      %v1067 = vpack.c.bf16 %v986, %v983
      %v1068 = vpack.c.bf16 %v994, %v991
      %v1069 = vpack.c.bf16 %v1002, %v999
      %v1070 = vpack.c.bf16 %v1010, %v1007
      %v1071 = vpack.c.bf16 %v1018, %v1015
      %v1072 = vpack.c.bf16 %v1026, %v1023
      %v1073 = vpack.c.bf16 %v1034, %v1031
      %v1074 = vpack.c.bf16 %v1042, %v1039
      %v1075 = vpack.c.bf16 %v1050, %v1047
      %v1076 = vpack.c.bf16 %v1058, %v1055
      %v1093 = vunpack.c.l.b16 %v1061
      %v1094 = vunpack.c.h.b16 %v1061
      %v1095 = vunpack.c.l.b16 %v1062
      %v1096 = vunpack.c.h.b16 %v1062
      %v1097 = vunpack.c.l.b16 %v1063
      %v1098 = vunpack.c.h.b16 %v1063
      %v1099 = vunpack.c.l.b16 %v1064
      %v1100 = vunpack.c.h.b16 %v1064
      %v1101 = vunpack.c.l.b16 %v1065
      %v1102 = vunpack.c.h.b16 %v1065
      %v1103 = vunpack.c.l.b16 %v1066
      %v1104 = vunpack.c.h.b16 %v1066
      %v1105 = vunpack.c.l.b16 %v1067
      %v1106 = vunpack.c.h.b16 %v1067
      %v1107 = vunpack.c.l.b16 %v1068
      %v1108 = vunpack.c.h.b16 %v1068
      %v1109 = vunpack.c.l.b16 %v1069
      %v1110 = vunpack.c.h.b16 %v1069
      %v1111 = vunpack.c.l.b16 %v1070
      %v1112 = vunpack.c.h.b16 %v1070
      %v1113 = vunpack.c.l.b16 %v1071
      %v1114 = vunpack.c.h.b16 %v1071
      %v1115 = vunpack.c.l.b16 %v1072
      %v1116 = vunpack.c.h.b16 %v1072
      %v1117 = vunpack.c.l.b16 %v1073
      %v1118 = vunpack.c.h.b16 %v1073
      %v1119 = vunpack.c.l.b16 %v1074
      %v1120 = vunpack.c.h.b16 %v1074
      %v1121 = vunpack.c.l.b16 %v1075
      %v1122 = vunpack.c.h.b16 %v1075
      %v1123 = vunpack.c.l.b16 %v1076
      %v1124 = vunpack.c.h.b16 %v1076
      %v1125 = vpack.c.b16 %v1093, %v1093
      %v1126 = vpack.c.b16 %v1094, %v1094
      %v1127 = vpack.c.b16 %v1095, %v1095
      %v1128 = vpack.c.b16 %v1096, %v1096
      %v1129 = vpack.c.b16 %v1097, %v1097
      %v1130 = vpack.c.b16 %v1098, %v1098
      %v1131 = vpack.c.b16 %v1099, %v1099
      %v1132 = vpack.c.b16 %v1100, %v1100
      %v1133 = vpack.c.b16 %v1101, %v1101
      %v1134 = vpack.c.b16 %v1102, %v1102
      %v1135 = vpack.c.b16 %v1103, %v1103
      %v1136 = vpack.c.b16 %v1104, %v1104
      %v1137 = vpack.c.b16 %v1105, %v1105
      %v1138 = vpack.c.b16 %v1106, %v1106
      %v1139 = vpack.c.b16 %v1107, %v1107
      %v1140 = vpack.c.b16 %v1108, %v1108
      %v1141 = vpack.c.b16 %v1109, %v1109
      %v1142 = vpack.c.b16 %v1110, %v1110
      %v1143 = vpack.c.b16 %v1111, %v1111
      %v1144 = vpack.c.b16 %v1112, %v1112
      %v1145 = vpack.c.b16 %v1113, %v1113
      %v1146 = vpack.c.b16 %v1114, %v1114
      %v1147 = vpack.c.b16 %v1115, %v1115
      %v1148 = vpack.c.b16 %v1116, %v1116
      %v1149 = vpack.c.b16 %v1117, %v1117
      %v1150 = vpack.c.b16 %v1118, %v1118
      %v1151 = vpack.c.b16 %v1119, %v1119
      %v1152 = vpack.c.b16 %v1120, %v1120
      %v1153 = vpack.c.b16 %v1121, %v1121
      %v1154 = vpack.c.b16 %v1122, %v1122
      %v1155 = vpack.c.b16 %v1123, %v1123
      %v1156 = vpack.c.b16 %v1124, %v1124
      %vm1189 = vcmask 60416
      %1190 = vst.msk [vmem:[%s231] sm:$0xf] %vm1189, %v1125
      %1191 = vst.msk [vmem:[%s231 + $0x4] sm:$0xf] %vm1189, %v1126
      %1192 = vst.msk [vmem:[%s231 + $0x8] sm:$0xf] %vm1189, %v1127
      %1193 = vst.msk [vmem:[%s231 + $0xc] sm:$0xf] %vm1189, %v1128
      %1194 = vst.msk [vmem:[%s231 + $0x10] sm:$0xf] %vm1189, %v1129
      %1195 = vst.msk [vmem:[%s231 + $0x14] sm:$0xf] %vm1189, %v1130
      %1196 = vst.msk [vmem:[%s231 + $0x18] sm:$0xf] %vm1189, %v1131
      %1197 = vst.msk [vmem:[%s231 + $0x1c] sm:$0xf] %vm1189, %v1132
      %1198 = vst.msk [vmem:[%s231 + $0x20] sm:$0xf] %vm1189, %v1133
      %1199 = vst.msk [vmem:[%s231 + $0x24] sm:$0xf] %vm1189, %v1134
      %1200 = vst.msk [vmem:[%s231 + $0x28] sm:$0xf] %vm1189, %v1135
      %1201 = vst.msk [vmem:[%s231 + $0x2c] sm:$0xf] %vm1189, %v1136
      %1202 = vst.msk [vmem:[%s231 + $0x30] sm:$0xf] %vm1189, %v1137
      %1203 = vst.msk [vmem:[%s231 + $0x34] sm:$0xf] %vm1189, %v1138
      %1204 = vst.msk [vmem:[%s231 + $0x38] sm:$0xf] %vm1189, %v1139
      %1205 = vst.msk [vmem:[%s231 + $0x3c] sm:$0xf] %vm1189, %v1140
      %1206 = vst.msk [vmem:[%s231 + $0x40] sm:$0xf] %vm1189, %v1141
      %1207 = vst.msk [vmem:[%s231 + $0x44] sm:$0xf] %vm1189, %v1142
      %1208 = vst.msk [vmem:[%s231 + $0x48] sm:$0xf] %vm1189, %v1143
      %1209 = vst.msk [vmem:[%s231 + $0x4c] sm:$0xf] %vm1189, %v1144
      %1210 = vst.msk [vmem:[%s231 + $0x50] sm:$0xf] %vm1189, %v1145
      %1211 = vst.msk [vmem:[%s231 + $0x54] sm:$0xf] %vm1189, %v1146
      %1212 = vst.msk [vmem:[%s231 + $0x58] sm:$0xf] %vm1189, %v1147
      %1213 = vst.msk [vmem:[%s231 + $0x5c] sm:$0xf] %vm1189, %v1148
      %1214 = vst.msk [vmem:[%s231 + $0x60] sm:$0xf] %vm1189, %v1149
      %1215 = vst.msk [vmem:[%s231 + $0x64] sm:$0xf] %vm1189, %v1150
      %1216 = vst.msk [vmem:[%s231 + $0x68] sm:$0xf] %vm1189, %v1151
      %1217 = vst.msk [vmem:[%s231 + $0x6c] sm:$0xf] %vm1189, %v1152
      %1218 = vst.msk [vmem:[%s231 + $0x70] sm:$0xf] %vm1189, %v1153
      %1219 = vst.msk [vmem:[%s231 + $0x74] sm:$0xf] %vm1189, %v1154
      %1220 = vst.msk [vmem:[%s231 + $0x78] sm:$0xf] %vm1189, %v1155
      %1221 = vst.msk [vmem:[%s231 + $0x7c] sm:$0xf] %vm1189, %v1156
      %v1222 = vsel %vm628, %v935, 0.0
      %v1223 = vsel %vm628, %v938, 0.0
      %v1224 = vadd.f32 %v1222, %v1223
      %v1225 = vsel %vm628, %v943, 0.0
      %v1226 = vadd.f32 %v1224, %v1225
      %v1227 = vsel %vm628, %v946, 0.0
      %v1228 = vadd.f32 %v1226, %v1227
      %v1229 = vsel %vm628, %v951, 0.0
      %v1230 = vadd.f32 %v1228, %v1229
      %v1231 = vsel %vm628, %v954, 0.0
      %v1232 = vadd.f32 %v1230, %v1231
      %v1233 = vsel %vm628, %v959, 0.0
      %v1234 = vadd.f32 %v1232, %v1233
      %v1235 = vsel %vm628, %v962, 0.0
      %v1236 = vadd.f32 %v1234, %v1235
      %v1237 = vsel %vm628, %v967, 0.0
      %v1238 = vadd.f32 %v1236, %v1237
      %v1239 = vsel %vm628, %v970, 0.0
      %v1240 = vadd.f32 %v1238, %v1239
      %v1241 = vsel %vm628, %v975, 0.0
      %v1242 = vadd.f32 %v1240, %v1241
      %v1243 = vsel %vm628, %v978, 0.0
      %v1244 = vadd.f32 %v1242, %v1243
      %v1245 = vsel %vm628, %v983, 0.0
      %v1246 = vadd.f32 %v1244, %v1245
      %v1247 = vsel %vm628, %v986, 0.0
      %v1248 = vadd.f32 %v1246, %v1247
      %v1249 = vsel %vm628, %v991, 0.0
      %v1250 = vadd.f32 %v1248, %v1249
      %v1251 = vsel %vm628, %v994, 0.0
      %v1252 = vadd.f32 %v1250, %v1251
      %v1253 = vsel %vm628, %v999, 0.0
      %v1254 = vadd.f32 %v1252, %v1253
      %v1255 = vsel %vm628, %v1002, 0.0
      %v1256 = vadd.f32 %v1254, %v1255
      %v1257 = vsel %vm628, %v1007, 0.0
      %v1258 = vadd.f32 %v1256, %v1257
      %v1259 = vsel %vm628, %v1010, 0.0
      %v1260 = vadd.f32 %v1258, %v1259
      %v1261 = vsel %vm628, %v1015, 0.0
      %v1262 = vadd.f32 %v1260, %v1261
      %v1263 = vsel %vm628, %v1018, 0.0
      %v1264 = vadd.f32 %v1262, %v1263
      %v1265 = vsel %vm628, %v1023, 0.0
      %v1266 = vadd.f32 %v1264, %v1265
      %v1267 = vsel %vm628, %v1026, 0.0
      %v1268 = vadd.f32 %v1266, %v1267
      %v1269 = vsel %vm628, %v1031, 0.0
      %v1270 = vadd.f32 %v1268, %v1269
      %v1271 = vsel %vm628, %v1034, 0.0
      %v1272 = vadd.f32 %v1270, %v1271
      %v1273 = vsel %vm628, %v1039, 0.0
      %v1274 = vadd.f32 %v1272, %v1273
      %v1275 = vsel %vm628, %v1042, 0.0
      %v1276 = vadd.f32 %v1274, %v1275
      %v1277 = vsel %vm628, %v1047, 0.0
      %v1278 = vadd.f32 %v1276, %v1277
      %v1279 = vsel %vm628, %v1050, 0.0
      %v1280 = vadd.f32 %v1278, %v1279
      %v1281 = vsel %vm628, %v1055, 0.0
      %v1282 = vadd.f32 %v1280, %v1281
      %v1283 = vsel %vm628, %v1058, 0.0
      %v1284 = vadd.f32 %v1282, %v1283
      %v1285 = vrot.slane %v1284, 4
      %v1286 = vadd.f32 %v1284, %v1285
      %v1287 = vrot.slane %v1286, 2
      %v1288 = vadd.f32 %v1286, %v1287
      %v1289 = vrot.slane %v1288, 1
      %v1290 = vadd.f32 %v1288, %v1289
      %v1291 = vmul.f32 %v935, %v935
      %v1292 = vmul.f32 %v938, %v938
      %v1293 = vmul.f32 %v943, %v943
      %v1294 = vmul.f32 %v946, %v946
      %v1295 = vmul.f32 %v951, %v951
      %v1296 = vmul.f32 %v954, %v954
      %v1297 = vmul.f32 %v959, %v959
      %v1298 = vmul.f32 %v962, %v962
      %v1299 = vmul.f32 %v967, %v967
      %v1300 = vmul.f32 %v970, %v970
      %v1301 = vmul.f32 %v975, %v975
      %v1302 = vmul.f32 %v978, %v978
      %v1303 = vmul.f32 %v983, %v983
      %v1304 = vmul.f32 %v986, %v986
      %v1305 = vmul.f32 %v991, %v991
      %v1306 = vmul.f32 %v994, %v994
      %v1307 = vmul.f32 %v999, %v999
      %v1308 = vmul.f32 %v1002, %v1002
      %v1309 = vmul.f32 %v1007, %v1007
      %v1310 = vmul.f32 %v1010, %v1010
      %v1311 = vmul.f32 %v1015, %v1015
      %v1312 = vmul.f32 %v1018, %v1018
      %v1313 = vmul.f32 %v1023, %v1023
      %v1314 = vmul.f32 %v1026, %v1026
      %v1315 = vmul.f32 %v1031, %v1031
      %v1316 = vmul.f32 %v1034, %v1034
      %v1317 = vmul.f32 %v1039, %v1039
      %v1318 = vmul.f32 %v1042, %v1042
      %v1319 = vmul.f32 %v1047, %v1047
      %v1320 = vmul.f32 %v1050, %v1050
      %v1321 = vmul.f32 %v1055, %v1055
      %v1322 = vmul.f32 %v1058, %v1058
      %v1323 = vsel %vm628, %v1291, 0.0
      %v1324 = vsel %vm628, %v1292, 0.0
      %v1325 = vadd.f32 %v1323, %v1324
      %v1326 = vsel %vm628, %v1293, 0.0
      %v1327 = vadd.f32 %v1325, %v1326
      %v1328 = vsel %vm628, %v1294, 0.0
      %v1329 = vadd.f32 %v1327, %v1328
      %v1330 = vsel %vm628, %v1295, 0.0
      %v1331 = vadd.f32 %v1329, %v1330
      %v1332 = vsel %vm628, %v1296, 0.0
      %v1333 = vadd.f32 %v1331, %v1332
      %v1334 = vsel %vm628, %v1297, 0.0
      %v1335 = vadd.f32 %v1333, %v1334
      %v1336 = vsel %vm628, %v1298, 0.0
      %v1337 = vadd.f32 %v1335, %v1336
      %v1338 = vsel %vm628, %v1299, 0.0
      %v1339 = vadd.f32 %v1337, %v1338
      %v1340 = vsel %vm628, %v1300, 0.0
      %v1341 = vadd.f32 %v1339, %v1340
      %v1342 = vsel %vm628, %v1301, 0.0
      %v1343 = vadd.f32 %v1341, %v1342
      %v1344 = vsel %vm628, %v1302, 0.0
      %v1345 = vadd.f32 %v1343, %v1344
      %v1346 = vsel %vm628, %v1303, 0.0
      %v1347 = vadd.f32 %v1345, %v1346
      %v1348 = vsel %vm628, %v1304, 0.0
      %v1349 = vadd.f32 %v1347, %v1348
      %v1350 = vsel %vm628, %v1305, 0.0
      %v1351 = vadd.f32 %v1349, %v1350
      %v1352 = vsel %vm628, %v1306, 0.0
      %v1353 = vadd.f32 %v1351, %v1352
      %v1354 = vsel %vm628, %v1307, 0.0
      %v1355 = vadd.f32 %v1353, %v1354
      %v1356 = vsel %vm628, %v1308, 0.0
      %v1357 = vadd.f32 %v1355, %v1356
      %v1358 = vsel %vm628, %v1309, 0.0
      %v1359 = vadd.f32 %v1357, %v1358
      %v1360 = vsel %vm628, %v1310, 0.0
      %v1361 = vadd.f32 %v1359, %v1360
      %v1362 = vsel %vm628, %v1311, 0.0
      %v1363 = vadd.f32 %v1361, %v1362
      %v1364 = vsel %vm628, %v1312, 0.0
      %v1365 = vadd.f32 %v1363, %v1364
      %v1366 = vsel %vm628, %v1313, 0.0
      %v1367 = vadd.f32 %v1365, %v1366
      %v1368 = vsel %vm628, %v1314, 0.0
      %v1369 = vadd.f32 %v1367, %v1368
      %v1370 = vsel %vm628, %v1315, 0.0
      %v1371 = vadd.f32 %v1369, %v1370
      %v1372 = vsel %vm628, %v1316, 0.0
      %v1373 = vadd.f32 %v1371, %v1372
      %v1374 = vsel %vm628, %v1317, 0.0
      %v1375 = vadd.f32 %v1373, %v1374
      %v1376 = vsel %vm628, %v1318, 0.0
      %v1377 = vadd.f32 %v1375, %v1376
      %v1378 = vsel %vm628, %v1319, 0.0
      %v1379 = vadd.f32 %v1377, %v1378
      %v1380 = vsel %vm628, %v1320, 0.0
      %v1381 = vadd.f32 %v1379, %v1380
      %v1382 = vsel %vm628, %v1321, 0.0
      %v1383 = vadd.f32 %v1381, %v1382
      %v1384 = vsel %vm628, %v1322, 0.0
      %v1385 = vadd.f32 %v1383, %v1384
      %v1386 = vrot.slane %v1385, 4
      %v1387 = vadd.f32 %v1385, %v1386
      %v1388 = vrot.slane %v1387, 2
      %v1389 = vadd.f32 %v1387, %v1388
      %v1390 = vrot.slane %v1389, 1
      %v1391 = vadd.f32 %v1389, %v1390
      %vm1392 = vcmask 1040384
      %v1393 = vsel %vm1392, %v1290, %v1391
      %vm1394 = vcmask 58368
      %1395 = vst.msk [vmem:[%s235] sm:$0x3] %vm1394, %v1393
      %p1396 = scmp.lt.s32.totalorder %s17, 1
      %s1397 = scalar_select %p1396, %s17, 1
      %s1398 = smul.addr %s1397, 32
      %s1399 = smul.addr %s1398, 4
      %s1400 = scalar_lea.vmem %s4, %s1399
      %p1401 = scmp.lt.s32.totalorder %s17, 1
      %s1402 = scalar_select %p1401, %s17, 1
      %s1403 = smul.addr %s1402, 2
      %s1404 = scalar_lea.vmem %s5, %s1403
      // Predicated region
      $region37: #{inception_f6_forward.17} parent=35 // pred_check
        %p1405 = pneg %p124
      $region38: #{inception_f6_forward.17} parent=35 // pred_check_branch
        %1407 = sbr.rel (%p1405) target = $region40
      $region39: #{inception_f6_forward.17} parent=35 // pred_region
        _
      $region40: #{inception_f6_forward.17} parent=35 // pred_fallthru
        _
      // Predicated region
      $region41: #{inception_f6_forward.17} parent=35 // pred_check
        %p1408 = pneg %p150
      $region42: #{inception_f6_forward.17} parent=35 // pred_check_branch
        %1410 = sbr.rel (%p1408) target = $region44
      $region43: #{inception_f6_forward.17} parent=35 // pred_region
        _
      $region44: #{inception_f6_forward.17} parent=35 // pred_fallthru
        _
    $region36: #{inception_f6_forward.17} parent=5 // pred_fallthru
      _
    %p1411 = scmp.le.s32.totalorder 2, %s12
    // Predicated region
    $region45: #{inception_f6_forward.17} parent=5 // pred_check
      %p1412 = pneg %p1411
    $region46: #{inception_f6_forward.17} parent=5 // pred_check_branch
      %1414 = sbr.rel (%p1412) target = $region48
    $region47: #{inception_f6_forward.17} parent=5 // pred_region
      %s1415 = ssub.s32 %s12, 2
      // Predicated region
      $region49: #{inception_f6_forward.17} parent=47 // pred_check
        %p1416 = pneg %p130
      $region50: #{inception_f6_forward.17} parent=47 // pred_check_branch
        %1418 = sbr.rel (%p1416) target = $region52
      $region51: #{inception_f6_forward.17} parent=47 // pred_region
        %p1419 = scmp.lt.s32.totalorder %s18, 1
        %s1420 = scalar_select %p1419, %s18, 1
        %s1421 = smul.addr %s1420, 32
        %s1422 = smul.addr %s1421, 4
        %s1423 = scalar_lea.vmem %s4, %s1422
      $region52: #{inception_f6_forward.17} parent=47 // pred_fallthru
        _
      // Predicated region
      $region53: #{inception_f6_forward.17} parent=47 // pred_check
        %p1424 = pneg %p156
      $region54: #{inception_f6_forward.17} parent=47 // pred_check_branch
        %1426 = sbr.rel (%p1424) target = $region56
      $region55: #{inception_f6_forward.17} parent=47 // pred_region
        %p1427 = scmp.lt.s32.totalorder %s18, 1
        %s1428 = scalar_select %p1427, %s18, 1
        %s1429 = smul.addr %s1428, 2
        %s1430 = scalar_lea.vmem %s5, %s1429
      $region56: #{inception_f6_forward.17} parent=47 // pred_fallthru
        _
    $region48: #{inception_f6_forward.17} parent=5 // pred_fallthru
      _
  $region6: #{inception_f6_forward.17} parent=0 // loop_footer
    %s16 = sadd.s32 1, %s12
  $region7: #{inception_f6_forward.17} parent=0 // loop_footer_branch
    %11 = sbr.rel target = $region3
  $region8: #{inception_f6_forward.17} parent=0 // loop_exit
    _

// kernel: inception_f6_forward.26
$region0: #{inception_f6_forward.26}
  #allocation0 [shape = 'u32[]', space=smem, size = 0x4, offset = 0x4, fixed_abs, tag = 'smem constant byte address 0x4 - core index']
  #allocation1 [shape = 'u32[144,128]{1,0:T(1,128)}', space=vmem, size = 0x12000, scoped, tag = 'internal scratch']
  %s0 = inlined_call_operand.vmem [shape: bf16[32,16,4], index: 0, kind: input, shape index: {}]
  %s1 = inlined_call_operand.vmem [shape: bf16[4,192], index: 1, kind: input, shape index: {}]
  %s2 = inlined_call_operand.vmem [shape: bf16[32,16,192], index: 2, kind: output, shape index: {0}]
  %s3 = inlined_call_operand.vmem [shape: f32[2,2,192], index: 3, kind: output, shape index: {1}]
  %4 = xla_tuple %s2, %s3
  %s5 = sld [smem:[#allocation0]]
  $region49: #{inception_f6_forward.26} parent=0
    _
  %s7 = ssub.s32 1, %s5
  %s8 = scalar_select 0, %s7, %s5
  loop: start=0, step=1, limit=4
  $region2: #{inception_f6_forward.26} parent=0 // loop_pre_header
    _
  $region3: #{inception_f6_forward.26} parent=0 // loop_header
    %s10 = sphi 0, %s14
    %p11 = scmp.ge.s32.totalorder %s10, 4
    %s20 = sphi 0, %s22
    %s23 = sphi 0, %s20
    %s24 = sphi 0, %s23
    %s40 = sphi 0, %s24
    %s44 = sphi 0, %s44
    %s46 = sphi 0, %s44
    %s47 = sphi 0, %s46
    %s61 = sphi 0, %s47
    %s67 = sphi 0, %s69
    %s70 = sphi 0, %s67
    %s71 = sphi 0, %s70
    %s87 = sphi 0, %s71
    %s93 = sphi 0, %s95
    %s96 = sphi 0, %s93
    %s97 = sphi 0, %s96
    %s113 = sphi 0, %s97
  $region4: #{inception_f6_forward.26} parent=0 // loop_header_branch
    %13 = sbr.rel (%p11) target = $region8
  $region5: #{inception_f6_forward.26} parent=0 // loop_body
    %s15 = ssub.s32 %s10, 1
    %s16 = ssub.s32 %s10, 2
    %s17 = sadd.s32 %s10, 1
    %s18 = ssub.s32 %s10, %s17
    %p19 = scmp.eq.s32.totalorder %s18, 0
    %s21 = sadd.s32 %s20, 1
    %s22 = scalar_select %p19, %s20, %s21
    %p25 = pneg %p19
    %p26 = scmp.eq.s32.totalorder %s10, 1
    %p27 = por %p25, %p26
    %p28 = scmp.ne.s32.totalorder %s20, %s23
    %p29 = scmp.eq.s32.totalorder %s10, 0
    %p30 = por %p28, %p29
    %p31 = scmp.ne.s32.totalorder %s20, %s23
    %p32 = scmp.eq.s32.totalorder %s15, 1
    %p33 = por %p31, %p32
    %p34 = scmp.ne.s32.totalorder %s23, %s24
    %p35 = scmp.eq.s32.totalorder %s15, 0
    %p36 = por %p34, %p35
    %p37 = scmp.ne.s32.totalorder %s23, %s24
    %p38 = scmp.eq.s32.totalorder %s16, 1
    %p39 = por %p37, %p38
    %p41 = scmp.ne.s32.totalorder %s24, %s40
    %p42 = scmp.eq.s32.totalorder %s16, 0
    %p43 = por %p41, %p42
    %s45 = sadd.s32 %s44, 1
    %p48 = scmp.eq.s32.totalorder %s10, 1
    %p49 = scmp.ne.s32.totalorder %s44, %s46
    %p50 = scmp.eq.s32.totalorder %s10, 0
    %p51 = por %p49, %p50
    %p52 = scmp.ne.s32.totalorder %s44, %s46
    %p53 = scmp.eq.s32.totalorder %s15, 1
    %p54 = por %p52, %p53
    %p55 = scmp.ne.s32.totalorder %s46, %s47
    %p56 = scmp.eq.s32.totalorder %s15, 0
    %p57 = por %p55, %p56
    %p58 = scmp.ne.s32.totalorder %s46, %s47
    %p59 = scmp.eq.s32.totalorder %s16, 1
    %p60 = por %p58, %p59
    %p62 = scmp.ne.s32.totalorder %s47, %s61
    %p63 = scmp.eq.s32.totalorder %s16, 0
    %p64 = por %p62, %p63
    %s65 = ssub.s32 %s10, %s17
    %p66 = scmp.eq.s32.totalorder %s65, 0
    %s68 = sadd.s32 %s67, 1
    %s69 = scalar_select %p66, %s67, %s68
    %p72 = pneg %p66
    %p73 = scmp.eq.s32.totalorder %s10, 1
    %p74 = por %p72, %p73
    %p75 = scmp.ne.s32.totalorder %s67, %s70
    %p76 = scmp.eq.s32.totalorder %s10, 0
    %p77 = por %p75, %p76
    %p78 = scmp.ne.s32.totalorder %s67, %s70
    %p79 = scmp.eq.s32.totalorder %s15, 1
    %p80 = por %p78, %p79
    %p81 = scmp.ne.s32.totalorder %s70, %s71
    %p82 = scmp.eq.s32.totalorder %s15, 0
    %p83 = por %p81, %p82
    %p84 = scmp.ne.s32.totalorder %s70, %s71
    %p85 = scmp.eq.s32.totalorder %s16, 1
    %p86 = por %p84, %p85
    %p88 = scmp.ne.s32.totalorder %s71, %s87
    %p89 = scmp.eq.s32.totalorder %s16, 0
    %p90 = por %p88, %p89
    %s91 = ssub.s32 %s10, %s17
    %p92 = scmp.eq.s32.totalorder %s91, 0
    %s94 = sadd.s32 %s93, 1
    %s95 = scalar_select %p92, %s93, %s94
    %p98 = pneg %p92
    %p99 = scmp.eq.s32.totalorder %s10, 1
    %p100 = por %p98, %p99
    %p101 = scmp.ne.s32.totalorder %s93, %s96
    %p102 = scmp.eq.s32.totalorder %s10, 0
    %p103 = por %p101, %p102
    %p104 = scmp.ne.s32.totalorder %s93, %s96
    %p105 = scmp.eq.s32.totalorder %s15, 1
    %p106 = por %p104, %p105
    %p107 = scmp.ne.s32.totalorder %s96, %s97
    %p108 = scmp.eq.s32.totalorder %s15, 0
    %p109 = por %p107, %p108
    %p110 = scmp.ne.s32.totalorder %s96, %s97
    %p111 = scmp.eq.s32.totalorder %s16, 1
    %p112 = por %p110, %p111
    %p114 = scmp.ne.s32.totalorder %s97, %s113
    %p115 = scmp.eq.s32.totalorder %s16, 0
    %p116 = por %p114, %p115
    %p117 = scmp.le.s32.totalorder 1, %s10
    %p118 = scmp.lt.s32.totalorder %s10, 3
    %p119 = pnand %p117, %p118
    %p120 = pneg %p119
    // Predicated region
    $region9: #{inception_f6_forward.26} parent=5 // pred_check
      _
    $region10: #{inception_f6_forward.26} parent=5 // pred_check_branch
      %122 = sbr.rel (%p119) target = $region12
    $region11: #{inception_f6_forward.26} parent=5 // pred_region
      %s123 = ssub.s32 %s10, 1
      // Predicated region
      $region13: #{inception_f6_forward.26} parent=11 // pred_check
        %p124 = pneg %p57
      $region14: #{inception_f6_forward.26} parent=11 // pred_check_branch
        %126 = sbr.rel (%p124) target = $region16
      $region15: #{inception_f6_forward.26} parent=11 // pred_region
        _
      $region16: #{inception_f6_forward.26} parent=11 // pred_fallthru
        _
    $region12: #{inception_f6_forward.26} parent=5 // pred_fallthru
      _
    %p127 = scmp.lt.s32.totalorder %s10, 2
    // Predicated region
    $region17: #{inception_f6_forward.26} parent=5 // pred_check
      %p128 = pneg %p127
    $region18: #{inception_f6_forward.26} parent=5 // pred_check_branch
      %130 = sbr.rel (%p128) target = $region20
    $region19: #{inception_f6_forward.26} parent=5 // pred_region
      // Predicated region
      $region21: #{inception_f6_forward.26} parent=19 // pred_check
        %p131 = pneg %p30
      $region22: #{inception_f6_forward.26} parent=19 // pred_check_branch
        %133 = sbr.rel (%p131) target = $region24
      $region23: #{inception_f6_forward.26} parent=19 // pred_region
        %s134 = smul.u32 16, %s10
        %p135 = scmp.lt.s32.totalorder %s134, 31
        %s136 = scalar_select %p135, %s134, 31
        %s137 = smul.addr %s136, 2
        %s138 = smul.addr %s137, 4
        %s139 = scalar_lea.vmem %s0, %s138
        %s140 = smul.u32 16, %s10
      $region24: #{inception_f6_forward.26} parent=19 // pred_fallthru
        _
    $region20: #{inception_f6_forward.26} parent=5 // pred_fallthru
      _
    %p141 = scmp.le.s32.totalorder 1, %s10
    %p142 = scmp.lt.s32.totalorder %s10, 3
    %p143 = pnand %p141, %p142
    %p144 = pneg %p143
    // Predicated region
    $region25: #{inception_f6_forward.26} parent=5 // pred_check
      _
    $region26: #{inception_f6_forward.26} parent=5 // pred_check_branch
      %146 = sbr.rel (%p143) target = $region28
    $region27: #{inception_f6_forward.26} parent=5 // pred_region
      %s147 = ssub.s32 %s10, 1
      %s148 = smul.u32 16, %s15
      %p149 = scmp.lt.s32.totalorder %s148, 31
      %s150 = scalar_select %p149, %s148, 31
      %s151 = smul.addr %s150, 2
      %s152 = smul.addr %s151, 4
      %s153 = scalar_lea.vmem %s0, %s152
      %p154 = pneg %p36
      %p155 = pneg %p33
      %p156 = pneg %p57
      %p157 = pneg %p54
      %p158 = pneg %p83
      %p159 = pneg %p80
      %s160 = smul.u32 16, %s15
      %p161 = scmp.lt.s32.totalorder %s160, 31
      %s162 = scalar_select %p161, %s160, 31
      %s163 = smul.addr %s162, 4
      %s164 = smul.addr %s163, 4
      %s165 = scalar_lea.vmem %s2, %s164
      %p166 = pneg %p109
      %p167 = pneg %p106
      %p168 = scmp.lt.s32.totalorder %s15, 1
      %s169 = scalar_select %p168, %s15, 1
      %s170 = smul.addr %s169, 2
      %s171 = smul.addr %s170, 2
      %s172 = scalar_lea.vmem %s3, %s171
      %s173 = smul.u32 16, %s15
      %p174 = scmp.lt.s32.totalorder %s173, 31
      %s175 = scalar_select %p174, %s173, 31
      %s176 = smul.addr %s175, 2
      %s177 = smul.addr %s176, 4
      %s178 = scalar_lea.vmem %s0, %s177
      %s179 = smul.u32 16, %s15
      %s180 = smul.u32 16, %s15
      %p181 = scmp.lt.s32.totalorder %s180, 31
      %s182 = scalar_select %p181, %s180, 31
      %s183 = smul.addr %s182, 4
      %s184 = smul.addr %s183, 4
      %s185 = scalar_lea.vmem %s2, %s184
      %s186 = smul.u32 16, %s15
      %p187 = scmp.lt.s32.totalorder %s15, 1
      %s188 = scalar_select %p187, %s15, 1
      %s189 = smul.addr %s188, 2
      %s190 = smul.addr %s189, 2
      %s191 = scalar_lea.vmem %s3, %s190
      %v193 = vld [vmem:[%s178] sm:$0xf]
      %v194 = vld [vmem:[%s178 + $0x4] sm:$0xf]
      %v195 = vld [vmem:[%s178 + $0x8] sm:$0xf]
      %v196 = vld [vmem:[%s178 + $0xc] sm:$0xf]
      %v197 = vld [vmem:[%s178 + $0x10] sm:$0xf]
      %v198 = vld [vmem:[%s178 + $0x14] sm:$0xf]
      %v199 = vld [vmem:[%s178 + $0x18] sm:$0xf]
      %v200 = vld [vmem:[%s178 + $0x1c] sm:$0xf]
      %v201 = vld [vmem:[%s178 + $0x20] sm:$0xf]
      %v202 = vld [vmem:[%s178 + $0x24] sm:$0xf]
      %v203 = vld [vmem:[%s178 + $0x28] sm:$0xf]
      %v204 = vld [vmem:[%s178 + $0x2c] sm:$0xf]
      %v205 = vld [vmem:[%s178 + $0x30] sm:$0xf]
      %v206 = vld [vmem:[%s178 + $0x34] sm:$0xf]
      %v207 = vld [vmem:[%s178 + $0x38] sm:$0xf]
      %v208 = vld [vmem:[%s178 + $0x3c] sm:$0xf]
      %v209 = vld [vmem:[%s178 + $0x40] sm:$0xf]
      %v210 = vld [vmem:[%s178 + $0x44] sm:$0xf]
      %v211 = vld [vmem:[%s178 + $0x48] sm:$0xf]
      %v212 = vld [vmem:[%s178 + $0x4c] sm:$0xf]
      %v213 = vld [vmem:[%s178 + $0x50] sm:$0xf]
      %v214 = vld [vmem:[%s178 + $0x54] sm:$0xf]
      %v215 = vld [vmem:[%s178 + $0x58] sm:$0xf]
      %v216 = vld [vmem:[%s178 + $0x5c] sm:$0xf]
      %v217 = vld [vmem:[%s178 + $0x60] sm:$0xf]
      %v218 = vld [vmem:[%s178 + $0x64] sm:$0xf]
      %v219 = vld [vmem:[%s178 + $0x68] sm:$0xf]
      %v220 = vld [vmem:[%s178 + $0x6c] sm:$0xf]
      %v221 = vld [vmem:[%s178 + $0x70] sm:$0xf]
      %v222 = vld [vmem:[%s178 + $0x74] sm:$0xf]
      %v223 = vld [vmem:[%s178 + $0x78] sm:$0xf]
      %v224 = vld [vmem:[%s178 + $0x7c] sm:$0xf]
      %v225 = vld [vmem:[%s1] sm:$0xf]
      %v258 = vunpack.c.l.b16 %v193
      %v259 = vunpack.c.l.b16 %v194
      %v260 = vunpack.c.l.b16 %v195
      %v261 = vunpack.c.l.b16 %v196
      %v262 = vunpack.c.l.b16 %v197
      %v263 = vunpack.c.l.b16 %v198
      %v264 = vunpack.c.l.b16 %v199
      %v265 = vunpack.c.l.b16 %v200
      %v266 = vunpack.c.l.b16 %v201
      %v267 = vunpack.c.l.b16 %v202
      %v268 = vunpack.c.l.b16 %v203
      %v269 = vunpack.c.l.b16 %v204
      %v270 = vunpack.c.l.b16 %v205
      %v271 = vunpack.c.l.b16 %v206
      %v272 = vunpack.c.l.b16 %v207
      %v273 = vunpack.c.l.b16 %v208
      %v274 = vunpack.c.l.b16 %v209
      %v275 = vunpack.c.l.b16 %v210
      %v276 = vunpack.c.l.b16 %v211
      %v277 = vunpack.c.l.b16 %v212
      %v278 = vunpack.c.l.b16 %v213
      %v279 = vunpack.c.l.b16 %v214
      %v280 = vunpack.c.l.b16 %v215
      %v281 = vunpack.c.l.b16 %v216
      %v282 = vunpack.c.l.b16 %v217
      %v283 = vunpack.c.l.b16 %v218
      %v284 = vunpack.c.l.b16 %v219
      %v285 = vunpack.c.l.b16 %v220
      %v286 = vunpack.c.l.b16 %v221
      %v287 = vunpack.c.l.b16 %v222
      %v288 = vunpack.c.l.b16 %v223
      %v289 = vunpack.c.l.b16 %v224
      %v290 = vpack.c.b16 %v259, %v258
      %v291 = vpack.c.b16 %v261, %v260
      %v292 = vpack.c.b16 %v263, %v262
      %v293 = vpack.c.b16 %v265, %v264
      %v294 = vpack.c.b16 %v267, %v266
      %v295 = vpack.c.b16 %v269, %v268
      %v296 = vpack.c.b16 %v271, %v270
      %v297 = vpack.c.b16 %v273, %v272
      %v298 = vpack.c.b16 %v275, %v274
      %v299 = vpack.c.b16 %v277, %v276
      %v300 = vpack.c.b16 %v279, %v278
      %v301 = vpack.c.b16 %v281, %v280
      %v302 = vpack.c.b16 %v283, %v282
      %v303 = vpack.c.b16 %v285, %v284
      %v304 = vpack.c.b16 %v287, %v286
      %v305 = vpack.c.b16 %v289, %v288
      %v308 = vunpack.c.l.s4 1983009808
      %v309 = vunpack.c.0.s8 %v308
      %v310 = vlaneseq
      %v311 = vshrl.u32 %v310, 7
      %v312 = vsub.s32 %v309, %v311
      %v313 = vrot.slane %v225, %v312
      %v314 = vcombine.high %v313, %v313
      %vm315 = vcmask 31744
      %v317 = vsel %vm315, %v290, 0
      %v320 = vsel %vm315, %v291, 0
      %v323 = vsel %vm315, %v292, 0
      %v326 = vsel %vm315, %v293, 0
      %v329 = vsel %vm315, %v294, 0
      %v332 = vsel %vm315, %v295, 0
      %v335 = vsel %vm315, %v296, 0
      %v338 = vsel %vm315, %v297, 0
      %v341 = vsel %vm315, %v298, 0
      %v344 = vsel %vm315, %v299, 0
      %v347 = vsel %vm315, %v300, 0
      %v350 = vsel %vm315, %v301, 0
      %v353 = vsel %vm315, %v302, 0
      %v356 = vsel %vm315, %v303, 0
      %v359 = vsel %vm315, %v304, 0
      %v362 = vsel %vm315, %v305, 0
      %vm364 = vcmask 1041408
      %v366 = vsel %vm364, %v313, 0
      %v369 = vsel %vm364, %v314, 0
      %371 = vmatprep.subr.bf16.mxu0 0
      %372 = vmatpush1.bf16.msra.mxu0 0
      %373 = vmatprep.subr.bf16.mxu0 0
      %374 = vmatpush1.bf16.msra.mxu0 0
      %375 = vmatprep.subr.bf16.mxu0 0
      %376 = vmatpush1.bf16.msra.mxu0 0
      %377 = vmatprep.subr.bf16.mxu0 0
      %378 = vmatpush1.bf16.msra.mxu0 0
      %379 = vmatprep.subr.bf16.mxu0 0
      %380 = vmatpush1.bf16.msra.mxu0 0
      %381 = vmatprep.subr.bf16.mxu0 0
      %382 = vmatpush1.bf16.msra.mxu0 0
      %383 = vmatprep.subr.bf16.mxu0 0
      %384 = vmatpush1.bf16.msra.mxu0 0
      %385 = vmatprep.subr.bf16.mxu0 %v369
      %386 = vmatpush1.bf16.msra.mxu0 %v366
      %387 = vmatprep.subr.bf16.mxu0 0
      %388 = vmatpush2.bf16.msra.mxu0 0
      %389 = vmatprep.subr.bf16.mxu0 0
      %390 = vmatpush2.bf16.msra.mxu0 0
      %391 = vmatprep.subr.bf16.mxu0 0
      %392 = vmatpush2.bf16.msra.mxu0 0
      %393 = vmatprep.subr.bf16.mxu0 0
      %394 = vmatpush2.bf16.msra.mxu0 0
      %395 = vmatprep.subr.bf16.mxu0 0
      %396 = vmatpush2.bf16.msra.mxu0 0
      %397 = vmatprep.subr.bf16.mxu0 0
      %398 = vmatpush2.bf16.msra.mxu0 0
      %399 = vmatprep.subr.bf16.mxu0 0
      %400 = vmatpush2.bf16.msra.mxu0 0
      %401 = vmatprep.subr.bf16.mxu0 0
      %402 = vmatpush2.bf16.msra.mxu0 0
      %403 = vmatprep.mubr.bf16.mxu0 0
      %404 = vmatmul.mubr.bf16.gmra.mxu0 %v317
      %v405 = vpop.f32.mrf.mxu0
      %v406 = vadd.f32 0.0, %v405
      %v407 = vpop.f32.mrf.mxu0
      %v408 = vadd.f32 0.0, %v407
      %v409 = vpop.f32.mrf.mxu0
      %v410 = vadd.f32 0.0, %v409
      %v411 = vpop.f32.mrf.mxu0
      %v412 = vadd.f32 0.0, %v411
      %413 = vmatprep.mubr.bf16.mxu0 0
      %414 = vmatmul.mubr.bf16.gmra.mxu0 %v320
      %v415 = vpop.f32.mrf.mxu0
      %v416 = vadd.f32 0.0, %v415
      %v417 = vpop.f32.mrf.mxu0
      %v418 = vadd.f32 0.0, %v417
      %v419 = vpop.f32.mrf.mxu0
      %v420 = vadd.f32 0.0, %v419
      %v421 = vpop.f32.mrf.mxu0
      %v422 = vadd.f32 0.0, %v421
      %423 = vmatprep.mubr.bf16.mxu0 0
      %424 = vmatmul.mubr.bf16.gmra.mxu0 %v323
      %v425 = vpop.f32.mrf.mxu0
      %v426 = vadd.f32 0.0, %v425
      %v427 = vpop.f32.mrf.mxu0
      %v428 = vadd.f32 0.0, %v427
      %v429 = vpop.f32.mrf.mxu0
      %v430 = vadd.f32 0.0, %v429
      %v431 = vpop.f32.mrf.mxu0
      %v432 = vadd.f32 0.0, %v431
      %433 = vmatprep.mubr.bf16.mxu0 0
      %434 = vmatmul.mubr.bf16.gmra.mxu0 %v326
      %v435 = vpop.f32.mrf.mxu0
      %v436 = vadd.f32 0.0, %v435
      %v437 = vpop.f32.mrf.mxu0
      %v438 = vadd.f32 0.0, %v437
      %v439 = vpop.f32.mrf.mxu0
      %v440 = vadd.f32 0.0, %v439
      %v441 = vpop.f32.mrf.mxu0
      %v442 = vadd.f32 0.0, %v441
      %443 = vmatprep.mubr.bf16.mxu0 0
      %444 = vmatmul.mubr.bf16.gmra.mxu0 %v329
      %v445 = vpop.f32.mrf.mxu0
      %v446 = vadd.f32 0.0, %v445
      %v447 = vpop.f32.mrf.mxu0
      %v448 = vadd.f32 0.0, %v447
      %v449 = vpop.f32.mrf.mxu0
      %v450 = vadd.f32 0.0, %v449
      %v451 = vpop.f32.mrf.mxu0
      %v452 = vadd.f32 0.0, %v451
      %453 = vmatprep.mubr.bf16.mxu0 0
      %454 = vmatmul.mubr.bf16.gmra.mxu0 %v332
      %v455 = vpop.f32.mrf.mxu0
      %v456 = vadd.f32 0.0, %v455
      %v457 = vpop.f32.mrf.mxu0
      %v458 = vadd.f32 0.0, %v457
      %v459 = vpop.f32.mrf.mxu0
      %v460 = vadd.f32 0.0, %v459
      %v461 = vpop.f32.mrf.mxu0
      %v462 = vadd.f32 0.0, %v461
      %463 = vmatprep.mubr.bf16.mxu0 0
      %464 = vmatmul.mubr.bf16.gmra.mxu0 %v335
      %v465 = vpop.f32.mrf.mxu0
      %v466 = vadd.f32 0.0, %v465
      %v467 = vpop.f32.mrf.mxu0
      %v468 = vadd.f32 0.0, %v467
      %v469 = vpop.f32.mrf.mxu0
      %v470 = vadd.f32 0.0, %v469
      %v471 = vpop.f32.mrf.mxu0
      %v472 = vadd.f32 0.0, %v471
      %473 = vmatprep.mubr.bf16.mxu0 0
      %474 = vmatmul.mubr.bf16.gmra.mxu0 %v338
      %v475 = vpop.f32.mrf.mxu0
      %v476 = vadd.f32 0.0, %v475
      %v477 = vpop.f32.mrf.mxu0
      %v478 = vadd.f32 0.0, %v477
      %v479 = vpop.f32.mrf.mxu0
      %v480 = vadd.f32 0.0, %v479
      %v481 = vpop.f32.mrf.mxu0
      %v482 = vadd.f32 0.0, %v481
      %483 = vmatprep.mubr.bf16.mxu0 0
      %484 = vmatmul.mubr.bf16.gmra.mxu0 %v341
      %v485 = vpop.f32.mrf.mxu0
      %v486 = vadd.f32 0.0, %v485
      %v487 = vpop.f32.mrf.mxu0
      %v488 = vadd.f32 0.0, %v487
      %v489 = vpop.f32.mrf.mxu0
      %v490 = vadd.f32 0.0, %v489
      %v491 = vpop.f32.mrf.mxu0
      %v492 = vadd.f32 0.0, %v491
      %493 = vmatprep.mubr.bf16.mxu0 0
      %494 = vmatmul.mubr.bf16.gmra.mxu0 %v344
      %v495 = vpop.f32.mrf.mxu0
      %v496 = vadd.f32 0.0, %v495
      %v497 = vpop.f32.mrf.mxu0
      %v498 = vadd.f32 0.0, %v497
      %v499 = vpop.f32.mrf.mxu0
      %v500 = vadd.f32 0.0, %v499
      %v501 = vpop.f32.mrf.mxu0
      %v502 = vadd.f32 0.0, %v501
      %503 = vmatprep.mubr.bf16.mxu0 0
      %504 = vmatmul.mubr.bf16.gmra.mxu0 %v347
      %v505 = vpop.f32.mrf.mxu0
      %v506 = vadd.f32 0.0, %v505
      %v507 = vpop.f32.mrf.mxu0
      %v508 = vadd.f32 0.0, %v507
      %v509 = vpop.f32.mrf.mxu0
      %v510 = vadd.f32 0.0, %v509
      %v511 = vpop.f32.mrf.mxu0
      %v512 = vadd.f32 0.0, %v511
      %513 = vmatprep.mubr.bf16.mxu0 0
      %514 = vmatmul.mubr.bf16.gmra.mxu0 %v350
      %v515 = vpop.f32.mrf.mxu0
      %v516 = vadd.f32 0.0, %v515
      %v517 = vpop.f32.mrf.mxu0
      %v518 = vadd.f32 0.0, %v517
      %v519 = vpop.f32.mrf.mxu0
      %v520 = vadd.f32 0.0, %v519
      %v521 = vpop.f32.mrf.mxu0
      %v522 = vadd.f32 0.0, %v521
      %523 = vmatprep.mubr.bf16.mxu0 0
      %524 = vmatmul.mubr.bf16.gmra.mxu0 %v353
      %v525 = vpop.f32.mrf.mxu0
      %v526 = vadd.f32 0.0, %v525
      %v527 = vpop.f32.mrf.mxu0
      %v528 = vadd.f32 0.0, %v527
      %v529 = vpop.f32.mrf.mxu0
      %v530 = vadd.f32 0.0, %v529
      %v531 = vpop.f32.mrf.mxu0
      %v532 = vadd.f32 0.0, %v531
      %533 = vmatprep.mubr.bf16.mxu0 0
      %534 = vmatmul.mubr.bf16.gmra.mxu0 %v356
      %v535 = vpop.f32.mrf.mxu0
      %v536 = vadd.f32 0.0, %v535
      %v537 = vpop.f32.mrf.mxu0
      %v538 = vadd.f32 0.0, %v537
      %v539 = vpop.f32.mrf.mxu0
      %v540 = vadd.f32 0.0, %v539
      %v541 = vpop.f32.mrf.mxu0
      %v542 = vadd.f32 0.0, %v541
      %543 = vmatprep.mubr.bf16.mxu0 0
      %544 = vmatmul.mubr.bf16.gmra.mxu0 %v359
      %v545 = vpop.f32.mrf.mxu0
      %v546 = vadd.f32 0.0, %v545
      %v547 = vpop.f32.mrf.mxu0
      %v548 = vadd.f32 0.0, %v547
      %v549 = vpop.f32.mrf.mxu0
      %v550 = vadd.f32 0.0, %v549
      %v551 = vpop.f32.mrf.mxu0
      %v552 = vadd.f32 0.0, %v551
      %553 = vmatprep.mubr.bf16.mxu0 0
      %554 = vmatmul.mubr.bf16.gmra.mxu0 %v362
      %v555 = vpop.f32.mrf.mxu0
      %v556 = vadd.f32 0.0, %v555
      %v557 = vpop.f32.mrf.mxu0
      %v558 = vadd.f32 0.0, %v557
      %v559 = vpop.f32.mrf.mxu0
      %v560 = vadd.f32 0.0, %v559
      %v561 = vpop.f32.mrf.mxu0
      %v562 = vadd.f32 0.0, %v561
      %563 = vdwg.mxu0
      %v564 = vpack.c.bf16 %v410, %v406
      %v565 = vpack.c.bf16 %v412, %v408
      %v566 = vpack.c.bf16 %v420, %v416
      %v567 = vpack.c.bf16 %v422, %v418
      %v568 = vpack.c.bf16 %v430, %v426
      %v569 = vpack.c.bf16 %v432, %v428
      %v570 = vpack.c.bf16 %v440, %v436
      %v571 = vpack.c.bf16 %v442, %v438
      %v572 = vpack.c.bf16 %v450, %v446
      %v573 = vpack.c.bf16 %v452, %v448
      %v574 = vpack.c.bf16 %v460, %v456
      %v575 = vpack.c.bf16 %v462, %v458
      %v576 = vpack.c.bf16 %v470, %v466
      %v577 = vpack.c.bf16 %v472, %v468
      %v578 = vpack.c.bf16 %v480, %v476
      %v579 = vpack.c.bf16 %v482, %v478
      %v580 = vpack.c.bf16 %v490, %v486
      %v581 = vpack.c.bf16 %v492, %v488
      %v582 = vpack.c.bf16 %v500, %v496
      %v583 = vpack.c.bf16 %v502, %v498
      %v584 = vpack.c.bf16 %v510, %v506
      %v585 = vpack.c.bf16 %v512, %v508
      %v586 = vpack.c.bf16 %v520, %v516
      %v587 = vpack.c.bf16 %v522, %v518
      %v588 = vpack.c.bf16 %v530, %v526
      %v589 = vpack.c.bf16 %v532, %v528
      %v590 = vpack.c.bf16 %v540, %v536
      %v591 = vpack.c.bf16 %v542, %v538
      %v592 = vpack.c.bf16 %v550, %v546
      %v593 = vpack.c.bf16 %v552, %v548
      %v594 = vpack.c.bf16 %v560, %v556
      %v595 = vpack.c.bf16 %v562, %v558
      %v628 = vunpack.c.l.b16 %v564
      %v629 = vunpack.c.l.b16 %v565
      %v630 = vunpack.c.h.b16 %v564
      %v631 = vunpack.c.h.b16 %v565
      %v632 = vunpack.c.l.b16 %v566
      %v633 = vunpack.c.l.b16 %v567
      %v634 = vunpack.c.h.b16 %v566
      %v635 = vunpack.c.h.b16 %v567
      %v636 = vunpack.c.l.b16 %v568
      %v637 = vunpack.c.l.b16 %v569
      %v638 = vunpack.c.h.b16 %v568
      %v639 = vunpack.c.h.b16 %v569
      %v640 = vunpack.c.l.b16 %v570
      %v641 = vunpack.c.l.b16 %v571
      %v642 = vunpack.c.h.b16 %v570
      %v643 = vunpack.c.h.b16 %v571
      %v644 = vunpack.c.l.b16 %v572
      %v645 = vunpack.c.l.b16 %v573
      %v646 = vunpack.c.h.b16 %v572
      %v647 = vunpack.c.h.b16 %v573
      %v648 = vunpack.c.l.b16 %v574
      %v649 = vunpack.c.l.b16 %v575
      %v650 = vunpack.c.h.b16 %v574
      %v651 = vunpack.c.h.b16 %v575
      %v652 = vunpack.c.l.b16 %v576
      %v653 = vunpack.c.l.b16 %v577
      %v654 = vunpack.c.h.b16 %v576
      %v655 = vunpack.c.h.b16 %v577
      %v656 = vunpack.c.l.b16 %v578
      %v657 = vunpack.c.l.b16 %v579
      %v658 = vunpack.c.h.b16 %v578
      %v659 = vunpack.c.h.b16 %v579
      %v660 = vunpack.c.l.b16 %v580
      %v661 = vunpack.c.l.b16 %v581
      %v662 = vunpack.c.h.b16 %v580
      %v663 = vunpack.c.h.b16 %v581
      %v664 = vunpack.c.l.b16 %v582
      %v665 = vunpack.c.l.b16 %v583
      %v666 = vunpack.c.h.b16 %v582
      %v667 = vunpack.c.h.b16 %v583
      %v668 = vunpack.c.l.b16 %v584
      %v669 = vunpack.c.l.b16 %v585
      %v670 = vunpack.c.h.b16 %v584
      %v671 = vunpack.c.h.b16 %v585
      %v672 = vunpack.c.l.b16 %v586
      %v673 = vunpack.c.l.b16 %v587
      %v674 = vunpack.c.h.b16 %v586
      %v675 = vunpack.c.h.b16 %v587
      %v676 = vunpack.c.l.b16 %v588
      %v677 = vunpack.c.l.b16 %v589
      %v678 = vunpack.c.h.b16 %v588
      %v679 = vunpack.c.h.b16 %v589
      %v680 = vunpack.c.l.b16 %v590
      %v681 = vunpack.c.l.b16 %v591
      %v682 = vunpack.c.h.b16 %v590
      %v683 = vunpack.c.h.b16 %v591
      %v684 = vunpack.c.l.b16 %v592
      %v685 = vunpack.c.l.b16 %v593
      %v686 = vunpack.c.h.b16 %v592
      %v687 = vunpack.c.h.b16 %v593
      %v688 = vunpack.c.l.b16 %v594
      %v689 = vunpack.c.l.b16 %v595
      %v690 = vunpack.c.h.b16 %v594
      %v691 = vunpack.c.h.b16 %v595
      %v692 = vpack.c.b16 %v629, %v628
      %v693 = vpack.c.b16 %v631, %v630
      %v694 = vpack.c.b16 %v633, %v632
      %v695 = vpack.c.b16 %v635, %v634
      %v696 = vpack.c.b16 %v637, %v636
      %v697 = vpack.c.b16 %v639, %v638
      %v698 = vpack.c.b16 %v641, %v640
      %v699 = vpack.c.b16 %v643, %v642
      %v700 = vpack.c.b16 %v645, %v644
      %v701 = vpack.c.b16 %v647, %v646
      %v702 = vpack.c.b16 %v649, %v648
      %v703 = vpack.c.b16 %v651, %v650
      %v704 = vpack.c.b16 %v653, %v652
      %v705 = vpack.c.b16 %v655, %v654
      %v706 = vpack.c.b16 %v657, %v656
      %v707 = vpack.c.b16 %v659, %v658
      %v708 = vpack.c.b16 %v661, %v660
      %v709 = vpack.c.b16 %v663, %v662
      %v710 = vpack.c.b16 %v665, %v664
      %v711 = vpack.c.b16 %v667, %v666
      %v712 = vpack.c.b16 %v669, %v668
      %v713 = vpack.c.b16 %v671, %v670
      %v714 = vpack.c.b16 %v673, %v672
      %v715 = vpack.c.b16 %v675, %v674
      %v716 = vpack.c.b16 %v677, %v676
      %v717 = vpack.c.b16 %v679, %v678
      %v718 = vpack.c.b16 %v681, %v680
      %v719 = vpack.c.b16 %v683, %v682
      %v720 = vpack.c.b16 %v685, %v684
      %v721 = vpack.c.b16 %v687, %v686
      %v722 = vpack.c.b16 %v689, %v688
      %v723 = vpack.c.b16 %v691, %v690
      %vm756 = vcmask 1043456
      %vm757 = vcmask 523268
      %vm758 = vmor %vm757, %vm756
      %759 = vst.msk [vmem:[%s185] sm:$0xff] %vm758, %v692
      %760 = vst.msk [vmem:[%s185 + $0x8] sm:$0xff] %vm758, %v693
      %761 = vst.msk [vmem:[%s185 + $0x10] sm:$0xff] %vm758, %v694
      %762 = vst.msk [vmem:[%s185 + $0x18] sm:$0xff] %vm758, %v695
      %763 = vst.msk [vmem:[%s185 + $0x20] sm:$0xff] %vm758, %v696
      %764 = vst.msk [vmem:[%s185 + $0x28] sm:$0xff] %vm758, %v697
      %765 = vst.msk [vmem:[%s185 + $0x30] sm:$0xff] %vm758, %v698
      %766 = vst.msk [vmem:[%s185 + $0x38] sm:$0xff] %vm758, %v699
      %767 = vst.msk [vmem:[%s185 + $0x40] sm:$0xff] %vm758, %v700
      %768 = vst.msk [vmem:[%s185 + $0x48] sm:$0xff] %vm758, %v701
      %769 = vst.msk [vmem:[%s185 + $0x50] sm:$0xff] %vm758, %v702
      %770 = vst.msk [vmem:[%s185 + $0x58] sm:$0xff] %vm758, %v703
      %771 = vst.msk [vmem:[%s185 + $0x60] sm:$0xff] %vm758, %v704
      %772 = vst.msk [vmem:[%s185 + $0x68] sm:$0xff] %vm758, %v705
      %773 = vst.msk [vmem:[%s185 + $0x70] sm:$0xff] %vm758, %v706
      %774 = vst.msk [vmem:[%s185 + $0x78] sm:$0xff] %vm758, %v707
      %775 = vst.msk [vmem:[%s185 + $0x80] sm:$0xff] %vm758, %v708
      %776 = vst.msk [vmem:[%s185 + $0x88] sm:$0xff] %vm758, %v709
      %777 = vst.msk [vmem:[%s185 + $0x90] sm:$0xff] %vm758, %v710
      %778 = vst.msk [vmem:[%s185 + $0x98] sm:$0xff] %vm758, %v711
      %779 = vst.msk [vmem:[%s185 + $0xa0] sm:$0xff] %vm758, %v712
      %780 = vst.msk [vmem:[%s185 + $0xa8] sm:$0xff] %vm758, %v713
      %781 = vst.msk [vmem:[%s185 + $0xb0] sm:$0xff] %vm758, %v714
      %782 = vst.msk [vmem:[%s185 + $0xb8] sm:$0xff] %vm758, %v715
      %783 = vst.msk [vmem:[%s185 + $0xc0] sm:$0xff] %vm758, %v716
      %784 = vst.msk [vmem:[%s185 + $0xc8] sm:$0xff] %vm758, %v717
      %785 = vst.msk [vmem:[%s185 + $0xd0] sm:$0xff] %vm758, %v718
      %786 = vst.msk [vmem:[%s185 + $0xd8] sm:$0xff] %vm758, %v719
      %787 = vst.msk [vmem:[%s185 + $0xe0] sm:$0xff] %vm758, %v720
      %788 = vst.msk [vmem:[%s185 + $0xe8] sm:$0xff] %vm758, %v721
      %789 = vst.msk [vmem:[%s185 + $0xf0] sm:$0xff] %vm758, %v722
      %790 = vst.msk [vmem:[%s185 + $0xf8] sm:$0xff] %vm758, %v723
      %v791 = vadd.f32 %v406, %v410
      %v792 = vadd.f32 %v791, %v416
      %v793 = vadd.f32 %v792, %v420
      %v794 = vadd.f32 %v793, %v426
      %v795 = vadd.f32 %v794, %v430
      %v796 = vadd.f32 %v795, %v436
      %v797 = vadd.f32 %v796, %v440
      %v798 = vadd.f32 %v797, %v446
      %v799 = vadd.f32 %v798, %v450
      %v800 = vadd.f32 %v799, %v456
      %v801 = vadd.f32 %v800, %v460
      %v802 = vadd.f32 %v801, %v466
      %v803 = vadd.f32 %v802, %v470
      %v804 = vadd.f32 %v803, %v476
      %v805 = vadd.f32 %v804, %v480
      %v806 = vadd.f32 %v805, %v486
      %v807 = vadd.f32 %v806, %v490
      %v808 = vadd.f32 %v807, %v496
      %v809 = vadd.f32 %v808, %v500
      %v810 = vadd.f32 %v809, %v506
      %v811 = vadd.f32 %v810, %v510
      %v812 = vadd.f32 %v811, %v516
      %v813 = vadd.f32 %v812, %v520
      %v814 = vadd.f32 %v813, %v526
      %v815 = vadd.f32 %v814, %v530
      %v816 = vadd.f32 %v815, %v536
      %v817 = vadd.f32 %v816, %v540
      %v818 = vadd.f32 %v817, %v546
      %v819 = vadd.f32 %v818, %v550
      %v820 = vadd.f32 %v819, %v556
      %v821 = vadd.f32 %v820, %v560
      %v822 = vrot.slane %v821, 4
      %v823 = vadd.f32 %v821, %v822
      %v824 = vrot.slane %v823, 2
      %v825 = vadd.f32 %v823, %v824
      %v826 = vrot.slane %v825, 1
      %v827 = vadd.f32 %v825, %v826
      %vm828 = vcmask 523264
      %v829 = vsel %vm828, %v408, 0.0
      %v830 = vsel %vm828, %v412, 0.0
      %v831 = vadd.f32 %v829, %v830
      %v832 = vsel %vm828, %v418, 0.0
      %v833 = vadd.f32 %v831, %v832
      %v834 = vsel %vm828, %v422, 0.0
      %v835 = vadd.f32 %v833, %v834
      %v836 = vsel %vm828, %v428, 0.0
      %v837 = vadd.f32 %v835, %v836
      %v838 = vsel %vm828, %v432, 0.0
      %v839 = vadd.f32 %v837, %v838
      %v840 = vsel %vm828, %v438, 0.0
      %v841 = vadd.f32 %v839, %v840
      %v842 = vsel %vm828, %v442, 0.0
      %v843 = vadd.f32 %v841, %v842
      %v844 = vsel %vm828, %v448, 0.0
      %v845 = vadd.f32 %v843, %v844
      %v846 = vsel %vm828, %v452, 0.0
      %v847 = vadd.f32 %v845, %v846
      %v848 = vsel %vm828, %v458, 0.0
      %v849 = vadd.f32 %v847, %v848
      %v850 = vsel %vm828, %v462, 0.0
      %v851 = vadd.f32 %v849, %v850
      %v852 = vsel %vm828, %v468, 0.0
      %v853 = vadd.f32 %v851, %v852
      %v854 = vsel %vm828, %v472, 0.0
      %v855 = vadd.f32 %v853, %v854
      %v856 = vsel %vm828, %v478, 0.0
      %v857 = vadd.f32 %v855, %v856
      %v858 = vsel %vm828, %v482, 0.0
      %v859 = vadd.f32 %v857, %v858
      %v860 = vsel %vm828, %v488, 0.0
      %v861 = vadd.f32 %v859, %v860
      %v862 = vsel %vm828, %v492, 0.0
      %v863 = vadd.f32 %v861, %v862
      %v864 = vsel %vm828, %v498, 0.0
      %v865 = vadd.f32 %v863, %v864
      %v866 = vsel %vm828, %v502, 0.0
      %v867 = vadd.f32 %v865, %v866
      %v868 = vsel %vm828, %v508, 0.0
      %v869 = vadd.f32 %v867, %v868
      %v870 = vsel %vm828, %v512, 0.0
      %v871 = vadd.f32 %v869, %v870
      %v872 = vsel %vm828, %v518, 0.0
      %v873 = vadd.f32 %v871, %v872
      %v874 = vsel %vm828, %v522, 0.0
      %v875 = vadd.f32 %v873, %v874
      %v876 = vsel %vm828, %v528, 0.0
      %v877 = vadd.f32 %v875, %v876
      %v878 = vsel %vm828, %v532, 0.0
      %v879 = vadd.f32 %v877, %v878
      %v880 = vsel %vm828, %v538, 0.0
      %v881 = vadd.f32 %v879, %v880
      %v882 = vsel %vm828, %v542, 0.0
      %v883 = vadd.f32 %v881, %v882
      %v884 = vsel %vm828, %v548, 0.0
      %v885 = vadd.f32 %v883, %v884
      %v886 = vsel %vm828, %v552, 0.0
      %v887 = vadd.f32 %v885, %v886
      %v888 = vsel %vm828, %v558, 0.0
      %v889 = vadd.f32 %v887, %v888
      %v890 = vsel %vm828, %v562, 0.0
      %v891 = vadd.f32 %v889, %v890
      %v892 = vrot.slane %v891, 4
      %v893 = vadd.f32 %v891, %v892
      %v894 = vrot.slane %v893, 2
      %v895 = vadd.f32 %v893, %v894
      %v896 = vrot.slane %v895, 1
      %v897 = vadd.f32 %v895, %v896
      %v898 = vmul.f32 %v406, %v406
      %v899 = vmul.f32 %v408, %v408
      %v900 = vmul.f32 %v410, %v410
      %v901 = vmul.f32 %v412, %v412
      %v902 = vmul.f32 %v416, %v416
      %v903 = vmul.f32 %v418, %v418
      %v904 = vmul.f32 %v420, %v420
      %v905 = vmul.f32 %v422, %v422
      %v906 = vmul.f32 %v426, %v426
      %v907 = vmul.f32 %v428, %v428
      %v908 = vmul.f32 %v430, %v430
      %v909 = vmul.f32 %v432, %v432
      %v910 = vmul.f32 %v436, %v436
      %v911 = vmul.f32 %v438, %v438
      %v912 = vmul.f32 %v440, %v440
      %v913 = vmul.f32 %v442, %v442
      %v914 = vmul.f32 %v446, %v446
      %v915 = vmul.f32 %v448, %v448
      %v916 = vmul.f32 %v450, %v450
      %v917 = vmul.f32 %v452, %v452
      %v918 = vmul.f32 %v456, %v456
      %v919 = vmul.f32 %v458, %v458
      %v920 = vmul.f32 %v460, %v460
      %v921 = vmul.f32 %v462, %v462
      %v922 = vmul.f32 %v466, %v466
      %v923 = vmul.f32 %v468, %v468
      %v924 = vmul.f32 %v470, %v470
      %v925 = vmul.f32 %v472, %v472
      %v926 = vmul.f32 %v476, %v476
      %v927 = vmul.f32 %v478, %v478
      %v928 = vmul.f32 %v480, %v480
      %v929 = vmul.f32 %v482, %v482
      %v930 = vmul.f32 %v486, %v486
      %v931 = vmul.f32 %v488, %v488
      %v932 = vmul.f32 %v490, %v490
      %v933 = vmul.f32 %v492, %v492
      %v934 = vmul.f32 %v496, %v496
      %v935 = vmul.f32 %v498, %v498
      %v936 = vmul.f32 %v500, %v500
      %v937 = vmul.f32 %v502, %v502
      %v938 = vmul.f32 %v506, %v506
      %v939 = vmul.f32 %v508, %v508
      %v940 = vmul.f32 %v510, %v510
      %v941 = vmul.f32 %v512, %v512
      %v942 = vmul.f32 %v516, %v516
      %v943 = vmul.f32 %v518, %v518
      %v944 = vmul.f32 %v520, %v520
      %v945 = vmul.f32 %v522, %v522
      %v946 = vmul.f32 %v526, %v526
      %v947 = vmul.f32 %v528, %v528
      %v948 = vmul.f32 %v530, %v530
      %v949 = vmul.f32 %v532, %v532
      %v950 = vmul.f32 %v536, %v536
      %v951 = vmul.f32 %v538, %v538
      %v952 = vmul.f32 %v540, %v540
      %v953 = vmul.f32 %v542, %v542
      %v954 = vmul.f32 %v546, %v546
      %v955 = vmul.f32 %v548, %v548
      %v956 = vmul.f32 %v550, %v550
      %v957 = vmul.f32 %v552, %v552
      %v958 = vmul.f32 %v556, %v556
      %v959 = vmul.f32 %v558, %v558
      %v960 = vmul.f32 %v560, %v560
      %v961 = vmul.f32 %v562, %v562
      %v962 = vadd.f32 %v898, %v900
      %v963 = vadd.f32 %v962, %v902
      %v964 = vadd.f32 %v963, %v904
      %v965 = vadd.f32 %v964, %v906
      %v966 = vadd.f32 %v965, %v908
      %v967 = vadd.f32 %v966, %v910
      %v968 = vadd.f32 %v967, %v912
      %v969 = vadd.f32 %v968, %v914
      %v970 = vadd.f32 %v969, %v916
      %v971 = vadd.f32 %v970, %v918
      %v972 = vadd.f32 %v971, %v920
      %v973 = vadd.f32 %v972, %v922
      %v974 = vadd.f32 %v973, %v924
      %v975 = vadd.f32 %v974, %v926
      %v976 = vadd.f32 %v975, %v928
      %v977 = vadd.f32 %v976, %v930
      %v978 = vadd.f32 %v977, %v932
      %v979 = vadd.f32 %v978, %v934
      %v980 = vadd.f32 %v979, %v936
      %v981 = vadd.f32 %v980, %v938
      %v982 = vadd.f32 %v981, %v940
      %v983 = vadd.f32 %v982, %v942
      %v984 = vadd.f32 %v983, %v944
      %v985 = vadd.f32 %v984, %v946
      %v986 = vadd.f32 %v985, %v948
      %v987 = vadd.f32 %v986, %v950
      %v988 = vadd.f32 %v987, %v952
      %v989 = vadd.f32 %v988, %v954
      %v990 = vadd.f32 %v989, %v956
      %v991 = vadd.f32 %v990, %v958
      %v992 = vadd.f32 %v991, %v960
      %v993 = vrot.slane %v992, 4
      %v994 = vadd.f32 %v992, %v993
      %v995 = vrot.slane %v994, 2
      %v996 = vadd.f32 %v994, %v995
      %v997 = vrot.slane %v996, 1
      %v998 = vadd.f32 %v996, %v997
      %v999 = vsel %vm828, %v899, 0.0
      %v1000 = vsel %vm828, %v901, 0.0
      %v1001 = vadd.f32 %v999, %v1000
      %v1002 = vsel %vm828, %v903, 0.0
      %v1003 = vadd.f32 %v1001, %v1002
      %v1004 = vsel %vm828, %v905, 0.0
      %v1005 = vadd.f32 %v1003, %v1004
      %v1006 = vsel %vm828, %v907, 0.0
      %v1007 = vadd.f32 %v1005, %v1006
      %v1008 = vsel %vm828, %v909, 0.0
      %v1009 = vadd.f32 %v1007, %v1008
      %v1010 = vsel %vm828, %v911, 0.0
      %v1011 = vadd.f32 %v1009, %v1010
      %v1012 = vsel %vm828, %v913, 0.0
      %v1013 = vadd.f32 %v1011, %v1012
      %v1014 = vsel %vm828, %v915, 0.0
      %v1015 = vadd.f32 %v1013, %v1014
      %v1016 = vsel %vm828, %v917, 0.0
      %v1017 = vadd.f32 %v1015, %v1016
      %v1018 = vsel %vm828, %v919, 0.0
      %v1019 = vadd.f32 %v1017, %v1018
      %v1020 = vsel %vm828, %v921, 0.0
      %v1021 = vadd.f32 %v1019, %v1020
      %v1022 = vsel %vm828, %v923, 0.0
      %v1023 = vadd.f32 %v1021, %v1022
      %v1024 = vsel %vm828, %v925, 0.0
      %v1025 = vadd.f32 %v1023, %v1024
      %v1026 = vsel %vm828, %v927, 0.0
      %v1027 = vadd.f32 %v1025, %v1026
      %v1028 = vsel %vm828, %v929, 0.0
      %v1029 = vadd.f32 %v1027, %v1028
      %v1030 = vsel %vm828, %v931, 0.0
      %v1031 = vadd.f32 %v1029, %v1030
      %v1032 = vsel %vm828, %v933, 0.0
      %v1033 = vadd.f32 %v1031, %v1032
      %v1034 = vsel %vm828, %v935, 0.0
      %v1035 = vadd.f32 %v1033, %v1034
      %v1036 = vsel %vm828, %v937, 0.0
      %v1037 = vadd.f32 %v1035, %v1036
      %v1038 = vsel %vm828, %v939, 0.0
      %v1039 = vadd.f32 %v1037, %v1038
      %v1040 = vsel %vm828, %v941, 0.0
      %v1041 = vadd.f32 %v1039, %v1040
      %v1042 = vsel %vm828, %v943, 0.0
      %v1043 = vadd.f32 %v1041, %v1042
      %v1044 = vsel %vm828, %v945, 0.0
      %v1045 = vadd.f32 %v1043, %v1044
      %v1046 = vsel %vm828, %v947, 0.0
      %v1047 = vadd.f32 %v1045, %v1046
      %v1048 = vsel %vm828, %v949, 0.0
      %v1049 = vadd.f32 %v1047, %v1048
      %v1050 = vsel %vm828, %v951, 0.0
      %v1051 = vadd.f32 %v1049, %v1050
      %v1052 = vsel %vm828, %v953, 0.0
      %v1053 = vadd.f32 %v1051, %v1052
      %v1054 = vsel %vm828, %v955, 0.0
      %v1055 = vadd.f32 %v1053, %v1054
      %v1056 = vsel %vm828, %v957, 0.0
      %v1057 = vadd.f32 %v1055, %v1056
      %v1058 = vsel %vm828, %v959, 0.0
      %v1059 = vadd.f32 %v1057, %v1058
      %v1060 = vsel %vm828, %v961, 0.0
      %v1061 = vadd.f32 %v1059, %v1060
      %v1062 = vrot.slane %v1061, 4
      %v1063 = vadd.f32 %v1061, %v1062
      %v1064 = vrot.slane %v1063, 2
      %v1065 = vadd.f32 %v1063, %v1064
      %v1066 = vrot.slane %v1065, 1
      %v1067 = vadd.f32 %v1065, %v1066
      %vm1068 = vcmask 1040384
      %v1069 = vsel %vm1068, %v827, %v998
      %v1070 = vsel %vm1068, %v897, %v1067
      %v1073 = vcombine.low %v1069, %v1070
      %v1075 = vunpack.c.l.s4 1983009808
      %v1076 = vunpack.c.0.s8 %v1075
      %v1077 = vlaneseq
      %v1078 = vshrl.u32 %v1077, 7
      %v1079 = vsub.s32 %v1076, %v1078
      %v1080 = vrot.slane %v1073, %v1079
      %vm1082 = vcmask 519170
      %vm1083 = vmor %vm1082, %vm364
      %1084 = vst.msk [vmem:[%s191] sm:$0xf] %vm1083, %v1080
      %s1085 = smul.u32 16, %s15
      %p1086 = scmp.lt.s32.totalorder %s1085, 31
      %s1087 = scalar_select %p1086, %s1085, 31
      %s1088 = smul.addr %s1087, 4
      %s1089 = smul.addr %s1088, 4
      %s1090 = scalar_lea.vmem %s2, %s1089
      %p1091 = scmp.lt.s32.totalorder %s15, 1
      %s1092 = scalar_select %p1091, %s15, 1
      %s1093 = smul.addr %s1092, 2
      %s1094 = smul.addr %s1093, 2
      %s1095 = scalar_lea.vmem %s3, %s1094
      // Predicated region
      $region29: #{inception_f6_forward.26} parent=27 // pred_check
        %p1096 = pneg %p80
      $region30: #{inception_f6_forward.26} parent=27 // pred_check_branch
        %1098 = sbr.rel (%p1096) target = $region32
      $region31: #{inception_f6_forward.26} parent=27 // pred_region
        %s1099 = smul.u32 16, %s15
      $region32: #{inception_f6_forward.26} parent=27 // pred_fallthru
        _
      // Predicated region
      $region33: #{inception_f6_forward.26} parent=27 // pred_check
        %p1100 = pneg %p106
      $region34: #{inception_f6_forward.26} parent=27 // pred_check_branch
        %1102 = sbr.rel (%p1100) target = $region36
      $region35: #{inception_f6_forward.26} parent=27 // pred_region
        _
      $region36: #{inception_f6_forward.26} parent=27 // pred_fallthru
        _
    $region28: #{inception_f6_forward.26} parent=5 // pred_fallthru
      _
    %p1103 = scmp.le.s32.totalorder 2, %s10
    // Predicated region
    $region37: #{inception_f6_forward.26} parent=5 // pred_check
      %p1104 = pneg %p1103
    $region38: #{inception_f6_forward.26} parent=5 // pred_check_branch
      %1106 = sbr.rel (%p1104) target = $region40
    $region39: #{inception_f6_forward.26} parent=5 // pred_region
      %s1107 = ssub.s32 %s10, 2
      // Predicated region
      $region41: #{inception_f6_forward.26} parent=39 // pred_check
        %p1108 = pneg %p86
      $region42: #{inception_f6_forward.26} parent=39 // pred_check_branch
        %1110 = sbr.rel (%p1108) target = $region44
      $region43: #{inception_f6_forward.26} parent=39 // pred_region
        %s1111 = smul.u32 16, %s16
        %p1112 = scmp.lt.s32.totalorder %s1111, 31
        %s1113 = scalar_select %p1112, %s1111, 31
        %s1114 = smul.addr %s1113, 4
        %s1115 = smul.addr %s1114, 4
        %s1116 = scalar_lea.vmem %s2, %s1115
      $region44: #{inception_f6_forward.26} parent=39 // pred_fallthru
        _
      // Predicated region
      $region45: #{inception_f6_forward.26} parent=39 // pred_check
        %p1117 = pneg %p112
      $region46: #{inception_f6_forward.26} parent=39 // pred_check_branch
        %1119 = sbr.rel (%p1117) target = $region48
      $region47: #{inception_f6_forward.26} parent=39 // pred_region
        %p1120 = scmp.lt.s32.totalorder %s16, 1
        %s1121 = scalar_select %p1120, %s16, 1
        %s1122 = smul.addr %s1121, 2
        %s1123 = smul.addr %s1122, 2
        %s1124 = scalar_lea.vmem %s3, %s1123
      $region48: #{inception_f6_forward.26} parent=39 // pred_fallthru
        _
    $region40: #{inception_f6_forward.26} parent=5 // pred_fallthru
      _
  $region6: #{inception_f6_forward.26} parent=0 // loop_footer
    %s14 = sadd.s32 1, %s10
  $region7: #{inception_f6_forward.26} parent=0 // loop_footer_branch
    %9 = sbr.rel target = $region3
  $region8: #{inception_f6_forward.26} parent=0 // loop_exit
    _

// kernel: inception_f6_forward.25
$region0: #{inception_f6_forward.25}
  #allocation0 [shape = 'u32[]', space=smem, size = 0x4, offset = 0x4, fixed_abs, tag = 'smem constant byte address 0x4 - core index']
  #allocation1 [shape = 'u32[144,128]{1,0:T(1,128)}', space=vmem, size = 0x12000, scoped, tag = 'internal scratch']
  %s0 = inlined_call_operand.vmem [shape: bf16[2,18,18,4], index: 0, kind: input, shape index: {}]
  %s1 = inlined_call_operand.vmem [shape: bf16[2,16,16,4], index: 1, kind: output, shape index: {}]
  %s2 = sld [smem:[#allocation0]]
  $region37: #{inception_f6_forward.25} parent=0
    _
  %s4 = ssub.s32 1, %s2
  %s5 = scalar_select 0, %s4, %s2
  loop: start=0, step=1, limit=4
  $region2: #{inception_f6_forward.25} parent=0 // loop_pre_header
    _
  $region3: #{inception_f6_forward.25} parent=0 // loop_header
    %s7 = sphi 0, %s11
    %p8 = scmp.ge.s32.totalorder %s7, 4
    %s17 = sphi 0, %s19
    %s20 = sphi 0, %s17
    %s21 = sphi 0, %s20
    %s37 = sphi 0, %s21
    %s43 = sphi 0, %s45
    %s46 = sphi 0, %s43
    %s47 = sphi 0, %s46
    %s63 = sphi 0, %s47
  $region4: #{inception_f6_forward.25} parent=0 // loop_header_branch
    %10 = sbr.rel (%p8) target = $region8
  $region5: #{inception_f6_forward.25} parent=0 // loop_body
    %s12 = ssub.s32 %s7, 1
    %s13 = ssub.s32 %s7, 2
    %s14 = sadd.s32 %s7, 1
    %s15 = ssub.s32 %s7, %s14
    %p16 = scmp.eq.s32.totalorder %s15, 0
    %s18 = sadd.s32 %s17, 1
    %s19 = scalar_select %p16, %s17, %s18
    %p22 = pneg %p16
    %p23 = scmp.eq.s32.totalorder %s7, 1
    %p24 = por %p22, %p23
    %p25 = scmp.ne.s32.totalorder %s17, %s20
    %p26 = scmp.eq.s32.totalorder %s7, 0
    %p27 = por %p25, %p26
    %p28 = scmp.ne.s32.totalorder %s17, %s20
    %p29 = scmp.eq.s32.totalorder %s12, 1
    %p30 = por %p28, %p29
    %p31 = scmp.ne.s32.totalorder %s20, %s21
    %p32 = scmp.eq.s32.totalorder %s12, 0
    %p33 = por %p31, %p32
    %p34 = scmp.ne.s32.totalorder %s20, %s21
    %p35 = scmp.eq.s32.totalorder %s13, 1
    %p36 = por %p34, %p35
    %p38 = scmp.ne.s32.totalorder %s21, %s37
    %p39 = scmp.eq.s32.totalorder %s13, 0
    %p40 = por %p38, %p39
    %s41 = ssub.s32 %s7, %s14
    %p42 = scmp.eq.s32.totalorder %s41, 0
    %s44 = sadd.s32 %s43, 1
    %s45 = scalar_select %p42, %s43, %s44
    %p48 = pneg %p42
    %p49 = scmp.eq.s32.totalorder %s7, 1
    %p50 = por %p48, %p49
    %p51 = scmp.ne.s32.totalorder %s43, %s46
    %p52 = scmp.eq.s32.totalorder %s7, 0
    %p53 = por %p51, %p52
    %p54 = scmp.ne.s32.totalorder %s43, %s46
    %p55 = scmp.eq.s32.totalorder %s12, 1
    %p56 = por %p54, %p55
    %p57 = scmp.ne.s32.totalorder %s46, %s47
    %p58 = scmp.eq.s32.totalorder %s12, 0
    %p59 = por %p57, %p58
    %p60 = scmp.ne.s32.totalorder %s46, %s47
    %p61 = scmp.eq.s32.totalorder %s13, 1
    %p62 = por %p60, %p61
    %p64 = scmp.ne.s32.totalorder %s47, %s63
    %p65 = scmp.eq.s32.totalorder %s13, 0
    %p66 = por %p64, %p65
    %p67 = scmp.le.s32.totalorder 1, %s7
    %p68 = scmp.lt.s32.totalorder %s7, 3
    %p69 = pnand %p67, %p68
    %p70 = pneg %p69
    // Predicated region
    $region9: #{inception_f6_forward.25} parent=5 // pred_check
      _
    $region10: #{inception_f6_forward.25} parent=5 // pred_check_branch
      %72 = sbr.rel (%p69) target = $region12
    $region11: #{inception_f6_forward.25} parent=5 // pred_region
      %s73 = ssub.s32 %s7, 1
    $region12: #{inception_f6_forward.25} parent=5 // pred_fallthru
      _
    %p74 = scmp.lt.s32.totalorder %s7, 2
    // Predicated region
    $region13: #{inception_f6_forward.25} parent=5 // pred_check
      %p75 = pneg %p74
    $region14: #{inception_f6_forward.25} parent=5 // pred_check_branch
      %77 = sbr.rel (%p75) target = $region16
    $region15: #{inception_f6_forward.25} parent=5 // pred_region
      // Predicated region
      $region17: #{inception_f6_forward.25} parent=15 // pred_check
        %p78 = pneg %p27
      $region18: #{inception_f6_forward.25} parent=15 // pred_check_branch
        %80 = sbr.rel (%p78) target = $region20
      $region19: #{inception_f6_forward.25} parent=15 // pred_region
        %p81 = scmp.lt.s32.totalorder %s7, 1
        %s82 = scalar_select %p81, %s7, 1
        %s83 = smul.addr %s82, 54
        %s84 = smul.addr %s83, 4
        %s85 = scalar_lea.vmem %s0, %s84
      $region20: #{inception_f6_forward.25} parent=15 // pred_fallthru
        _
    $region16: #{inception_f6_forward.25} parent=5 // pred_fallthru
      _
    %p86 = scmp.le.s32.totalorder 1, %s7
    %p87 = scmp.lt.s32.totalorder %s7, 3
    %p88 = pnand %p86, %p87
    %p89 = pneg %p88
    // Predicated region
    $region21: #{inception_f6_forward.25} parent=5 // pred_check
      _
    $region22: #{inception_f6_forward.25} parent=5 // pred_check_branch
      %91 = sbr.rel (%p88) target = $region24
    $region23: #{inception_f6_forward.25} parent=5 // pred_region
      %s92 = ssub.s32 %s7, 1
      %p93 = scmp.lt.s32.totalorder %s12, 1
      %s94 = scalar_select %p93, %s12, 1
      %s95 = smul.addr %s94, 54
      %s96 = smul.addr %s95, 4
      %s97 = scalar_lea.vmem %s0, %s96
      %p98 = pneg %p33
      %p99 = pneg %p30
      %p100 = pneg %p59
      %p101 = pneg %p56
      %p102 = scmp.lt.s32.totalorder %s12, 1
      %s103 = scalar_select %p102, %s12, 1
      %s104 = smul.addr %s103, 32
      %s105 = smul.addr %s104, 4
      %s106 = scalar_lea.vmem %s1, %s105
      %p107 = scmp.lt.s32.totalorder %s12, 1
      %s108 = scalar_select %p107, %s12, 1
      %s109 = smul.addr %s108, 54
      %s110 = smul.addr %s109, 4
      %s111 = scalar_lea.vmem %s0, %s110
      %p112 = scmp.lt.s32.totalorder %s12, 1
      %s113 = scalar_select %p112, %s12, 1
      %s114 = smul.addr %s113, 32
      %s115 = smul.addr %s114, 4
      %s116 = scalar_lea.vmem %s1, %s115
      %v117 = vld [vmem:[%s111] sm:$0xf]
      %v118 = vld [vmem:[%s111 + $0x4] sm:$0xf]
      %v119 = vld [vmem:[%s111 + $0x8] sm:$0x1]
      %v120 = vld [vmem:[%s111 + $0xc] sm:$0xf]
      %v121 = vld [vmem:[%s111 + $0x10] sm:$0xf]
      %v122 = vld [vmem:[%s111 + $0x14] sm:$0x1]
      %v123 = vld [vmem:[%s111 + $0x18] sm:$0xf]
      %v124 = vld [vmem:[%s111 + $0x1c] sm:$0xf]
      %v125 = vld [vmem:[%s111 + $0x20] sm:$0x1]
      %v126 = vld [vmem:[%s111 + $0x24] sm:$0xf]
      %v127 = vld [vmem:[%s111 + $0x28] sm:$0xf]
      %v128 = vld [vmem:[%s111 + $0x2c] sm:$0x1]
      %v129 = vld [vmem:[%s111 + $0x30] sm:$0xf]
      %v130 = vld [vmem:[%s111 + $0x34] sm:$0xf]
      %v131 = vld [vmem:[%s111 + $0x38] sm:$0x1]
      %v132 = vld [vmem:[%s111 + $0x3c] sm:$0xf]
      %v133 = vld [vmem:[%s111 + $0x40] sm:$0xf]
      %v134 = vld [vmem:[%s111 + $0x44] sm:$0x1]
      %v135 = vld [vmem:[%s111 + $0x48] sm:$0xf]
      %v136 = vld [vmem:[%s111 + $0x4c] sm:$0xf]
      %v137 = vld [vmem:[%s111 + $0x50] sm:$0x1]
      %v138 = vld [vmem:[%s111 + $0x54] sm:$0xf]
      %v139 = vld [vmem:[%s111 + $0x58] sm:$0xf]
      %v140 = vld [vmem:[%s111 + $0x5c] sm:$0x1]
      %v141 = vld [vmem:[%s111 + $0x60] sm:$0xf]
      %v142 = vld [vmem:[%s111 + $0x64] sm:$0xf]
      %v143 = vld [vmem:[%s111 + $0x68] sm:$0x1]
      %v144 = vld [vmem:[%s111 + $0x6c] sm:$0xf]
      %v145 = vld [vmem:[%s111 + $0x70] sm:$0xf]
      %v146 = vld [vmem:[%s111 + $0x74] sm:$0x1]
      %v147 = vld [vmem:[%s111 + $0x78] sm:$0xf]
      %v148 = vld [vmem:[%s111 + $0x7c] sm:$0xf]
      %v149 = vld [vmem:[%s111 + $0x80] sm:$0x1]
      %v150 = vld [vmem:[%s111 + $0x84] sm:$0xf]
      %v151 = vld [vmem:[%s111 + $0x88] sm:$0xf]
      %v152 = vld [vmem:[%s111 + $0x8c] sm:$0x1]
      %v153 = vld [vmem:[%s111 + $0x90] sm:$0xf]
      %v154 = vld [vmem:[%s111 + $0x94] sm:$0xf]
      %v155 = vld [vmem:[%s111 + $0x98] sm:$0x1]
      %v156 = vld [vmem:[%s111 + $0x9c] sm:$0xf]
      %v157 = vld [vmem:[%s111 + $0xa0] sm:$0xf]
      %v158 = vld [vmem:[%s111 + $0xa4] sm:$0x1]
      %v159 = vld [vmem:[%s111 + $0xa8] sm:$0xf]
      %v160 = vld [vmem:[%s111 + $0xac] sm:$0xf]
      %v161 = vld [vmem:[%s111 + $0xb0] sm:$0x1]
      %v162 = vld [vmem:[%s111 + $0xb4] sm:$0xf]
      %v163 = vld [vmem:[%s111 + $0xb8] sm:$0xf]
      %v164 = vld [vmem:[%s111 + $0xbc] sm:$0x1]
      %v165 = vld [vmem:[%s111 + $0xc0] sm:$0xf]
      %v166 = vld [vmem:[%s111 + $0xc4] sm:$0xf]
      %v167 = vld [vmem:[%s111 + $0xc8] sm:$0x1]
      %v168 = vld [vmem:[%s111 + $0xcc] sm:$0xf]
      %v169 = vld [vmem:[%s111 + $0xd0] sm:$0xf]
      %v170 = vld [vmem:[%s111 + $0xd4] sm:$0x1]
      %vm171 = vsmask.f32 3328
      %vm172 = vsmask.f32 7440
      %vm173 = vmor %vm171, %vm172
      %v175 = vshrl.u32 %v117, 16
      %v177 = vrot.slane %v175, 4
      %v178 = vshll.u32 %v117, 16
      %v180 = vrot.slane %v178, 5
      %v181 = vor.u32 %v177, %v180
      %v182 = vrot.slane %v181, 4
      %v184 = vshll.u32 %v118, 16
      %v186 = vrot.slane %v184, 5
      %v187 = vsel %vm173, %v182, %v186
      %v188 = vshrl.u32 %v118, 16
      %v190 = vrot.slane %v188, 4
      %v191 = vor.u32 %v190, %v186
      %v192 = vrot.slane %v191, 4
      %v194 = vshll.u32 %v119, 16
      %v196 = vrot.slane %v194, 5
      %v197 = vsel %vm173, %v192, %v196
      %v199 = vshrl.u32 %v120, 16
      %v201 = vrot.slane %v199, 4
      %v202 = vshll.u32 %v120, 16
      %v204 = vrot.slane %v202, 5
      %v205 = vor.u32 %v201, %v204
      %v206 = vrot.slane %v205, 4
      %v208 = vshll.u32 %v121, 16
      %v210 = vrot.slane %v208, 5
      %v211 = vsel %vm173, %v206, %v210
      %v212 = vshrl.u32 %v121, 16
      %v214 = vrot.slane %v212, 4
      %v215 = vor.u32 %v214, %v210
      %v216 = vrot.slane %v215, 4
      %v218 = vshll.u32 %v122, 16
      %v220 = vrot.slane %v218, 5
      %v221 = vsel %vm173, %v216, %v220
      %v223 = vshrl.u32 %v123, 16
      %v225 = vrot.slane %v223, 4
      %v226 = vshll.u32 %v123, 16
      %v228 = vrot.slane %v226, 5
      %v229 = vor.u32 %v225, %v228
      %v230 = vrot.slane %v229, 4
      %v232 = vshll.u32 %v124, 16
      %v234 = vrot.slane %v232, 5
      %v235 = vsel %vm173, %v230, %v234
      %v236 = vshrl.u32 %v124, 16
      %v238 = vrot.slane %v236, 4
      %v239 = vor.u32 %v238, %v234
      %v240 = vrot.slane %v239, 4
      %v242 = vshll.u32 %v125, 16
      %v244 = vrot.slane %v242, 5
      %v245 = vsel %vm173, %v240, %v244
      %v247 = vshrl.u32 %v126, 16
      %v249 = vrot.slane %v247, 4
      %v250 = vshll.u32 %v126, 16
      %v252 = vrot.slane %v250, 5
      %v253 = vor.u32 %v249, %v252
      %v254 = vrot.slane %v253, 4
      %v256 = vshll.u32 %v127, 16
      %v258 = vrot.slane %v256, 5
      %v259 = vsel %vm173, %v254, %v258
      %v260 = vshrl.u32 %v127, 16
      %v262 = vrot.slane %v260, 4
      %v263 = vor.u32 %v262, %v258
      %v264 = vrot.slane %v263, 4
      %v266 = vshll.u32 %v128, 16
      %v268 = vrot.slane %v266, 5
      %v269 = vsel %vm173, %v264, %v268
      %v271 = vshrl.u32 %v129, 16
      %v273 = vrot.slane %v271, 4
      %v274 = vshll.u32 %v129, 16
      %v276 = vrot.slane %v274, 5
      %v277 = vor.u32 %v273, %v276
      %v278 = vrot.slane %v277, 4
      %v280 = vshll.u32 %v130, 16
      %v282 = vrot.slane %v280, 5
      %v283 = vsel %vm173, %v278, %v282
      %v284 = vshrl.u32 %v130, 16
      %v286 = vrot.slane %v284, 4
      %v287 = vor.u32 %v286, %v282
      %v288 = vrot.slane %v287, 4
      %v290 = vshll.u32 %v131, 16
      %v292 = vrot.slane %v290, 5
      %v293 = vsel %vm173, %v288, %v292
      %v295 = vshrl.u32 %v132, 16
      %v297 = vrot.slane %v295, 4
      %v298 = vshll.u32 %v132, 16
      %v300 = vrot.slane %v298, 5
      %v301 = vor.u32 %v297, %v300
      %v302 = vrot.slane %v301, 4
      %v304 = vshll.u32 %v133, 16
      %v306 = vrot.slane %v304, 5
      %v307 = vsel %vm173, %v302, %v306
      %v308 = vshrl.u32 %v133, 16
      %v310 = vrot.slane %v308, 4
      %v311 = vor.u32 %v310, %v306
      %v312 = vrot.slane %v311, 4
      %v314 = vshll.u32 %v134, 16
      %v316 = vrot.slane %v314, 5
      %v317 = vsel %vm173, %v312, %v316
      %v319 = vshrl.u32 %v135, 16
      %v321 = vrot.slane %v319, 4
      %v322 = vshll.u32 %v135, 16
      %v324 = vrot.slane %v322, 5
      %v325 = vor.u32 %v321, %v324
      %v326 = vrot.slane %v325, 4
      %v328 = vshll.u32 %v136, 16
      %v330 = vrot.slane %v328, 5
      %v331 = vsel %vm173, %v326, %v330
      %v332 = vshrl.u32 %v136, 16
      %v334 = vrot.slane %v332, 4
      %v335 = vor.u32 %v334, %v330
      %v336 = vrot.slane %v335, 4
      %v338 = vshll.u32 %v137, 16
      %v340 = vrot.slane %v338, 5
      %v341 = vsel %vm173, %v336, %v340
      %v343 = vshrl.u32 %v138, 16
      %v345 = vrot.slane %v343, 4
      %v346 = vshll.u32 %v138, 16
      %v348 = vrot.slane %v346, 5
      %v349 = vor.u32 %v345, %v348
      %v350 = vrot.slane %v349, 4
      %v352 = vshll.u32 %v139, 16
      %v354 = vrot.slane %v352, 5
      %v355 = vsel %vm173, %v350, %v354
      %v356 = vshrl.u32 %v139, 16
      %v358 = vrot.slane %v356, 4
      %v359 = vor.u32 %v358, %v354
      %v360 = vrot.slane %v359, 4
      %v362 = vshll.u32 %v140, 16
      %v364 = vrot.slane %v362, 5
      %v365 = vsel %vm173, %v360, %v364
      %v367 = vshrl.u32 %v141, 16
      %v369 = vrot.slane %v367, 4
      %v370 = vshll.u32 %v141, 16
      %v372 = vrot.slane %v370, 5
      %v373 = vor.u32 %v369, %v372
      %v374 = vrot.slane %v373, 4
      %v376 = vshll.u32 %v142, 16
      %v378 = vrot.slane %v376, 5
      %v379 = vsel %vm173, %v374, %v378
      %v380 = vshrl.u32 %v142, 16
      %v382 = vrot.slane %v380, 4
      %v383 = vor.u32 %v382, %v378
      %v384 = vrot.slane %v383, 4
      %v386 = vshll.u32 %v143, 16
      %v388 = vrot.slane %v386, 5
      %v389 = vsel %vm173, %v384, %v388
      %v391 = vshrl.u32 %v144, 16
      %v393 = vrot.slane %v391, 4
      %v394 = vshll.u32 %v144, 16
      %v396 = vrot.slane %v394, 5
      %v397 = vor.u32 %v393, %v396
      %v398 = vrot.slane %v397, 4
      %v400 = vshll.u32 %v145, 16
      %v402 = vrot.slane %v400, 5
      %v403 = vsel %vm173, %v398, %v402
      %v404 = vshrl.u32 %v145, 16
      %v406 = vrot.slane %v404, 4
      %v407 = vor.u32 %v406, %v402
      %v408 = vrot.slane %v407, 4
      %v410 = vshll.u32 %v146, 16
      %v412 = vrot.slane %v410, 5
      %v413 = vsel %vm173, %v408, %v412
      %v415 = vshrl.u32 %v147, 16
      %v417 = vrot.slane %v415, 4
      %v418 = vshll.u32 %v147, 16
      %v420 = vrot.slane %v418, 5
      %v421 = vor.u32 %v417, %v420
      %v422 = vrot.slane %v421, 4
      %v424 = vshll.u32 %v148, 16
      %v426 = vrot.slane %v424, 5
      %v427 = vsel %vm173, %v422, %v426
      %v428 = vshrl.u32 %v148, 16
      %v430 = vrot.slane %v428, 4
      %v431 = vor.u32 %v430, %v426
      %v432 = vrot.slane %v431, 4
      %v434 = vshll.u32 %v149, 16
      %v436 = vrot.slane %v434, 5
      %v437 = vsel %vm173, %v432, %v436
      %v439 = vshrl.u32 %v150, 16
      %v441 = vrot.slane %v439, 4
      %v442 = vshll.u32 %v150, 16
      %v444 = vrot.slane %v442, 5
      %v445 = vor.u32 %v441, %v444
      %v446 = vrot.slane %v445, 4
      %v448 = vshll.u32 %v151, 16
      %v450 = vrot.slane %v448, 5
      %v451 = vsel %vm173, %v446, %v450
      %v452 = vshrl.u32 %v151, 16
      %v454 = vrot.slane %v452, 4
      %v455 = vor.u32 %v454, %v450
      %v456 = vrot.slane %v455, 4
      %v458 = vshll.u32 %v152, 16
      %v460 = vrot.slane %v458, 5
      %v461 = vsel %vm173, %v456, %v460
      %v463 = vshrl.u32 %v153, 16
      %v465 = vrot.slane %v463, 4
      %v466 = vshll.u32 %v153, 16
      %v468 = vrot.slane %v466, 5
      %v469 = vor.u32 %v465, %v468
      %v470 = vrot.slane %v469, 4
      %v472 = vshll.u32 %v154, 16
      %v474 = vrot.slane %v472, 5
      %v475 = vsel %vm173, %v470, %v474
      %v476 = vshrl.u32 %v154, 16
      %v478 = vrot.slane %v476, 4
      %v479 = vor.u32 %v478, %v474
      %v480 = vrot.slane %v479, 4
      %v482 = vshll.u32 %v155, 16
      %v484 = vrot.slane %v482, 5
      %v485 = vsel %vm173, %v480, %v484
      %v487 = vshrl.u32 %v156, 16
      %v489 = vrot.slane %v487, 4
      %v490 = vshll.u32 %v156, 16
      %v492 = vrot.slane %v490, 5
      %v493 = vor.u32 %v489, %v492
      %v494 = vrot.slane %v493, 4
      %v496 = vshll.u32 %v157, 16
      %v498 = vrot.slane %v496, 5
      %v499 = vsel %vm173, %v494, %v498
      %v500 = vshrl.u32 %v157, 16
      %v502 = vrot.slane %v500, 4
      %v503 = vor.u32 %v502, %v498
      %v504 = vrot.slane %v503, 4
      %v506 = vshll.u32 %v158, 16
      %v508 = vrot.slane %v506, 5
      %v509 = vsel %vm173, %v504, %v508
      %v511 = vshrl.u32 %v159, 16
      %v513 = vrot.slane %v511, 4
      %v514 = vshll.u32 %v159, 16
      %v516 = vrot.slane %v514, 5
      %v517 = vor.u32 %v513, %v516
      %v518 = vrot.slane %v517, 4
      %v520 = vshll.u32 %v160, 16
      %v522 = vrot.slane %v520, 5
      %v523 = vsel %vm173, %v518, %v522
      %v524 = vshrl.u32 %v160, 16
      %v526 = vrot.slane %v524, 4
      %v527 = vor.u32 %v526, %v522
      %v528 = vrot.slane %v527, 4
      %v530 = vshll.u32 %v161, 16
      %v532 = vrot.slane %v530, 5
      %v533 = vsel %vm173, %v528, %v532
      %v535 = vshrl.u32 %v162, 16
      %v537 = vrot.slane %v535, 4
      %v538 = vshll.u32 %v162, 16
      %v540 = vrot.slane %v538, 5
      %v541 = vor.u32 %v537, %v540
      %v542 = vrot.slane %v541, 4
      %v544 = vshll.u32 %v163, 16
      %v546 = vrot.slane %v544, 5
      %v547 = vsel %vm173, %v542, %v546
      %v548 = vshrl.u32 %v163, 16
      %v550 = vrot.slane %v548, 4
      %v551 = vor.u32 %v550, %v546
      %v552 = vrot.slane %v551, 4
      %v554 = vshll.u32 %v164, 16
      %v556 = vrot.slane %v554, 5
      %v557 = vsel %vm173, %v552, %v556
      %v590 = vmax.bf16 %v117, %v187
      %v591 = vmax.bf16 %v118, %v197
      %v592 = vmax.bf16 %v120, %v211
      %v593 = vmax.bf16 %v121, %v221
      %v594 = vmax.bf16 %v123, %v235
      %v595 = vmax.bf16 %v124, %v245
      %v596 = vmax.bf16 %v126, %v259
      %v597 = vmax.bf16 %v127, %v269
      %v598 = vmax.bf16 %v129, %v283
      %v599 = vmax.bf16 %v130, %v293
      %v600 = vmax.bf16 %v132, %v307
      %v601 = vmax.bf16 %v133, %v317
      %v602 = vmax.bf16 %v135, %v331
      %v603 = vmax.bf16 %v136, %v341
      %v604 = vmax.bf16 %v138, %v355
      %v605 = vmax.bf16 %v139, %v365
      %v606 = vmax.bf16 %v141, %v379
      %v607 = vmax.bf16 %v142, %v389
      %v608 = vmax.bf16 %v144, %v403
      %v609 = vmax.bf16 %v145, %v413
      %v610 = vmax.bf16 %v147, %v427
      %v611 = vmax.bf16 %v148, %v437
      %v612 = vmax.bf16 %v150, %v451
      %v613 = vmax.bf16 %v151, %v461
      %v614 = vmax.bf16 %v153, %v475
      %v615 = vmax.bf16 %v154, %v485
      %v616 = vmax.bf16 %v156, %v499
      %v617 = vmax.bf16 %v157, %v509
      %v618 = vmax.bf16 %v159, %v523
      %v619 = vmax.bf16 %v160, %v533
      %v620 = vmax.bf16 %v162, %v547
      %v621 = vmax.bf16 %v163, %v557
      %vm670 = vcmask 1042432
      %vm671 = vcmask 1046532
      %vm672 = vmor %vm670, %vm671
      %v673 = vrot.slane %v117, 5
      %v674 = vrot.slane %v673, 4
      %v675 = vrot.slane %v118, 5
      %v676 = vsel %vm672, %v674, %v675
      %v677 = vrot.slane %v675, 4
      %v678 = vrot.slane %v119, 5
      %v679 = vsel %vm672, %v677, %v678
      %v680 = vrot.slane %v120, 5
      %v681 = vrot.slane %v680, 4
      %v682 = vrot.slane %v121, 5
      %v683 = vsel %vm672, %v681, %v682
      %v684 = vrot.slane %v682, 4
      %v685 = vrot.slane %v122, 5
      %v686 = vsel %vm672, %v684, %v685
      %v687 = vrot.slane %v123, 5
      %v688 = vrot.slane %v687, 4
      %v689 = vrot.slane %v124, 5
      %v690 = vsel %vm672, %v688, %v689
      %v691 = vrot.slane %v689, 4
      %v692 = vrot.slane %v125, 5
      %v693 = vsel %vm672, %v691, %v692
      %v694 = vrot.slane %v126, 5
      %v695 = vrot.slane %v694, 4
      %v696 = vrot.slane %v127, 5
      %v697 = vsel %vm672, %v695, %v696
      %v698 = vrot.slane %v696, 4
      %v699 = vrot.slane %v128, 5
      %v700 = vsel %vm672, %v698, %v699
      %v701 = vrot.slane %v129, 5
      %v702 = vrot.slane %v701, 4
      %v703 = vrot.slane %v130, 5
      %v704 = vsel %vm672, %v702, %v703
      %v705 = vrot.slane %v703, 4
      %v706 = vrot.slane %v131, 5
      %v707 = vsel %vm672, %v705, %v706
      %v708 = vrot.slane %v132, 5
      %v709 = vrot.slane %v708, 4
      %v710 = vrot.slane %v133, 5
      %v711 = vsel %vm672, %v709, %v710
      %v712 = vrot.slane %v710, 4
      %v713 = vrot.slane %v134, 5
      %v714 = vsel %vm672, %v712, %v713
      %v715 = vrot.slane %v135, 5
      %v716 = vrot.slane %v715, 4
      %v717 = vrot.slane %v136, 5
      %v718 = vsel %vm672, %v716, %v717
      %v719 = vrot.slane %v717, 4
      %v720 = vrot.slane %v137, 5
      %v721 = vsel %vm672, %v719, %v720
      %v722 = vrot.slane %v138, 5
      %v723 = vrot.slane %v722, 4
      %v724 = vrot.slane %v139, 5
      %v725 = vsel %vm672, %v723, %v724
      %v726 = vrot.slane %v724, 4
      %v727 = vrot.slane %v140, 5
      %v728 = vsel %vm672, %v726, %v727
      %v729 = vrot.slane %v141, 5
      %v730 = vrot.slane %v729, 4
      %v731 = vrot.slane %v142, 5
      %v732 = vsel %vm672, %v730, %v731
      %v733 = vrot.slane %v731, 4
      %v734 = vrot.slane %v143, 5
      %v735 = vsel %vm672, %v733, %v734
      %v736 = vrot.slane %v144, 5
      %v737 = vrot.slane %v736, 4
      %v738 = vrot.slane %v145, 5
      %v739 = vsel %vm672, %v737, %v738
      %v740 = vrot.slane %v738, 4
      %v741 = vrot.slane %v146, 5
      %v742 = vsel %vm672, %v740, %v741
      %v743 = vrot.slane %v147, 5
      %v744 = vrot.slane %v743, 4
      %v745 = vrot.slane %v148, 5
      %v746 = vsel %vm672, %v744, %v745
      %v747 = vrot.slane %v745, 4
      %v748 = vrot.slane %v149, 5
      %v749 = vsel %vm672, %v747, %v748
      %v750 = vrot.slane %v150, 5
      %v751 = vrot.slane %v750, 4
      %v752 = vrot.slane %v151, 5
      %v753 = vsel %vm672, %v751, %v752
      %v754 = vrot.slane %v752, 4
      %v755 = vrot.slane %v152, 5
      %v756 = vsel %vm672, %v754, %v755
      %v757 = vrot.slane %v153, 5
      %v758 = vrot.slane %v757, 4
      %v759 = vrot.slane %v154, 5
      %v760 = vsel %vm672, %v758, %v759
      %v761 = vrot.slane %v759, 4
      %v762 = vrot.slane %v155, 5
      %v763 = vsel %vm672, %v761, %v762
      %v764 = vrot.slane %v156, 5
      %v765 = vrot.slane %v764, 4
      %v766 = vrot.slane %v157, 5
      %v767 = vsel %vm672, %v765, %v766
      %v768 = vrot.slane %v766, 4
      %v769 = vrot.slane %v158, 5
      %v770 = vsel %vm672, %v768, %v769
      %v771 = vrot.slane %v159, 5
      %v772 = vrot.slane %v771, 4
      %v773 = vrot.slane %v160, 5
      %v774 = vsel %vm672, %v772, %v773
      %v775 = vrot.slane %v773, 4
      %v776 = vrot.slane %v161, 5
      %v777 = vsel %vm672, %v775, %v776
      %v778 = vrot.slane %v162, 5
      %v779 = vrot.slane %v778, 4
      %v780 = vrot.slane %v163, 5
      %v781 = vsel %vm672, %v779, %v780
      %v782 = vrot.slane %v780, 4
      %v783 = vrot.slane %v164, 5
      %v784 = vsel %vm672, %v782, %v783
      %v817 = vmax.bf16 %v590, %v676
      %v818 = vmax.bf16 %v591, %v679
      %v819 = vmax.bf16 %v592, %v683
      %v820 = vmax.bf16 %v593, %v686
      %v821 = vmax.bf16 %v594, %v690
      %v822 = vmax.bf16 %v595, %v693
      %v823 = vmax.bf16 %v596, %v697
      %v824 = vmax.bf16 %v597, %v700
      %v825 = vmax.bf16 %v598, %v704
      %v826 = vmax.bf16 %v599, %v707
      %v827 = vmax.bf16 %v600, %v711
      %v828 = vmax.bf16 %v601, %v714
      %v829 = vmax.bf16 %v602, %v718
      %v830 = vmax.bf16 %v603, %v721
      %v831 = vmax.bf16 %v604, %v725
      %v832 = vmax.bf16 %v605, %v728
      %v833 = vmax.bf16 %v606, %v732
      %v834 = vmax.bf16 %v607, %v735
      %v835 = vmax.bf16 %v608, %v739
      %v836 = vmax.bf16 %v609, %v742
      %v837 = vmax.bf16 %v610, %v746
      %v838 = vmax.bf16 %v611, %v749
      %v839 = vmax.bf16 %v612, %v753
      %v840 = vmax.bf16 %v613, %v756
      %v841 = vmax.bf16 %v614, %v760
      %v842 = vmax.bf16 %v615, %v763
      %v843 = vmax.bf16 %v616, %v767
      %v844 = vmax.bf16 %v617, %v770
      %v845 = vmax.bf16 %v618, %v774
      %v846 = vmax.bf16 %v619, %v777
      %v847 = vmax.bf16 %v620, %v781
      %v848 = vmax.bf16 %v621, %v784
      %v849 = vmax.bf16 %v817, %v120
      %v850 = vmax.bf16 %v818, %v121
      %v851 = vmax.bf16 %v819, %v123
      %v852 = vmax.bf16 %v820, %v124
      %v853 = vmax.bf16 %v821, %v126
      %v854 = vmax.bf16 %v822, %v127
      %v855 = vmax.bf16 %v823, %v129
      %v856 = vmax.bf16 %v824, %v130
      %v857 = vmax.bf16 %v825, %v132
      %v858 = vmax.bf16 %v826, %v133
      %v859 = vmax.bf16 %v827, %v135
      %v860 = vmax.bf16 %v828, %v136
      %v861 = vmax.bf16 %v829, %v138
      %v862 = vmax.bf16 %v830, %v139
      %v863 = vmax.bf16 %v831, %v141
      %v864 = vmax.bf16 %v832, %v142
      %v865 = vmax.bf16 %v833, %v144
      %v866 = vmax.bf16 %v834, %v145
      %v867 = vmax.bf16 %v835, %v147
      %v868 = vmax.bf16 %v836, %v148
      %v869 = vmax.bf16 %v837, %v150
      %v870 = vmax.bf16 %v838, %v151
      %v871 = vmax.bf16 %v839, %v153
      %v872 = vmax.bf16 %v840, %v154
      %v873 = vmax.bf16 %v841, %v156
      %v874 = vmax.bf16 %v842, %v157
      %v875 = vmax.bf16 %v843, %v159
      %v876 = vmax.bf16 %v844, %v160
      %v877 = vmax.bf16 %v845, %v162
      %v878 = vmax.bf16 %v846, %v163
      %v879 = vmax.bf16 %v847, %v165
      %v880 = vmax.bf16 %v848, %v166
      %v882 = vshrl.u32 %v165, 16
      %v884 = vrot.slane %v882, 4
      %v885 = vshll.u32 %v165, 16
      %v887 = vrot.slane %v885, 5
      %v888 = vor.u32 %v884, %v887
      %v889 = vrot.slane %v888, 4
      %v891 = vshll.u32 %v166, 16
      %v893 = vrot.slane %v891, 5
      %v894 = vsel %vm173, %v889, %v893
      %v895 = vshrl.u32 %v166, 16
      %v897 = vrot.slane %v895, 4
      %v898 = vor.u32 %v897, %v893
      %v899 = vrot.slane %v898, 4
      %v901 = vshll.u32 %v167, 16
      %v903 = vrot.slane %v901, 5
      %v904 = vsel %vm173, %v899, %v903
      %v907 = vmax.bf16 %v849, %v211
      %v908 = vmax.bf16 %v850, %v221
      %v909 = vmax.bf16 %v851, %v235
      %v910 = vmax.bf16 %v852, %v245
      %v911 = vmax.bf16 %v853, %v259
      %v912 = vmax.bf16 %v854, %v269
      %v913 = vmax.bf16 %v855, %v283
      %v914 = vmax.bf16 %v856, %v293
      %v915 = vmax.bf16 %v857, %v307
      %v916 = vmax.bf16 %v858, %v317
      %v917 = vmax.bf16 %v859, %v331
      %v918 = vmax.bf16 %v860, %v341
      %v919 = vmax.bf16 %v861, %v355
      %v920 = vmax.bf16 %v862, %v365
      %v921 = vmax.bf16 %v863, %v379
      %v922 = vmax.bf16 %v864, %v389
      %v923 = vmax.bf16 %v865, %v403
      %v924 = vmax.bf16 %v866, %v413
      %v925 = vmax.bf16 %v867, %v427
      %v926 = vmax.bf16 %v868, %v437
      %v927 = vmax.bf16 %v869, %v451
      %v928 = vmax.bf16 %v870, %v461
      %v929 = vmax.bf16 %v871, %v475
      %v930 = vmax.bf16 %v872, %v485
      %v931 = vmax.bf16 %v873, %v499
      %v932 = vmax.bf16 %v874, %v509
      %v933 = vmax.bf16 %v875, %v523
      %v934 = vmax.bf16 %v876, %v533
      %v935 = vmax.bf16 %v877, %v547
      %v936 = vmax.bf16 %v878, %v557
      %v937 = vmax.bf16 %v879, %v894
      %v938 = vmax.bf16 %v880, %v904
      %v942 = vrot.slane %v165, 5
      %v943 = vrot.slane %v942, 4
      %v944 = vrot.slane %v166, 5
      %v945 = vsel %vm672, %v943, %v944
      %v946 = vrot.slane %v944, 4
      %v947 = vrot.slane %v167, 5
      %v948 = vsel %vm672, %v946, %v947
      %v951 = vmax.bf16 %v907, %v683
      %v952 = vmax.bf16 %v908, %v686
      %v953 = vmax.bf16 %v909, %v690
      %v954 = vmax.bf16 %v910, %v693
      %v955 = vmax.bf16 %v911, %v697
      %v956 = vmax.bf16 %v912, %v700
      %v957 = vmax.bf16 %v913, %v704
      %v958 = vmax.bf16 %v914, %v707
      %v959 = vmax.bf16 %v915, %v711
      %v960 = vmax.bf16 %v916, %v714
      %v961 = vmax.bf16 %v917, %v718
      %v962 = vmax.bf16 %v918, %v721
      %v963 = vmax.bf16 %v919, %v725
      %v964 = vmax.bf16 %v920, %v728
      %v965 = vmax.bf16 %v921, %v732
      %v966 = vmax.bf16 %v922, %v735
      %v967 = vmax.bf16 %v923, %v739
      %v968 = vmax.bf16 %v924, %v742
      %v969 = vmax.bf16 %v925, %v746
      %v970 = vmax.bf16 %v926, %v749
      %v971 = vmax.bf16 %v927, %v753
      %v972 = vmax.bf16 %v928, %v756
      %v973 = vmax.bf16 %v929, %v760
      %v974 = vmax.bf16 %v930, %v763
      %v975 = vmax.bf16 %v931, %v767
      %v976 = vmax.bf16 %v932, %v770
      %v977 = vmax.bf16 %v933, %v774
      %v978 = vmax.bf16 %v934, %v777
      %v979 = vmax.bf16 %v935, %v781
      %v980 = vmax.bf16 %v936, %v784
      %v981 = vmax.bf16 %v937, %v945
      %v982 = vmax.bf16 %v938, %v948
      %v983 = vmax.bf16 %v951, %v123
      %v984 = vmax.bf16 %v952, %v124
      %v985 = vmax.bf16 %v953, %v126
      %v986 = vmax.bf16 %v954, %v127
      %v987 = vmax.bf16 %v955, %v129
      %v988 = vmax.bf16 %v956, %v130
      %v989 = vmax.bf16 %v957, %v132
      %v990 = vmax.bf16 %v958, %v133
      %v991 = vmax.bf16 %v959, %v135
      %v992 = vmax.bf16 %v960, %v136
      %v993 = vmax.bf16 %v961, %v138
      %v994 = vmax.bf16 %v962, %v139
      %v995 = vmax.bf16 %v963, %v141
      %v996 = vmax.bf16 %v964, %v142
      %v997 = vmax.bf16 %v965, %v144
      %v998 = vmax.bf16 %v966, %v145
      %v999 = vmax.bf16 %v967, %v147
      %v1000 = vmax.bf16 %v968, %v148
      %v1001 = vmax.bf16 %v969, %v150
      %v1002 = vmax.bf16 %v970, %v151
      %v1003 = vmax.bf16 %v971, %v153
      %v1004 = vmax.bf16 %v972, %v154
      %v1005 = vmax.bf16 %v973, %v156
      %v1006 = vmax.bf16 %v974, %v157
      %v1007 = vmax.bf16 %v975, %v159
      %v1008 = vmax.bf16 %v976, %v160
      %v1009 = vmax.bf16 %v977, %v162
      %v1010 = vmax.bf16 %v978, %v163
      %v1011 = vmax.bf16 %v979, %v165
      %v1012 = vmax.bf16 %v980, %v166
      %v1013 = vmax.bf16 %v981, %v168
      %v1014 = vmax.bf16 %v982, %v169
      %v1016 = vshrl.u32 %v168, 16
      %v1018 = vrot.slane %v1016, 4
      %v1019 = vshll.u32 %v168, 16
      %v1021 = vrot.slane %v1019, 5
      %v1022 = vor.u32 %v1018, %v1021
      %v1023 = vrot.slane %v1022, 4
      %v1025 = vshll.u32 %v169, 16
      %v1027 = vrot.slane %v1025, 5
      %v1028 = vsel %vm173, %v1023, %v1027
      %v1029 = vshrl.u32 %v169, 16
      %v1031 = vrot.slane %v1029, 4
      %v1032 = vor.u32 %v1031, %v1027
      %v1033 = vrot.slane %v1032, 4
      %v1035 = vshll.u32 %v170, 16
      %v1037 = vrot.slane %v1035, 5
      %v1038 = vsel %vm173, %v1033, %v1037
      %v1041 = vmax.bf16 %v983, %v235
      %v1042 = vmax.bf16 %v984, %v245
      %v1043 = vmax.bf16 %v985, %v259
      %v1044 = vmax.bf16 %v986, %v269
      %v1045 = vmax.bf16 %v987, %v283
      %v1046 = vmax.bf16 %v988, %v293
      %v1047 = vmax.bf16 %v989, %v307
      %v1048 = vmax.bf16 %v990, %v317
      %v1049 = vmax.bf16 %v991, %v331
      %v1050 = vmax.bf16 %v992, %v341
      %v1051 = vmax.bf16 %v993, %v355
      %v1052 = vmax.bf16 %v994, %v365
      %v1053 = vmax.bf16 %v995, %v379
      %v1054 = vmax.bf16 %v996, %v389
      %v1055 = vmax.bf16 %v997, %v403
      %v1056 = vmax.bf16 %v998, %v413
      %v1057 = vmax.bf16 %v999, %v427
      %v1058 = vmax.bf16 %v1000, %v437
      %v1059 = vmax.bf16 %v1001, %v451
      %v1060 = vmax.bf16 %v1002, %v461
      %v1061 = vmax.bf16 %v1003, %v475
      %v1062 = vmax.bf16 %v1004, %v485
      %v1063 = vmax.bf16 %v1005, %v499
      %v1064 = vmax.bf16 %v1006, %v509
      %v1065 = vmax.bf16 %v1007, %v523
      %v1066 = vmax.bf16 %v1008, %v533
      %v1067 = vmax.bf16 %v1009, %v547
      %v1068 = vmax.bf16 %v1010, %v557
      %v1069 = vmax.bf16 %v1011, %v894
      %v1070 = vmax.bf16 %v1012, %v904
      %v1071 = vmax.bf16 %v1013, %v1028
      %v1072 = vmax.bf16 %v1014, %v1038
      %v1076 = vrot.slane %v168, 5
      %v1077 = vrot.slane %v1076, 4
      %v1078 = vrot.slane %v169, 5
      %v1079 = vsel %vm672, %v1077, %v1078
      %v1080 = vrot.slane %v1078, 4
      %v1081 = vrot.slane %v170, 5
      %v1082 = vsel %vm672, %v1080, %v1081
      %v1085 = vmax.bf16 %v1041, %v690
      %v1086 = vmax.bf16 %v1042, %v693
      %v1087 = vmax.bf16 %v1043, %v697
      %v1088 = vmax.bf16 %v1044, %v700
      %v1089 = vmax.bf16 %v1045, %v704
      %v1090 = vmax.bf16 %v1046, %v707
      %v1091 = vmax.bf16 %v1047, %v711
      %v1092 = vmax.bf16 %v1048, %v714
      %v1093 = vmax.bf16 %v1049, %v718
      %v1094 = vmax.bf16 %v1050, %v721
      %v1095 = vmax.bf16 %v1051, %v725
      %v1096 = vmax.bf16 %v1052, %v728
      %v1097 = vmax.bf16 %v1053, %v732
      %v1098 = vmax.bf16 %v1054, %v735
      %v1099 = vmax.bf16 %v1055, %v739
      %v1100 = vmax.bf16 %v1056, %v742
      %v1101 = vmax.bf16 %v1057, %v746
      %v1102 = vmax.bf16 %v1058, %v749
      %v1103 = vmax.bf16 %v1059, %v753
      %v1104 = vmax.bf16 %v1060, %v756
      %v1105 = vmax.bf16 %v1061, %v760
      %v1106 = vmax.bf16 %v1062, %v763
      %v1107 = vmax.bf16 %v1063, %v767
      %v1108 = vmax.bf16 %v1064, %v770
      %v1109 = vmax.bf16 %v1065, %v774
      %v1110 = vmax.bf16 %v1066, %v777
      %v1111 = vmax.bf16 %v1067, %v781
      %v1112 = vmax.bf16 %v1068, %v784
      %v1113 = vmax.bf16 %v1069, %v945
      %v1114 = vmax.bf16 %v1070, %v948
      %v1115 = vmax.bf16 %v1071, %v1079
      %v1116 = vmax.bf16 %v1072, %v1082
      %vm1117 = vcmask 27648
      %1118 = vst.msk [vmem:[%s116] sm:$0xf] %vm1117, %v1085
      %1119 = vst.msk [vmem:[%s116 + $0x4] sm:$0xf] %vm1117, %v1086
      %1120 = vst.msk [vmem:[%s116 + $0x8] sm:$0xf] %vm1117, %v1087
      %1121 = vst.msk [vmem:[%s116 + $0xc] sm:$0xf] %vm1117, %v1088
      %1122 = vst.msk [vmem:[%s116 + $0x10] sm:$0xf] %vm1117, %v1089
      %1123 = vst.msk [vmem:[%s116 + $0x14] sm:$0xf] %vm1117, %v1090
      %1124 = vst.msk [vmem:[%s116 + $0x18] sm:$0xf] %vm1117, %v1091
      %1125 = vst.msk [vmem:[%s116 + $0x1c] sm:$0xf] %vm1117, %v1092
      %1126 = vst.msk [vmem:[%s116 + $0x20] sm:$0xf] %vm1117, %v1093
      %1127 = vst.msk [vmem:[%s116 + $0x24] sm:$0xf] %vm1117, %v1094
      %1128 = vst.msk [vmem:[%s116 + $0x28] sm:$0xf] %vm1117, %v1095
      %1129 = vst.msk [vmem:[%s116 + $0x2c] sm:$0xf] %vm1117, %v1096
      %1130 = vst.msk [vmem:[%s116 + $0x30] sm:$0xf] %vm1117, %v1097
      %1131 = vst.msk [vmem:[%s116 + $0x34] sm:$0xf] %vm1117, %v1098
      %1132 = vst.msk [vmem:[%s116 + $0x38] sm:$0xf] %vm1117, %v1099
      %1133 = vst.msk [vmem:[%s116 + $0x3c] sm:$0xf] %vm1117, %v1100
      %1134 = vst.msk [vmem:[%s116 + $0x40] sm:$0xf] %vm1117, %v1101
      %1135 = vst.msk [vmem:[%s116 + $0x44] sm:$0xf] %vm1117, %v1102
      %1136 = vst.msk [vmem:[%s116 + $0x48] sm:$0xf] %vm1117, %v1103
      %1137 = vst.msk [vmem:[%s116 + $0x4c] sm:$0xf] %vm1117, %v1104
      %1138 = vst.msk [vmem:[%s116 + $0x50] sm:$0xf] %vm1117, %v1105
      %1139 = vst.msk [vmem:[%s116 + $0x54] sm:$0xf] %vm1117, %v1106
      %1140 = vst.msk [vmem:[%s116 + $0x58] sm:$0xf] %vm1117, %v1107
      %1141 = vst.msk [vmem:[%s116 + $0x5c] sm:$0xf] %vm1117, %v1108
      %1142 = vst.msk [vmem:[%s116 + $0x60] sm:$0xf] %vm1117, %v1109
      %1143 = vst.msk [vmem:[%s116 + $0x64] sm:$0xf] %vm1117, %v1110
      %1144 = vst.msk [vmem:[%s116 + $0x68] sm:$0xf] %vm1117, %v1111
      %1145 = vst.msk [vmem:[%s116 + $0x6c] sm:$0xf] %vm1117, %v1112
      %1146 = vst.msk [vmem:[%s116 + $0x70] sm:$0xf] %vm1117, %v1113
      %1147 = vst.msk [vmem:[%s116 + $0x74] sm:$0xf] %vm1117, %v1114
      %1148 = vst.msk [vmem:[%s116 + $0x78] sm:$0xf] %vm1117, %v1115
      %1149 = vst.msk [vmem:[%s116 + $0x7c] sm:$0xf] %vm1117, %v1116
      %p1150 = scmp.lt.s32.totalorder %s12, 1
      %s1151 = scalar_select %p1150, %s12, 1
      %s1152 = smul.addr %s1151, 32
      %s1153 = smul.addr %s1152, 4
      %s1154 = scalar_lea.vmem %s1, %s1153
      // Predicated region
      $region25: #{inception_f6_forward.25} parent=23 // pred_check
        %p1155 = pneg %p56
      $region26: #{inception_f6_forward.25} parent=23 // pred_check_branch
        %1157 = sbr.rel (%p1155) target = $region28
      $region27: #{inception_f6_forward.25} parent=23 // pred_region
        _
      $region28: #{inception_f6_forward.25} parent=23 // pred_fallthru
        _
    $region24: #{inception_f6_forward.25} parent=5 // pred_fallthru
      _
    %p1158 = scmp.le.s32.totalorder 2, %s7
    // Predicated region
    $region29: #{inception_f6_forward.25} parent=5 // pred_check
      %p1159 = pneg %p1158
    $region30: #{inception_f6_forward.25} parent=5 // pred_check_branch
      %1161 = sbr.rel (%p1159) target = $region32
    $region31: #{inception_f6_forward.25} parent=5 // pred_region
      %s1162 = ssub.s32 %s7, 2
      // Predicated region
      $region33: #{inception_f6_forward.25} parent=31 // pred_check
        %p1163 = pneg %p62
      $region34: #{inception_f6_forward.25} parent=31 // pred_check_branch
        %1165 = sbr.rel (%p1163) target = $region36
      $region35: #{inception_f6_forward.25} parent=31 // pred_region
        %p1166 = scmp.lt.s32.totalorder %s13, 1
        %s1167 = scalar_select %p1166, %s13, 1
        %s1168 = smul.addr %s1167, 32
        %s1169 = smul.addr %s1168, 4
        %s1170 = scalar_lea.vmem %s1, %s1169
      $region36: #{inception_f6_forward.25} parent=31 // pred_fallthru
        _
    $region32: #{inception_f6_forward.25} parent=5 // pred_fallthru
      _
  $region6: #{inception_f6_forward.25} parent=0 // loop_footer
    %s11 = sadd.s32 1, %s7
  $region7: #{inception_f6_forward.25} parent=0 // loop_footer_branch
    %6 = sbr.rel target = $region3
  $region8: #{inception_f6_forward.25} parent=0 // loop_exit
    _

// kernel: inception_f6_forward.27
$region0: #{inception_f6_forward.27}
  #allocation0 [shape = 'u32[]', space=smem, size = 0x4, offset = 0x4, fixed_abs, tag = 'smem constant byte address 0x4 - core index']
  #allocation1 [shape = 'u32[144,128]{1,0:T(1,128)}', space=vmem, size = 0x12000, scoped, tag = 'internal scratch']
  %s0 = inlined_call_operand.vmem [shape: bf16[512,192], index: 0, kind: input, shape index: {}]
  %s1 = inlined_call_operand.vmem [shape: f32[1,192], index: 1, kind: input, shape index: {}]
  %s2 = inlined_call_operand.vmem [shape: f32[1,192], index: 2, kind: input, shape index: {}]
  %s3 = inlined_call_operand.vmem [shape: f32[512,192], index: 3, kind: output, shape index: {}]
  %s4 = sld [smem:[#allocation0]]
  $region45: #{inception_f6_forward.27} parent=0
    _
  %s6 = ssub.s32 1, %s4
  %s7 = scalar_select 0, %s6, %s4
  loop: start=0, step=1, limit=4
  $region2: #{inception_f6_forward.27} parent=0 // loop_pre_header
    _
  $region3: #{inception_f6_forward.27} parent=0 // loop_header
    %s9 = sphi 0, %s13
    %p10 = scmp.ge.s32.totalorder %s9, 4
    %s19 = sphi 0, %s21
    %s22 = sphi 0, %s19
    %s23 = sphi 0, %s22
    %s39 = sphi 0, %s23
    %s43 = sphi 0, %s43
    %s45 = sphi 0, %s43
    %s46 = sphi 0, %s45
    %s60 = sphi 0, %s46
    %s64 = sphi 0, %s64
    %s66 = sphi 0, %s64
    %s67 = sphi 0, %s66
    %s81 = sphi 0, %s67
    %s87 = sphi 0, %s89
    %s90 = sphi 0, %s87
    %s91 = sphi 0, %s90
    %s107 = sphi 0, %s91
  $region4: #{inception_f6_forward.27} parent=0 // loop_header_branch
    %12 = sbr.rel (%p10) target = $region8
  $region5: #{inception_f6_forward.27} parent=0 // loop_body
    %s14 = ssub.s32 %s9, 1
    %s15 = ssub.s32 %s9, 2
    %s16 = sadd.s32 %s9, 1
    %s17 = ssub.s32 %s9, %s16
    %p18 = scmp.eq.s32.totalorder %s17, 0
    %s20 = sadd.s32 %s19, 1
    %s21 = scalar_select %p18, %s19, %s20
    %p24 = pneg %p18
    %p25 = scmp.eq.s32.totalorder %s9, 1
    %p26 = por %p24, %p25
    %p27 = scmp.ne.s32.totalorder %s19, %s22
    %p28 = scmp.eq.s32.totalorder %s9, 0
    %p29 = por %p27, %p28
    %p30 = scmp.ne.s32.totalorder %s19, %s22
    %p31 = scmp.eq.s32.totalorder %s14, 1
    %p32 = por %p30, %p31
    %p33 = scmp.ne.s32.totalorder %s22, %s23
    %p34 = scmp.eq.s32.totalorder %s14, 0
    %p35 = por %p33, %p34
    %p36 = scmp.ne.s32.totalorder %s22, %s23
    %p37 = scmp.eq.s32.totalorder %s15, 1
    %p38 = por %p36, %p37
    %p40 = scmp.ne.s32.totalorder %s23, %s39
    %p41 = scmp.eq.s32.totalorder %s15, 0
    %p42 = por %p40, %p41
    %s44 = sadd.s32 %s43, 1
    %p47 = scmp.eq.s32.totalorder %s9, 1
    %p48 = scmp.ne.s32.totalorder %s43, %s45
    %p49 = scmp.eq.s32.totalorder %s9, 0
    %p50 = por %p48, %p49
    %p51 = scmp.ne.s32.totalorder %s43, %s45
    %p52 = scmp.eq.s32.totalorder %s14, 1
    %p53 = por %p51, %p52
    %p54 = scmp.ne.s32.totalorder %s45, %s46
    %p55 = scmp.eq.s32.totalorder %s14, 0
    %p56 = por %p54, %p55
    %p57 = scmp.ne.s32.totalorder %s45, %s46
    %p58 = scmp.eq.s32.totalorder %s15, 1
    %p59 = por %p57, %p58
    %p61 = scmp.ne.s32.totalorder %s46, %s60
    %p62 = scmp.eq.s32.totalorder %s15, 0
    %p63 = por %p61, %p62
    %s65 = sadd.s32 %s64, 1
    %p68 = scmp.eq.s32.totalorder %s9, 1
    %p69 = scmp.ne.s32.totalorder %s64, %s66
    %p70 = scmp.eq.s32.totalorder %s9, 0
    %p71 = por %p69, %p70
    %p72 = scmp.ne.s32.totalorder %s64, %s66
    %p73 = scmp.eq.s32.totalorder %s14, 1
    %p74 = por %p72, %p73
    %p75 = scmp.ne.s32.totalorder %s66, %s67
    %p76 = scmp.eq.s32.totalorder %s14, 0
    %p77 = por %p75, %p76
    %p78 = scmp.ne.s32.totalorder %s66, %s67
    %p79 = scmp.eq.s32.totalorder %s15, 1
    %p80 = por %p78, %p79
    %p82 = scmp.ne.s32.totalorder %s67, %s81
    %p83 = scmp.eq.s32.totalorder %s15, 0
    %p84 = por %p82, %p83
    %s85 = ssub.s32 %s9, %s16
    %p86 = scmp.eq.s32.totalorder %s85, 0
    %s88 = sadd.s32 %s87, 1
    %s89 = scalar_select %p86, %s87, %s88
    %p92 = pneg %p86
    %p93 = scmp.eq.s32.totalorder %s9, 1
    %p94 = por %p92, %p93
    %p95 = scmp.ne.s32.totalorder %s87, %s90
    %p96 = scmp.eq.s32.totalorder %s9, 0
    %p97 = por %p95, %p96
    %p98 = scmp.ne.s32.totalorder %s87, %s90
    %p99 = scmp.eq.s32.totalorder %s14, 1
    %p100 = por %p98, %p99
    %p101 = scmp.ne.s32.totalorder %s90, %s91
    %p102 = scmp.eq.s32.totalorder %s14, 0
    %p103 = por %p101, %p102
    %p104 = scmp.ne.s32.totalorder %s90, %s91
    %p105 = scmp.eq.s32.totalorder %s15, 1
    %p106 = por %p104, %p105
    %p108 = scmp.ne.s32.totalorder %s91, %s107
    %p109 = scmp.eq.s32.totalorder %s15, 0
    %p110 = por %p108, %p109
    %p111 = scmp.le.s32.totalorder 1, %s9
    %p112 = scmp.lt.s32.totalorder %s9, 3
    %p113 = pnand %p111, %p112
    %p114 = pneg %p113
    // Predicated region
    $region9: #{inception_f6_forward.27} parent=5 // pred_check
      _
    $region10: #{inception_f6_forward.27} parent=5 // pred_check_branch
      %116 = sbr.rel (%p113) target = $region12
    $region11: #{inception_f6_forward.27} parent=5 // pred_region
      %s117 = ssub.s32 %s9, 1
      // Predicated region
      $region13: #{inception_f6_forward.27} parent=11 // pred_check
        %p118 = pneg %p56
      $region14: #{inception_f6_forward.27} parent=11 // pred_check_branch
        %120 = sbr.rel (%p118) target = $region16
      $region15: #{inception_f6_forward.27} parent=11 // pred_region
        _
      $region16: #{inception_f6_forward.27} parent=11 // pred_fallthru
        _
      // Predicated region
      $region17: #{inception_f6_forward.27} parent=11 // pred_check
        %p121 = pneg %p77
      $region18: #{inception_f6_forward.27} parent=11 // pred_check_branch
        %123 = sbr.rel (%p121) target = $region20
      $region19: #{inception_f6_forward.27} parent=11 // pred_region
        _
      $region20: #{inception_f6_forward.27} parent=11 // pred_fallthru
        _
    $region12: #{inception_f6_forward.27} parent=5 // pred_fallthru
      _
    %p124 = scmp.lt.s32.totalorder %s9, 2
    // Predicated region
    $region21: #{inception_f6_forward.27} parent=5 // pred_check
      %p125 = pneg %p124
    $region22: #{inception_f6_forward.27} parent=5 // pred_check_branch
      %127 = sbr.rel (%p125) target = $region24
    $region23: #{inception_f6_forward.27} parent=5 // pred_region
      // Predicated region
      $region25: #{inception_f6_forward.27} parent=23 // pred_check
        %p128 = pneg %p29
      $region26: #{inception_f6_forward.27} parent=23 // pred_check_branch
        %130 = sbr.rel (%p128) target = $region28
      $region27: #{inception_f6_forward.27} parent=23 // pred_region
        %s131 = smul.u32 32, %s9
        %p132 = scmp.lt.s32.totalorder %s131, 63
        %s133 = scalar_select %p132, %s131, 63
        %s134 = smul.addr %s133, 2
        %s135 = smul.addr %s134, 4
        %s136 = scalar_lea.vmem %s0, %s135
        %s137 = smul.u32 32, %s9
      $region28: #{inception_f6_forward.27} parent=23 // pred_fallthru
        _
    $region24: #{inception_f6_forward.27} parent=5 // pred_fallthru
      _
    %p138 = scmp.le.s32.totalorder 1, %s9
    %p139 = scmp.lt.s32.totalorder %s9, 3
    %p140 = pnand %p138, %p139
    %p141 = pneg %p140
    // Predicated region
    $region29: #{inception_f6_forward.27} parent=5 // pred_check
      _
    $region30: #{inception_f6_forward.27} parent=5 // pred_check_branch
      %143 = sbr.rel (%p140) target = $region32
    $region31: #{inception_f6_forward.27} parent=5 // pred_region
      %s144 = ssub.s32 %s9, 1
      %s145 = smul.u32 32, %s14
      %p146 = scmp.lt.s32.totalorder %s145, 63
      %s147 = scalar_select %p146, %s145, 63
      %s148 = smul.addr %s147, 2
      %s149 = smul.addr %s148, 4
      %s150 = scalar_lea.vmem %s0, %s149
      %p151 = pneg %p35
      %p152 = pneg %p32
      %p153 = pneg %p56
      %p154 = pneg %p53
      %p155 = pneg %p77
      %p156 = pneg %p74
      %p157 = pneg %p103
      %p158 = pneg %p100
      %s159 = smul.u32 32, %s14
      %p160 = scmp.lt.s32.totalorder %s159, 63
      %s161 = scalar_select %p160, %s159, 63
      %s162 = smul.addr %s161, 2
      %s163 = smul.addr %s162, 8
      %s164 = scalar_lea.vmem %s3, %s163
      %s165 = smul.u32 32, %s14
      %p166 = scmp.lt.s32.totalorder %s165, 63
      %s167 = scalar_select %p166, %s165, 63
      %s168 = smul.addr %s167, 2
      %s169 = smul.addr %s168, 4
      %s170 = scalar_lea.vmem %s0, %s169
      %s171 = smul.u32 32, %s14
      %s172 = smul.u32 32, %s14
      %p173 = scmp.lt.s32.totalorder %s172, 63
      %s174 = scalar_select %p173, %s172, 63
      %s175 = smul.addr %s174, 2
      %s176 = smul.addr %s175, 8
      %s177 = scalar_lea.vmem %s3, %s176
      %s178 = smul.u32 32, %s14
      %v179 = vld [vmem:[%s170] sm:$0xff]
      %v180 = vld [vmem:[%s170 + $0x8] sm:$0xff]
      %v181 = vld [vmem:[%s170 + $0x10] sm:$0xff]
      %v182 = vld [vmem:[%s170 + $0x18] sm:$0xff]
      %v183 = vld [vmem:[%s170 + $0x20] sm:$0xff]
      %v184 = vld [vmem:[%s170 + $0x28] sm:$0xff]
      %v185 = vld [vmem:[%s170 + $0x30] sm:$0xff]
      %v186 = vld [vmem:[%s170 + $0x38] sm:$0xff]
      %v187 = vld [vmem:[%s170 + $0x40] sm:$0xff]
      %v188 = vld [vmem:[%s170 + $0x48] sm:$0xff]
      %v189 = vld [vmem:[%s170 + $0x50] sm:$0xff]
      %v190 = vld [vmem:[%s170 + $0x58] sm:$0xff]
      %v191 = vld [vmem:[%s170 + $0x60] sm:$0xff]
      %v192 = vld [vmem:[%s170 + $0x68] sm:$0xff]
      %v193 = vld [vmem:[%s170 + $0x70] sm:$0xff]
      %v194 = vld [vmem:[%s170 + $0x78] sm:$0xff]
      %v195 = vld [vmem:[%s170 + $0x80] sm:$0xff]
      %v196 = vld [vmem:[%s170 + $0x88] sm:$0xff]
      %v197 = vld [vmem:[%s170 + $0x90] sm:$0xff]
      %v198 = vld [vmem:[%s170 + $0x98] sm:$0xff]
      %v199 = vld [vmem:[%s170 + $0xa0] sm:$0xff]
      %v200 = vld [vmem:[%s170 + $0xa8] sm:$0xff]
      %v201 = vld [vmem:[%s170 + $0xb0] sm:$0xff]
      %v202 = vld [vmem:[%s170 + $0xb8] sm:$0xff]
      %v203 = vld [vmem:[%s170 + $0xc0] sm:$0xff]
      %v204 = vld [vmem:[%s170 + $0xc8] sm:$0xff]
      %v205 = vld [vmem:[%s170 + $0xd0] sm:$0xff]
      %v206 = vld [vmem:[%s170 + $0xd8] sm:$0xff]
      %v207 = vld [vmem:[%s170 + $0xe0] sm:$0xff]
      %v208 = vld [vmem:[%s170 + $0xe8] sm:$0xff]
      %v209 = vld [vmem:[%s170 + $0xf0] sm:$0xff]
      %v210 = vld [vmem:[%s170 + $0xf8] sm:$0xff]
      %v211 = vunpack.c.l.bf16 %v179
      %v212 = vunpack.c.h.bf16 %v179
      %v213 = vunpack.c.l.bf16 %v180
      %v214 = vunpack.c.h.bf16 %v180
      %v215 = vunpack.c.l.bf16 %v181
      %v216 = vunpack.c.h.bf16 %v181
      %v217 = vunpack.c.l.bf16 %v182
      %v218 = vunpack.c.h.bf16 %v182
      %v219 = vunpack.c.l.bf16 %v183
      %v220 = vunpack.c.h.bf16 %v183
      %v221 = vunpack.c.l.bf16 %v184
      %v222 = vunpack.c.h.bf16 %v184
      %v223 = vunpack.c.l.bf16 %v185
      %v224 = vunpack.c.h.bf16 %v185
      %v225 = vunpack.c.l.bf16 %v186
      %v226 = vunpack.c.h.bf16 %v186
      %v227 = vunpack.c.l.bf16 %v187
      %v228 = vunpack.c.h.bf16 %v187
      %v229 = vunpack.c.l.bf16 %v188
      %v230 = vunpack.c.h.bf16 %v188
      %v231 = vunpack.c.l.bf16 %v189
      %v232 = vunpack.c.h.bf16 %v189
      %v233 = vunpack.c.l.bf16 %v190
      %v234 = vunpack.c.h.bf16 %v190
      %v235 = vunpack.c.l.bf16 %v191
      %v236 = vunpack.c.h.bf16 %v191
      %v237 = vunpack.c.l.bf16 %v192
      %v238 = vunpack.c.h.bf16 %v192
      %v239 = vunpack.c.l.bf16 %v193
      %v240 = vunpack.c.h.bf16 %v193
      %v241 = vunpack.c.l.bf16 %v194
      %v242 = vunpack.c.h.bf16 %v194
      %v243 = vunpack.c.l.bf16 %v195
      %v244 = vunpack.c.h.bf16 %v195
      %v245 = vunpack.c.l.bf16 %v196
      %v246 = vunpack.c.h.bf16 %v196
      %v247 = vunpack.c.l.bf16 %v197
      %v248 = vunpack.c.h.bf16 %v197
      %v249 = vunpack.c.l.bf16 %v198
      %v250 = vunpack.c.h.bf16 %v198
      %v251 = vunpack.c.l.bf16 %v199
      %v252 = vunpack.c.h.bf16 %v199
      %v253 = vunpack.c.l.bf16 %v200
      %v254 = vunpack.c.h.bf16 %v200
      %v255 = vunpack.c.l.bf16 %v201
      %v256 = vunpack.c.h.bf16 %v201
      %v257 = vunpack.c.l.bf16 %v202
      %v258 = vunpack.c.h.bf16 %v202
      %v259 = vunpack.c.l.bf16 %v203
      %v260 = vunpack.c.h.bf16 %v203
      %v261 = vunpack.c.l.bf16 %v204
      %v262 = vunpack.c.h.bf16 %v204
      %v263 = vunpack.c.l.bf16 %v205
      %v264 = vunpack.c.h.bf16 %v205
      %v265 = vunpack.c.l.bf16 %v206
      %v266 = vunpack.c.h.bf16 %v206
      %v267 = vunpack.c.l.bf16 %v207
      %v268 = vunpack.c.h.bf16 %v207
      %v269 = vunpack.c.l.bf16 %v208
      %v270 = vunpack.c.h.bf16 %v208
      %v271 = vunpack.c.l.bf16 %v209
      %v272 = vunpack.c.h.bf16 %v209
      %v273 = vunpack.c.l.bf16 %v210
      %v274 = vunpack.c.h.bf16 %v210
      %v275 = vld [vmem:[%s1] sm:$0x3]
      %v277 = vlaneseq
      %v278 = vshrl.u32 %v277, 7
      %v279 = vsub.s32 0, %v278
      %v280 = vrot.slane %v275, %v279
      %v281 = vlaneseq
      %v282 = vshrl.u32 %v281, 7
      %v283 = vsub.s32 1, %v282
      %v284 = vrot.slane %v275, %v283
      %v287 = vmul.f32 %v211, %v280
      %v288 = vmul.f32 %v212, %v284
      %v289 = vmul.f32 %v213, %v280
      %v290 = vmul.f32 %v214, %v284
      %v291 = vmul.f32 %v215, %v280
      %v292 = vmul.f32 %v216, %v284
      %v293 = vmul.f32 %v217, %v280
      %v294 = vmul.f32 %v218, %v284
      %v295 = vmul.f32 %v219, %v280
      %v296 = vmul.f32 %v220, %v284
      %v297 = vmul.f32 %v221, %v280
      %v298 = vmul.f32 %v222, %v284
      %v299 = vmul.f32 %v223, %v280
      %v300 = vmul.f32 %v224, %v284
      %v301 = vmul.f32 %v225, %v280
      %v302 = vmul.f32 %v226, %v284
      %v303 = vmul.f32 %v227, %v280
      %v304 = vmul.f32 %v228, %v284
      %v305 = vmul.f32 %v229, %v280
      %v306 = vmul.f32 %v230, %v284
      %v307 = vmul.f32 %v231, %v280
      %v308 = vmul.f32 %v232, %v284
      %v309 = vmul.f32 %v233, %v280
      %v310 = vmul.f32 %v234, %v284
      %v311 = vmul.f32 %v235, %v280
      %v312 = vmul.f32 %v236, %v284
      %v313 = vmul.f32 %v237, %v280
      %v314 = vmul.f32 %v238, %v284
      %v315 = vmul.f32 %v239, %v280
      %v316 = vmul.f32 %v240, %v284
      %v317 = vmul.f32 %v241, %v280
      %v318 = vmul.f32 %v242, %v284
      %v319 = vmul.f32 %v243, %v280
      %v320 = vmul.f32 %v244, %v284
      %v321 = vmul.f32 %v245, %v280
      %v322 = vmul.f32 %v246, %v284
      %v323 = vmul.f32 %v247, %v280
      %v324 = vmul.f32 %v248, %v284
      %v325 = vmul.f32 %v249, %v280
      %v326 = vmul.f32 %v250, %v284
      %v327 = vmul.f32 %v251, %v280
      %v328 = vmul.f32 %v252, %v284
      %v329 = vmul.f32 %v253, %v280
      %v330 = vmul.f32 %v254, %v284
      %v331 = vmul.f32 %v255, %v280
      %v332 = vmul.f32 %v256, %v284
      %v333 = vmul.f32 %v257, %v280
      %v334 = vmul.f32 %v258, %v284
      %v335 = vmul.f32 %v259, %v280
      %v336 = vmul.f32 %v260, %v284
      %v337 = vmul.f32 %v261, %v280
      %v338 = vmul.f32 %v262, %v284
      %v339 = vmul.f32 %v263, %v280
      %v340 = vmul.f32 %v264, %v284
      %v341 = vmul.f32 %v265, %v280
      %v342 = vmul.f32 %v266, %v284
      %v343 = vmul.f32 %v267, %v280
      %v344 = vmul.f32 %v268, %v284
      %v345 = vmul.f32 %v269, %v280
      %v346 = vmul.f32 %v270, %v284
      %v347 = vmul.f32 %v271, %v280
      %v348 = vmul.f32 %v272, %v284
      %v349 = vmul.f32 %v273, %v280
      %v350 = vmul.f32 %v274, %v284
      %v351 = vld [vmem:[%s2] sm:$0x3]
      %v353 = vlaneseq
      %v354 = vshrl.u32 %v353, 7
      %v355 = vsub.s32 0, %v354
      %v356 = vrot.slane %v351, %v355
      %v357 = vlaneseq
      %v358 = vshrl.u32 %v357, 7
      %v359 = vsub.s32 1, %v358
      %v360 = vrot.slane %v351, %v359
      %v363 = vadd.f32 %v287, %v356
      %v364 = vadd.f32 %v288, %v360
      %v365 = vadd.f32 %v289, %v356
      %v366 = vadd.f32 %v290, %v360
      %v367 = vadd.f32 %v291, %v356
      %v368 = vadd.f32 %v292, %v360
      %v369 = vadd.f32 %v293, %v356
      %v370 = vadd.f32 %v294, %v360
      %v371 = vadd.f32 %v295, %v356
      %v372 = vadd.f32 %v296, %v360
      %v373 = vadd.f32 %v297, %v356
      %v374 = vadd.f32 %v298, %v360
      %v375 = vadd.f32 %v299, %v356
      %v376 = vadd.f32 %v300, %v360
      %v377 = vadd.f32 %v301, %v356
      %v378 = vadd.f32 %v302, %v360
      %v379 = vadd.f32 %v303, %v356
      %v380 = vadd.f32 %v304, %v360
      %v381 = vadd.f32 %v305, %v356
      %v382 = vadd.f32 %v306, %v360
      %v383 = vadd.f32 %v307, %v356
      %v384 = vadd.f32 %v308, %v360
      %v385 = vadd.f32 %v309, %v356
      %v386 = vadd.f32 %v310, %v360
      %v387 = vadd.f32 %v311, %v356
      %v388 = vadd.f32 %v312, %v360
      %v389 = vadd.f32 %v313, %v356
      %v390 = vadd.f32 %v314, %v360
      %v391 = vadd.f32 %v315, %v356
      %v392 = vadd.f32 %v316, %v360
      %v393 = vadd.f32 %v317, %v356
      %v394 = vadd.f32 %v318, %v360
      %v395 = vadd.f32 %v319, %v356
      %v396 = vadd.f32 %v320, %v360
      %v397 = vadd.f32 %v321, %v356
      %v398 = vadd.f32 %v322, %v360
      %v399 = vadd.f32 %v323, %v356
      %v400 = vadd.f32 %v324, %v360
      %v401 = vadd.f32 %v325, %v356
      %v402 = vadd.f32 %v326, %v360
      %v403 = vadd.f32 %v327, %v356
      %v404 = vadd.f32 %v328, %v360
      %v405 = vadd.f32 %v329, %v356
      %v406 = vadd.f32 %v330, %v360
      %v407 = vadd.f32 %v331, %v356
      %v408 = vadd.f32 %v332, %v360
      %v409 = vadd.f32 %v333, %v356
      %v410 = vadd.f32 %v334, %v360
      %v411 = vadd.f32 %v335, %v356
      %v412 = vadd.f32 %v336, %v360
      %v413 = vadd.f32 %v337, %v356
      %v414 = vadd.f32 %v338, %v360
      %v415 = vadd.f32 %v339, %v356
      %v416 = vadd.f32 %v340, %v360
      %v417 = vadd.f32 %v341, %v356
      %v418 = vadd.f32 %v342, %v360
      %v419 = vadd.f32 %v343, %v356
      %v420 = vadd.f32 %v344, %v360
      %v421 = vadd.f32 %v345, %v356
      %v422 = vadd.f32 %v346, %v360
      %v423 = vadd.f32 %v347, %v356
      %v424 = vadd.f32 %v348, %v360
      %v425 = vadd.f32 %v349, %v356
      %v426 = vadd.f32 %v350, %v360
      %v427 = vmax.f32 %v363, 0.0
      %v428 = vmax.f32 %v364, 0.0
      %v429 = vmax.f32 %v365, 0.0
      %v430 = vmax.f32 %v366, 0.0
      %v431 = vmax.f32 %v367, 0.0
      %v432 = vmax.f32 %v368, 0.0
      %v433 = vmax.f32 %v369, 0.0
      %v434 = vmax.f32 %v370, 0.0
      %v435 = vmax.f32 %v371, 0.0
      %v436 = vmax.f32 %v372, 0.0
      %v437 = vmax.f32 %v373, 0.0
      %v438 = vmax.f32 %v374, 0.0
      %v439 = vmax.f32 %v375, 0.0
      %v440 = vmax.f32 %v376, 0.0
      %v441 = vmax.f32 %v377, 0.0
      %v442 = vmax.f32 %v378, 0.0
      %v443 = vmax.f32 %v379, 0.0
      %v444 = vmax.f32 %v380, 0.0
      %v445 = vmax.f32 %v381, 0.0
      %v446 = vmax.f32 %v382, 0.0
      %v447 = vmax.f32 %v383, 0.0
      %v448 = vmax.f32 %v384, 0.0
      %v449 = vmax.f32 %v385, 0.0
      %v450 = vmax.f32 %v386, 0.0
      %v451 = vmax.f32 %v387, 0.0
      %v452 = vmax.f32 %v388, 0.0
      %v453 = vmax.f32 %v389, 0.0
      %v454 = vmax.f32 %v390, 0.0
      %v455 = vmax.f32 %v391, 0.0
      %v456 = vmax.f32 %v392, 0.0
      %v457 = vmax.f32 %v393, 0.0
      %v458 = vmax.f32 %v394, 0.0
      %v459 = vmax.f32 %v395, 0.0
      %v460 = vmax.f32 %v396, 0.0
      %v461 = vmax.f32 %v397, 0.0
      %v462 = vmax.f32 %v398, 0.0
      %v463 = vmax.f32 %v399, 0.0
      %v464 = vmax.f32 %v400, 0.0
      %v465 = vmax.f32 %v401, 0.0
      %v466 = vmax.f32 %v402, 0.0
      %v467 = vmax.f32 %v403, 0.0
      %v468 = vmax.f32 %v404, 0.0
      %v469 = vmax.f32 %v405, 0.0
      %v470 = vmax.f32 %v406, 0.0
      %v471 = vmax.f32 %v407, 0.0
      %v472 = vmax.f32 %v408, 0.0
      %v473 = vmax.f32 %v409, 0.0
      %v474 = vmax.f32 %v410, 0.0
      %v475 = vmax.f32 %v411, 0.0
      %v476 = vmax.f32 %v412, 0.0
      %v477 = vmax.f32 %v413, 0.0
      %v478 = vmax.f32 %v414, 0.0
      %v479 = vmax.f32 %v415, 0.0
      %v480 = vmax.f32 %v416, 0.0
      %v481 = vmax.f32 %v417, 0.0
      %v482 = vmax.f32 %v418, 0.0
      %v483 = vmax.f32 %v419, 0.0
      %v484 = vmax.f32 %v420, 0.0
      %v485 = vmax.f32 %v421, 0.0
      %v486 = vmax.f32 %v422, 0.0
      %v487 = vmax.f32 %v423, 0.0
      %v488 = vmax.f32 %v424, 0.0
      %v489 = vmax.f32 %v425, 0.0
      %v490 = vmax.f32 %v426, 0.0
      %491 = vst [vmem:[%s177] sm:$0xff] %v427
      %vm492 = vcmask 523264
      %493 = vst.msk [vmem:[%s177 + $0x8] sm:$0xff] %vm492, %v428
      %494 = vst [vmem:[%s177 + $0x10] sm:$0xff] %v429
      %495 = vst.msk [vmem:[%s177 + $0x18] sm:$0xff] %vm492, %v430
      %496 = vst [vmem:[%s177 + $0x20] sm:$0xff] %v431
      %497 = vst.msk [vmem:[%s177 + $0x28] sm:$0xff] %vm492, %v432
      %498 = vst [vmem:[%s177 + $0x30] sm:$0xff] %v433
      %499 = vst.msk [vmem:[%s177 + $0x38] sm:$0xff] %vm492, %v434
      %500 = vst [vmem:[%s177 + $0x40] sm:$0xff] %v435
      %501 = vst.msk [vmem:[%s177 + $0x48] sm:$0xff] %vm492, %v436
      %502 = vst [vmem:[%s177 + $0x50] sm:$0xff] %v437
      %503 = vst.msk [vmem:[%s177 + $0x58] sm:$0xff] %vm492, %v438
      %504 = vst [vmem:[%s177 + $0x60] sm:$0xff] %v439
      %505 = vst.msk [vmem:[%s177 + $0x68] sm:$0xff] %vm492, %v440
      %506 = vst [vmem:[%s177 + $0x70] sm:$0xff] %v441
      %507 = vst.msk [vmem:[%s177 + $0x78] sm:$0xff] %vm492, %v442
      %508 = vst [vmem:[%s177 + $0x80] sm:$0xff] %v443
      %509 = vst.msk [vmem:[%s177 + $0x88] sm:$0xff] %vm492, %v444
      %510 = vst [vmem:[%s177 + $0x90] sm:$0xff] %v445
      %511 = vst.msk [vmem:[%s177 + $0x98] sm:$0xff] %vm492, %v446
      %512 = vst [vmem:[%s177 + $0xa0] sm:$0xff] %v447
      %513 = vst.msk [vmem:[%s177 + $0xa8] sm:$0xff] %vm492, %v448
      %514 = vst [vmem:[%s177 + $0xb0] sm:$0xff] %v449
      %515 = vst.msk [vmem:[%s177 + $0xb8] sm:$0xff] %vm492, %v450
      %516 = vst [vmem:[%s177 + $0xc0] sm:$0xff] %v451
      %517 = vst.msk [vmem:[%s177 + $0xc8] sm:$0xff] %vm492, %v452
      %518 = vst [vmem:[%s177 + $0xd0] sm:$0xff] %v453
      %519 = vst.msk [vmem:[%s177 + $0xd8] sm:$0xff] %vm492, %v454
      %520 = vst [vmem:[%s177 + $0xe0] sm:$0xff] %v455
      %521 = vst.msk [vmem:[%s177 + $0xe8] sm:$0xff] %vm492, %v456
      %522 = vst [vmem:[%s177 + $0xf0] sm:$0xff] %v457
      %523 = vst.msk [vmem:[%s177 + $0xf8] sm:$0xff] %vm492, %v458
      %524 = vst [vmem:[%s177 + $0x100] sm:$0xff] %v459
      %525 = vst.msk [vmem:[%s177 + $0x108] sm:$0xff] %vm492, %v460
      %526 = vst [vmem:[%s177 + $0x110] sm:$0xff] %v461
      %527 = vst.msk [vmem:[%s177 + $0x118] sm:$0xff] %vm492, %v462
      %528 = vst [vmem:[%s177 + $0x120] sm:$0xff] %v463
      %529 = vst.msk [vmem:[%s177 + $0x128] sm:$0xff] %vm492, %v464
      %530 = vst [vmem:[%s177 + $0x130] sm:$0xff] %v465
      %531 = vst.msk [vmem:[%s177 + $0x138] sm:$0xff] %vm492, %v466
      %532 = vst [vmem:[%s177 + $0x140] sm:$0xff] %v467
      %533 = vst.msk [vmem:[%s177 + $0x148] sm:$0xff] %vm492, %v468
      %534 = vst [vmem:[%s177 + $0x150] sm:$0xff] %v469
      %535 = vst.msk [vmem:[%s177 + $0x158] sm:$0xff] %vm492, %v470
      %536 = vst [vmem:[%s177 + $0x160] sm:$0xff] %v471
      %537 = vst.msk [vmem:[%s177 + $0x168] sm:$0xff] %vm492, %v472
      %538 = vst [vmem:[%s177 + $0x170] sm:$0xff] %v473
      %539 = vst.msk [vmem:[%s177 + $0x178] sm:$0xff] %vm492, %v474
      %540 = vst [vmem:[%s177 + $0x180] sm:$0xff] %v475
      %541 = vst.msk [vmem:[%s177 + $0x188] sm:$0xff] %vm492, %v476
      %542 = vst [vmem:[%s177 + $0x190] sm:$0xff] %v477
      %543 = vst.msk [vmem:[%s177 + $0x198] sm:$0xff] %vm492, %v478
      %544 = vst [vmem:[%s177 + $0x1a0] sm:$0xff] %v479
      %545 = vst.msk [vmem:[%s177 + $0x1a8] sm:$0xff] %vm492, %v480
      %546 = vst [vmem:[%s177 + $0x1b0] sm:$0xff] %v481
      %547 = vst.msk [vmem:[%s177 + $0x1b8] sm:$0xff] %vm492, %v482
      %548 = vst [vmem:[%s177 + $0x1c0] sm:$0xff] %v483
      %549 = vst.msk [vmem:[%s177 + $0x1c8] sm:$0xff] %vm492, %v484
      %550 = vst [vmem:[%s177 + $0x1d0] sm:$0xff] %v485
      %551 = vst.msk [vmem:[%s177 + $0x1d8] sm:$0xff] %vm492, %v486
      %552 = vst [vmem:[%s177 + $0x1e0] sm:$0xff] %v487
      %553 = vst.msk [vmem:[%s177 + $0x1e8] sm:$0xff] %vm492, %v488
      %554 = vst [vmem:[%s177 + $0x1f0] sm:$0xff] %v489
      %555 = vst.msk [vmem:[%s177 + $0x1f8] sm:$0xff] %vm492, %v490
      %s556 = smul.u32 32, %s14
      %p557 = scmp.lt.s32.totalorder %s556, 63
      %s558 = scalar_select %p557, %s556, 63
      %s559 = smul.addr %s558, 2
      %s560 = smul.addr %s559, 8
      %s561 = scalar_lea.vmem %s3, %s560
      // Predicated region
      $region33: #{inception_f6_forward.27} parent=31 // pred_check
        %p562 = pneg %p100
      $region34: #{inception_f6_forward.27} parent=31 // pred_check_branch
        %564 = sbr.rel (%p562) target = $region36
      $region35: #{inception_f6_forward.27} parent=31 // pred_region
        %s565 = smul.u32 32, %s14
      $region36: #{inception_f6_forward.27} parent=31 // pred_fallthru
        _
    $region32: #{inception_f6_forward.27} parent=5 // pred_fallthru
      _
    %p566 = scmp.le.s32.totalorder 2, %s9
    // Predicated region
    $region37: #{inception_f6_forward.27} parent=5 // pred_check
      %p567 = pneg %p566
    $region38: #{inception_f6_forward.27} parent=5 // pred_check_branch
      %569 = sbr.rel (%p567) target = $region40
    $region39: #{inception_f6_forward.27} parent=5 // pred_region
      %s570 = ssub.s32 %s9, 2
      // Predicated region
      $region41: #{inception_f6_forward.27} parent=39 // pred_check
        %p571 = pneg %p106
      $region42: #{inception_f6_forward.27} parent=39 // pred_check_branch
        %573 = sbr.rel (%p571) target = $region44
      $region43: #{inception_f6_forward.27} parent=39 // pred_region
        %s574 = smul.u32 32, %s15
        %p575 = scmp.lt.s32.totalorder %s574, 63
        %s576 = scalar_select %p575, %s574, 63
        %s577 = smul.addr %s576, 2
        %s578 = smul.addr %s577, 8
        %s579 = scalar_lea.vmem %s3, %s578
      $region44: #{inception_f6_forward.27} parent=39 // pred_fallthru
        _
    $region40: #{inception_f6_forward.27} parent=5 // pred_fallthru
      _
  $region6: #{inception_f6_forward.27} parent=0 // loop_footer
    %s13 = sadd.s32 1, %s9
  $region7: #{inception_f6_forward.27} parent=0 // loop_footer_branch
    %8 = sbr.rel target = $region3
  $region8: #{inception_f6_forward.27} parent=0 // loop_exit
    _

</llo_original>
